<compile_context>
chip_gen: v5e
topology: v5e:2x2
jax: 0.10.0
libtpu: 0.0.40
codegen_flags: <defaults>
</compile_context>

<pallas_src>
import jax
import jax.numpy as jnp
from jax.experimental import pallas as pl
from jax.experimental.pallas import tpu as pltpu

GUARD = 8  # aligned guard rows around the extended row buffer


def down_sampling_kernel(xc_ref, xu_ref, xd_ref,
                         w1_ref, b1_ref, w3_ref, b3_ref,
                         wp1_ref, wp2_ref, bp_ref, alpha_ref,
                         o_ref,
                         ext_buf, vbuf1, vbuf2):
    i = pl.program_id(1)
    n_row_tiles = pl.num_programs(1)

    THW, cin = xc_ref.shape[1], xc_ref.shape[2]
    W = xu_ref.shape[1]
    TH = THW // W
    Wp = W // 2
    P = o_ref.shape[1]
    f32 = jnp.float32

    alpha1 = alpha_ref[0]                       # PReLU slopes (SMEM scalars)
    alpha2 = alpha_ref[1]

    w1 = w1_ref[...]
    b1 = b1_ref[...]

    def prelu(v, a):
        return jnp.where(v >= 0.0, v, a * v)

    def conv1x1_prelu(v):                       # (R, Cin) -> (R, Cin)
        return prelu(jnp.dot(v, w1, preferred_element_type=f32) + b1, alpha1)

    # ---- stage 1: first 1x1 conv + PReLU on the band and its halo rows -----
    xc = xc_ref[0]                              # (TH*W, Cin) centre band
    a1c = conv1x1_prelu(xc)
    a1u = conv1x1_prelu(xu_ref[0])              # (W, Cin) row above the band
    a1d = conv1x1_prelu(xd_ref[0])              # (W, Cin) row below the band
    # rows outside the image contribute zeros (zero padding of the 3x3 input)
    a1u = jnp.where(i > 0, a1u, 0.0)
    a1d = jnp.where(i < n_row_tiles - 1, a1d, 0.0)

    # ---- stage 2: 3x3 conv (padding=1) + PReLU as 9 shifted matmuls --------
    # ext_buf rows: [0,G) zero guard | [G,G+W) halo-above | [G+W,G+W+THW)
    # centre band | next W rows halo-below | last G rows zero guard.
    ext_buf[pl.ds(0, GUARD), :] = jnp.zeros((GUARD, cin), f32)
    ext_buf[pl.ds(GUARD, W), :] = a1u
    ext_buf[pl.ds(GUARD + W, THW), :] = a1c
    ext_buf[pl.ds(GUARD + W + THW, W), :] = a1d
    ext_buf[pl.ds(GUARD + 2 * W + THW, GUARD), :] = jnp.zeros((GUARD, cin), f32)

    # column masks for the horizontally shifted taps (flat row-major layout)
    col = jax.lax.broadcasted_iota(jnp.int32, (THW, 1), 0) % W
    mask_l = (col > 0).astype(f32)              # kx = 0 taps read column w-1
    mask_r = (col < (W - 1)).astype(f32)        # kx = 2 taps read column w+1

    def tap_sum(kx):                            # sum_ky window(ky,kx) @ W3[ky,kx]
        acc = jnp.zeros((THW, cin), f32)
        for ky in range(3):
            win = ext_buf[pl.ds(GUARD + ky * W + kx - 1, THW), :]
            acc = acc + jnp.dot(win, w3_ref[ky * 3 + kx],
                                preferred_element_type=f32)
        return acc

    a2 = tap_sum(1) + mask_l * tap_sum(0) + mask_r * tap_sum(2) + b3_ref[...]
    a2 = prelu(a2, alpha2)                      # (TH*W, Cin)

    # ---- stage 3: 2x2 max pool of a2 (path1) and of x (path2) --------------
    def max_pool_2x2(flat, vbuf):               # (TH*W, C) -> (TH/2 * W/2, C)
        v4 = flat.reshape(TH // 2, 2, W, cin)
        vbuf[...] = jnp.maximum(v4[:, 0], v4[:, 1])                # vertical
        pooled = jnp.maximum(vbuf[:, pl.ds(0, Wp, stride=2), :],
                             vbuf[:, pl.ds(1, Wp, stride=2), :])   # horizontal
        return pooled.reshape(P, cin)

    p1 = max_pool_2x2(a2, vbuf1)
    p2 = max_pool_2x2(xc, vbuf2)

    # ---- stage 4: the two final 1x1 convs (biases pre-folded) + add --------
    out = (jnp.dot(p1, wp1_ref[...], preferred_element_type=f32)
           + jnp.dot(p2, wp2_ref[...], preferred_element_type=f32)
           + bp_ref[...])
    o_ref[0] = out.astype(o_ref.dtype)


def down_sampling_pallas(x_flat, params, *, H, W, tile_h=8):
    """x_flat: (N, H*W, Cin) float32, channels-last flattened spatial."""
    N, HW, Cin = x_flat.shape
    assert HW == H * W and x_flat.dtype == jnp.float32
    w1, b1, w3_taps, b3, wp1, wp2, bp, alphas = params
    Cout = wp1.shape[1]

    TH = min(tile_h, H)
    assert H % TH == 0 and TH % 2 == 0 and W % 2 == 0 and W % 8 == 0
    n_row_tiles = H // TH
    THW = TH * W
    Hp, Wp = H // 2, W // 2
    P = (TH // 2) * Wp

    def full_spec(a):
        nd = a.ndim
        return pl.BlockSpec(a.shape, lambda n, i, _nd=nd: (0,) * _nd)

    grid_spec = pltpu.PrefetchScalarGridSpec(
        num_scalar_prefetch=0,
        grid=(N, n_row_tiles),
        in_specs=[
            # centre band of TH image rows
            pl.BlockSpec((1, THW, Cin), lambda n, i: (n, i, 0)),
            # single halo row above / below (clamped at the image border,
            # the clamped copies are zeroed inside the kernel)
            pl.BlockSpec((1, W, Cin),
                         lambda n, i: (n, jnp.maximum(i * TH - 1, 0), 0)),
            pl.BlockSpec((1, W, Cin),
                         lambda n, i: (n, jnp.minimum(i * TH + TH, H - 1), 0)),
            full_spec(w1), full_spec(b1), full_spec(w3_taps), full_spec(b3),
            full_spec(wp1), full_spec(wp2), full_spec(bp),
            pl.BlockSpec(memory_space=pltpu.MemorySpace.SMEM),   # PReLU alphas
        ],
        out_specs=pl.BlockSpec((1, P, Cout), lambda n, i: (n, i, 0)),
        scratch_shapes=[
            pltpu.VMEM((THW + 2 * W + 2 * GUARD, Cin), jnp.float32),
            pltpu.VMEM((TH // 2, W, Cin), jnp.float32),
            pltpu.VMEM((TH // 2, W, Cin), jnp.float32),
        ],
    )

    return pl.pallas_call(
        down_sampling_kernel,
        out_shape=jax.ShapeDtypeStruct((N, Hp * Wp, Cout), x_flat.dtype),
        grid_spec=grid_spec,
        compiler_params=pltpu.CompilerParams(
            dimension_semantics=("parallel", "parallel")),
    )(x_flat, x_flat, x_flat,
      w1, b1, w3_taps, b3, wp1, wp2, bp, alphas)


# ----------------------------- pure-JAX reference ---------------------------
def make_params(key, cin, cout):
    ks = jax.random.split(key, 10)
    s1 = 1.0 / jnp.sqrt(cin)
    return dict(
        w1=jax.random.normal(ks[0], (cin, cin), jnp.float32) * s1,
        b1=jax.random.normal(ks[1], (1, cin), jnp.float32) * s1,
        w3=jax.random.normal(ks[2], (3, 3, cin, cin), jnp.float32) * (s1 / 3.0),
        b3=jax.random.normal(ks[3], (1, cin), jnp.float32) * s1,
        wp1=jax.random.normal(ks[4], (cin, cout), jnp.float32) * s1,
        bp1=jax.random.normal(ks[5], (1, cout), jnp.float32) * s1,
        wp2=jax.random.normal(ks[6], (cin, cout), jnp.float32) * s1,
        bp2=jax.random.normal(ks[7], (1, cout), jnp.float32) * s1,
        alphas=jnp.array([0.25, 0.1], jnp.float32),   # PReLU slopes
    )


def down_sampling_reference(x_nhwc, p):
    def prelu(v, a):
        return jnp.where(v >= 0.0, v, a * v)
    a1 = prelu(jnp.einsum('nhwc,cd->nhwd', x_nhwc, p['w1']) + p['b1'],
               p['alphas'][0])
    a2 = jax.lax.conv_general_dilated(
        a1, p['w3'], window_strides=(1, 1), padding='SAME',
        dimension_numbers=('NHWC', 'HWIO', 'NHWC')) + p['b3']
    a2 = prelu(a2, p['alphas'][1])
    pool = lambda t: jax.lax.reduce_window(
        t, -jnp.inf, jax.lax.max, (1, 2, 2, 1), (1, 2, 2, 1), 'VALID')
    path1 = jnp.einsum('nhwc,cd->nhwd', pool(a2), p['wp1']) + p['bp1']
    path2 = jnp.einsum('nhwc,cd->nhwd', pool(x_nhwc), p['wp2']) + p['bp2']
    return path1 + path2


if __name__ == "__main__":
    # true f32 matmuls everywhere so kernel and reference agree tightly
    jax.config.update("jax_default_matmul_precision", "highest")

    N, Cin, Cout, H, W = 2, 16, 32, 16, 16

    key = jax.random.PRNGKey(0)
    kx, kp = jax.random.split(key)
    x_nchw = jax.random.normal(kx, (N, Cin, H, W), jnp.float32)  # PyTorch layout
    p = make_params(kp, Cin, Cout)

    # NCHW -> channels-last flattened spatial for the kernel
    x_nhwc = jnp.transpose(x_nchw, (0, 2, 3, 1))
    x_flat = x_nhwc.reshape(N, H * W, Cin)

    kernel_params = (p['w1'], p['b1'],
                     p['w3'].reshape(9, Cin, Cin),        # tap t = ky*3 + kx
                     p['b3'],
                     p['wp1'], p['wp2'],
                     p['bp1'] + p['bp2'],                 # folded output bias
                     p['alphas'])

    out_flat = down_sampling_pallas(x_flat, kernel_params, H=H, W=W, tile_h=8)
    out_flat = jax.block_until_ready(out_flat)

    ref = down_sampling_reference(x_nhwc, p)              # (N, H/2, W/2, Cout)
    ref_flat = ref.reshape(N, (H // 2) * (W // 2), Cout)

    assert out_flat.shape == ref_flat.shape
    max_err = float(jnp.max(jnp.abs(out_flat - ref_flat)))
    assert jnp.allclose(out_flat, ref_flat, atol=1e-3, rtol=1e-3), (
        "mismatch vs reference, max abs err = %g" % max_err)

    # back to NCHW for callers that want the PyTorch layout
    out_nchw = jnp.transpose(
        out_flat.reshape(N, H // 2, W // 2, Cout), (0, 3, 1, 2))
    jax.block_until_ready(out_nchw)

    print("KERNEL_OK")
</pallas_src>

<mosaic_0001>
module attributes {stable_mosaic.version = 11 : i64} {
  func.func @down_sampling_kernel(%arg0: i32, %arg1: i32, %arg2: memref<1x128x16xf32, #tpu.memory_space<vmem>>, %arg3: memref<1x16x16xf32, #tpu.memory_space<vmem>>, %arg4: memref<1x16x16xf32, #tpu.memory_space<vmem>>, %arg5: memref<16x16xf32, #tpu.memory_space<vmem>>, %arg6: memref<1x16xf32, #tpu.memory_space<vmem>>, %arg7: memref<9x16x16xf32, #tpu.memory_space<vmem>>, %arg8: memref<1x16xf32, #tpu.memory_space<vmem>>, %arg9: memref<16x32xf32, #tpu.memory_space<vmem>>, %arg10: memref<16x32xf32, #tpu.memory_space<vmem>>, %arg11: memref<1x32xf32, #tpu.memory_space<vmem>>, %arg12: memref<2xf32, #tpu.memory_space<smem>>, %arg13: memref<1x32x32xf32, #tpu.memory_space<vmem>>, %arg14: memref<176x16xf32, #tpu.memory_space<vmem>>, %arg15: memref<4x16x16xf32, #tpu.memory_space<vmem>>, %arg16: memref<4x16x16xf32, #tpu.memory_space<vmem>>) attributes {dimension_semantics = [#tpu.dimension_semantics<parallel>, #tpu.dimension_semantics<parallel>], iteration_bounds = array<i64: 2, 2>, scalar_prefetch = 0 : i64, scratch_operands = 3 : i64, tpu.core_type = #tpu.core_type<tc>, window_params = [{transform_indices = @transform_0, window_bounds = array<i64: 1, 128, 16>}, {transform_indices = @transform_1, window_bounds = array<i64: 1, 16, 16>}, {transform_indices = @transform_2, window_bounds = array<i64: 1, 16, 16>}, {pipeline_mode = #tpu.pipeline_mode<synchronous>, transform_indices = @transform_3, window_bounds = array<i64: 16, 16>}, {pipeline_mode = #tpu.pipeline_mode<synchronous>, transform_indices = @transform_4, window_bounds = array<i64: 1, 16>}, {pipeline_mode = #tpu.pipeline_mode<synchronous>, transform_indices = @transform_5, window_bounds = array<i64: 9, 16, 16>}, {pipeline_mode = #tpu.pipeline_mode<synchronous>, transform_indices = @transform_6, window_bounds = array<i64: 1, 16>}, {pipeline_mode = #tpu.pipeline_mode<synchronous>, transform_indices = @transform_7, window_bounds = array<i64: 16, 32>}, {pipeline_mode = #tpu.pipeline_mode<synchronous>, transform_indices = @transform_8, window_bounds = array<i64: 16, 32>}, {pipeline_mode = #tpu.pipeline_mode<synchronous>, transform_indices = @transform_9, window_bounds = array<i64: 1, 32>}, {transform_indices = @transform_10, window_bounds = array<i64: 2>}, {transform_indices = @transform_11, window_bounds = array<i64: 1, 32, 32>}]} {
    %c0 = arith.constant 0 : index
    %0 = memref.load %arg12[%c0] : memref<2xf32, #tpu.memory_space<smem>>
    %c1 = arith.constant 1 : index
    %1 = memref.load %arg12[%c1] : memref<2xf32, #tpu.memory_space<smem>>
    %c0_0 = arith.constant 0 : index
    %c0_1 = arith.constant 0 : index
    %2 = vector.load %arg5[%c0_0, %c0_1] : memref<16x16xf32, #tpu.memory_space<vmem>>, vector<16x16xf32>
    %c0_2 = arith.constant 0 : index
    %c0_3 = arith.constant 0 : index
    %3 = vector.load %arg6[%c0_2, %c0_3] : memref<1x16xf32, #tpu.memory_space<vmem>>, vector<1x16xf32>
    %c0_4 = arith.constant 0 : index
    %c0_5 = arith.constant 0 : index
    %c0_6 = arith.constant 0 : index
    %4 = vector.load %arg2[%c0_4, %c0_5, %c0_6] : memref<1x128x16xf32, #tpu.memory_space<vmem>>, vector<1x128x16xf32>
    %5 = vector.shape_cast %4 : vector<1x128x16xf32> to vector<128x16xf32>
    %cst = arith.constant dense<0.000000e+00> : vector<128x16xf32>
    %6 = tpu.matmul %5, %2, %cst {dimension_numbers = #tpu.dot_dimension_numbers<[1], [0], [0], [1], [0, 0, 1, 1], [], []>, precision = #tpu.contract_precision<fp32>} : vector<128x16xf32>, vector<16x16xf32>, vector<128x16xf32> -> vector<128x16xf32>
    %7 = vector.broadcast %3 : vector<1x16xf32> to vector<128x16xf32>
    %8 = arith.addf %6, %7 : vector<128x16xf32>
    %cst_7 = arith.constant 0.000000e+00 : f32
    %9 = vector.broadcast %cst_7 : f32 to vector<128x16xf32>
    %10 = arith.cmpf oge, %8, %9 : vector<128x16xf32>
    %11 = vector.broadcast %0 : f32 to vector<128x16xf32>
    %12 = arith.mulf %11, %8 : vector<128x16xf32>
    %13 = arith.select %10, %8, %12 : vector<128x16xi1>, vector<128x16xf32>
    %c0_8 = arith.constant 0 : index
    %c0_9 = arith.constant 0 : index
    %c0_10 = arith.constant 0 : index
    %14 = vector.load %arg3[%c0_8, %c0_9, %c0_10] : memref<1x16x16xf32, #tpu.memory_space<vmem>>, vector<1x16x16xf32>
    %15 = vector.shape_cast %14 : vector<1x16x16xf32> to vector<16x16xf32>
    %cst_11 = arith.constant dense<0.000000e+00> : vector<16x16xf32>
    %16 = tpu.matmul %15, %2, %cst_11 {dimension_numbers = #tpu.dot_dimension_numbers<[1], [0], [0], [1], [0, 0, 1, 1], [], []>, precision = #tpu.contract_precision<fp32>} : vector<16x16xf32>, vector<16x16xf32>, vector<16x16xf32> -> vector<16x16xf32>
    %17 = vector.broadcast %3 : vector<1x16xf32> to vector<16x16xf32>
    %18 = arith.addf %16, %17 : vector<16x16xf32>
    %cst_12 = arith.constant 0.000000e+00 : f32
    %19 = vector.broadcast %cst_12 : f32 to vector<16x16xf32>
    %20 = arith.cmpf oge, %18, %19 : vector<16x16xf32>
    %21 = vector.broadcast %0 : f32 to vector<16x16xf32>
    %22 = arith.mulf %21, %18 : vector<16x16xf32>
    %23 = arith.select %20, %18, %22 : vector<16x16xi1>, vector<16x16xf32>
    %c0_13 = arith.constant 0 : index
    %c0_14 = arith.constant 0 : index
    %c0_15 = arith.constant 0 : index
    %24 = vector.load %arg4[%c0_13, %c0_14, %c0_15] : memref<1x16x16xf32, #tpu.memory_space<vmem>>, vector<1x16x16xf32>
    %25 = vector.shape_cast %24 : vector<1x16x16xf32> to vector<16x16xf32>
    %cst_16 = arith.constant dense<0.000000e+00> : vector<16x16xf32>
    %26 = tpu.matmul %25, %2, %cst_16 {dimension_numbers = #tpu.dot_dimension_numbers<[1], [0], [0], [1], [0, 0, 1, 1], [], []>, precision = #tpu.contract_precision<fp32>} : vector<16x16xf32>, vector<16x16xf32>, vector<16x16xf32> -> vector<16x16xf32>
    %27 = vector.broadcast %3 : vector<1x16xf32> to vector<16x16xf32>
    %28 = arith.addf %26, %27 : vector<16x16xf32>
    %cst_17 = arith.constant 0.000000e+00 : f32
    %29 = vector.broadcast %cst_17 : f32 to vector<16x16xf32>
    %30 = arith.cmpf oge, %28, %29 : vector<16x16xf32>
    %31 = vector.broadcast %0 : f32 to vector<16x16xf32>
    %32 = arith.mulf %31, %28 : vector<16x16xf32>
    %33 = arith.select %30, %28, %32 : vector<16x16xi1>, vector<16x16xf32>
    %c0_i32 = arith.constant 0 : i32
    %34 = arith.cmpi sgt, %arg1, %c0_i32 : i32
    %cst_18 = arith.constant 0.000000e+00 : f32
    %35 = vector.broadcast %cst_18 : f32 to vector<16x16xf32>
    %36 = arith.select %34, %23, %35 : vector<16x16xf32>
    %c1_i32 = arith.constant 1 : i32
    %37 = arith.cmpi slt, %arg1, %c1_i32 : i32
    %cst_19 = arith.constant 0.000000e+00 : f32
    %38 = vector.broadcast %cst_19 : f32 to vector<16x16xf32>
    %39 = arith.select %37, %33, %38 : vector<16x16xf32>
    %cst_20 = arith.constant 0.000000e+00 : f32
    %40 = vector.broadcast %cst_20 : f32 to vector<8x16xf32>
    %c0_21 = arith.constant 0 : index
    %c0_22 = arith.constant 0 : index
    %41 = vector.load %arg14[%c0_21, %c0_22] : memref<176x16xf32, #tpu.memory_space<vmem>>, vector<8x16xf32>
    tpu.vector_store %arg14[%c0_21, %c0_22], %40 {strides = array<i32>} : memref<176x16xf32, #tpu.memory_space<vmem>>, vector<8x16xf32>,
    %c8 = arith.constant 8 : index
    %c0_23 = arith.constant 0 : index
    %42 = vector.load %arg14[%c8, %c0_23] : memref<176x16xf32, #tpu.memory_space<vmem>>, vector<16x16xf32>
    tpu.vector_store %arg14[%c8, %c0_23], %36 {strides = array<i32>} : memref<176x16xf32, #tpu.memory_space<vmem>>, vector<16x16xf32>,
    %c24 = arith.constant 24 : index
    %c0_24 = arith.constant 0 : index
    %43 = vector.load %arg14[%c24, %c0_24] : memref<176x16xf32, #tpu.memory_space<vmem>>, vector<128x16xf32>
    tpu.vector_store %arg14[%c24, %c0_24], %13 {strides = array<i32>} : memref<176x16xf32, #tpu.memory_space<vmem>>, vector<128x16xf32>,
    %c152 = arith.constant 152 : index
    %c0_25 = arith.constant 0 : index
    %44 = vector.load %arg14[%c152, %c0_25] : memref<176x16xf32, #tpu.memory_space<vmem>>, vector<16x16xf32>
    tpu.vector_store %arg14[%c152, %c0_25], %39 {strides = array<i32>} : memref<176x16xf32, #tpu.memory_space<vmem>>, vector<16x16xf32>,
    %cst_26 = arith.constant 0.000000e+00 : f32
    %45 = vector.broadcast %cst_26 : f32 to vector<8x16xf32>
    %c168 = arith.constant 168 : index
    %c0_27 = arith.constant 0 : index
    %46 = vector.load %arg14[%c168, %c0_27] : memref<176x16xf32, #tpu.memory_space<vmem>>, vector<8x16xf32>
    tpu.vector_store %arg14[%c168, %c0_27], %45 {strides = array<i32>} : memref<176x16xf32, #tpu.memory_space<vmem>>, vector<8x16xf32>,
    %47 = tpu.iota {dimensions = array<i32: 0>} : vector<128x1xi32>
    %c16_i32 = arith.constant 16 : i32
    %c0_i32_28 = arith.constant 0 : i32
    %48 = arith.cmpi eq, %c16_i32, %c0_i32_28 : i32
    %c1_i32_29 = arith.constant 1 : i32
    %49 = arith.select %48, %c1_i32_29, %c16_i32 : i32
    %50 = vector.broadcast %49 : i32 to vector<128x1xi32>
    %51 = arith.remsi %47, %50 : vector<128x1xi32>
    %c0_i32_30 = arith.constant 0 : i32
    %52 = vector.broadcast %c0_i32_30 : i32 to vector<128x1xi32>
    %53 = arith.cmpi ne, %51, %52 : vector<128x1xi32>
    %c0_i32_31 = arith.constant 0 : i32
    %54 = vector.broadcast %c0_i32_31 : i32 to vector<128x1xi32>
    %55 = arith.cmpi slt, %51, %54 : vector<128x1xi32>
    %c0_i32_32 = arith.constant 0 : i32
    %56 = arith.cmpi slt, %49, %c0_i32_32 : i32
    %57 = vector.broadcast %56 : i1 to vector<128x1xi1>
    %58 = vector.broadcast %57 : vector<128x1xi1> to vector<128x1xi1>
    %59 = arith.xori %55, %58 : vector<128x1xi1>
    %60 = arith.andi %59, %53 : vector<128x1xi1>
    %61 = vector.broadcast %49 : i32 to vector<128x1xi32>
    %62 = arith.addi %51, %61 : vector<128x1xi32>
    %63 = arith.select %60, %62, %51 : vector<128x1xi1>, vector<128x1xi32>
    %c0_i32_33 = arith.constant 0 : i32
    %64 = vector.broadcast %c0_i32_33 : i32 to vector<128x1xi32>
    %65 = arith.cmpi sgt, %63, %64 : vector<128x1xi32>
    %66 = arith.extui %65 : vector<128x1xi1> to vector<128x1xi32>
    %67 = arith.sitofp %66 : vector<128x1xi32> to vector<128x1xf32>
    %c15_i32 = arith.constant 15 : i32
    %68 = vector.broadcast %c15_i32 : i32 to vector<128x1xi32>
    %69 = arith.cmpi slt, %63, %68 : vector<128x1xi32>
    %70 = arith.extui %69 : vector<128x1xi1> to vector<128x1xi32>
    %71 = arith.sitofp %70 : vector<128x1xi32> to vector<128x1xf32>
    %cst_34 = arith.constant 0.000000e+00 : f32
    %72 = vector.broadcast %cst_34 : f32 to vector<128x16xf32>
    %c8_35 = arith.constant 8 : index
    %c0_36 = arith.constant 0 : index
    %73 = vector.load %arg14[%c8_35, %c0_36] : memref<176x16xf32, #tpu.memory_space<vmem>>, vector<128x16xf32>
    %c1_37 = arith.constant 1 : index
    %c0_38 = arith.constant 0 : index
    %c0_39 = arith.constant 0 : index
    %74 = vector.load %arg7[%c1_37, %c0_38, %c0_39] : memref<9x16x16xf32, #tpu.memory_space<vmem>>, vector<1x16x16xf32>
    %75 = vector.shape_cast %74 : vector<1x16x16xf32> to vector<16x16xf32>
    %cst_40 = arith.constant dense<0.000000e+00> : vector<128x16xf32>
    %76 = tpu.matmul %73, %75, %cst_40 {dimension_numbers = #tpu.dot_dimension_numbers<[1], [0], [0], [1], [0, 0, 1, 1], [], []>, precision = #tpu.contract_precision<fp32>} : vector<128x16xf32>, vector<16x16xf32>, vector<128x16xf32> -> vector<128x16xf32>
    %77 = arith.addf %72, %76 : vector<128x16xf32>
    %c24_41 = arith.constant 24 : index
    %c0_42 = arith.constant 0 : index
    %78 = vector.load %arg14[%c24_41, %c0_42] : memref<176x16xf32, #tpu.memory_space<vmem>>, vector<128x16xf32>
    %c4 = arith.constant 4 : index
    %c0_43 = arith.constant 0 : index
    %c0_44 = arith.constant 0 : index
    %79 = vector.load %arg7[%c4, %c0_43, %c0_44] : memref<9x16x16xf32, #tpu.memory_space<vmem>>, vector<1x16x16xf32>
    %80 = vector.shape_cast %79 : vector<1x16x16xf32> to vector<16x16xf32>
    %cst_45 = arith.constant dense<0.000000e+00> : vector<128x16xf32>
    %81 = tpu.matmul %78, %80, %cst_45 {dimension_numbers = #tpu.dot_dimension_numbers<[1], [0], [0], [1], [0, 0, 1, 1], [], []>, precision = #tpu.contract_precision<fp32>} : vector<128x16xf32>, vector<16x16xf32>, vector<128x16xf32> -> vector<128x16xf32>
    %82 = arith.addf %77, %81 : vector<128x16xf32>
    %c40 = arith.constant 40 : index
    %c0_46 = arith.constant 0 : index
    %83 = vector.load %arg14[%c40, %c0_46] : memref<176x16xf32, #tpu.memory_space<vmem>>, vector<128x16xf32>
    %c7 = arith.constant 7 : index
    %c0_47 = arith.constant 0 : index
    %c0_48 = arith.constant 0 : index
    %84 = vector.load %arg7[%c7, %c0_47, %c0_48] : memref<9x16x16xf32, #tpu.memory_space<vmem>>, vector<1x16x16xf32>
    %85 = vector.shape_cast %84 : vector<1x16x16xf32> to vector<16x16xf32>
    %cst_49 = arith.constant dense<0.000000e+00> : vector<128x16xf32>
    %86 = tpu.matmul %83, %85, %cst_49 {dimension_numbers = #tpu.dot_dimension_numbers<[1], [0], [0], [1], [0, 0, 1, 1], [], []>, precision = #tpu.contract_precision<fp32>} : vector<128x16xf32>, vector<16x16xf32>, vector<128x16xf32> -> vector<128x16xf32>
    %87 = arith.addf %82, %86 : vector<128x16xf32>
    %cst_50 = arith.constant 0.000000e+00 : f32
    %88 = vector.broadcast %cst_50 : f32 to vector<128x16xf32>
    %c7_51 = arith.constant 7 : index
    %c0_52 = arith.constant 0 : index
    %89 = vector.load %arg14[%c7_51, %c0_52] : memref<176x16xf32, #tpu.memory_space<vmem>>, vector<128x16xf32>
    %c0_53 = arith.constant 0 : index
    %c0_54 = arith.constant 0 : index
    %c0_55 = arith.constant 0 : index
    %90 = vector.load %arg7[%c0_53, %c0_54, %c0_55] : memref<9x16x16xf32, #tpu.memory_space<vmem>>, vector<1x16x16xf32>
    %91 = vector.shape_cast %90 : vector<1x16x16xf32> to vector<16x16xf32>
    %cst_56 = arith.constant dense<0.000000e+00> : vector<128x16xf32>
    %92 = tpu.matmul %89, %91, %cst_56 {dimension_numbers = #tpu.dot_dimension_numbers<[1], [0], [0], [1], [0, 0, 1, 1], [], []>, precision = #tpu.contract_precision<fp32>} : vector<128x16xf32>, vector<16x16xf32>, vector<128x16xf32> -> vector<128x16xf32>
    %93 = arith.addf %88, %92 : vector<128x16xf32>
    %c23 = arith.constant 23 : index
    %c0_57 = arith.constant 0 : index
    %94 = vector.load %arg14[%c23, %c0_57] : memref<176x16xf32, #tpu.memory_space<vmem>>, vector<128x16xf32>
    %c3 = arith.constant 3 : index
    %c0_58 = arith.constant 0 : index
    %c0_59 = arith.constant 0 : index
    %95 = vector.load %arg7[%c3, %c0_58, %c0_59] : memref<9x16x16xf32, #tpu.memory_space<vmem>>, vector<1x16x16xf32>
    %96 = vector.shape_cast %95 : vector<1x16x16xf32> to vector<16x16xf32>
    %cst_60 = arith.constant dense<0.000000e+00> : vector<128x16xf32>
    %97 = tpu.matmul %94, %96, %cst_60 {dimension_numbers = #tpu.dot_dimension_numbers<[1], [0], [0], [1], [0, 0, 1, 1], [], []>, precision = #tpu.contract_precision<fp32>} : vector<128x16xf32>, vector<16x16xf32>, vector<128x16xf32> -> vector<128x16xf32>
    %98 = arith.addf %93, %97 : vector<128x16xf32>
    %c39 = arith.constant 39 : index
    %c0_61 = arith.constant 0 : index
    %99 = vector.load %arg14[%c39, %c0_61] : memref<176x16xf32, #tpu.memory_space<vmem>>, vector<128x16xf32>
    %c6 = arith.constant 6 : index
    %c0_62 = arith.constant 0 : index
    %c0_63 = arith.constant 0 : index
    %100 = vector.load %arg7[%c6, %c0_62, %c0_63] : memref<9x16x16xf32, #tpu.memory_space<vmem>>, vector<1x16x16xf32>
    %101 = vector.shape_cast %100 : vector<1x16x16xf32> to vector<16x16xf32>
    %cst_64 = arith.constant dense<0.000000e+00> : vector<128x16xf32>
    %102 = tpu.matmul %99, %101, %cst_64 {dimension_numbers = #tpu.dot_dimension_numbers<[1], [0], [0], [1], [0, 0, 1, 1], [], []>, precision = #tpu.contract_precision<fp32>} : vector<128x16xf32>, vector<16x16xf32>, vector<128x16xf32> -> vector<128x16xf32>
    %103 = arith.addf %98, %102 : vector<128x16xf32>
    %104 = vector.broadcast %67 : vector<128x1xf32> to vector<128x16xf32>
    %105 = arith.mulf %104, %103 : vector<128x16xf32>
    %106 = arith.addf %87, %105 : vector<128x16xf32>
    %cst_65 = arith.constant 0.000000e+00 : f32
    %107 = vector.broadcast %cst_65 : f32 to vector<128x16xf32>
    %c9 = arith.constant 9 : index
    %c0_66 = arith.constant 0 : index
    %108 = vector.load %arg14[%c9, %c0_66] : memref<176x16xf32, #tpu.memory_space<vmem>>, vector<128x16xf32>
    %c2 = arith.constant 2 : index
    %c0_67 = arith.constant 0 : index
    %c0_68 = arith.constant 0 : index
    %109 = vector.load %arg7[%c2, %c0_67, %c0_68] : memref<9x16x16xf32, #tpu.memory_space<vmem>>, vector<1x16x16xf32>
    %110 = vector.shape_cast %109 : vector<1x16x16xf32> to vector<16x16xf32>
    %cst_69 = arith.constant dense<0.000000e+00> : vector<128x16xf32>
    %111 = tpu.matmul %108, %110, %cst_69 {dimension_numbers = #tpu.dot_dimension_numbers<[1], [0], [0], [1], [0, 0, 1, 1], [], []>, precision = #tpu.contract_precision<fp32>} : vector<128x16xf32>, vector<16x16xf32>, vector<128x16xf32> -> vector<128x16xf32>
    %112 = arith.addf %107, %111 : vector<128x16xf32>
    %c25 = arith.constant 25 : index
    %c0_70 = arith.constant 0 : index
    %113 = vector.load %arg14[%c25, %c0_70] : memref<176x16xf32, #tpu.memory_space<vmem>>, vector<128x16xf32>
    %c5 = arith.constant 5 : index
    %c0_71 = arith.constant 0 : index
    %c0_72 = arith.constant 0 : index
    %114 = vector.load %arg7[%c5, %c0_71, %c0_72] : memref<9x16x16xf32, #tpu.memory_space<vmem>>, vector<1x16x16xf32>
    %115 = vector.shape_cast %114 : vector<1x16x16xf32> to vector<16x16xf32>
    %cst_73 = arith.constant dense<0.000000e+00> : vector<128x16xf32>
    %116 = tpu.matmul %113, %115, %cst_73 {dimension_numbers = #tpu.dot_dimension_numbers<[1], [0], [0], [1], [0, 0, 1, 1], [], []>, precision = #tpu.contract_precision<fp32>} : vector<128x16xf32>, vector<16x16xf32>, vector<128x16xf32> -> vector<128x16xf32>
    %117 = arith.addf %112, %116 : vector<128x16xf32>
    %c41 = arith.constant 41 : index
    %c0_74 = arith.constant 0 : index
    %118 = vector.load %arg14[%c41, %c0_74] : memref<176x16xf32, #tpu.memory_space<vmem>>, vector<128x16xf32>
    %c8_75 = arith.constant 8 : index
    %c0_76 = arith.constant 0 : index
    %c0_77 = arith.constant 0 : index
    %119 = vector.load %arg7[%c8_75, %c0_76, %c0_77] : memref<9x16x16xf32, #tpu.memory_space<vmem>>, vector<1x16x16xf32>
    %120 = vector.shape_cast %119 : vector<1x16x16xf32> to vector<16x16xf32>
    %cst_78 = arith.constant dense<0.000000e+00> : vector<128x16xf32>
    %121 = tpu.matmul %118, %120, %cst_78 {dimension_numbers = #tpu.dot_dimension_numbers<[1], [0], [0], [1], [0, 0, 1, 1], [], []>, precision = #tpu.contract_precision<fp32>} : vector<128x16xf32>, vector<16x16xf32>, vector<128x16xf32> -> vector<128x16xf32>
    %122 = arith.addf %117, %121 : vector<128x16xf32>
    %123 = vector.broadcast %71 : vector<128x1xf32> to vector<128x16xf32>
    %124 = arith.mulf %123, %122 : vector<128x16xf32>
    %125 = arith.addf %106, %124 : vector<128x16xf32>
    %c0_79 = arith.constant 0 : index
    %c0_80 = arith.constant 0 : index
    %126 = vector.load %arg8[%c0_79, %c0_80] : memref<1x16xf32, #tpu.memory_space<vmem>>, vector<1x16xf32>
    %127 = vector.broadcast %126 : vector<1x16xf32> to vector<128x16xf32>
    %128 = arith.addf %125, %127 : vector<128x16xf32>
    %cst_81 = arith.constant 0.000000e+00 : f32
    %129 = vector.broadcast %cst_81 : f32 to vector<128x16xf32>
    %130 = arith.cmpf oge, %128, %129 : vector<128x16xf32>
    %131 = vector.broadcast %1 : f32 to vector<128x16xf32>
    %132 = arith.mulf %131, %128 : vector<128x16xf32>
    %133 = arith.select %130, %128, %132 : vector<128x16xi1>, vector<128x16xf32>
    %134 = vector.shape_cast %133 : vector<128x16xf32> to vector<4x2x16x16xf32>
    %135 = vector.extract_strided_slice %134 {offsets = [0, 0, 0, 0], sizes = [4, 1, 16, 16], strides = [1, 1, 1, 1]} : vector<4x2x16x16xf32> to vector<4x1x16x16xf32>
    %136 = vector.shape_cast %135 : vector<4x1x16x16xf32> to vector<4x16x16xf32>
    %137 = vector.extract_strided_slice %134 {offsets = [0, 1, 0, 0], sizes = [4, 1, 16, 16], strides = [1, 1, 1, 1]} : vector<4x2x16x16xf32> to vector<4x1x16x16xf32>
    %138 = vector.shape_cast %137 : vector<4x1x16x16xf32> to vector<4x16x16xf32>
    %139 = arith.maximumf %136, %138 : vector<4x16x16xf32>
    %c0_82 = arith.constant 0 : index
    %c0_83 = arith.constant 0 : index
    %c0_84 = arith.constant 0 : index
    %140 = vector.load %arg15[%c0_82, %c0_83, %c0_84] : memref<4x16x16xf32, #tpu.memory_space<vmem>>, vector<4x16x16xf32>
    tpu.vector_store %arg15[%c0_82, %c0_83, %c0_84], %139 {strides = array<i32>} : memref<4x16x16xf32, #tpu.memory_space<vmem>>, vector<4x16x16xf32>,
    %c0_85 = arith.constant 0 : index
    %c0_86 = arith.constant 0 : index
    %c0_87 = arith.constant 0 : index
    %141 = tpu.strided_load %arg15[%c0_85, %c0_86, %c0_87] {strides = array<i32: 1, 2, 1>} : memref<4x16x16xf32, #tpu.memory_space<vmem>>, vector<4x8x16xf32>
    %c0_88 = arith.constant 0 : index
    %c1_89 = arith.constant 1 : index
    %c0_90 = arith.constant 0 : index
    %142 = tpu.strided_load %arg15[%c0_88, %c1_89, %c0_90] {strides = array<i32: 1, 2, 1>} : memref<4x16x16xf32, #tpu.memory_space<vmem>>, vector<4x8x16xf32>
    %143 = arith.maximumf %141, %142 : vector<4x8x16xf32>
    %144 = vector.shape_cast %143 : vector<4x8x16xf32> to vector<32x16xf32>
    %145 = vector.shape_cast %5 : vector<128x16xf32> to vector<4x2x16x16xf32>
    %146 = vector.extract_strided_slice %145 {offsets = [0, 0, 0, 0], sizes = [4, 1, 16, 16], strides = [1, 1, 1, 1]} : vector<4x2x16x16xf32> to vector<4x1x16x16xf32>
    %147 = vector.shape_cast %146 : vector<4x1x16x16xf32> to vector<4x16x16xf32>
    %148 = vector.extract_strided_slice %145 {offsets = [0, 1, 0, 0], sizes = [4, 1, 16, 16], strides = [1, 1, 1, 1]} : vector<4x2x16x16xf32> to vector<4x1x16x16xf32>
    %149 = vector.shape_cast %148 : vector<4x1x16x16xf32> to vector<4x16x16xf32>
    %150 = arith.maximumf %147, %149 : vector<4x16x16xf32>
    %c0_91 = arith.constant 0 : index
    %c0_92 = arith.constant 0 : index
    %c0_93 = arith.constant 0 : index
    %151 = vector.load %arg16[%c0_91, %c0_92, %c0_93] : memref<4x16x16xf32, #tpu.memory_space<vmem>>, vector<4x16x16xf32>
    tpu.vector_store %arg16[%c0_91, %c0_92, %c0_93], %150 {strides = array<i32>} : memref<4x16x16xf32, #tpu.memory_space<vmem>>, vector<4x16x16xf32>,
    %c0_94 = arith.constant 0 : index
    %c0_95 = arith.constant 0 : index
    %c0_96 = arith.constant 0 : index
    %152 = tpu.strided_load %arg16[%c0_94, %c0_95, %c0_96] {strides = array<i32: 1, 2, 1>} : memref<4x16x16xf32, #tpu.memory_space<vmem>>, vector<4x8x16xf32>
    %c0_97 = arith.constant 0 : index
    %c1_98 = arith.constant 1 : index
    %c0_99 = arith.constant 0 : index
    %153 = tpu.strided_load %arg16[%c0_97, %c1_98, %c0_99] {strides = array<i32: 1, 2, 1>} : memref<4x16x16xf32, #tpu.memory_space<vmem>>, vector<4x8x16xf32>
    %154 = arith.maximumf %152, %153 : vector<4x8x16xf32>
    %155 = vector.shape_cast %154 : vector<4x8x16xf32> to vector<32x16xf32>
    %c0_100 = arith.constant 0 : index
    %c0_101 = arith.constant 0 : index
    %156 = vector.load %arg9[%c0_100, %c0_101] : memref<16x32xf32, #tpu.memory_space<vmem>>, vector<16x32xf32>
    %cst_102 = arith.constant dense<0.000000e+00> : vector<32x32xf32>
    %157 = tpu.matmul %144, %156, %cst_102 {dimension_numbers = #tpu.dot_dimension_numbers<[1], [0], [0], [1], [0, 0, 1, 1], [], []>, precision = #tpu.contract_precision<fp32>} : vector<32x16xf32>, vector<16x32xf32>, vector<32x32xf32> -> vector<32x32xf32>
    %c0_103 = arith.constant 0 : index
    %c0_104 = arith.constant 0 : index
    %158 = vector.load %arg10[%c0_103, %c0_104] : memref<16x32xf32, #tpu.memory_space<vmem>>, vector<16x32xf32>
    %cst_105 = arith.constant dense<0.000000e+00> : vector<32x32xf32>
    %159 = tpu.matmul %155, %158, %cst_105 {dimension_numbers = #tpu.dot_dimension_numbers<[1], [0], [0], [1], [0, 0, 1, 1], [], []>, precision = #tpu.contract_precision<fp32>} : vector<32x16xf32>, vector<16x32xf32>, vector<32x32xf32> -> vector<32x32xf32>
    %160 = arith.addf %157, %159 : vector<32x32xf32>
    %c0_106 = arith.constant 0 : index
    %c0_107 = arith.constant 0 : index
    %161 = vector.load %arg11[%c0_106, %c0_107] : memref<1x32xf32, #tpu.memory_space<vmem>>, vector<1x32xf32>
    %162 = vector.broadcast %161 : vector<1x32xf32> to vector<32x32xf32>
    %163 = arith.addf %160, %162 : vector<32x32xf32>
    %c0_108 = arith.constant 0 : index
    %c0_109 = arith.constant 0 : index
    %c0_110 = arith.constant 0 : index
    %164 = vector.load %arg13[%c0_108, %c0_109, %c0_110] : memref<1x32x32xf32, #tpu.memory_space<vmem>>, vector<1x32x32xf32>
    %165 = vector.shape_cast %164 : vector<1x32x32xf32> to vector<32x32xf32>
    %166 = vector.shape_cast %163 : vector<32x32xf32> to vector<1x32x32xf32>
    tpu.vector_store %arg13[%c0_108, %c0_109, %c0_110], %166 {strides = array<i32>} : memref<1x32x32xf32, #tpu.memory_space<vmem>>, vector<1x32x32xf32>,
    return
  }
  func.func @transform_0(%arg0: i32, %arg1: i32) -> (i32, i32, i32) {
    %c0_i32 = arith.constant 0 : i32
    %c0_i32_0 = arith.constant 0 : i32
    return %arg0, %arg1, %c0_i32 : i32, i32, i32
  }
  func.func @transform_1(%arg0: i32, %arg1: i32) -> (i32, i32, i32) {
    %c8_i32 = arith.constant 8 : i32
    %0 = arith.muli %arg1, %c8_i32 : i32
    %c1_i32 = arith.constant 1 : i32
    %1 = arith.subi %0, %c1_i32 : i32
    %c0_i32 = arith.constant 0 : i32
    %2 = arith.maxsi %1, %c0_i32 : i32
    %c0_i32_0 = arith.constant 0 : i32
    %c0_i32_1 = arith.constant 0 : i32
    return %arg0, %2, %c0_i32_0 : i32, i32, i32
  }
  func.func @transform_2(%arg0: i32, %arg1: i32) -> (i32, i32, i32) {
    %c8_i32 = arith.constant 8 : i32
    %0 = arith.muli %arg1, %c8_i32 : i32
    %c8_i32_0 = arith.constant 8 : i32
    %1 = arith.addi %0, %c8_i32_0 : i32
    %c15_i32 = arith.constant 15 : i32
    %2 = arith.minsi %1, %c15_i32 : i32
    %c0_i32 = arith.constant 0 : i32
    %c0_i32_1 = arith.constant 0 : i32
    return %arg0, %2, %c0_i32 : i32, i32, i32
  }
  func.func @transform_3(%arg0: i32, %arg1: i32) -> (i32, i32) {
    %c0_i32 = arith.constant 0 : i32
    %c0_i32_0 = arith.constant 0 : i32
    %c0_i32_1 = arith.constant 0 : i32
    return %c0_i32, %c0_i32_0 : i32, i32
  }
  func.func @transform_4(%arg0: i32, %arg1: i32) -> (i32, i32) {
    %c0_i32 = arith.constant 0 : i32
    %c0_i32_0 = arith.constant 0 : i32
    %c0_i32_1 = arith.constant 0 : i32
    return %c0_i32, %c0_i32_0 : i32, i32
  }
  func.func @transform_5(%arg0: i32, %arg1: i32) -> (i32, i32, i32) {
    %c0_i32 = arith.constant 0 : i32
    %c0_i32_0 = arith.constant 0 : i32
    %c0_i32_1 = arith.constant 0 : i32
    %c0_i32_2 = arith.constant 0 : i32
    return %c0_i32, %c0_i32_0, %c0_i32_1 : i32, i32, i32
  }
  func.func @transform_6(%arg0: i32, %arg1: i32) -> (i32, i32) {
    %c0_i32 = arith.constant 0 : i32
    %c0_i32_0 = arith.constant 0 : i32
    %c0_i32_1 = arith.constant 0 : i32
    return %c0_i32, %c0_i32_0 : i32, i32
  }
  func.func @transform_7(%arg0: i32, %arg1: i32) -> (i32, i32) {
    %c0_i32 = arith.constant 0 : i32
    %c0_i32_0 = arith.constant 0 : i32
    %c0_i32_1 = arith.constant 0 : i32
    return %c0_i32, %c0_i32_0 : i32, i32
  }
  func.func @transform_8(%arg0: i32, %arg1: i32) -> (i32, i32) {
    %c0_i32 = arith.constant 0 : i32
    %c0_i32_0 = arith.constant 0 : i32
    %c0_i32_1 = arith.constant 0 : i32
    return %c0_i32, %c0_i32_0 : i32, i32
  }
  func.func @transform_9(%arg0: i32, %arg1: i32) -> (i32, i32) {
    %c0_i32 = arith.constant 0 : i32
    %c0_i32_0 = arith.constant 0 : i32
    %c0_i32_1 = arith.constant 0 : i32
    return %c0_i32, %c0_i32_0 : i32, i32
  }
  func.func @transform_10(%arg0: i32, %arg1: i32) -> i32 {
    %c0_i32 = arith.constant 0 : i32
    %c0_i32_0 = arith.constant 0 : i32
    return %c0_i32 : i32
  }
  func.func @transform_11(%arg0: i32, %arg1: i32) -> (i32, i32, i32) {
    %c0_i32 = arith.constant 0 : i32
    %c0_i32_0 = arith.constant 0 : i32
    return %arg0, %arg1, %c0_i32 : i32, i32, i32
  }
}

</mosaic_0001>

<llo_original>
// kernel: tpu_custom_call.1
$region0: #{tpu_custom_call.1}
  #allocation0 [shape = 'u32[]', space=smem, size = 0x4, offset = 0x4, fixed_abs, tag = 'smem constant byte address 0x4 - core index']
  #allocation1 [shape = 'u32[72,128]{1,0:T(1,128)}', space=vmem, size = 0x9000, scoped, tag = 'internal scratch']
  #allocation2 [shape = 'f32[176,16]{1,0:T(8,128)}', space=vmem, size = 0x16000, scoped, tag = 'scratch operand']
  #allocation3 [shape = 'f32[4,16,16]{2,1,0:T(8,128)}', space=vmem, size = 0x8000, scoped, tag = 'scratch operand']
  #allocation4 [shape = 'f32[4,16,16]{2,1,0:T(8,128)}', space=vmem, size = 0x8000, scoped, tag = 'scratch operand']
  %s0 = inlined_call_operand.vmem [shape: f32[2,256,16], index: 0, kind: input, shape index: {}]
  %s1 = inlined_call_operand.vmem [shape: f32[2,256,16], index: 1, kind: input, shape index: {}]
  %s2 = inlined_call_operand.vmem [shape: f32[2,256,16], index: 2, kind: input, shape index: {}]
  %s3 = inlined_call_operand.vmem [shape: f32[16,16], index: 3, kind: input, shape index: {}]
  %s4 = inlined_call_operand.vmem [shape: f32[1,16], index: 4, kind: input, shape index: {}]
  %s5 = inlined_call_operand.vmem [shape: f32[9,16,16], index: 5, kind: input, shape index: {}]
  %s6 = inlined_call_operand.vmem [shape: f32[1,16], index: 6, kind: input, shape index: {}]
  %s7 = inlined_call_operand.vmem [shape: f32[16,32], index: 7, kind: input, shape index: {}]
  %s8 = inlined_call_operand.vmem [shape: f32[16,32], index: 8, kind: input, shape index: {}]
  %s9 = inlined_call_operand.vmem [shape: f32[1,32], index: 9, kind: input, shape index: {}]
  %s10 = inlined_call_operand.vmem [shape: f32[2], index: 10, kind: input, shape index: {}]
  %s11 = inlined_call_operand.vmem [shape: f32[2,64,32], index: 11, kind: output, shape index: {}]
  %s12 = sld [smem:[#allocation0]]
  $region81: #{tpu_custom_call.1} parent=0
    _
  %s14 = ssub.s32 1, %s12
  %s15 = scalar_select 0, %s14, %s12
  $region1: #{tpu_custom_call.1} parent=0
    #allocation5 [shape = 'u8[512]{0}', space=smem, size = 0x200, scoped, tag = 'input window, operand 10, single buffered']
    #allocation6 [shape = 's32[2]{0}', space=sflag, size = 0x8, scoped, tag = 'scoped memory for tpu_custom_call.1']
    %16 = vsyncpa [#allocation6], 0
    loop: start=0, step=1, limit=6
    $region2: #{tpu_custom_call.1} parent=1 // loop_pre_header
      _
    $region3: #{tpu_custom_call.1} parent=1 // loop_header
      %s18 = sphi 0, %s22
      %p19 = scmp.ge.s32.totalorder %s18, 6
      %s25 = sphi 0, %s37
      %s26 = sphi 0, %s33
      %s27 = sphi 0, %s25
      %s28 = sphi 0, %s26
      %s29 = sphi 0, %s27
      %s30 = sphi 0, %s28
      %s42 = sphi 0, %s44
      %s45 = sphi 0, %s42
      %s46 = sphi 0, %s45
      %s62 = sphi 0, %s46
      %s78 = sphi 0, %s80
      %s81 = sphi 0, %s78
      %s82 = sphi 0, %s81
      %s98 = sphi 0, %s82
      %s114 = sphi 0, %s116
      %s117 = sphi 0, %s114
      %s118 = sphi 0, %s117
      %s134 = sphi 0, %s118
      %s138 = sphi 0, %s138
      %s140 = sphi 0, %s138
      %s141 = sphi 0, %s140
      %s155 = sphi 0, %s141
      %s159 = sphi 0, %s159
      %s161 = sphi 0, %s159
      %s162 = sphi 0, %s161
      %s176 = sphi 0, %s162
      %s180 = sphi 0, %s180
      %s182 = sphi 0, %s180
      %s183 = sphi 0, %s182
      %s197 = sphi 0, %s183
      %s201 = sphi 0, %s201
      %s203 = sphi 0, %s201
      %s204 = sphi 0, %s203
      %s218 = sphi 0, %s204
      %s222 = sphi 0, %s222
      %s224 = sphi 0, %s222
      %s225 = sphi 0, %s224
      %s239 = sphi 0, %s225
      %s243 = sphi 0, %s243
      %s245 = sphi 0, %s243
      %s246 = sphi 0, %s245
      %s260 = sphi 0, %s246
      %s264 = sphi 0, %s264
      %s266 = sphi 0, %s264
      %s267 = sphi 0, %s266
      %s281 = sphi 0, %s267
      %s285 = sphi 0, %s285
      %s287 = sphi 0, %s285
      %s288 = sphi 0, %s287
      %s302 = sphi 0, %s288
      %s310 = sphi 0, %s312
      %s313 = sphi 0, %s310
      %s314 = sphi 0, %s313
      %s330 = sphi 0, %s314
    $region4: #{tpu_custom_call.1} parent=1 // loop_header_branch
      %21 = sbr.rel (%p19) target = $region8
    $region5: #{tpu_custom_call.1} parent=1 // loop_body
      %s23 = ssub.s32 %s18, 1
      %s24 = ssub.s32 %s18, 2
      %s31 = sadd.s32 1, %s26
      %p32 = scmp.ge.s32.totalorder %s31, 2
      %s33 = scalar_select %p32, 0, %s31
      %s34 = sadd.s32 1, %s25
      %s35 = scalar_select %p32, %s34, %s25
      %p36 = scmp.ge.s32.totalorder %s35, 2
      %s37 = scalar_select %p36, 0, %s35
      %s38 = ssub.s32 %s25, %s37
      %s39 = ssub.s32 %s26, %s33
      %s40 = sor.u32 %s38, %s39
      %p41 = scmp.eq.s32.totalorder %s40, 0
      %s43 = sadd.s32 %s42, 1
      %s44 = scalar_select %p41, %s42, %s43
      %p47 = pneg %p41
      %p48 = scmp.eq.s32.totalorder %s18, 3
      %p49 = por %p47, %p48
      %p50 = scmp.ne.s32.totalorder %s42, %s45
      %p51 = scmp.eq.s32.totalorder %s18, 0
      %p52 = por %p50, %p51
      %p53 = scmp.ne.s32.totalorder %s42, %s45
      %p54 = scmp.eq.s32.totalorder %s23, 3
      %p55 = por %p53, %p54
      %p56 = scmp.ne.s32.totalorder %s45, %s46
      %p57 = scmp.eq.s32.totalorder %s23, 0
      %p58 = por %p56, %p57
      %p59 = scmp.ne.s32.totalorder %s45, %s46
      %p60 = scmp.eq.s32.totalorder %s24, 3
      %p61 = por %p59, %p60
      %p63 = scmp.ne.s32.totalorder %s46, %s62
      %p64 = scmp.eq.s32.totalorder %s24, 0
      %p65 = por %p63, %p64
      %s66 = smul.u32 %s26, 8
      %s67 = ssub.s32 %s66, 1
      %p68 = scmp.gt.s32.totalorder %s67, 0
      %s69 = scalar_select %p68, %s67, 0
      %s70 = smul.u32 %s33, 8
      %s71 = ssub.s32 %s70, 1
      %p72 = scmp.gt.s32.totalorder %s71, 0
      %s73 = scalar_select %p72, %s71, 0
      %s74 = ssub.s32 %s25, %s37
      %s75 = ssub.s32 %s69, %s73
      %s76 = sor.u32 %s74, %s75
      %p77 = scmp.eq.s32.totalorder %s76, 0
      %s79 = sadd.s32 %s78, 1
      %s80 = scalar_select %p77, %s78, %s79
      %p83 = pneg %p77
      %p84 = scmp.eq.s32.totalorder %s18, 3
      %p85 = por %p83, %p84
      %p86 = scmp.ne.s32.totalorder %s78, %s81
      %p87 = scmp.eq.s32.totalorder %s18, 0
      %p88 = por %p86, %p87
      %p89 = scmp.ne.s32.totalorder %s78, %s81
      %p90 = scmp.eq.s32.totalorder %s23, 3
      %p91 = por %p89, %p90
      %p92 = scmp.ne.s32.totalorder %s81, %s82
      %p93 = scmp.eq.s32.totalorder %s23, 0
      %p94 = por %p92, %p93
      %p95 = scmp.ne.s32.totalorder %s81, %s82
      %p96 = scmp.eq.s32.totalorder %s24, 3
      %p97 = por %p95, %p96
      %p99 = scmp.ne.s32.totalorder %s82, %s98
      %p100 = scmp.eq.s32.totalorder %s24, 0
      %p101 = por %p99, %p100
      %s102 = smul.u32 %s26, 8
      %s103 = sadd.s32 %s102, 8
      %p104 = scmp.lt.s32.totalorder %s103, 15
      %s105 = scalar_select %p104, %s103, 15
      %s106 = smul.u32 %s33, 8
      %s107 = sadd.s32 %s106, 8
      %p108 = scmp.lt.s32.totalorder %s107, 15
      %s109 = scalar_select %p108, %s107, 15
      %s110 = ssub.s32 %s25, %s37
      %s111 = ssub.s32 %s105, %s109
      %s112 = sor.u32 %s110, %s111
      %p113 = scmp.eq.s32.totalorder %s112, 0
      %s115 = sadd.s32 %s114, 1
      %s116 = scalar_select %p113, %s114, %s115
      %p119 = pneg %p113
      %p120 = scmp.eq.s32.totalorder %s18, 3
      %p121 = por %p119, %p120
      %p122 = scmp.ne.s32.totalorder %s114, %s117
      %p123 = scmp.eq.s32.totalorder %s18, 0
      %p124 = por %p122, %p123
      %p125 = scmp.ne.s32.totalorder %s114, %s117
      %p126 = scmp.eq.s32.totalorder %s23, 3
      %p127 = por %p125, %p126
      %p128 = scmp.ne.s32.totalorder %s117, %s118
      %p129 = scmp.eq.s32.totalorder %s23, 0
      %p130 = por %p128, %p129
      %p131 = scmp.ne.s32.totalorder %s117, %s118
      %p132 = scmp.eq.s32.totalorder %s24, 3
      %p133 = por %p131, %p132
      %p135 = scmp.ne.s32.totalorder %s118, %s134
      %p136 = scmp.eq.s32.totalorder %s24, 0
      %p137 = por %p135, %p136
      %s139 = sadd.s32 %s138, 1
      %p142 = scmp.eq.s32.totalorder %s18, 3
      %p143 = scmp.ne.s32.totalorder %s138, %s140
      %p144 = scmp.eq.s32.totalorder %s18, 0
      %p145 = por %p143, %p144
      %p146 = scmp.ne.s32.totalorder %s138, %s140
      %p147 = scmp.eq.s32.totalorder %s23, 3
      %p148 = por %p146, %p147
      %p149 = scmp.ne.s32.totalorder %s140, %s141
      %p150 = scmp.eq.s32.totalorder %s23, 0
      %p151 = por %p149, %p150
      %p152 = scmp.ne.s32.totalorder %s140, %s141
      %p153 = scmp.eq.s32.totalorder %s24, 3
      %p154 = por %p152, %p153
      %p156 = scmp.ne.s32.totalorder %s141, %s155
      %p157 = scmp.eq.s32.totalorder %s24, 0
      %p158 = por %p156, %p157
      %s160 = sadd.s32 %s159, 1
      %p163 = scmp.eq.s32.totalorder %s18, 3
      %p164 = scmp.ne.s32.totalorder %s159, %s161
      %p165 = scmp.eq.s32.totalorder %s18, 0
      %p166 = por %p164, %p165
      %p167 = scmp.ne.s32.totalorder %s159, %s161
      %p168 = scmp.eq.s32.totalorder %s23, 3
      %p169 = por %p167, %p168
      %p170 = scmp.ne.s32.totalorder %s161, %s162
      %p171 = scmp.eq.s32.totalorder %s23, 0
      %p172 = por %p170, %p171
      %p173 = scmp.ne.s32.totalorder %s161, %s162
      %p174 = scmp.eq.s32.totalorder %s24, 3
      %p175 = por %p173, %p174
      %p177 = scmp.ne.s32.totalorder %s162, %s176
      %p178 = scmp.eq.s32.totalorder %s24, 0
      %p179 = por %p177, %p178
      %s181 = sadd.s32 %s180, 1
      %p184 = scmp.eq.s32.totalorder %s18, 3
      %p185 = scmp.ne.s32.totalorder %s180, %s182
      %p186 = scmp.eq.s32.totalorder %s18, 0
      %p187 = por %p185, %p186
      %p188 = scmp.ne.s32.totalorder %s180, %s182
      %p189 = scmp.eq.s32.totalorder %s23, 3
      %p190 = por %p188, %p189
      %p191 = scmp.ne.s32.totalorder %s182, %s183
      %p192 = scmp.eq.s32.totalorder %s23, 0
      %p193 = por %p191, %p192
      %p194 = scmp.ne.s32.totalorder %s182, %s183
      %p195 = scmp.eq.s32.totalorder %s24, 3
      %p196 = por %p194, %p195
      %p198 = scmp.ne.s32.totalorder %s183, %s197
      %p199 = scmp.eq.s32.totalorder %s24, 0
      %p200 = por %p198, %p199
      %s202 = sadd.s32 %s201, 1
      %p205 = scmp.eq.s32.totalorder %s18, 3
      %p206 = scmp.ne.s32.totalorder %s201, %s203
      %p207 = scmp.eq.s32.totalorder %s18, 0
      %p208 = por %p206, %p207
      %p209 = scmp.ne.s32.totalorder %s201, %s203
      %p210 = scmp.eq.s32.totalorder %s23, 3
      %p211 = por %p209, %p210
      %p212 = scmp.ne.s32.totalorder %s203, %s204
      %p213 = scmp.eq.s32.totalorder %s23, 0
      %p214 = por %p212, %p213
      %p215 = scmp.ne.s32.totalorder %s203, %s204
      %p216 = scmp.eq.s32.totalorder %s24, 3
      %p217 = por %p215, %p216
      %p219 = scmp.ne.s32.totalorder %s204, %s218
      %p220 = scmp.eq.s32.totalorder %s24, 0
      %p221 = por %p219, %p220
      %s223 = sadd.s32 %s222, 1
      %p226 = scmp.eq.s32.totalorder %s18, 3
      %p227 = scmp.ne.s32.totalorder %s222, %s224
      %p228 = scmp.eq.s32.totalorder %s18, 0
      %p229 = por %p227, %p228
      %p230 = scmp.ne.s32.totalorder %s222, %s224
      %p231 = scmp.eq.s32.totalorder %s23, 3
      %p232 = por %p230, %p231
      %p233 = scmp.ne.s32.totalorder %s224, %s225
      %p234 = scmp.eq.s32.totalorder %s23, 0
      %p235 = por %p233, %p234
      %p236 = scmp.ne.s32.totalorder %s224, %s225
      %p237 = scmp.eq.s32.totalorder %s24, 3
      %p238 = por %p236, %p237
      %p240 = scmp.ne.s32.totalorder %s225, %s239
      %p241 = scmp.eq.s32.totalorder %s24, 0
      %p242 = por %p240, %p241
      %s244 = sadd.s32 %s243, 1
      %p247 = scmp.eq.s32.totalorder %s18, 3
      %p248 = scmp.ne.s32.totalorder %s243, %s245
      %p249 = scmp.eq.s32.totalorder %s18, 0
      %p250 = por %p248, %p249
      %p251 = scmp.ne.s32.totalorder %s243, %s245
      %p252 = scmp.eq.s32.totalorder %s23, 3
      %p253 = por %p251, %p252
      %p254 = scmp.ne.s32.totalorder %s245, %s246
      %p255 = scmp.eq.s32.totalorder %s23, 0
      %p256 = por %p254, %p255
      %p257 = scmp.ne.s32.totalorder %s245, %s246
      %p258 = scmp.eq.s32.totalorder %s24, 3
      %p259 = por %p257, %p258
      %p261 = scmp.ne.s32.totalorder %s246, %s260
      %p262 = scmp.eq.s32.totalorder %s24, 0
      %p263 = por %p261, %p262
      %s265 = sadd.s32 %s264, 1
      %p268 = scmp.eq.s32.totalorder %s18, 3
      %p269 = scmp.ne.s32.totalorder %s264, %s266
      %p270 = scmp.eq.s32.totalorder %s18, 0
      %p271 = por %p269, %p270
      %p272 = scmp.ne.s32.totalorder %s264, %s266
      %p273 = scmp.eq.s32.totalorder %s23, 3
      %p274 = por %p272, %p273
      %p275 = scmp.ne.s32.totalorder %s266, %s267
      %p276 = scmp.eq.s32.totalorder %s23, 0
      %p277 = por %p275, %p276
      %p278 = scmp.ne.s32.totalorder %s266, %s267
      %p279 = scmp.eq.s32.totalorder %s24, 3
      %p280 = por %p278, %p279
      %p282 = scmp.ne.s32.totalorder %s267, %s281
      %p283 = scmp.eq.s32.totalorder %s24, 0
      %p284 = por %p282, %p283
      %s286 = sadd.s32 %s285, 1
      %p289 = scmp.eq.s32.totalorder %s18, 3
      %p290 = scmp.ne.s32.totalorder %s285, %s287
      %p291 = scmp.eq.s32.totalorder %s18, 0
      %p292 = por %p290, %p291
      %p293 = scmp.ne.s32.totalorder %s285, %s287
      %p294 = scmp.eq.s32.totalorder %s23, 3
      %p295 = por %p293, %p294
      %p296 = scmp.ne.s32.totalorder %s287, %s288
      %p297 = scmp.eq.s32.totalorder %s23, 0
      %p298 = por %p296, %p297
      %p299 = scmp.ne.s32.totalorder %s287, %s288
      %p300 = scmp.eq.s32.totalorder %s24, 3
      %p301 = por %p299, %p300
      %p303 = scmp.ne.s32.totalorder %s288, %s302
      %p304 = scmp.eq.s32.totalorder %s24, 0
      %p305 = por %p303, %p304
      %s306 = ssub.s32 %s25, %s37
      %s307 = ssub.s32 %s26, %s33
      %s308 = sor.u32 %s306, %s307
      %p309 = scmp.eq.s32.totalorder %s308, 0
      %s311 = sadd.s32 %s310, 1
      %s312 = scalar_select %p309, %s310, %s311
      %p315 = pneg %p309
      %p316 = scmp.eq.s32.totalorder %s18, 3
      %p317 = por %p315, %p316
      %p318 = scmp.ne.s32.totalorder %s310, %s313
      %p319 = scmp.eq.s32.totalorder %s18, 0
      %p320 = por %p318, %p319
      %p321 = scmp.ne.s32.totalorder %s310, %s313
      %p322 = scmp.eq.s32.totalorder %s23, 3
      %p323 = por %p321, %p322
      %p324 = scmp.ne.s32.totalorder %s313, %s314
      %p325 = scmp.eq.s32.totalorder %s23, 0
      %p326 = por %p324, %p325
      %p327 = scmp.ne.s32.totalorder %s313, %s314
      %p328 = scmp.eq.s32.totalorder %s24, 3
      %p329 = por %p327, %p328
      %p331 = scmp.ne.s32.totalorder %s314, %s330
      %p332 = scmp.eq.s32.totalorder %s24, 0
      %p333 = por %p331, %p332
      %p334 = scmp.le.s32.totalorder 1, %s18
      %p335 = scmp.lt.s32.totalorder %s18, 5
      %p336 = pnand %p334, %p335
      %p337 = pneg %p336
      // Predicated region
      $region9: #{tpu_custom_call.1} parent=5 // pred_check
        _
      $region10: #{tpu_custom_call.1} parent=5 // pred_check_branch
        %339 = sbr.rel (%p336) target = $region12
      $region11: #{tpu_custom_call.1} parent=5 // pred_region
        %s340 = ssub.s32 %s18, 1
        // Predicated region
        $region13: #{tpu_custom_call.1} parent=11 // pred_check
          %p341 = pneg %p151
        $region14: #{tpu_custom_call.1} parent=11 // pred_check_branch
          %343 = sbr.rel (%p341) target = $region16
        $region15: #{tpu_custom_call.1} parent=11 // pred_region
          _
        $region16: #{tpu_custom_call.1} parent=11 // pred_fallthru
          _
        // Predicated region
        $region17: #{tpu_custom_call.1} parent=11 // pred_check
          %p344 = pneg %p172
        $region18: #{tpu_custom_call.1} parent=11 // pred_check_branch
          %346 = sbr.rel (%p344) target = $region20
        $region19: #{tpu_custom_call.1} parent=11 // pred_region
          _
        $region20: #{tpu_custom_call.1} parent=11 // pred_fallthru
          _
        // Predicated region
        $region21: #{tpu_custom_call.1} parent=11 // pred_check
          %p347 = pneg %p193
        $region22: #{tpu_custom_call.1} parent=11 // pred_check_branch
          %349 = sbr.rel (%p347) target = $region24
        $region23: #{tpu_custom_call.1} parent=11 // pred_region
          _
        $region24: #{tpu_custom_call.1} parent=11 // pred_fallthru
          _
        // Predicated region
        $region25: #{tpu_custom_call.1} parent=11 // pred_check
          %p350 = pneg %p214
        $region26: #{tpu_custom_call.1} parent=11 // pred_check_branch
          %352 = sbr.rel (%p350) target = $region28
        $region27: #{tpu_custom_call.1} parent=11 // pred_region
          _
        $region28: #{tpu_custom_call.1} parent=11 // pred_fallthru
          _
        // Predicated region
        $region29: #{tpu_custom_call.1} parent=11 // pred_check
          %p353 = pneg %p235
        $region30: #{tpu_custom_call.1} parent=11 // pred_check_branch
          %355 = sbr.rel (%p353) target = $region32
        $region31: #{tpu_custom_call.1} parent=11 // pred_region
          _
        $region32: #{tpu_custom_call.1} parent=11 // pred_fallthru
          _
        // Predicated region
        $region33: #{tpu_custom_call.1} parent=11 // pred_check
          %p356 = pneg %p256
        $region34: #{tpu_custom_call.1} parent=11 // pred_check_branch
          %358 = sbr.rel (%p356) target = $region36
        $region35: #{tpu_custom_call.1} parent=11 // pred_region
          _
        $region36: #{tpu_custom_call.1} parent=11 // pred_fallthru
          _
        // Predicated region
        $region37: #{tpu_custom_call.1} parent=11 // pred_check
          %p359 = pneg %p277
        $region38: #{tpu_custom_call.1} parent=11 // pred_check_branch
          %361 = sbr.rel (%p359) target = $region40
        $region39: #{tpu_custom_call.1} parent=11 // pred_region
          _
        $region40: #{tpu_custom_call.1} parent=11 // pred_fallthru
          _
        // Predicated region
        $region41: #{tpu_custom_call.1} parent=11 // pred_check
          %p362 = pneg %p298
        $region42: #{tpu_custom_call.1} parent=11 // pred_check_branch
          %364 = sbr.rel (%p362) target = $region44
        $region43: #{tpu_custom_call.1} parent=11 // pred_region
          %366 = vsyncadd [#allocation6], 0
          %s368 = sshll.u32 %s10, 4
          %s369 = int_to_ptr.vmem [resolvable:$true] %s368
          %371 = dma.vmem_to_smem %s369, 16, [#allocation5], [#allocation6]
        $region44: #{tpu_custom_call.1} parent=11 // pred_fallthru
          _
      $region12: #{tpu_custom_call.1} parent=5 // pred_fallthru
        _
      %p372 = scmp.lt.s32.totalorder %s18, 4
      // Predicated region
      $region45: #{tpu_custom_call.1} parent=5 // pred_check
        %p373 = pneg %p372
      $region46: #{tpu_custom_call.1} parent=5 // pred_check_branch
        %375 = sbr.rel (%p373) target = $region48
      $region47: #{tpu_custom_call.1} parent=5 // pred_region
        // Predicated region
        $region49: #{tpu_custom_call.1} parent=47 // pred_check
          %p376 = pneg %p52
        $region50: #{tpu_custom_call.1} parent=47 // pred_check_branch
          %378 = sbr.rel (%p376) target = $region52
        $region51: #{tpu_custom_call.1} parent=47 // pred_region
          %s379 = smul.u32 16, %s26
          %p380 = scmp.lt.s32.totalorder %s25, 1
          %s381 = scalar_select %p380, %s25, 1
          %p382 = scmp.lt.s32.totalorder %s379, 31
          %s383 = scalar_select %p382, %s379, 31
          %s384 = smul.addr %s381, 32
          %s385 = sadd.s32 %s383, %s384
          %s386 = smul.addr %s385, 8
          %s387 = scalar_lea.vmem %s0, %s386
          %s388 = smul.u32 16, %s26
        $region52: #{tpu_custom_call.1} parent=47 // pred_fallthru
          _
        // Predicated region
        $region53: #{tpu_custom_call.1} parent=47 // pred_check
          %p389 = pneg %p88
        $region54: #{tpu_custom_call.1} parent=47 // pred_check_branch
          %391 = sbr.rel (%p389) target = $region56
        $region55: #{tpu_custom_call.1} parent=47 // pred_region
          %s392 = smul.u32 %s26, 8
          %s393 = ssub.s32 %s392, 1
          %p394 = scmp.gt.s32.totalorder %s393, 0
          %s395 = scalar_select %p394, %s393, 0
          %s396 = smul.u32 2, %s395
          %p397 = scmp.lt.s32.totalorder %s25, 1
          %s398 = scalar_select %p397, %s25, 1
          %p399 = scmp.lt.s32.totalorder %s396, 31
          %s400 = scalar_select %p399, %s396, 31
          %s401 = smul.addr %s398, 32
          %s402 = sadd.s32 %s400, %s401
          %s403 = smul.addr %s402, 8
          %s404 = scalar_lea.vmem %s1, %s403
          %s405 = smul.u32 %s26, 8
          %s406 = ssub.s32 %s405, 1
          %p407 = scmp.gt.s32.totalorder %s406, 0
          %s408 = scalar_select %p407, %s406, 0
          %s409 = smul.u32 2, %s408
        $region56: #{tpu_custom_call.1} parent=47 // pred_fallthru
          _
        // Predicated region
        $region57: #{tpu_custom_call.1} parent=47 // pred_check
          %p410 = pneg %p124
        $region58: #{tpu_custom_call.1} parent=47 // pred_check_branch
          %412 = sbr.rel (%p410) target = $region60
        $region59: #{tpu_custom_call.1} parent=47 // pred_region
          %s413 = smul.u32 %s26, 8
          %s414 = sadd.s32 %s413, 8
          %p415 = scmp.lt.s32.totalorder %s414, 15
          %s416 = scalar_select %p415, %s414, 15
          %s417 = smul.u32 2, %s416
          %p418 = scmp.lt.s32.totalorder %s25, 1
          %s419 = scalar_select %p418, %s25, 1
          %p420 = scmp.lt.s32.totalorder %s417, 31
          %s421 = scalar_select %p420, %s417, 31
          %s422 = smul.addr %s419, 32
          %s423 = sadd.s32 %s421, %s422
          %s424 = smul.addr %s423, 8
          %s425 = scalar_lea.vmem %s2, %s424
          %s426 = smul.u32 %s26, 8
          %s427 = sadd.s32 %s426, 8
          %p428 = scmp.lt.s32.totalorder %s427, 15
          %s429 = scalar_select %p428, %s427, 15
          %s430 = smul.u32 2, %s429
        $region60: #{tpu_custom_call.1} parent=47 // pred_fallthru
          _
      $region48: #{tpu_custom_call.1} parent=5 // pred_fallthru
        _
      %p431 = scmp.le.s32.totalorder 1, %s18
      %p432 = scmp.lt.s32.totalorder %s18, 5
      %p433 = pnand %p431, %p432
      %p434 = pneg %p433
      // Predicated region
      $region61: #{tpu_custom_call.1} parent=5 // pred_check
        _
      $region62: #{tpu_custom_call.1} parent=5 // pred_check_branch
        %436 = sbr.rel (%p433) target = $region64
      $region63: #{tpu_custom_call.1} parent=5 // pred_region
        %s437 = ssub.s32 %s18, 1
        // Predicated region
        $region65: #{tpu_custom_call.1} parent=63 // pred_check
          %p438 = pneg %p298
        $region66: #{tpu_custom_call.1} parent=63 // pred_check_branch
          %440 = sbr.rel (%p438) target = $region68
        $region67: #{tpu_custom_call.1} parent=63 // pred_region
          %442 = dma.done [#allocation6], 16
        $region68: #{tpu_custom_call.1} parent=63 // pred_fallthru
          _
        %443 = sfence
        %s444 = smul.u32 16, %s28
        %p445 = scmp.lt.s32.totalorder %s27, 1
        %s446 = scalar_select %p445, %s27, 1
        %p447 = scmp.lt.s32.totalorder %s444, 31
        %s448 = scalar_select %p447, %s444, 31
        %s449 = smul.addr %s446, 32
        %s450 = sadd.s32 %s448, %s449
        %s451 = smul.addr %s450, 8
        %s452 = scalar_lea.vmem %s0, %s451
        %p453 = pneg %p58
        %p454 = pneg %p55
        %s455 = smul.u32 %s28, 8
        %s456 = ssub.s32 %s455, 1
        %p457 = scmp.gt.s32.totalorder %s456, 0
        %s458 = scalar_select %p457, %s456, 0
        %s459 = smul.u32 2, %s458
        %p460 = scmp.lt.s32.totalorder %s27, 1
        %s461 = scalar_select %p460, %s27, 1
        %p462 = scmp.lt.s32.totalorder %s459, 31
        %s463 = scalar_select %p462, %s459, 31
        %s464 = smul.addr %s461, 32
        %s465 = sadd.s32 %s463, %s464
        %s466 = smul.addr %s465, 8
        %s467 = scalar_lea.vmem %s1, %s466
        %p468 = pneg %p94
        %p469 = pneg %p91
        %s470 = smul.u32 %s28, 8
        %s471 = sadd.s32 %s470, 8
        %p472 = scmp.lt.s32.totalorder %s471, 15
        %s473 = scalar_select %p472, %s471, 15
        %s474 = smul.u32 2, %s473
        %p475 = scmp.lt.s32.totalorder %s27, 1
        %s476 = scalar_select %p475, %s27, 1
        %p477 = scmp.lt.s32.totalorder %s474, 31
        %s478 = scalar_select %p477, %s474, 31
        %s479 = smul.addr %s476, 32
        %s480 = sadd.s32 %s478, %s479
        %s481 = smul.addr %s480, 8
        %s482 = scalar_lea.vmem %s2, %s481
        %p483 = pneg %p130
        %p484 = pneg %p127
        %p485 = pneg %p151
        %p486 = pneg %p148
        %p487 = pneg %p172
        %p488 = pneg %p169
        %p489 = pneg %p193
        %p490 = pneg %p190
        %p491 = pneg %p214
        %p492 = pneg %p211
        %p493 = pneg %p235
        %p494 = pneg %p232
        %p495 = pneg %p256
        %p496 = pneg %p253
        %p497 = pneg %p277
        %p498 = pneg %p274
        %p499 = pneg %p298
        %p500 = pneg %p295
        %p501 = pneg %p326
        %p502 = pneg %p323
        %s503 = smul.u32 4, %s28
        %p504 = scmp.lt.s32.totalorder %s27, 1
        %s505 = scalar_select %p504, %s27, 1
        %p506 = scmp.lt.s32.totalorder %s503, 7
        %s507 = scalar_select %p506, %s503, 7
        %s508 = smul.addr %s505, 8
        %s509 = sadd.s32 %s507, %s508
        %s510 = smul.addr %s509, 8
        %s511 = scalar_lea.vmem %s11, %s510
        %s512 = smul.u32 16, %s28
        %p513 = scmp.lt.s32.totalorder %s27, 1
        %s514 = scalar_select %p513, %s27, 1
        %p515 = scmp.lt.s32.totalorder %s512, 31
        %s516 = scalar_select %p515, %s512, 31
        %s517 = smul.addr %s514, 32
        %s518 = sadd.s32 %s516, %s517
        %s519 = smul.addr %s518, 8
        %s520 = scalar_lea.vmem %s0, %s519
        %s521 = smul.u32 16, %s28
        %s522 = smul.u32 %s28, 8
        %s523 = ssub.s32 %s522, 1
        %p524 = scmp.gt.s32.totalorder %s523, 0
        %s525 = scalar_select %p524, %s523, 0
        %s526 = smul.u32 2, %s525
        %p527 = scmp.lt.s32.totalorder %s27, 1
        %s528 = scalar_select %p527, %s27, 1
        %p529 = scmp.lt.s32.totalorder %s526, 31
        %s530 = scalar_select %p529, %s526, 31
        %s531 = smul.addr %s528, 32
        %s532 = sadd.s32 %s530, %s531
        %s533 = smul.addr %s532, 8
        %s534 = scalar_lea.vmem %s1, %s533
        %s535 = smul.u32 %s28, 8
        %s536 = ssub.s32 %s535, 1
        %p537 = scmp.gt.s32.totalorder %s536, 0
        %s538 = scalar_select %p537, %s536, 0
        %s539 = smul.u32 2, %s538
        %s540 = smul.u32 %s28, 8
        %s541 = sadd.s32 %s540, 8
        %p542 = scmp.lt.s32.totalorder %s541, 15
        %s543 = scalar_select %p542, %s541, 15
        %s544 = smul.u32 2, %s543
        %p545 = scmp.lt.s32.totalorder %s27, 1
        %s546 = scalar_select %p545, %s27, 1
        %p547 = scmp.lt.s32.totalorder %s544, 31
        %s548 = scalar_select %p547, %s544, 31
        %s549 = smul.addr %s546, 32
        %s550 = sadd.s32 %s548, %s549
        %s551 = smul.addr %s550, 8
        %s552 = scalar_lea.vmem %s2, %s551
        %s553 = smul.u32 %s28, 8
        %s554 = sadd.s32 %s553, 8
        %p555 = scmp.lt.s32.totalorder %s554, 15
        %s556 = scalar_select %p555, %s554, 15
        %s557 = smul.u32 2, %s556
        %s558 = smul.u32 4, %s28
        %p559 = scmp.lt.s32.totalorder %s27, 1
        %s560 = scalar_select %p559, %s27, 1
        %p561 = scmp.lt.s32.totalorder %s558, 7
        %s562 = scalar_select %p561, %s558, 7
        %s563 = smul.addr %s560, 8
        %s564 = sadd.s32 %s562, %s563
        %s565 = smul.addr %s564, 8
        %s566 = scalar_lea.vmem %s11, %s565
        %s567 = smul.u32 4, %s28
        %s568 = sld [smem:[#allocation5]]
        %s569 = sld [smem:[#allocation5 + $0x1]]
        %v570 = vld [vmem:[%s3] sm:$0xff]
        %v571 = vld [vmem:[%s3 + $0x8] sm:$0xff]
        %v572 = vld [vmem:[%s4] sm:$0x1]
        %v573 = vld [vmem:[%s520] sm:$0xff]
        %v574 = vld [vmem:[%s520 + $0x8] sm:$0xff]
        %v575 = vld [vmem:[%s520 + $0x10] sm:$0xff]
        %v576 = vld [vmem:[%s520 + $0x18] sm:$0xff]
        %v577 = vld [vmem:[%s520 + $0x20] sm:$0xff]
        %v578 = vld [vmem:[%s520 + $0x28] sm:$0xff]
        %v579 = vld [vmem:[%s520 + $0x30] sm:$0xff]
        %v580 = vld [vmem:[%s520 + $0x38] sm:$0xff]
        %v581 = vld [vmem:[%s520 + $0x40] sm:$0xff]
        %v582 = vld [vmem:[%s520 + $0x48] sm:$0xff]
        %v583 = vld [vmem:[%s520 + $0x50] sm:$0xff]
        %v584 = vld [vmem:[%s520 + $0x58] sm:$0xff]
        %v585 = vld [vmem:[%s520 + $0x60] sm:$0xff]
        %v586 = vld [vmem:[%s520 + $0x68] sm:$0xff]
        %v587 = vld [vmem:[%s520 + $0x70] sm:$0xff]
        %v588 = vld [vmem:[%s520 + $0x78] sm:$0xff]
        %v590 = vperm.slane %v572, 0
        %vm592 = vcmask 130048
        %v594 = vsel %vm592, %v573, 0
        %v597 = vsel %vm592, %v574, 0
        %v600 = vsel %vm592, %v575, 0
        %v603 = vsel %vm592, %v576, 0
        %v606 = vsel %vm592, %v577, 0
        %v609 = vsel %vm592, %v578, 0
        %v612 = vsel %vm592, %v579, 0
        %v615 = vsel %vm592, %v580, 0
        %v618 = vsel %vm592, %v581, 0
        %v621 = vsel %vm592, %v582, 0
        %v624 = vsel %vm592, %v583, 0
        %v627 = vsel %vm592, %v584, 0
        %v630 = vsel %vm592, %v585, 0
        %v633 = vsel %vm592, %v586, 0
        %v636 = vsel %vm592, %v587, 0
        %v639 = vsel %vm592, %v588, 0
        %641 = vmatpush.msra.mxu0 0.0
        %642 = vmatpush.msra.mxu0 0.0
        %643 = vmatpush.msra.mxu0 0.0
        %644 = vmatpush.msra.mxu0 0.0
        %645 = vmatpush.msra.mxu0 0.0
        %646 = vmatpush.msra.mxu0 0.0
        %647 = vmatpush.msra.mxu0 0.0
        %648 = vmatpush.msra.mxu0 0.0
        %649 = vmatpush.msra.mxu0 0.0
        %650 = vmatpush.msra.mxu0 0.0
        %651 = vmatpush.msra.mxu0 0.0
        %652 = vmatpush.msra.mxu0 0.0
        %653 = vmatpush.msra.mxu0 0.0
        %654 = vmatpush.msra.mxu0 0.0
        %v655 = vand.u32 %v571, 4294901760
        %656 = vmatpush.msra.mxu0 %v655
        %v657 = vand.u32 %v570, 4294901760
        %658 = vmatpush.msra.mxu0 %v657
        %v659 = vand.u32 %v594, 4294901760
        %v660 = vsub.f32 %v594, %v659
        %v661 = vand.u32 %v660, 4294901760
        %v662 = vsub.f32 %v660, %v661
        %v663 = vand.u32 %v662, 4294901760
        %664 = vmatmul.f32.gmra.mxu0 %v663
        %v665 = vpop.f32.mrf.mxu0
        %v666 = vadd.f32 %v590, %v665
        %v667 = vand.u32 %v597, 4294901760
        %v668 = vsub.f32 %v597, %v667
        %v669 = vand.u32 %v668, 4294901760
        %v670 = vsub.f32 %v668, %v669
        %v671 = vand.u32 %v670, 4294901760
        %672 = vmatmul.f32.gmra.mxu0 %v671
        %v673 = vpop.f32.mrf.mxu0
        %v674 = vadd.f32 %v590, %v673
        %v675 = vand.u32 %v600, 4294901760
        %v676 = vsub.f32 %v600, %v675
        %v677 = vand.u32 %v676, 4294901760
        %v678 = vsub.f32 %v676, %v677
        %v679 = vand.u32 %v678, 4294901760
        %680 = vmatmul.f32.gmra.mxu0 %v679
        %v681 = vpop.f32.mrf.mxu0
        %v682 = vadd.f32 %v590, %v681
        %v683 = vand.u32 %v603, 4294901760
        %v684 = vsub.f32 %v603, %v683
        %v685 = vand.u32 %v684, 4294901760
        %v686 = vsub.f32 %v684, %v685
        %v687 = vand.u32 %v686, 4294901760
        %688 = vmatmul.f32.gmra.mxu0 %v687
        %v689 = vpop.f32.mrf.mxu0
        %v690 = vadd.f32 %v590, %v689
        %v691 = vand.u32 %v606, 4294901760
        %v692 = vsub.f32 %v606, %v691
        %v693 = vand.u32 %v692, 4294901760
        %v694 = vsub.f32 %v692, %v693
        %v695 = vand.u32 %v694, 4294901760
        %696 = vmatmul.f32.gmra.mxu0 %v695
        %v697 = vpop.f32.mrf.mxu0
        %v698 = vadd.f32 %v590, %v697
        %v699 = vand.u32 %v609, 4294901760
        %v700 = vsub.f32 %v609, %v699
        %v701 = vand.u32 %v700, 4294901760
        %v702 = vsub.f32 %v700, %v701
        %v703 = vand.u32 %v702, 4294901760
        %704 = vmatmul.f32.gmra.mxu0 %v703
        %v705 = vpop.f32.mrf.mxu0
        %v706 = vadd.f32 %v590, %v705
        %v707 = vand.u32 %v612, 4294901760
        %v708 = vsub.f32 %v612, %v707
        %v709 = vand.u32 %v708, 4294901760
        %v710 = vsub.f32 %v708, %v709
        %v711 = vand.u32 %v710, 4294901760
        %712 = vmatmul.f32.gmra.mxu0 %v711
        %v713 = vpop.f32.mrf.mxu0
        %v714 = vadd.f32 %v590, %v713
        %v715 = vand.u32 %v615, 4294901760
        %v716 = vsub.f32 %v615, %v715
        %v717 = vand.u32 %v716, 4294901760
        %v718 = vsub.f32 %v716, %v717
        %v719 = vand.u32 %v718, 4294901760
        %720 = vmatmul.f32.gmra.mxu0 %v719
        %v721 = vpop.f32.mrf.mxu0
        %v722 = vadd.f32 %v590, %v721
        %v723 = vand.u32 %v618, 4294901760
        %v724 = vsub.f32 %v618, %v723
        %v725 = vand.u32 %v724, 4294901760
        %v726 = vsub.f32 %v724, %v725
        %v727 = vand.u32 %v726, 4294901760
        %728 = vmatmul.f32.gmra.mxu0 %v727
        %v729 = vpop.f32.mrf.mxu0
        %v730 = vadd.f32 %v590, %v729
        %v731 = vand.u32 %v621, 4294901760
        %v732 = vsub.f32 %v621, %v731
        %v733 = vand.u32 %v732, 4294901760
        %v734 = vsub.f32 %v732, %v733
        %v735 = vand.u32 %v734, 4294901760
        %736 = vmatmul.f32.gmra.mxu0 %v735
        %v737 = vpop.f32.mrf.mxu0
        %v738 = vadd.f32 %v590, %v737
        %v739 = vand.u32 %v624, 4294901760
        %v740 = vsub.f32 %v624, %v739
        %v741 = vand.u32 %v740, 4294901760
        %v742 = vsub.f32 %v740, %v741
        %v743 = vand.u32 %v742, 4294901760
        %744 = vmatmul.f32.gmra.mxu0 %v743
        %v745 = vpop.f32.mrf.mxu0
        %v746 = vadd.f32 %v590, %v745
        %v747 = vand.u32 %v627, 4294901760
        %v748 = vsub.f32 %v627, %v747
        %v749 = vand.u32 %v748, 4294901760
        %v750 = vsub.f32 %v748, %v749
        %v751 = vand.u32 %v750, 4294901760
        %752 = vmatmul.f32.gmra.mxu0 %v751
        %v753 = vpop.f32.mrf.mxu0
        %v754 = vadd.f32 %v590, %v753
        %v755 = vand.u32 %v630, 4294901760
        %v756 = vsub.f32 %v630, %v755
        %v757 = vand.u32 %v756, 4294901760
        %v758 = vsub.f32 %v756, %v757
        %v759 = vand.u32 %v758, 4294901760
        %760 = vmatmul.f32.gmra.mxu0 %v759
        %v761 = vpop.f32.mrf.mxu0
        %v762 = vadd.f32 %v590, %v761
        %v763 = vand.u32 %v633, 4294901760
        %v764 = vsub.f32 %v633, %v763
        %v765 = vand.u32 %v764, 4294901760
        %v766 = vsub.f32 %v764, %v765
        %v767 = vand.u32 %v766, 4294901760
        %768 = vmatmul.f32.gmra.mxu0 %v767
        %v769 = vpop.f32.mrf.mxu0
        %v770 = vadd.f32 %v590, %v769
        %v771 = vand.u32 %v636, 4294901760
        %v772 = vsub.f32 %v636, %v771
        %v773 = vand.u32 %v772, 4294901760
        %v774 = vsub.f32 %v772, %v773
        %v775 = vand.u32 %v774, 4294901760
        %776 = vmatmul.f32.gmra.mxu0 %v775
        %v777 = vpop.f32.mrf.mxu0
        %v778 = vadd.f32 %v590, %v777
        %v779 = vand.u32 %v639, 4294901760
        %v780 = vsub.f32 %v639, %v779
        %v781 = vand.u32 %v780, 4294901760
        %v782 = vsub.f32 %v780, %v781
        %v783 = vand.u32 %v782, 4294901760
        %784 = vmatmul.f32.gmra.mxu0 %v783
        %v785 = vpop.f32.mrf.mxu0
        %v786 = vadd.f32 %v590, %v785
        %787 = vdwg.mxu0
        %788 = vmatpush.msra.mxu0 0.0
        %789 = vmatpush.msra.mxu0 0.0
        %790 = vmatpush.msra.mxu0 0.0
        %791 = vmatpush.msra.mxu0 0.0
        %792 = vmatpush.msra.mxu0 0.0
        %793 = vmatpush.msra.mxu0 0.0
        %794 = vmatpush.msra.mxu0 0.0
        %795 = vmatpush.msra.mxu0 0.0
        %796 = vmatpush.msra.mxu0 0.0
        %797 = vmatpush.msra.mxu0 0.0
        %798 = vmatpush.msra.mxu0 0.0
        %799 = vmatpush.msra.mxu0 0.0
        %800 = vmatpush.msra.mxu0 0.0
        %801 = vmatpush.msra.mxu0 0.0
        %v802 = vand.u32 %v571, 4294901760
        %v803 = vsub.f32 %v571, %v802
        %v804 = vand.u32 %v803, 4294901760
        %v805 = vsub.f32 %v803, %v804
        %v806 = vand.u32 %v805, 4294901760
        %807 = vmatpush.msra.mxu0 %v806
        %v808 = vand.u32 %v570, 4294901760
        %v809 = vsub.f32 %v570, %v808
        %v810 = vand.u32 %v809, 4294901760
        %v811 = vsub.f32 %v809, %v810
        %v812 = vand.u32 %v811, 4294901760
        %813 = vmatpush.msra.mxu0 %v812
        %v814 = vand.u32 %v594, 4294901760
        %815 = vmatmul.f32.gmra.mxu0 %v814
        %v816 = vpop.f32.mrf.mxu0
        %v817 = vadd.f32 %v666, %v816
        %v818 = vand.u32 %v597, 4294901760
        %819 = vmatmul.f32.gmra.mxu0 %v818
        %v820 = vpop.f32.mrf.mxu0
        %v821 = vadd.f32 %v674, %v820
        %v822 = vand.u32 %v600, 4294901760
        %823 = vmatmul.f32.gmra.mxu0 %v822
        %v824 = vpop.f32.mrf.mxu0
        %v825 = vadd.f32 %v682, %v824
        %v826 = vand.u32 %v603, 4294901760
        %827 = vmatmul.f32.gmra.mxu0 %v826
        %v828 = vpop.f32.mrf.mxu0
        %v829 = vadd.f32 %v690, %v828
        %v830 = vand.u32 %v606, 4294901760
        %831 = vmatmul.f32.gmra.mxu0 %v830
        %v832 = vpop.f32.mrf.mxu0
        %v833 = vadd.f32 %v698, %v832
        %v834 = vand.u32 %v609, 4294901760
        %835 = vmatmul.f32.gmra.mxu0 %v834
        %v836 = vpop.f32.mrf.mxu0
        %v837 = vadd.f32 %v706, %v836
        %v838 = vand.u32 %v612, 4294901760
        %839 = vmatmul.f32.gmra.mxu0 %v838
        %v840 = vpop.f32.mrf.mxu0
        %v841 = vadd.f32 %v714, %v840
        %v842 = vand.u32 %v615, 4294901760
        %843 = vmatmul.f32.gmra.mxu0 %v842
        %v844 = vpop.f32.mrf.mxu0
        %v845 = vadd.f32 %v722, %v844
        %v846 = vand.u32 %v618, 4294901760
        %847 = vmatmul.f32.gmra.mxu0 %v846
        %v848 = vpop.f32.mrf.mxu0
        %v849 = vadd.f32 %v730, %v848
        %v850 = vand.u32 %v621, 4294901760
        %851 = vmatmul.f32.gmra.mxu0 %v850
        %v852 = vpop.f32.mrf.mxu0
        %v853 = vadd.f32 %v738, %v852
        %v854 = vand.u32 %v624, 4294901760
        %855 = vmatmul.f32.gmra.mxu0 %v854
        %v856 = vpop.f32.mrf.mxu0
        %v857 = vadd.f32 %v746, %v856
        %v858 = vand.u32 %v627, 4294901760
        %859 = vmatmul.f32.gmra.mxu0 %v858
        %v860 = vpop.f32.mrf.mxu0
        %v861 = vadd.f32 %v754, %v860
        %v862 = vand.u32 %v630, 4294901760
        %863 = vmatmul.f32.gmra.mxu0 %v862
        %v864 = vpop.f32.mrf.mxu0
        %v865 = vadd.f32 %v762, %v864
        %v866 = vand.u32 %v633, 4294901760
        %867 = vmatmul.f32.gmra.mxu0 %v866
        %v868 = vpop.f32.mrf.mxu0
        %v869 = vadd.f32 %v770, %v868
        %v870 = vand.u32 %v636, 4294901760
        %871 = vmatmul.f32.gmra.mxu0 %v870
        %v872 = vpop.f32.mrf.mxu0
        %v873 = vadd.f32 %v778, %v872
        %v874 = vand.u32 %v639, 4294901760
        %875 = vmatmul.f32.gmra.mxu0 %v874
        %v876 = vpop.f32.mrf.mxu0
        %v877 = vadd.f32 %v786, %v876
        %878 = vdwg.mxu0
        %879 = vmatpush.msra.mxu0 0.0
        %880 = vmatpush.msra.mxu0 0.0
        %881 = vmatpush.msra.mxu0 0.0
        %882 = vmatpush.msra.mxu0 0.0
        %883 = vmatpush.msra.mxu0 0.0
        %884 = vmatpush.msra.mxu0 0.0
        %885 = vmatpush.msra.mxu0 0.0
        %886 = vmatpush.msra.mxu0 0.0
        %887 = vmatpush.msra.mxu0 0.0
        %888 = vmatpush.msra.mxu0 0.0
        %889 = vmatpush.msra.mxu0 0.0
        %890 = vmatpush.msra.mxu0 0.0
        %891 = vmatpush.msra.mxu0 0.0
        %892 = vmatpush.msra.mxu0 0.0
        %v893 = vand.u32 %v571, 4294901760
        %v894 = vsub.f32 %v571, %v893
        %895 = vmatpush.msra.mxu0 %v894
        %v896 = vand.u32 %v570, 4294901760
        %v897 = vsub.f32 %v570, %v896
        %898 = vmatpush.msra.mxu0 %v897
        %v899 = vand.u32 %v594, 4294901760
        %v900 = vsub.f32 %v594, %v899
        %901 = vmatmul.f32.gmra.mxu0 %v900
        %v902 = vpop.f32.mrf.mxu0
        %v903 = vadd.f32 %v817, %v902
        %v904 = vand.u32 %v597, 4294901760
        %v905 = vsub.f32 %v597, %v904
        %906 = vmatmul.f32.gmra.mxu0 %v905
        %v907 = vpop.f32.mrf.mxu0
        %v908 = vadd.f32 %v821, %v907
        %v909 = vand.u32 %v600, 4294901760
        %v910 = vsub.f32 %v600, %v909
        %911 = vmatmul.f32.gmra.mxu0 %v910
        %v912 = vpop.f32.mrf.mxu0
        %v913 = vadd.f32 %v825, %v912
        %v914 = vand.u32 %v603, 4294901760
        %v915 = vsub.f32 %v603, %v914
        %916 = vmatmul.f32.gmra.mxu0 %v915
        %v917 = vpop.f32.mrf.mxu0
        %v918 = vadd.f32 %v829, %v917
        %v919 = vand.u32 %v606, 4294901760
        %v920 = vsub.f32 %v606, %v919
        %921 = vmatmul.f32.gmra.mxu0 %v920
        %v922 = vpop.f32.mrf.mxu0
        %v923 = vadd.f32 %v833, %v922
        %v924 = vand.u32 %v609, 4294901760
        %v925 = vsub.f32 %v609, %v924
        %926 = vmatmul.f32.gmra.mxu0 %v925
        %v927 = vpop.f32.mrf.mxu0
        %v928 = vadd.f32 %v837, %v927
        %v929 = vand.u32 %v612, 4294901760
        %v930 = vsub.f32 %v612, %v929
        %931 = vmatmul.f32.gmra.mxu0 %v930
        %v932 = vpop.f32.mrf.mxu0
        %v933 = vadd.f32 %v841, %v932
        %v934 = vand.u32 %v615, 4294901760
        %v935 = vsub.f32 %v615, %v934
        %936 = vmatmul.f32.gmra.mxu0 %v935
        %v937 = vpop.f32.mrf.mxu0
        %v938 = vadd.f32 %v845, %v937
        %v939 = vand.u32 %v618, 4294901760
        %v940 = vsub.f32 %v618, %v939
        %941 = vmatmul.f32.gmra.mxu0 %v940
        %v942 = vpop.f32.mrf.mxu0
        %v943 = vadd.f32 %v849, %v942
        %v944 = vand.u32 %v621, 4294901760
        %v945 = vsub.f32 %v621, %v944
        %946 = vmatmul.f32.gmra.mxu0 %v945
        %v947 = vpop.f32.mrf.mxu0
        %v948 = vadd.f32 %v853, %v947
        %v949 = vand.u32 %v624, 4294901760
        %v950 = vsub.f32 %v624, %v949
        %951 = vmatmul.f32.gmra.mxu0 %v950
        %v952 = vpop.f32.mrf.mxu0
        %v953 = vadd.f32 %v857, %v952
        %v954 = vand.u32 %v627, 4294901760
        %v955 = vsub.f32 %v627, %v954
        %956 = vmatmul.f32.gmra.mxu0 %v955
        %v957 = vpop.f32.mrf.mxu0
        %v958 = vadd.f32 %v861, %v957
        %v959 = vand.u32 %v630, 4294901760
        %v960 = vsub.f32 %v630, %v959
        %961 = vmatmul.f32.gmra.mxu0 %v960
        %v962 = vpop.f32.mrf.mxu0
        %v963 = vadd.f32 %v865, %v962
        %v964 = vand.u32 %v633, 4294901760
        %v965 = vsub.f32 %v633, %v964
        %966 = vmatmul.f32.gmra.mxu0 %v965
        %v967 = vpop.f32.mrf.mxu0
        %v968 = vadd.f32 %v869, %v967
        %v969 = vand.u32 %v636, 4294901760
        %v970 = vsub.f32 %v636, %v969
        %971 = vmatmul.f32.gmra.mxu0 %v970
        %v972 = vpop.f32.mrf.mxu0
        %v973 = vadd.f32 %v873, %v972
        %v974 = vand.u32 %v639, 4294901760
        %v975 = vsub.f32 %v639, %v974
        %976 = vmatmul.f32.gmra.mxu0 %v975
        %v977 = vpop.f32.mrf.mxu0
        %v978 = vadd.f32 %v877, %v977
        %979 = vdwg.mxu0
        %980 = vmatpush.msra.mxu0 0.0
        %981 = vmatpush.msra.mxu0 0.0
        %982 = vmatpush.msra.mxu0 0.0
        %983 = vmatpush.msra.mxu0 0.0
        %984 = vmatpush.msra.mxu0 0.0
        %985 = vmatpush.msra.mxu0 0.0
        %986 = vmatpush.msra.mxu0 0.0
        %987 = vmatpush.msra.mxu0 0.0
        %988 = vmatpush.msra.mxu0 0.0
        %989 = vmatpush.msra.mxu0 0.0
        %990 = vmatpush.msra.mxu0 0.0
        %991 = vmatpush.msra.mxu0 0.0
        %992 = vmatpush.msra.mxu0 0.0
        %993 = vmatpush.msra.mxu0 0.0
        %v994 = vand.u32 %v571, 4294901760
        %995 = vmatpush.msra.mxu0 %v994
        %v996 = vand.u32 %v570, 4294901760
        %997 = vmatpush.msra.mxu0 %v996
        %v998 = vand.u32 %v594, 4294901760
        %v999 = vsub.f32 %v594, %v998
        %v1000 = vand.u32 %v999, 4294901760
        %1001 = vmatmul.f32.gmra.mxu0 %v1000
        %v1002 = vpop.f32.mrf.mxu0
        %v1003 = vadd.f32 %v903, %v1002
        %v1004 = vand.u32 %v597, 4294901760
        %v1005 = vsub.f32 %v597, %v1004
        %v1006 = vand.u32 %v1005, 4294901760
        %1007 = vmatmul.f32.gmra.mxu0 %v1006
        %v1008 = vpop.f32.mrf.mxu0
        %v1009 = vadd.f32 %v908, %v1008
        %v1010 = vand.u32 %v600, 4294901760
        %v1011 = vsub.f32 %v600, %v1010
        %v1012 = vand.u32 %v1011, 4294901760
        %1013 = vmatmul.f32.gmra.mxu0 %v1012
        %v1014 = vpop.f32.mrf.mxu0
        %v1015 = vadd.f32 %v913, %v1014
        %v1016 = vand.u32 %v603, 4294901760
        %v1017 = vsub.f32 %v603, %v1016
        %v1018 = vand.u32 %v1017, 4294901760
        %1019 = vmatmul.f32.gmra.mxu0 %v1018
        %v1020 = vpop.f32.mrf.mxu0
        %v1021 = vadd.f32 %v918, %v1020
        %v1022 = vand.u32 %v606, 4294901760
        %v1023 = vsub.f32 %v606, %v1022
        %v1024 = vand.u32 %v1023, 4294901760
        %1025 = vmatmul.f32.gmra.mxu0 %v1024
        %v1026 = vpop.f32.mrf.mxu0
        %v1027 = vadd.f32 %v923, %v1026
        %v1028 = vand.u32 %v609, 4294901760
        %v1029 = vsub.f32 %v609, %v1028
        %v1030 = vand.u32 %v1029, 4294901760
        %1031 = vmatmul.f32.gmra.mxu0 %v1030
        %v1032 = vpop.f32.mrf.mxu0
        %v1033 = vadd.f32 %v928, %v1032
        %v1034 = vand.u32 %v612, 4294901760
        %v1035 = vsub.f32 %v612, %v1034
        %v1036 = vand.u32 %v1035, 4294901760
        %1037 = vmatmul.f32.gmra.mxu0 %v1036
        %v1038 = vpop.f32.mrf.mxu0
        %v1039 = vadd.f32 %v933, %v1038
        %v1040 = vand.u32 %v615, 4294901760
        %v1041 = vsub.f32 %v615, %v1040
        %v1042 = vand.u32 %v1041, 4294901760
        %1043 = vmatmul.f32.gmra.mxu0 %v1042
        %v1044 = vpop.f32.mrf.mxu0
        %v1045 = vadd.f32 %v938, %v1044
        %v1046 = vand.u32 %v618, 4294901760
        %v1047 = vsub.f32 %v618, %v1046
        %v1048 = vand.u32 %v1047, 4294901760
        %1049 = vmatmul.f32.gmra.mxu0 %v1048
        %v1050 = vpop.f32.mrf.mxu0
        %v1051 = vadd.f32 %v943, %v1050
        %v1052 = vand.u32 %v621, 4294901760
        %v1053 = vsub.f32 %v621, %v1052
        %v1054 = vand.u32 %v1053, 4294901760
        %1055 = vmatmul.f32.gmra.mxu0 %v1054
        %v1056 = vpop.f32.mrf.mxu0
        %v1057 = vadd.f32 %v948, %v1056
        %v1058 = vand.u32 %v624, 4294901760
        %v1059 = vsub.f32 %v624, %v1058
        %v1060 = vand.u32 %v1059, 4294901760
        %1061 = vmatmul.f32.gmra.mxu0 %v1060
        %v1062 = vpop.f32.mrf.mxu0
        %v1063 = vadd.f32 %v953, %v1062
        %v1064 = vand.u32 %v627, 4294901760
        %v1065 = vsub.f32 %v627, %v1064
        %v1066 = vand.u32 %v1065, 4294901760
        %1067 = vmatmul.f32.gmra.mxu0 %v1066
        %v1068 = vpop.f32.mrf.mxu0
        %v1069 = vadd.f32 %v958, %v1068
        %v1070 = vand.u32 %v630, 4294901760
        %v1071 = vsub.f32 %v630, %v1070
        %v1072 = vand.u32 %v1071, 4294901760
        %1073 = vmatmul.f32.gmra.mxu0 %v1072
        %v1074 = vpop.f32.mrf.mxu0
        %v1075 = vadd.f32 %v963, %v1074
        %v1076 = vand.u32 %v633, 4294901760
        %v1077 = vsub.f32 %v633, %v1076
        %v1078 = vand.u32 %v1077, 4294901760
        %1079 = vmatmul.f32.gmra.mxu0 %v1078
        %v1080 = vpop.f32.mrf.mxu0
        %v1081 = vadd.f32 %v968, %v1080
        %v1082 = vand.u32 %v636, 4294901760
        %v1083 = vsub.f32 %v636, %v1082
        %v1084 = vand.u32 %v1083, 4294901760
        %1085 = vmatmul.f32.gmra.mxu0 %v1084
        %v1086 = vpop.f32.mrf.mxu0
        %v1087 = vadd.f32 %v973, %v1086
        %v1088 = vand.u32 %v639, 4294901760
        %v1089 = vsub.f32 %v639, %v1088
        %v1090 = vand.u32 %v1089, 4294901760
        %1091 = vmatmul.f32.gmra.mxu0 %v1090
        %v1092 = vpop.f32.mrf.mxu0
        %v1093 = vadd.f32 %v978, %v1092
        %1094 = vdwg.mxu0
        %1095 = vmatpush.msra.mxu0 0.0
        %1096 = vmatpush.msra.mxu0 0.0
        %1097 = vmatpush.msra.mxu0 0.0
        %1098 = vmatpush.msra.mxu0 0.0
        %1099 = vmatpush.msra.mxu0 0.0
        %1100 = vmatpush.msra.mxu0 0.0
        %1101 = vmatpush.msra.mxu0 0.0
        %1102 = vmatpush.msra.mxu0 0.0
        %1103 = vmatpush.msra.mxu0 0.0
        %1104 = vmatpush.msra.mxu0 0.0
        %1105 = vmatpush.msra.mxu0 0.0
        %1106 = vmatpush.msra.mxu0 0.0
        %1107 = vmatpush.msra.mxu0 0.0
        %1108 = vmatpush.msra.mxu0 0.0
        %v1109 = vand.u32 %v571, 4294901760
        %v1110 = vsub.f32 %v571, %v1109
        %v1111 = vand.u32 %v1110, 4294901760
        %1112 = vmatpush.msra.mxu0 %v1111
        %v1113 = vand.u32 %v570, 4294901760
        %v1114 = vsub.f32 %v570, %v1113
        %v1115 = vand.u32 %v1114, 4294901760
        %1116 = vmatpush.msra.mxu0 %v1115
        %v1117 = vand.u32 %v594, 4294901760
        %1118 = vmatmul.f32.gmra.mxu0 %v1117
        %v1119 = vpop.f32.mrf.mxu0
        %v1120 = vadd.f32 %v1003, %v1119
        %v1121 = vand.u32 %v597, 4294901760
        %1122 = vmatmul.f32.gmra.mxu0 %v1121
        %v1123 = vpop.f32.mrf.mxu0
        %v1124 = vadd.f32 %v1009, %v1123
        %v1125 = vand.u32 %v600, 4294901760
        %1126 = vmatmul.f32.gmra.mxu0 %v1125
        %v1127 = vpop.f32.mrf.mxu0
        %v1128 = vadd.f32 %v1015, %v1127
        %v1129 = vand.u32 %v603, 4294901760
        %1130 = vmatmul.f32.gmra.mxu0 %v1129
        %v1131 = vpop.f32.mrf.mxu0
        %v1132 = vadd.f32 %v1021, %v1131
        %v1133 = vand.u32 %v606, 4294901760
        %1134 = vmatmul.f32.gmra.mxu0 %v1133
        %v1135 = vpop.f32.mrf.mxu0
        %v1136 = vadd.f32 %v1027, %v1135
        %v1137 = vand.u32 %v609, 4294901760
        %1138 = vmatmul.f32.gmra.mxu0 %v1137
        %v1139 = vpop.f32.mrf.mxu0
        %v1140 = vadd.f32 %v1033, %v1139
        %v1141 = vand.u32 %v612, 4294901760
        %1142 = vmatmul.f32.gmra.mxu0 %v1141
        %v1143 = vpop.f32.mrf.mxu0
        %v1144 = vadd.f32 %v1039, %v1143
        %v1145 = vand.u32 %v615, 4294901760
        %1146 = vmatmul.f32.gmra.mxu0 %v1145
        %v1147 = vpop.f32.mrf.mxu0
        %v1148 = vadd.f32 %v1045, %v1147
        %v1149 = vand.u32 %v618, 4294901760
        %1150 = vmatmul.f32.gmra.mxu0 %v1149
        %v1151 = vpop.f32.mrf.mxu0
        %v1152 = vadd.f32 %v1051, %v1151
        %v1153 = vand.u32 %v621, 4294901760
        %1154 = vmatmul.f32.gmra.mxu0 %v1153
        %v1155 = vpop.f32.mrf.mxu0
        %v1156 = vadd.f32 %v1057, %v1155
        %v1157 = vand.u32 %v624, 4294901760
        %1158 = vmatmul.f32.gmra.mxu0 %v1157
        %v1159 = vpop.f32.mrf.mxu0
        %v1160 = vadd.f32 %v1063, %v1159
        %v1161 = vand.u32 %v627, 4294901760
        %1162 = vmatmul.f32.gmra.mxu0 %v1161
        %v1163 = vpop.f32.mrf.mxu0
        %v1164 = vadd.f32 %v1069, %v1163
        %v1165 = vand.u32 %v630, 4294901760
        %1166 = vmatmul.f32.gmra.mxu0 %v1165
        %v1167 = vpop.f32.mrf.mxu0
        %v1168 = vadd.f32 %v1075, %v1167
        %v1169 = vand.u32 %v633, 4294901760
        %1170 = vmatmul.f32.gmra.mxu0 %v1169
        %v1171 = vpop.f32.mrf.mxu0
        %v1172 = vadd.f32 %v1081, %v1171
        %v1173 = vand.u32 %v636, 4294901760
        %1174 = vmatmul.f32.gmra.mxu0 %v1173
        %v1175 = vpop.f32.mrf.mxu0
        %v1176 = vadd.f32 %v1087, %v1175
        %v1177 = vand.u32 %v639, 4294901760
        %1178 = vmatmul.f32.gmra.mxu0 %v1177
        %v1179 = vpop.f32.mrf.mxu0
        %v1180 = vadd.f32 %v1093, %v1179
        %1181 = vdwg.mxu0
        %1182 = vmatpush.msra.mxu0 0.0
        %1183 = vmatpush.msra.mxu0 0.0
        %1184 = vmatpush.msra.mxu0 0.0
        %1185 = vmatpush.msra.mxu0 0.0
        %1186 = vmatpush.msra.mxu0 0.0
        %1187 = vmatpush.msra.mxu0 0.0
        %1188 = vmatpush.msra.mxu0 0.0
        %1189 = vmatpush.msra.mxu0 0.0
        %1190 = vmatpush.msra.mxu0 0.0
        %1191 = vmatpush.msra.mxu0 0.0
        %1192 = vmatpush.msra.mxu0 0.0
        %1193 = vmatpush.msra.mxu0 0.0
        %1194 = vmatpush.msra.mxu0 0.0
        %1195 = vmatpush.msra.mxu0 0.0
        %v1196 = vand.u32 %v571, 4294901760
        %1197 = vmatpush.msra.mxu0 %v1196
        %v1198 = vand.u32 %v570, 4294901760
        %1199 = vmatpush.msra.mxu0 %v1198
        %v1200 = vand.u32 %v594, 4294901760
        %1201 = vmatmul.f32.gmra.mxu0 %v1200
        %v1202 = vpop.f32.mrf.mxu0
        %v1203 = vadd.f32 %v1120, %v1202
        %v1204 = vand.u32 %v597, 4294901760
        %1205 = vmatmul.f32.gmra.mxu0 %v1204
        %v1206 = vpop.f32.mrf.mxu0
        %v1207 = vadd.f32 %v1124, %v1206
        %v1208 = vand.u32 %v600, 4294901760
        %1209 = vmatmul.f32.gmra.mxu0 %v1208
        %v1210 = vpop.f32.mrf.mxu0
        %v1211 = vadd.f32 %v1128, %v1210
        %v1212 = vand.u32 %v603, 4294901760
        %1213 = vmatmul.f32.gmra.mxu0 %v1212
        %v1214 = vpop.f32.mrf.mxu0
        %v1215 = vadd.f32 %v1132, %v1214
        %v1216 = vand.u32 %v606, 4294901760
        %1217 = vmatmul.f32.gmra.mxu0 %v1216
        %v1218 = vpop.f32.mrf.mxu0
        %v1219 = vadd.f32 %v1136, %v1218
        %v1220 = vand.u32 %v609, 4294901760
        %1221 = vmatmul.f32.gmra.mxu0 %v1220
        %v1222 = vpop.f32.mrf.mxu0
        %v1223 = vadd.f32 %v1140, %v1222
        %v1224 = vand.u32 %v612, 4294901760
        %1225 = vmatmul.f32.gmra.mxu0 %v1224
        %v1226 = vpop.f32.mrf.mxu0
        %v1227 = vadd.f32 %v1144, %v1226
        %v1228 = vand.u32 %v615, 4294901760
        %1229 = vmatmul.f32.gmra.mxu0 %v1228
        %v1230 = vpop.f32.mrf.mxu0
        %v1231 = vadd.f32 %v1148, %v1230
        %v1232 = vand.u32 %v618, 4294901760
        %1233 = vmatmul.f32.gmra.mxu0 %v1232
        %v1234 = vpop.f32.mrf.mxu0
        %v1235 = vadd.f32 %v1152, %v1234
        %v1236 = vand.u32 %v621, 4294901760
        %1237 = vmatmul.f32.gmra.mxu0 %v1236
        %v1238 = vpop.f32.mrf.mxu0
        %v1239 = vadd.f32 %v1156, %v1238
        %v1240 = vand.u32 %v624, 4294901760
        %1241 = vmatmul.f32.gmra.mxu0 %v1240
        %v1242 = vpop.f32.mrf.mxu0
        %v1243 = vadd.f32 %v1160, %v1242
        %v1244 = vand.u32 %v627, 4294901760
        %1245 = vmatmul.f32.gmra.mxu0 %v1244
        %v1246 = vpop.f32.mrf.mxu0
        %v1247 = vadd.f32 %v1164, %v1246
        %v1248 = vand.u32 %v630, 4294901760
        %1249 = vmatmul.f32.gmra.mxu0 %v1248
        %v1250 = vpop.f32.mrf.mxu0
        %v1251 = vadd.f32 %v1168, %v1250
        %v1252 = vand.u32 %v633, 4294901760
        %1253 = vmatmul.f32.gmra.mxu0 %v1252
        %v1254 = vpop.f32.mrf.mxu0
        %v1255 = vadd.f32 %v1172, %v1254
        %v1256 = vand.u32 %v636, 4294901760
        %1257 = vmatmul.f32.gmra.mxu0 %v1256
        %v1258 = vpop.f32.mrf.mxu0
        %v1259 = vadd.f32 %v1176, %v1258
        %v1260 = vand.u32 %v639, 4294901760
        %1261 = vmatmul.f32.gmra.mxu0 %v1260
        %v1262 = vpop.f32.mrf.mxu0
        %v1263 = vadd.f32 %v1180, %v1262
        %1264 = vdwg.mxu0
        %vm1265 = vcmp.ge.f32.partialorder %v1203, 0.0
        %vm1266 = vcmp.ge.f32.partialorder %v1207, 0.0
        %vm1267 = vcmp.ge.f32.partialorder %v1211, 0.0
        %vm1268 = vcmp.ge.f32.partialorder %v1215, 0.0
        %vm1269 = vcmp.ge.f32.partialorder %v1219, 0.0
        %vm1270 = vcmp.ge.f32.partialorder %v1223, 0.0
        %vm1271 = vcmp.ge.f32.partialorder %v1227, 0.0
        %vm1272 = vcmp.ge.f32.partialorder %v1231, 0.0
        %vm1273 = vcmp.ge.f32.partialorder %v1235, 0.0
        %vm1274 = vcmp.ge.f32.partialorder %v1239, 0.0
        %vm1275 = vcmp.ge.f32.partialorder %v1243, 0.0
        %vm1276 = vcmp.ge.f32.partialorder %v1247, 0.0
        %vm1277 = vcmp.ge.f32.partialorder %v1251, 0.0
        %vm1278 = vcmp.ge.f32.partialorder %v1255, 0.0
        %vm1279 = vcmp.ge.f32.partialorder %v1259, 0.0
        %vm1280 = vcmp.ge.f32.partialorder %v1263, 0.0
        %v1281 = vstv %s568
        %v1282 = vmul.f32 %v1281, %v1203
        %v1283 = vmul.f32 %v1281, %v1207
        %v1284 = vmul.f32 %v1281, %v1211
        %v1285 = vmul.f32 %v1281, %v1215
        %v1286 = vmul.f32 %v1281, %v1219
        %v1287 = vmul.f32 %v1281, %v1223
        %v1288 = vmul.f32 %v1281, %v1227
        %v1289 = vmul.f32 %v1281, %v1231
        %v1290 = vmul.f32 %v1281, %v1235
        %v1291 = vmul.f32 %v1281, %v1239
        %v1292 = vmul.f32 %v1281, %v1243
        %v1293 = vmul.f32 %v1281, %v1247
        %v1294 = vmul.f32 %v1281, %v1251
        %v1295 = vmul.f32 %v1281, %v1255
        %v1296 = vmul.f32 %v1281, %v1259
        %v1297 = vmul.f32 %v1281, %v1263
        %v1298 = vsel %vm1265, %v1203, %v1282
        %v1299 = vsel %vm1266, %v1207, %v1283
        %v1300 = vsel %vm1267, %v1211, %v1284
        %v1301 = vsel %vm1268, %v1215, %v1285
        %v1302 = vsel %vm1269, %v1219, %v1286
        %v1303 = vsel %vm1270, %v1223, %v1287
        %v1304 = vsel %vm1271, %v1227, %v1288
        %v1305 = vsel %vm1272, %v1231, %v1289
        %v1306 = vsel %vm1273, %v1235, %v1290
        %v1307 = vsel %vm1274, %v1239, %v1291
        %v1308 = vsel %vm1275, %v1243, %v1292
        %v1309 = vsel %vm1276, %v1247, %v1293
        %v1310 = vsel %vm1277, %v1251, %v1294
        %v1311 = vsel %vm1278, %v1255, %v1295
        %v1312 = vsel %vm1279, %v1259, %v1296
        %v1313 = vsel %vm1280, %v1263, %v1297
        %v1314 = vld [vmem:[%s534] sm:$0xff]
        %v1315 = vld [vmem:[%s534 + $0x8] sm:$0xff]
        %v1317 = vsel %vm592, %v1314, 0
        %v1320 = vsel %vm592, %v1315, 0
        %1322 = vmatpush.msra.mxu0 0.0
        %1323 = vmatpush.msra.mxu0 0.0
        %1324 = vmatpush.msra.mxu0 0.0
        %1325 = vmatpush.msra.mxu0 0.0
        %1326 = vmatpush.msra.mxu0 0.0
        %1327 = vmatpush.msra.mxu0 0.0
        %1328 = vmatpush.msra.mxu0 0.0
        %1329 = vmatpush.msra.mxu0 0.0
        %1330 = vmatpush.msra.mxu0 0.0
        %1331 = vmatpush.msra.mxu0 0.0
        %1332 = vmatpush.msra.mxu0 0.0
        %1333 = vmatpush.msra.mxu0 0.0
        %1334 = vmatpush.msra.mxu0 0.0
        %1335 = vmatpush.msra.mxu0 0.0
        %v1336 = vand.u32 %v571, 4294901760
        %1337 = vmatpush.msra.mxu0 %v1336
        %v1338 = vand.u32 %v570, 4294901760
        %1339 = vmatpush.msra.mxu0 %v1338
        %v1340 = vand.u32 %v1317, 4294901760
        %v1341 = vsub.f32 %v1317, %v1340
        %v1342 = vand.u32 %v1341, 4294901760
        %v1343 = vsub.f32 %v1341, %v1342
        %v1344 = vand.u32 %v1343, 4294901760
        %1345 = vmatmul.f32.gmra.mxu0 %v1344
        %v1346 = vpop.f32.mrf.mxu0
        %v1347 = vadd.f32 %v590, %v1346
        %v1348 = vand.u32 %v1320, 4294901760
        %v1349 = vsub.f32 %v1320, %v1348
        %v1350 = vand.u32 %v1349, 4294901760
        %v1351 = vsub.f32 %v1349, %v1350
        %v1352 = vand.u32 %v1351, 4294901760
        %1353 = vmatmul.f32.gmra.mxu0 %v1352
        %v1354 = vpop.f32.mrf.mxu0
        %v1355 = vadd.f32 %v590, %v1354
        %1356 = vdwg.mxu0
        %1357 = vmatpush.msra.mxu0 0.0
        %1358 = vmatpush.msra.mxu0 0.0
        %1359 = vmatpush.msra.mxu0 0.0
        %1360 = vmatpush.msra.mxu0 0.0
        %1361 = vmatpush.msra.mxu0 0.0
        %1362 = vmatpush.msra.mxu0 0.0
        %1363 = vmatpush.msra.mxu0 0.0
        %1364 = vmatpush.msra.mxu0 0.0
        %1365 = vmatpush.msra.mxu0 0.0
        %1366 = vmatpush.msra.mxu0 0.0
        %1367 = vmatpush.msra.mxu0 0.0
        %1368 = vmatpush.msra.mxu0 0.0
        %1369 = vmatpush.msra.mxu0 0.0
        %1370 = vmatpush.msra.mxu0 0.0
        %v1371 = vand.u32 %v571, 4294901760
        %v1372 = vsub.f32 %v571, %v1371
        %v1373 = vand.u32 %v1372, 4294901760
        %v1374 = vsub.f32 %v1372, %v1373
        %v1375 = vand.u32 %v1374, 4294901760
        %1376 = vmatpush.msra.mxu0 %v1375
        %v1377 = vand.u32 %v570, 4294901760
        %v1378 = vsub.f32 %v570, %v1377
        %v1379 = vand.u32 %v1378, 4294901760
        %v1380 = vsub.f32 %v1378, %v1379
        %v1381 = vand.u32 %v1380, 4294901760
        %1382 = vmatpush.msra.mxu0 %v1381
        %v1383 = vand.u32 %v1317, 4294901760
        %1384 = vmatmul.f32.gmra.mxu0 %v1383
        %v1385 = vpop.f32.mrf.mxu0
        %v1386 = vadd.f32 %v1347, %v1385
        %v1387 = vand.u32 %v1320, 4294901760
        %1388 = vmatmul.f32.gmra.mxu0 %v1387
        %v1389 = vpop.f32.mrf.mxu0
        %v1390 = vadd.f32 %v1355, %v1389
        %1391 = vdwg.mxu0
        %1392 = vmatpush.msra.mxu0 0.0
        %1393 = vmatpush.msra.mxu0 0.0
        %1394 = vmatpush.msra.mxu0 0.0
        %1395 = vmatpush.msra.mxu0 0.0
        %1396 = vmatpush.msra.mxu0 0.0
        %1397 = vmatpush.msra.mxu0 0.0
        %1398 = vmatpush.msra.mxu0 0.0
        %1399 = vmatpush.msra.mxu0 0.0
        %1400 = vmatpush.msra.mxu0 0.0
        %1401 = vmatpush.msra.mxu0 0.0
        %1402 = vmatpush.msra.mxu0 0.0
        %1403 = vmatpush.msra.mxu0 0.0
        %1404 = vmatpush.msra.mxu0 0.0
        %1405 = vmatpush.msra.mxu0 0.0
        %v1406 = vand.u32 %v571, 4294901760
        %v1407 = vsub.f32 %v571, %v1406
        %1408 = vmatpush.msra.mxu0 %v1407
        %v1409 = vand.u32 %v570, 4294901760
        %v1410 = vsub.f32 %v570, %v1409
        %1411 = vmatpush.msra.mxu0 %v1410
        %v1412 = vand.u32 %v1317, 4294901760
        %v1413 = vsub.f32 %v1317, %v1412
        %1414 = vmatmul.f32.gmra.mxu0 %v1413
        %v1415 = vpop.f32.mrf.mxu0
        %v1416 = vadd.f32 %v1386, %v1415
        %v1417 = vand.u32 %v1320, 4294901760
        %v1418 = vsub.f32 %v1320, %v1417
        %1419 = vmatmul.f32.gmra.mxu0 %v1418
        %v1420 = vpop.f32.mrf.mxu0
        %v1421 = vadd.f32 %v1390, %v1420
        %1422 = vdwg.mxu0
        %1423 = vmatpush.msra.mxu0 0.0
        %1424 = vmatpush.msra.mxu0 0.0
        %1425 = vmatpush.msra.mxu0 0.0
        %1426 = vmatpush.msra.mxu0 0.0
        %1427 = vmatpush.msra.mxu0 0.0
        %1428 = vmatpush.msra.mxu0 0.0
        %1429 = vmatpush.msra.mxu0 0.0
        %1430 = vmatpush.msra.mxu0 0.0
        %1431 = vmatpush.msra.mxu0 0.0
        %1432 = vmatpush.msra.mxu0 0.0
        %1433 = vmatpush.msra.mxu0 0.0
        %1434 = vmatpush.msra.mxu0 0.0
        %1435 = vmatpush.msra.mxu0 0.0
        %1436 = vmatpush.msra.mxu0 0.0
        %v1437 = vand.u32 %v571, 4294901760
        %1438 = vmatpush.msra.mxu0 %v1437
        %v1439 = vand.u32 %v570, 4294901760
        %1440 = vmatpush.msra.mxu0 %v1439
        %v1441 = vand.u32 %v1317, 4294901760
        %v1442 = vsub.f32 %v1317, %v1441
        %v1443 = vand.u32 %v1442, 4294901760
        %1444 = vmatmul.f32.gmra.mxu0 %v1443
        %v1445 = vpop.f32.mrf.mxu0
        %v1446 = vadd.f32 %v1416, %v1445
        %v1447 = vand.u32 %v1320, 4294901760
        %v1448 = vsub.f32 %v1320, %v1447
        %v1449 = vand.u32 %v1448, 4294901760
        %1450 = vmatmul.f32.gmra.mxu0 %v1449
        %v1451 = vpop.f32.mrf.mxu0
        %v1452 = vadd.f32 %v1421, %v1451
        %1453 = vdwg.mxu0
        %1454 = vmatpush.msra.mxu0 0.0
        %1455 = vmatpush.msra.mxu0 0.0
        %1456 = vmatpush.msra.mxu0 0.0
        %1457 = vmatpush.msra.mxu0 0.0
        %1458 = vmatpush.msra.mxu0 0.0
        %1459 = vmatpush.msra.mxu0 0.0
        %1460 = vmatpush.msra.mxu0 0.0
        %1461 = vmatpush.msra.mxu0 0.0
        %1462 = vmatpush.msra.mxu0 0.0
        %1463 = vmatpush.msra.mxu0 0.0
        %1464 = vmatpush.msra.mxu0 0.0
        %1465 = vmatpush.msra.mxu0 0.0
        %1466 = vmatpush.msra.mxu0 0.0
        %1467 = vmatpush.msra.mxu0 0.0
        %v1468 = vand.u32 %v571, 4294901760
        %v1469 = vsub.f32 %v571, %v1468
        %v1470 = vand.u32 %v1469, 4294901760
        %1471 = vmatpush.msra.mxu0 %v1470
        %v1472 = vand.u32 %v570, 4294901760
        %v1473 = vsub.f32 %v570, %v1472
        %v1474 = vand.u32 %v1473, 4294901760
        %1475 = vmatpush.msra.mxu0 %v1474
        %v1476 = vand.u32 %v1317, 4294901760
        %1477 = vmatmul.f32.gmra.mxu0 %v1476
        %v1478 = vpop.f32.mrf.mxu0
        %v1479 = vadd.f32 %v1446, %v1478
        %v1480 = vand.u32 %v1320, 4294901760
        %1481 = vmatmul.f32.gmra.mxu0 %v1480
        %v1482 = vpop.f32.mrf.mxu0
        %v1483 = vadd.f32 %v1452, %v1482
        %1484 = vdwg.mxu0
        %1485 = vmatpush.msra.mxu0 0.0
        %1486 = vmatpush.msra.mxu0 0.0
        %1487 = vmatpush.msra.mxu0 0.0
        %1488 = vmatpush.msra.mxu0 0.0
        %1489 = vmatpush.msra.mxu0 0.0
        %1490 = vmatpush.msra.mxu0 0.0
        %1491 = vmatpush.msra.mxu0 0.0
        %1492 = vmatpush.msra.mxu0 0.0
        %1493 = vmatpush.msra.mxu0 0.0
        %1494 = vmatpush.msra.mxu0 0.0
        %1495 = vmatpush.msra.mxu0 0.0
        %1496 = vmatpush.msra.mxu0 0.0
        %1497 = vmatpush.msra.mxu0 0.0
        %1498 = vmatpush.msra.mxu0 0.0
        %v1499 = vand.u32 %v571, 4294901760
        %1500 = vmatpush.msra.mxu0 %v1499
        %v1501 = vand.u32 %v570, 4294901760
        %1502 = vmatpush.msra.mxu0 %v1501
        %v1503 = vand.u32 %v1317, 4294901760
        %1504 = vmatmul.f32.gmra.mxu0 %v1503
        %v1505 = vpop.f32.mrf.mxu0
        %v1506 = vadd.f32 %v1479, %v1505
        %v1507 = vand.u32 %v1320, 4294901760
        %1508 = vmatmul.f32.gmra.mxu0 %v1507
        %v1509 = vpop.f32.mrf.mxu0
        %v1510 = vadd.f32 %v1483, %v1509
        %1511 = vdwg.mxu0
        %vm1512 = vcmp.ge.f32.partialorder %v1506, 0.0
        %vm1513 = vcmp.ge.f32.partialorder %v1510, 0.0
        %v1514 = vmul.f32 %v1281, %v1506
        %v1515 = vmul.f32 %v1281, %v1510
        %v1516 = vsel %vm1512, %v1506, %v1514
        %v1517 = vsel %vm1513, %v1510, %v1515
        %v1518 = vld [vmem:[%s552] sm:$0xff]
        %v1519 = vld [vmem:[%s552 + $0x8] sm:$0xff]
        %v1521 = vsel %vm592, %v1518, 0
        %v1524 = vsel %vm592, %v1519, 0
        %1526 = vmatpush.msra.mxu0 0.0
        %1527 = vmatpush.msra.mxu0 0.0
        %1528 = vmatpush.msra.mxu0 0.0
        %1529 = vmatpush.msra.mxu0 0.0
        %1530 = vmatpush.msra.mxu0 0.0
        %1531 = vmatpush.msra.mxu0 0.0
        %1532 = vmatpush.msra.mxu0 0.0
        %1533 = vmatpush.msra.mxu0 0.0
        %1534 = vmatpush.msra.mxu0 0.0
        %1535 = vmatpush.msra.mxu0 0.0
        %1536 = vmatpush.msra.mxu0 0.0
        %1537 = vmatpush.msra.mxu0 0.0
        %1538 = vmatpush.msra.mxu0 0.0
        %1539 = vmatpush.msra.mxu0 0.0
        %v1540 = vand.u32 %v571, 4294901760
        %1541 = vmatpush.msra.mxu0 %v1540
        %v1542 = vand.u32 %v570, 4294901760
        %1543 = vmatpush.msra.mxu0 %v1542
        %v1544 = vand.u32 %v1521, 4294901760
        %v1545 = vsub.f32 %v1521, %v1544
        %v1546 = vand.u32 %v1545, 4294901760
        %v1547 = vsub.f32 %v1545, %v1546
        %v1548 = vand.u32 %v1547, 4294901760
        %1549 = vmatmul.f32.gmra.mxu0 %v1548
        %v1550 = vpop.f32.mrf.mxu0
        %v1551 = vadd.f32 %v590, %v1550
        %v1552 = vand.u32 %v1524, 4294901760
        %v1553 = vsub.f32 %v1524, %v1552
        %v1554 = vand.u32 %v1553, 4294901760
        %v1555 = vsub.f32 %v1553, %v1554
        %v1556 = vand.u32 %v1555, 4294901760
        %1557 = vmatmul.f32.gmra.mxu0 %v1556
        %v1558 = vpop.f32.mrf.mxu0
        %v1559 = vadd.f32 %v590, %v1558
        %1560 = vdwg.mxu0
        %1561 = vmatpush.msra.mxu0 0.0
        %1562 = vmatpush.msra.mxu0 0.0
        %1563 = vmatpush.msra.mxu0 0.0
        %1564 = vmatpush.msra.mxu0 0.0
        %1565 = vmatpush.msra.mxu0 0.0
        %1566 = vmatpush.msra.mxu0 0.0
        %1567 = vmatpush.msra.mxu0 0.0
        %1568 = vmatpush.msra.mxu0 0.0
        %1569 = vmatpush.msra.mxu0 0.0
        %1570 = vmatpush.msra.mxu0 0.0
        %1571 = vmatpush.msra.mxu0 0.0
        %1572 = vmatpush.msra.mxu0 0.0
        %1573 = vmatpush.msra.mxu0 0.0
        %1574 = vmatpush.msra.mxu0 0.0
        %v1575 = vand.u32 %v571, 4294901760
        %v1576 = vsub.f32 %v571, %v1575
        %v1577 = vand.u32 %v1576, 4294901760
        %v1578 = vsub.f32 %v1576, %v1577
        %v1579 = vand.u32 %v1578, 4294901760
        %1580 = vmatpush.msra.mxu0 %v1579
        %v1581 = vand.u32 %v570, 4294901760
        %v1582 = vsub.f32 %v570, %v1581
        %v1583 = vand.u32 %v1582, 4294901760
        %v1584 = vsub.f32 %v1582, %v1583
        %v1585 = vand.u32 %v1584, 4294901760
        %1586 = vmatpush.msra.mxu0 %v1585
        %v1587 = vand.u32 %v1521, 4294901760
        %1588 = vmatmul.f32.gmra.mxu0 %v1587
        %v1589 = vpop.f32.mrf.mxu0
        %v1590 = vadd.f32 %v1551, %v1589
        %v1591 = vand.u32 %v1524, 4294901760
        %1592 = vmatmul.f32.gmra.mxu0 %v1591
        %v1593 = vpop.f32.mrf.mxu0
        %v1594 = vadd.f32 %v1559, %v1593
        %1595 = vdwg.mxu0
        %1596 = vmatpush.msra.mxu0 0.0
        %1597 = vmatpush.msra.mxu0 0.0
        %1598 = vmatpush.msra.mxu0 0.0
        %1599 = vmatpush.msra.mxu0 0.0
        %1600 = vmatpush.msra.mxu0 0.0
        %1601 = vmatpush.msra.mxu0 0.0
        %1602 = vmatpush.msra.mxu0 0.0
        %1603 = vmatpush.msra.mxu0 0.0
        %1604 = vmatpush.msra.mxu0 0.0
        %1605 = vmatpush.msra.mxu0 0.0
        %1606 = vmatpush.msra.mxu0 0.0
        %1607 = vmatpush.msra.mxu0 0.0
        %1608 = vmatpush.msra.mxu0 0.0
        %1609 = vmatpush.msra.mxu0 0.0
        %v1610 = vand.u32 %v571, 4294901760
        %v1611 = vsub.f32 %v571, %v1610
        %1612 = vmatpush.msra.mxu0 %v1611
        %v1613 = vand.u32 %v570, 4294901760
        %v1614 = vsub.f32 %v570, %v1613
        %1615 = vmatpush.msra.mxu0 %v1614
        %v1616 = vand.u32 %v1521, 4294901760
        %v1617 = vsub.f32 %v1521, %v1616
        %1618 = vmatmul.f32.gmra.mxu0 %v1617
        %v1619 = vpop.f32.mrf.mxu0
        %v1620 = vadd.f32 %v1590, %v1619
        %v1621 = vand.u32 %v1524, 4294901760
        %v1622 = vsub.f32 %v1524, %v1621
        %1623 = vmatmul.f32.gmra.mxu0 %v1622
        %v1624 = vpop.f32.mrf.mxu0
        %v1625 = vadd.f32 %v1594, %v1624
        %1626 = vdwg.mxu0
        %1627 = vmatpush.msra.mxu0 0.0
        %1628 = vmatpush.msra.mxu0 0.0
        %1629 = vmatpush.msra.mxu0 0.0
        %1630 = vmatpush.msra.mxu0 0.0
        %1631 = vmatpush.msra.mxu0 0.0
        %1632 = vmatpush.msra.mxu0 0.0
        %1633 = vmatpush.msra.mxu0 0.0
        %1634 = vmatpush.msra.mxu0 0.0
        %1635 = vmatpush.msra.mxu0 0.0
        %1636 = vmatpush.msra.mxu0 0.0
        %1637 = vmatpush.msra.mxu0 0.0
        %1638 = vmatpush.msra.mxu0 0.0
        %1639 = vmatpush.msra.mxu0 0.0
        %1640 = vmatpush.msra.mxu0 0.0
        %v1641 = vand.u32 %v571, 4294901760
        %1642 = vmatpush.msra.mxu0 %v1641
        %v1643 = vand.u32 %v570, 4294901760
        %1644 = vmatpush.msra.mxu0 %v1643
        %v1645 = vand.u32 %v1521, 4294901760
        %v1646 = vsub.f32 %v1521, %v1645
        %v1647 = vand.u32 %v1646, 4294901760
        %1648 = vmatmul.f32.gmra.mxu0 %v1647
        %v1649 = vpop.f32.mrf.mxu0
        %v1650 = vadd.f32 %v1620, %v1649
        %v1651 = vand.u32 %v1524, 4294901760
        %v1652 = vsub.f32 %v1524, %v1651
        %v1653 = vand.u32 %v1652, 4294901760
        %1654 = vmatmul.f32.gmra.mxu0 %v1653
        %v1655 = vpop.f32.mrf.mxu0
        %v1656 = vadd.f32 %v1625, %v1655
        %1657 = vdwg.mxu0
        %1658 = vmatpush.msra.mxu0 0.0
        %1659 = vmatpush.msra.mxu0 0.0
        %1660 = vmatpush.msra.mxu0 0.0
        %1661 = vmatpush.msra.mxu0 0.0
        %1662 = vmatpush.msra.mxu0 0.0
        %1663 = vmatpush.msra.mxu0 0.0
        %1664 = vmatpush.msra.mxu0 0.0
        %1665 = vmatpush.msra.mxu0 0.0
        %1666 = vmatpush.msra.mxu0 0.0
        %1667 = vmatpush.msra.mxu0 0.0
        %1668 = vmatpush.msra.mxu0 0.0
        %1669 = vmatpush.msra.mxu0 0.0
        %1670 = vmatpush.msra.mxu0 0.0
        %1671 = vmatpush.msra.mxu0 0.0
        %v1672 = vand.u32 %v571, 4294901760
        %v1673 = vsub.f32 %v571, %v1672
        %v1674 = vand.u32 %v1673, 4294901760
        %1675 = vmatpush.msra.mxu0 %v1674
        %v1676 = vand.u32 %v570, 4294901760
        %v1677 = vsub.f32 %v570, %v1676
        %v1678 = vand.u32 %v1677, 4294901760
        %1679 = vmatpush.msra.mxu0 %v1678
        %v1680 = vand.u32 %v1521, 4294901760
        %1681 = vmatmul.f32.gmra.mxu0 %v1680
        %v1682 = vpop.f32.mrf.mxu0
        %v1683 = vadd.f32 %v1650, %v1682
        %v1684 = vand.u32 %v1524, 4294901760
        %1685 = vmatmul.f32.gmra.mxu0 %v1684
        %v1686 = vpop.f32.mrf.mxu0
        %v1687 = vadd.f32 %v1656, %v1686
        %1688 = vdwg.mxu0
        %1689 = vmatpush.msra.mxu0 0.0
        %1690 = vmatpush.msra.mxu0 0.0
        %1691 = vmatpush.msra.mxu0 0.0
        %1692 = vmatpush.msra.mxu0 0.0
        %1693 = vmatpush.msra.mxu0 0.0
        %1694 = vmatpush.msra.mxu0 0.0
        %1695 = vmatpush.msra.mxu0 0.0
        %1696 = vmatpush.msra.mxu0 0.0
        %1697 = vmatpush.msra.mxu0 0.0
        %1698 = vmatpush.msra.mxu0 0.0
        %1699 = vmatpush.msra.mxu0 0.0
        %1700 = vmatpush.msra.mxu0 0.0
        %1701 = vmatpush.msra.mxu0 0.0
        %1702 = vmatpush.msra.mxu0 0.0
        %v1703 = vand.u32 %v571, 4294901760
        %1704 = vmatpush.msra.mxu0 %v1703
        %v1705 = vand.u32 %v570, 4294901760
        %1706 = vmatpush.msra.mxu0 %v1705
        %v1707 = vand.u32 %v1521, 4294901760
        %1708 = vmatmul.f32.gmra.mxu0 %v1707
        %v1709 = vpop.f32.mrf.mxu0
        %v1710 = vadd.f32 %v1683, %v1709
        %v1711 = vand.u32 %v1524, 4294901760
        %1712 = vmatmul.f32.gmra.mxu0 %v1711
        %v1713 = vpop.f32.mrf.mxu0
        %v1714 = vadd.f32 %v1687, %v1713
        %1715 = vdwg.mxu0
        %vm1716 = vcmp.ge.f32.partialorder %v1710, 0.0
        %vm1717 = vcmp.ge.f32.partialorder %v1714, 0.0
        %v1718 = vmul.f32 %v1281, %v1710
        %v1719 = vmul.f32 %v1281, %v1714
        %v1720 = vsel %vm1716, %v1710, %v1718
        %v1721 = vsel %vm1717, %v1714, %v1719
        %p1722 = scmp.gt.s32.totalorder %s28, 0
        %s1723 = scalar_select %p1722, 1, 0
        %v1724 = vstv %s1723
        %vm1725 = vcmp.eq.s32.totalorder %v1724, 1
        %v1726 = vsel %vm1725, %v1516, 0.0
        %v1727 = vsel %vm1725, %v1517, 0.0
        %p1728 = scmp.lt.s32.totalorder %s28, 1
        %s1729 = scalar_select %p1728, 1, 0
        %v1730 = vstv %s1729
        %vm1731 = vcmp.eq.s32.totalorder %v1730, 1
        %v1732 = vsel %vm1731, %v1720, 0.0
        %v1733 = vsel %vm1731, %v1721, 0.0
        %1734 = vst.msk [vmem:[#allocation2] sm:$0xff] %vm592, 0.0
        %1735 = vst.msk [vmem:[#allocation2 + $0x8] sm:$0xff] %vm592, %v1726
        %1736 = vst.msk [vmem:[#allocation2 + $0x10] sm:$0xff] %vm592, %v1727
        %1737 = vst.msk [vmem:[#allocation2 + $0x18] sm:$0xff] %vm592, %v1298
        %1738 = vst.msk [vmem:[#allocation2 + $0x20] sm:$0xff] %vm592, %v1299
        %1739 = vst.msk [vmem:[#allocation2 + $0x28] sm:$0xff] %vm592, %v1300
        %1740 = vst.msk [vmem:[#allocation2 + $0x30] sm:$0xff] %vm592, %v1301
        %1741 = vst.msk [vmem:[#allocation2 + $0x38] sm:$0xff] %vm592, %v1302
        %1742 = vst.msk [vmem:[#allocation2 + $0x40] sm:$0xff] %vm592, %v1303
        %1743 = vst.msk [vmem:[#allocation2 + $0x48] sm:$0xff] %vm592, %v1304
        %1744 = vst.msk [vmem:[#allocation2 + $0x50] sm:$0xff] %vm592, %v1305
        %1745 = vst.msk [vmem:[#allocation2 + $0x58] sm:$0xff] %vm592, %v1306
        %1746 = vst.msk [vmem:[#allocation2 + $0x60] sm:$0xff] %vm592, %v1307
        %1747 = vst.msk [vmem:[#allocation2 + $0x68] sm:$0xff] %vm592, %v1308
        %1748 = vst.msk [vmem:[#allocation2 + $0x70] sm:$0xff] %vm592, %v1309
        %1749 = vst.msk [vmem:[#allocation2 + $0x78] sm:$0xff] %vm592, %v1310
        %1750 = vst.msk [vmem:[#allocation2 + $0x80] sm:$0xff] %vm592, %v1311
        %1751 = vst.msk [vmem:[#allocation2 + $0x88] sm:$0xff] %vm592, %v1312
        %1752 = vst.msk [vmem:[#allocation2 + $0x90] sm:$0xff] %vm592, %v1313
        %1753 = vst.msk [vmem:[#allocation2 + $0x98] sm:$0xff] %vm592, %v1732
        %1754 = vst.msk [vmem:[#allocation2 + $0xa0] sm:$0xff] %vm592, %v1733
        %1755 = vst.msk [vmem:[#allocation2 + $0xa8] sm:$0xff] %vm592, 0.0
        %v1756 = vlaneseq
        %v1757 = vshrl.u32 %v1756, 7
        %v1758 = vadd.s32 %v1757, 8
        %v1759 = vadd.s32 %v1757, 16
        %v1760 = vadd.s32 %v1757, 24
        %v1761 = vadd.s32 %v1757, 32
        %v1762 = vadd.s32 %v1757, 40
        %v1763 = vadd.s32 %v1757, 48
        %v1764 = vadd.s32 %v1757, 56
        %v1765 = vadd.s32 %v1757, 64
        %v1766 = vadd.s32 %v1757, 72
        %v1767 = vadd.s32 %v1757, 80
        %v1768 = vadd.s32 %v1757, 88
        %v1769 = vadd.s32 %v1757, 96
        %v1770 = vadd.s32 %v1757, 104
        %v1771 = vadd.s32 %v1757, 112
        %v1772 = vadd.s32 %v1757, 120
        %vm1773 = vcmp.lt.s32.totalorder %v1757, 0
        %v1774 = vsub.s32 0, %v1757
        %v1775 = vsel %vm1773, %v1774, %v1757
        %v1776 = vshrl.u32 %v1775, 4
        %v1777 = vand.u32 %v1775, 15
        %v1778 = vsub.s32 0, %v1777
        %v1779 = vsel %vm1773, %v1778, %v1777
        %vm1780 = vcmp.lt.s32.totalorder %v1758, 0
        %v1781 = vsub.s32 0, %v1758
        %v1782 = vsel %vm1780, %v1781, %v1758
        %v1783 = vshrl.u32 %v1782, 4
        %v1784 = vand.u32 %v1782, 15
        %v1785 = vsub.s32 0, %v1784
        %v1786 = vsel %vm1780, %v1785, %v1784
        %vm1787 = vcmp.lt.s32.totalorder %v1759, 0
        %v1788 = vsub.s32 0, %v1759
        %v1789 = vsel %vm1787, %v1788, %v1759
        %v1790 = vshrl.u32 %v1789, 4
        %v1791 = vand.u32 %v1789, 15
        %v1792 = vsub.s32 0, %v1791
        %v1793 = vsel %vm1787, %v1792, %v1791
        %vm1794 = vcmp.lt.s32.totalorder %v1760, 0
        %v1795 = vsub.s32 0, %v1760
        %v1796 = vsel %vm1794, %v1795, %v1760
        %v1797 = vshrl.u32 %v1796, 4
        %v1798 = vand.u32 %v1796, 15
        %v1799 = vsub.s32 0, %v1798
        %v1800 = vsel %vm1794, %v1799, %v1798
        %vm1801 = vcmp.lt.s32.totalorder %v1761, 0
        %v1802 = vsub.s32 0, %v1761
        %v1803 = vsel %vm1801, %v1802, %v1761
        %v1804 = vshrl.u32 %v1803, 4
        %v1805 = vand.u32 %v1803, 15
        %v1806 = vsub.s32 0, %v1805
        %v1807 = vsel %vm1801, %v1806, %v1805
        %vm1808 = vcmp.lt.s32.totalorder %v1762, 0
        %v1809 = vsub.s32 0, %v1762
        %v1810 = vsel %vm1808, %v1809, %v1762
        %v1811 = vshrl.u32 %v1810, 4
        %v1812 = vand.u32 %v1810, 15
        %v1813 = vsub.s32 0, %v1812
        %v1814 = vsel %vm1808, %v1813, %v1812
        %vm1815 = vcmp.lt.s32.totalorder %v1763, 0
        %v1816 = vsub.s32 0, %v1763
        %v1817 = vsel %vm1815, %v1816, %v1763
        %v1818 = vshrl.u32 %v1817, 4
        %v1819 = vand.u32 %v1817, 15
        %v1820 = vsub.s32 0, %v1819
        %v1821 = vsel %vm1815, %v1820, %v1819
        %vm1822 = vcmp.lt.s32.totalorder %v1764, 0
        %v1823 = vsub.s32 0, %v1764
        %v1824 = vsel %vm1822, %v1823, %v1764
        %v1825 = vshrl.u32 %v1824, 4
        %v1826 = vand.u32 %v1824, 15
        %v1827 = vsub.s32 0, %v1826
        %v1828 = vsel %vm1822, %v1827, %v1826
        %vm1829 = vcmp.lt.s32.totalorder %v1765, 0
        %v1830 = vsub.s32 0, %v1765
        %v1831 = vsel %vm1829, %v1830, %v1765
        %v1832 = vshrl.u32 %v1831, 4
        %v1833 = vand.u32 %v1831, 15
        %v1834 = vsub.s32 0, %v1833
        %v1835 = vsel %vm1829, %v1834, %v1833
        %vm1836 = vcmp.lt.s32.totalorder %v1766, 0
        %v1837 = vsub.s32 0, %v1766
        %v1838 = vsel %vm1836, %v1837, %v1766
        %v1839 = vshrl.u32 %v1838, 4
        %v1840 = vand.u32 %v1838, 15
        %v1841 = vsub.s32 0, %v1840
        %v1842 = vsel %vm1836, %v1841, %v1840
        %vm1843 = vcmp.lt.s32.totalorder %v1767, 0
        %v1844 = vsub.s32 0, %v1767
        %v1845 = vsel %vm1843, %v1844, %v1767
        %v1846 = vshrl.u32 %v1845, 4
        %v1847 = vand.u32 %v1845, 15
        %v1848 = vsub.s32 0, %v1847
        %v1849 = vsel %vm1843, %v1848, %v1847
        %vm1850 = vcmp.lt.s32.totalorder %v1768, 0
        %v1851 = vsub.s32 0, %v1768
        %v1852 = vsel %vm1850, %v1851, %v1768
        %v1853 = vshrl.u32 %v1852, 4
        %v1854 = vand.u32 %v1852, 15
        %v1855 = vsub.s32 0, %v1854
        %v1856 = vsel %vm1850, %v1855, %v1854
        %vm1857 = vcmp.lt.s32.totalorder %v1769, 0
        %v1858 = vsub.s32 0, %v1769
        %v1859 = vsel %vm1857, %v1858, %v1769
        %v1860 = vshrl.u32 %v1859, 4
        %v1861 = vand.u32 %v1859, 15
        %v1862 = vsub.s32 0, %v1861
        %v1863 = vsel %vm1857, %v1862, %v1861
        %vm1864 = vcmp.lt.s32.totalorder %v1770, 0
        %v1865 = vsub.s32 0, %v1770
        %v1866 = vsel %vm1864, %v1865, %v1770
        %v1867 = vshrl.u32 %v1866, 4
        %v1868 = vand.u32 %v1866, 15
        %v1869 = vsub.s32 0, %v1868
        %v1870 = vsel %vm1864, %v1869, %v1868
        %vm1871 = vcmp.lt.s32.totalorder %v1771, 0
        %v1872 = vsub.s32 0, %v1771
        %v1873 = vsel %vm1871, %v1872, %v1771
        %v1874 = vshrl.u32 %v1873, 4
        %v1875 = vand.u32 %v1873, 15
        %v1876 = vsub.s32 0, %v1875
        %v1877 = vsel %vm1871, %v1876, %v1875
        %vm1878 = vcmp.lt.s32.totalorder %v1772, 0
        %v1879 = vsub.s32 0, %v1772
        %v1880 = vsel %vm1878, %v1879, %v1772
        %v1881 = vshrl.u32 %v1880, 4
        %v1882 = vand.u32 %v1880, 15
        %v1883 = vsub.s32 0, %v1882
        %v1884 = vsel %vm1878, %v1883, %v1882
        %vm1885 = vcmp.ne.s32.totalorder %v1779, 0
        %vm1886 = vcmp.ne.s32.totalorder %v1786, 0
        %vm1887 = vcmp.ne.s32.totalorder %v1793, 0
        %vm1888 = vcmp.ne.s32.totalorder %v1800, 0
        %vm1889 = vcmp.ne.s32.totalorder %v1807, 0
        %vm1890 = vcmp.ne.s32.totalorder %v1814, 0
        %vm1891 = vcmp.ne.s32.totalorder %v1821, 0
        %vm1892 = vcmp.ne.s32.totalorder %v1828, 0
        %vm1893 = vcmp.ne.s32.totalorder %v1835, 0
        %vm1894 = vcmp.ne.s32.totalorder %v1842, 0
        %vm1895 = vcmp.ne.s32.totalorder %v1849, 0
        %vm1896 = vcmp.ne.s32.totalorder %v1856, 0
        %vm1897 = vcmp.ne.s32.totalorder %v1863, 0
        %vm1898 = vcmp.ne.s32.totalorder %v1870, 0
        %vm1899 = vcmp.ne.s32.totalorder %v1877, 0
        %vm1900 = vcmp.ne.s32.totalorder %v1884, 0
        %vm1901 = vcmp.lt.s32.totalorder %v1779, 0
        %vm1902 = vcmp.lt.s32.totalorder %v1786, 0
        %vm1903 = vcmp.lt.s32.totalorder %v1793, 0
        %vm1904 = vcmp.lt.s32.totalorder %v1800, 0
        %vm1905 = vcmp.lt.s32.totalorder %v1807, 0
        %vm1906 = vcmp.lt.s32.totalorder %v1814, 0
        %vm1907 = vcmp.lt.s32.totalorder %v1821, 0
        %vm1908 = vcmp.lt.s32.totalorder %v1828, 0
        %vm1909 = vcmp.lt.s32.totalorder %v1835, 0
        %vm1910 = vcmp.lt.s32.totalorder %v1842, 0
        %vm1911 = vcmp.lt.s32.totalorder %v1849, 0
        %vm1912 = vcmp.lt.s32.totalorder %v1856, 0
        %vm1913 = vcmp.lt.s32.totalorder %v1863, 0
        %vm1914 = vcmp.lt.s32.totalorder %v1870, 0
        %vm1915 = vcmp.lt.s32.totalorder %v1877, 0
        %vm1916 = vcmp.lt.s32.totalorder %v1884, 0
        %vm1917 = vmand %vm1901, %vm1885
        %vm1918 = vmand %vm1902, %vm1886
        %vm1919 = vmand %vm1903, %vm1887
        %vm1920 = vmand %vm1904, %vm1888
        %vm1921 = vmand %vm1905, %vm1889
        %vm1922 = vmand %vm1906, %vm1890
        %vm1923 = vmand %vm1907, %vm1891
        %vm1924 = vmand %vm1908, %vm1892
        %vm1925 = vmand %vm1909, %vm1893
        %vm1926 = vmand %vm1910, %vm1894
        %vm1927 = vmand %vm1911, %vm1895
        %vm1928 = vmand %vm1912, %vm1896
        %vm1929 = vmand %vm1913, %vm1897
        %vm1930 = vmand %vm1914, %vm1898
        %vm1931 = vmand %vm1915, %vm1899
        %vm1932 = vmand %vm1916, %vm1900
        %v1933 = vadd.s32 %v1779, 16
        %v1934 = vadd.s32 %v1786, 16
        %v1935 = vadd.s32 %v1793, 16
        %v1936 = vadd.s32 %v1800, 16
        %v1937 = vadd.s32 %v1807, 16
        %v1938 = vadd.s32 %v1814, 16
        %v1939 = vadd.s32 %v1821, 16
        %v1940 = vadd.s32 %v1828, 16
        %v1941 = vadd.s32 %v1835, 16
        %v1942 = vadd.s32 %v1842, 16
        %v1943 = vadd.s32 %v1849, 16
        %v1944 = vadd.s32 %v1856, 16
        %v1945 = vadd.s32 %v1863, 16
        %v1946 = vadd.s32 %v1870, 16
        %v1947 = vadd.s32 %v1877, 16
        %v1948 = vadd.s32 %v1884, 16
        %v1949 = vsel %vm1917, %v1933, %v1779
        %v1950 = vsel %vm1918, %v1934, %v1786
        %v1951 = vsel %vm1919, %v1935, %v1793
        %v1952 = vsel %vm1920, %v1936, %v1800
        %v1953 = vsel %vm1921, %v1937, %v1807
        %v1954 = vsel %vm1922, %v1938, %v1814
        %v1955 = vsel %vm1923, %v1939, %v1821
        %v1956 = vsel %vm1924, %v1940, %v1828
        %v1957 = vsel %vm1925, %v1941, %v1835
        %v1958 = vsel %vm1926, %v1942, %v1842
        %v1959 = vsel %vm1927, %v1943, %v1849
        %v1960 = vsel %vm1928, %v1944, %v1856
        %v1961 = vsel %vm1929, %v1945, %v1863
        %v1962 = vsel %vm1930, %v1946, %v1870
        %v1963 = vsel %vm1931, %v1947, %v1877
        %v1964 = vsel %vm1932, %v1948, %v1884
        %vm1965 = vcmp.gt.s32.totalorder %v1949, 0
        %vm1966 = vcmp.gt.s32.totalorder %v1950, 0
        %vm1967 = vcmp.gt.s32.totalorder %v1951, 0
        %vm1968 = vcmp.gt.s32.totalorder %v1952, 0
        %vm1969 = vcmp.gt.s32.totalorder %v1953, 0
        %vm1970 = vcmp.gt.s32.totalorder %v1954, 0
        %vm1971 = vcmp.gt.s32.totalorder %v1955, 0
        %vm1972 = vcmp.gt.s32.totalorder %v1956, 0
        %vm1973 = vcmp.gt.s32.totalorder %v1957, 0
        %vm1974 = vcmp.gt.s32.totalorder %v1958, 0
        %vm1975 = vcmp.gt.s32.totalorder %v1959, 0
        %vm1976 = vcmp.gt.s32.totalorder %v1960, 0
        %vm1977 = vcmp.gt.s32.totalorder %v1961, 0
        %vm1978 = vcmp.gt.s32.totalorder %v1962, 0
        %vm1979 = vcmp.gt.s32.totalorder %v1963, 0
        %vm1980 = vcmp.gt.s32.totalorder %v1964, 0
        %v1981 = vsel %vm1965, 1, 0
        %v1982 = vsel %vm1966, 1, 0
        %v1983 = vsel %vm1967, 1, 0
        %v1984 = vsel %vm1968, 1, 0
        %v1985 = vsel %vm1969, 1, 0
        %v1986 = vsel %vm1970, 1, 0
        %v1987 = vsel %vm1971, 1, 0
        %v1988 = vsel %vm1972, 1, 0
        %v1989 = vsel %vm1973, 1, 0
        %v1990 = vsel %vm1974, 1, 0
        %v1991 = vsel %vm1975, 1, 0
        %v1992 = vsel %vm1976, 1, 0
        %v1993 = vsel %vm1977, 1, 0
        %v1994 = vsel %vm1978, 1, 0
        %v1995 = vsel %vm1979, 1, 0
        %v1996 = vsel %vm1980, 1, 0
        %v1997 = vcvt.s32.f32 %v1981
        %v1998 = vcvt.s32.f32 %v1982
        %v1999 = vcvt.s32.f32 %v1983
        %v2000 = vcvt.s32.f32 %v1984
        %v2001 = vcvt.s32.f32 %v1985
        %v2002 = vcvt.s32.f32 %v1986
        %v2003 = vcvt.s32.f32 %v1987
        %v2004 = vcvt.s32.f32 %v1988
        %v2005 = vcvt.s32.f32 %v1989
        %v2006 = vcvt.s32.f32 %v1990
        %v2007 = vcvt.s32.f32 %v1991
        %v2008 = vcvt.s32.f32 %v1992
        %v2009 = vcvt.s32.f32 %v1993
        %v2010 = vcvt.s32.f32 %v1994
        %v2011 = vcvt.s32.f32 %v1995
        %v2012 = vcvt.s32.f32 %v1996
        %vm2013 = vcmp.lt.s32.totalorder %v1949, 15
        %vm2014 = vcmp.lt.s32.totalorder %v1950, 15
        %vm2015 = vcmp.lt.s32.totalorder %v1951, 15
        %vm2016 = vcmp.lt.s32.totalorder %v1952, 15
        %vm2017 = vcmp.lt.s32.totalorder %v1953, 15
        %vm2018 = vcmp.lt.s32.totalorder %v1954, 15
        %vm2019 = vcmp.lt.s32.totalorder %v1955, 15
        %vm2020 = vcmp.lt.s32.totalorder %v1956, 15
        %vm2021 = vcmp.lt.s32.totalorder %v1957, 15
        %vm2022 = vcmp.lt.s32.totalorder %v1958, 15
        %vm2023 = vcmp.lt.s32.totalorder %v1959, 15
        %vm2024 = vcmp.lt.s32.totalorder %v1960, 15
        %vm2025 = vcmp.lt.s32.totalorder %v1961, 15
        %vm2026 = vcmp.lt.s32.totalorder %v1962, 15
        %vm2027 = vcmp.lt.s32.totalorder %v1963, 15
        %vm2028 = vcmp.lt.s32.totalorder %v1964, 15
        %v2029 = vsel %vm2013, 1, 0
        %v2030 = vsel %vm2014, 1, 0
        %v2031 = vsel %vm2015, 1, 0
        %v2032 = vsel %vm2016, 1, 0
        %v2033 = vsel %vm2017, 1, 0
        %v2034 = vsel %vm2018, 1, 0
        %v2035 = vsel %vm2019, 1, 0
        %v2036 = vsel %vm2020, 1, 0
        %v2037 = vsel %vm2021, 1, 0
        %v2038 = vsel %vm2022, 1, 0
        %v2039 = vsel %vm2023, 1, 0
        %v2040 = vsel %vm2024, 1, 0
        %v2041 = vsel %vm2025, 1, 0
        %v2042 = vsel %vm2026, 1, 0
        %v2043 = vsel %vm2027, 1, 0
        %v2044 = vsel %vm2028, 1, 0
        %v2045 = vcvt.s32.f32 %v2029
        %v2046 = vcvt.s32.f32 %v2030
        %v2047 = vcvt.s32.f32 %v2031
        %v2048 = vcvt.s32.f32 %v2032
        %v2049 = vcvt.s32.f32 %v2033
        %v2050 = vcvt.s32.f32 %v2034
        %v2051 = vcvt.s32.f32 %v2035
        %v2052 = vcvt.s32.f32 %v2036
        %v2053 = vcvt.s32.f32 %v2037
        %v2054 = vcvt.s32.f32 %v2038
        %v2055 = vcvt.s32.f32 %v2039
        %v2056 = vcvt.s32.f32 %v2040
        %v2057 = vcvt.s32.f32 %v2041
        %v2058 = vcvt.s32.f32 %v2042
        %v2059 = vcvt.s32.f32 %v2043
        %v2060 = vcvt.s32.f32 %v2044
        %v2061 = vld [vmem:[#allocation2 + $0x8] sm:$0xff]
        %v2062 = vld [vmem:[#allocation2 + $0x10] sm:$0xff]
        %v2063 = vld [vmem:[#allocation2 + $0x18] sm:$0xff]
        %v2064 = vld [vmem:[#allocation2 + $0x20] sm:$0xff]
        %v2065 = vld [vmem:[#allocation2 + $0x28] sm:$0xff]
        %v2066 = vld [vmem:[#allocation2 + $0x30] sm:$0xff]
        %v2067 = vld [vmem:[#allocation2 + $0x38] sm:$0xff]
        %v2068 = vld [vmem:[#allocation2 + $0x40] sm:$0xff]
        %v2069 = vld [vmem:[#allocation2 + $0x48] sm:$0xff]
        %v2070 = vld [vmem:[#allocation2 + $0x50] sm:$0xff]
        %v2071 = vld [vmem:[#allocation2 + $0x58] sm:$0xff]
        %v2072 = vld [vmem:[#allocation2 + $0x60] sm:$0xff]
        %v2073 = vld [vmem:[#allocation2 + $0x68] sm:$0xff]
        %v2074 = vld [vmem:[#allocation2 + $0x70] sm:$0xff]
        %v2075 = vld [vmem:[#allocation2 + $0x78] sm:$0xff]
        %v2076 = vld [vmem:[#allocation2 + $0x80] sm:$0xff]
        %s2077 = scalar_lea.vmem %s5, 16
        %v2078 = vld [vmem:[%s2077] sm:$0xff]
        %v2079 = vld [vmem:[%s2077 + $0x8] sm:$0xff]
        %v2080 = vld [vmem:[#allocation2 + $0x88] sm:$0xff]
        %v2081 = vld [vmem:[#allocation2 + $0x90] sm:$0xff]
        %s2082 = scalar_lea.vmem %s5, 64
        %v2083 = vld [vmem:[%s2082] sm:$0xff]
        %v2084 = vld [vmem:[%s2082 + $0x8] sm:$0xff]
        %v2086 = vsel %vm592, %v2063, 0
        %v2089 = vsel %vm592, %v2064, 0
        %v2092 = vsel %vm592, %v2065, 0
        %v2095 = vsel %vm592, %v2066, 0
        %v2098 = vsel %vm592, %v2067, 0
        %v2101 = vsel %vm592, %v2068, 0
        %v2104 = vsel %vm592, %v2069, 0
        %v2107 = vsel %vm592, %v2070, 0
        %v2110 = vsel %vm592, %v2071, 0
        %v2113 = vsel %vm592, %v2072, 0
        %v2116 = vsel %vm592, %v2073, 0
        %v2119 = vsel %vm592, %v2074, 0
        %v2122 = vsel %vm592, %v2075, 0
        %v2125 = vsel %vm592, %v2076, 0
        %v2128 = vsel %vm592, %v2080, 0
        %v2131 = vsel %vm592, %v2081, 0
        %2133 = vmatpush.msra.mxu0 0.0
        %2134 = vmatpush.msra.mxu0 0.0
        %2135 = vmatpush.msra.mxu0 0.0
        %2136 = vmatpush.msra.mxu0 0.0
        %2137 = vmatpush.msra.mxu0 0.0
        %2138 = vmatpush.msra.mxu0 0.0
        %2139 = vmatpush.msra.mxu0 0.0
        %2140 = vmatpush.msra.mxu0 0.0
        %2141 = vmatpush.msra.mxu0 0.0
        %2142 = vmatpush.msra.mxu0 0.0
        %2143 = vmatpush.msra.mxu0 0.0
        %2144 = vmatpush.msra.mxu0 0.0
        %2145 = vmatpush.msra.mxu0 0.0
        %2146 = vmatpush.msra.mxu0 0.0
        %v2147 = vand.u32 %v2084, 4294901760
        %2148 = vmatpush.msra.mxu0 %v2147
        %v2149 = vand.u32 %v2083, 4294901760
        %2150 = vmatpush.msra.mxu0 %v2149
        %v2151 = vand.u32 %v2086, 4294901760
        %v2152 = vsub.f32 %v2086, %v2151
        %v2153 = vand.u32 %v2152, 4294901760
        %v2154 = vsub.f32 %v2152, %v2153
        %v2155 = vand.u32 %v2154, 4294901760
        %2156 = vmatmul.f32.gmra.mxu0 %v2155
        %v2157 = vpop.f32.mrf.mxu0
        %v2158 = vadd.f32 0.0, %v2157
        %v2159 = vand.u32 %v2089, 4294901760
        %v2160 = vsub.f32 %v2089, %v2159
        %v2161 = vand.u32 %v2160, 4294901760
        %v2162 = vsub.f32 %v2160, %v2161
        %v2163 = vand.u32 %v2162, 4294901760
        %2164 = vmatmul.f32.gmra.mxu0 %v2163
        %v2165 = vpop.f32.mrf.mxu0
        %v2166 = vadd.f32 0.0, %v2165
        %v2167 = vand.u32 %v2092, 4294901760
        %v2168 = vsub.f32 %v2092, %v2167
        %v2169 = vand.u32 %v2168, 4294901760
        %v2170 = vsub.f32 %v2168, %v2169
        %v2171 = vand.u32 %v2170, 4294901760
        %2172 = vmatmul.f32.gmra.mxu0 %v2171
        %v2173 = vpop.f32.mrf.mxu0
        %v2174 = vadd.f32 0.0, %v2173
        %v2175 = vand.u32 %v2095, 4294901760
        %v2176 = vsub.f32 %v2095, %v2175
        %v2177 = vand.u32 %v2176, 4294901760
        %v2178 = vsub.f32 %v2176, %v2177
        %v2179 = vand.u32 %v2178, 4294901760
        %2180 = vmatmul.f32.gmra.mxu0 %v2179
        %v2181 = vpop.f32.mrf.mxu0
        %v2182 = vadd.f32 0.0, %v2181
        %v2183 = vand.u32 %v2098, 4294901760
        %v2184 = vsub.f32 %v2098, %v2183
        %v2185 = vand.u32 %v2184, 4294901760
        %v2186 = vsub.f32 %v2184, %v2185
        %v2187 = vand.u32 %v2186, 4294901760
        %2188 = vmatmul.f32.gmra.mxu0 %v2187
        %v2189 = vpop.f32.mrf.mxu0
        %v2190 = vadd.f32 0.0, %v2189
        %v2191 = vand.u32 %v2101, 4294901760
        %v2192 = vsub.f32 %v2101, %v2191
        %v2193 = vand.u32 %v2192, 4294901760
        %v2194 = vsub.f32 %v2192, %v2193
        %v2195 = vand.u32 %v2194, 4294901760
        %2196 = vmatmul.f32.gmra.mxu0 %v2195
        %v2197 = vpop.f32.mrf.mxu0
        %v2198 = vadd.f32 0.0, %v2197
        %v2199 = vand.u32 %v2104, 4294901760
        %v2200 = vsub.f32 %v2104, %v2199
        %v2201 = vand.u32 %v2200, 4294901760
        %v2202 = vsub.f32 %v2200, %v2201
        %v2203 = vand.u32 %v2202, 4294901760
        %2204 = vmatmul.f32.gmra.mxu0 %v2203
        %v2205 = vpop.f32.mrf.mxu0
        %v2206 = vadd.f32 0.0, %v2205
        %v2207 = vand.u32 %v2107, 4294901760
        %v2208 = vsub.f32 %v2107, %v2207
        %v2209 = vand.u32 %v2208, 4294901760
        %v2210 = vsub.f32 %v2208, %v2209
        %v2211 = vand.u32 %v2210, 4294901760
        %2212 = vmatmul.f32.gmra.mxu0 %v2211
        %v2213 = vpop.f32.mrf.mxu0
        %v2214 = vadd.f32 0.0, %v2213
        %v2215 = vand.u32 %v2110, 4294901760
        %v2216 = vsub.f32 %v2110, %v2215
        %v2217 = vand.u32 %v2216, 4294901760
        %v2218 = vsub.f32 %v2216, %v2217
        %v2219 = vand.u32 %v2218, 4294901760
        %2220 = vmatmul.f32.gmra.mxu0 %v2219
        %v2221 = vpop.f32.mrf.mxu0
        %v2222 = vadd.f32 0.0, %v2221
        %v2223 = vand.u32 %v2113, 4294901760
        %v2224 = vsub.f32 %v2113, %v2223
        %v2225 = vand.u32 %v2224, 4294901760
        %v2226 = vsub.f32 %v2224, %v2225
        %v2227 = vand.u32 %v2226, 4294901760
        %2228 = vmatmul.f32.gmra.mxu0 %v2227
        %v2229 = vpop.f32.mrf.mxu0
        %v2230 = vadd.f32 0.0, %v2229
        %v2231 = vand.u32 %v2116, 4294901760
        %v2232 = vsub.f32 %v2116, %v2231
        %v2233 = vand.u32 %v2232, 4294901760
        %v2234 = vsub.f32 %v2232, %v2233
        %v2235 = vand.u32 %v2234, 4294901760
        %2236 = vmatmul.f32.gmra.mxu0 %v2235
        %v2237 = vpop.f32.mrf.mxu0
        %v2238 = vadd.f32 0.0, %v2237
        %v2239 = vand.u32 %v2119, 4294901760
        %v2240 = vsub.f32 %v2119, %v2239
        %v2241 = vand.u32 %v2240, 4294901760
        %v2242 = vsub.f32 %v2240, %v2241
        %v2243 = vand.u32 %v2242, 4294901760
        %2244 = vmatmul.f32.gmra.mxu0 %v2243
        %v2245 = vpop.f32.mrf.mxu0
        %v2246 = vadd.f32 0.0, %v2245
        %v2247 = vand.u32 %v2122, 4294901760
        %v2248 = vsub.f32 %v2122, %v2247
        %v2249 = vand.u32 %v2248, 4294901760
        %v2250 = vsub.f32 %v2248, %v2249
        %v2251 = vand.u32 %v2250, 4294901760
        %2252 = vmatmul.f32.gmra.mxu0 %v2251
        %v2253 = vpop.f32.mrf.mxu0
        %v2254 = vadd.f32 0.0, %v2253
        %v2255 = vand.u32 %v2125, 4294901760
        %v2256 = vsub.f32 %v2125, %v2255
        %v2257 = vand.u32 %v2256, 4294901760
        %v2258 = vsub.f32 %v2256, %v2257
        %v2259 = vand.u32 %v2258, 4294901760
        %2260 = vmatmul.f32.gmra.mxu0 %v2259
        %v2261 = vpop.f32.mrf.mxu0
        %v2262 = vadd.f32 0.0, %v2261
        %v2263 = vand.u32 %v2128, 4294901760
        %v2264 = vsub.f32 %v2128, %v2263
        %v2265 = vand.u32 %v2264, 4294901760
        %v2266 = vsub.f32 %v2264, %v2265
        %v2267 = vand.u32 %v2266, 4294901760
        %2268 = vmatmul.f32.gmra.mxu0 %v2267
        %v2269 = vpop.f32.mrf.mxu0
        %v2270 = vadd.f32 0.0, %v2269
        %v2271 = vand.u32 %v2131, 4294901760
        %v2272 = vsub.f32 %v2131, %v2271
        %v2273 = vand.u32 %v2272, 4294901760
        %v2274 = vsub.f32 %v2272, %v2273
        %v2275 = vand.u32 %v2274, 4294901760
        %2276 = vmatmul.f32.gmra.mxu0 %v2275
        %v2277 = vpop.f32.mrf.mxu0
        %v2278 = vadd.f32 0.0, %v2277
        %2279 = vdwg.mxu0
        %2280 = vmatpush.msra.mxu0 0.0
        %2281 = vmatpush.msra.mxu0 0.0
        %2282 = vmatpush.msra.mxu0 0.0
        %2283 = vmatpush.msra.mxu0 0.0
        %2284 = vmatpush.msra.mxu0 0.0
        %2285 = vmatpush.msra.mxu0 0.0
        %2286 = vmatpush.msra.mxu0 0.0
        %2287 = vmatpush.msra.mxu0 0.0
        %2288 = vmatpush.msra.mxu0 0.0
        %2289 = vmatpush.msra.mxu0 0.0
        %2290 = vmatpush.msra.mxu0 0.0
        %2291 = vmatpush.msra.mxu0 0.0
        %2292 = vmatpush.msra.mxu0 0.0
        %2293 = vmatpush.msra.mxu0 0.0
        %v2294 = vand.u32 %v2084, 4294901760
        %v2295 = vsub.f32 %v2084, %v2294
        %v2296 = vand.u32 %v2295, 4294901760
        %v2297 = vsub.f32 %v2295, %v2296
        %v2298 = vand.u32 %v2297, 4294901760
        %2299 = vmatpush.msra.mxu0 %v2298
        %v2300 = vand.u32 %v2083, 4294901760
        %v2301 = vsub.f32 %v2083, %v2300
        %v2302 = vand.u32 %v2301, 4294901760
        %v2303 = vsub.f32 %v2301, %v2302
        %v2304 = vand.u32 %v2303, 4294901760
        %2305 = vmatpush.msra.mxu0 %v2304
        %v2306 = vand.u32 %v2086, 4294901760
        %2307 = vmatmul.f32.gmra.mxu0 %v2306
        %v2308 = vpop.f32.mrf.mxu0
        %v2309 = vadd.f32 %v2158, %v2308
        %v2310 = vand.u32 %v2089, 4294901760
        %2311 = vmatmul.f32.gmra.mxu0 %v2310
        %v2312 = vpop.f32.mrf.mxu0
        %v2313 = vadd.f32 %v2166, %v2312
        %v2314 = vand.u32 %v2092, 4294901760
        %2315 = vmatmul.f32.gmra.mxu0 %v2314
        %v2316 = vpop.f32.mrf.mxu0
        %v2317 = vadd.f32 %v2174, %v2316
        %v2318 = vand.u32 %v2095, 4294901760
        %2319 = vmatmul.f32.gmra.mxu0 %v2318
        %v2320 = vpop.f32.mrf.mxu0
        %v2321 = vadd.f32 %v2182, %v2320
        %v2322 = vand.u32 %v2098, 4294901760
        %2323 = vmatmul.f32.gmra.mxu0 %v2322
        %v2324 = vpop.f32.mrf.mxu0
        %v2325 = vadd.f32 %v2190, %v2324
        %v2326 = vand.u32 %v2101, 4294901760
        %2327 = vmatmul.f32.gmra.mxu0 %v2326
        %v2328 = vpop.f32.mrf.mxu0
        %v2329 = vadd.f32 %v2198, %v2328
        %v2330 = vand.u32 %v2104, 4294901760
        %2331 = vmatmul.f32.gmra.mxu0 %v2330
        %v2332 = vpop.f32.mrf.mxu0
        %v2333 = vadd.f32 %v2206, %v2332
        %v2334 = vand.u32 %v2107, 4294901760
        %2335 = vmatmul.f32.gmra.mxu0 %v2334
        %v2336 = vpop.f32.mrf.mxu0
        %v2337 = vadd.f32 %v2214, %v2336
        %v2338 = vand.u32 %v2110, 4294901760
        %2339 = vmatmul.f32.gmra.mxu0 %v2338
        %v2340 = vpop.f32.mrf.mxu0
        %v2341 = vadd.f32 %v2222, %v2340
        %v2342 = vand.u32 %v2113, 4294901760
        %2343 = vmatmul.f32.gmra.mxu0 %v2342
        %v2344 = vpop.f32.mrf.mxu0
        %v2345 = vadd.f32 %v2230, %v2344
        %v2346 = vand.u32 %v2116, 4294901760
        %2347 = vmatmul.f32.gmra.mxu0 %v2346
        %v2348 = vpop.f32.mrf.mxu0
        %v2349 = vadd.f32 %v2238, %v2348
        %v2350 = vand.u32 %v2119, 4294901760
        %2351 = vmatmul.f32.gmra.mxu0 %v2350
        %v2352 = vpop.f32.mrf.mxu0
        %v2353 = vadd.f32 %v2246, %v2352
        %v2354 = vand.u32 %v2122, 4294901760
        %2355 = vmatmul.f32.gmra.mxu0 %v2354
        %v2356 = vpop.f32.mrf.mxu0
        %v2357 = vadd.f32 %v2254, %v2356
        %v2358 = vand.u32 %v2125, 4294901760
        %2359 = vmatmul.f32.gmra.mxu0 %v2358
        %v2360 = vpop.f32.mrf.mxu0
        %v2361 = vadd.f32 %v2262, %v2360
        %v2362 = vand.u32 %v2128, 4294901760
        %2363 = vmatmul.f32.gmra.mxu0 %v2362
        %v2364 = vpop.f32.mrf.mxu0
        %v2365 = vadd.f32 %v2270, %v2364
        %v2366 = vand.u32 %v2131, 4294901760
        %2367 = vmatmul.f32.gmra.mxu0 %v2366
        %v2368 = vpop.f32.mrf.mxu0
        %v2369 = vadd.f32 %v2278, %v2368
        %2370 = vdwg.mxu0
        %2371 = vmatpush.msra.mxu0 0.0
        %2372 = vmatpush.msra.mxu0 0.0
        %2373 = vmatpush.msra.mxu0 0.0
        %2374 = vmatpush.msra.mxu0 0.0
        %2375 = vmatpush.msra.mxu0 0.0
        %2376 = vmatpush.msra.mxu0 0.0
        %2377 = vmatpush.msra.mxu0 0.0
        %2378 = vmatpush.msra.mxu0 0.0
        %2379 = vmatpush.msra.mxu0 0.0
        %2380 = vmatpush.msra.mxu0 0.0
        %2381 = vmatpush.msra.mxu0 0.0
        %2382 = vmatpush.msra.mxu0 0.0
        %2383 = vmatpush.msra.mxu0 0.0
        %2384 = vmatpush.msra.mxu0 0.0
        %v2385 = vand.u32 %v2084, 4294901760
        %v2386 = vsub.f32 %v2084, %v2385
        %2387 = vmatpush.msra.mxu0 %v2386
        %v2388 = vand.u32 %v2083, 4294901760
        %v2389 = vsub.f32 %v2083, %v2388
        %2390 = vmatpush.msra.mxu0 %v2389
        %v2391 = vand.u32 %v2086, 4294901760
        %v2392 = vsub.f32 %v2086, %v2391
        %2393 = vmatmul.f32.gmra.mxu0 %v2392
        %v2394 = vpop.f32.mrf.mxu0
        %v2395 = vadd.f32 %v2309, %v2394
        %v2396 = vand.u32 %v2089, 4294901760
        %v2397 = vsub.f32 %v2089, %v2396
        %2398 = vmatmul.f32.gmra.mxu0 %v2397
        %v2399 = vpop.f32.mrf.mxu0
        %v2400 = vadd.f32 %v2313, %v2399
        %v2401 = vand.u32 %v2092, 4294901760
        %v2402 = vsub.f32 %v2092, %v2401
        %2403 = vmatmul.f32.gmra.mxu0 %v2402
        %v2404 = vpop.f32.mrf.mxu0
        %v2405 = vadd.f32 %v2317, %v2404
        %v2406 = vand.u32 %v2095, 4294901760
        %v2407 = vsub.f32 %v2095, %v2406
        %2408 = vmatmul.f32.gmra.mxu0 %v2407
        %v2409 = vpop.f32.mrf.mxu0
        %v2410 = vadd.f32 %v2321, %v2409
        %v2411 = vand.u32 %v2098, 4294901760
        %v2412 = vsub.f32 %v2098, %v2411
        %2413 = vmatmul.f32.gmra.mxu0 %v2412
        %v2414 = vpop.f32.mrf.mxu0
        %v2415 = vadd.f32 %v2325, %v2414
        %v2416 = vand.u32 %v2101, 4294901760
        %v2417 = vsub.f32 %v2101, %v2416
        %2418 = vmatmul.f32.gmra.mxu0 %v2417
        %v2419 = vpop.f32.mrf.mxu0
        %v2420 = vadd.f32 %v2329, %v2419
        %v2421 = vand.u32 %v2104, 4294901760
        %v2422 = vsub.f32 %v2104, %v2421
        %2423 = vmatmul.f32.gmra.mxu0 %v2422
        %v2424 = vpop.f32.mrf.mxu0
        %v2425 = vadd.f32 %v2333, %v2424
        %v2426 = vand.u32 %v2107, 4294901760
        %v2427 = vsub.f32 %v2107, %v2426
        %2428 = vmatmul.f32.gmra.mxu0 %v2427
        %v2429 = vpop.f32.mrf.mxu0
        %v2430 = vadd.f32 %v2337, %v2429
        %v2431 = vand.u32 %v2110, 4294901760
        %v2432 = vsub.f32 %v2110, %v2431
        %2433 = vmatmul.f32.gmra.mxu0 %v2432
        %v2434 = vpop.f32.mrf.mxu0
        %v2435 = vadd.f32 %v2341, %v2434
        %v2436 = vand.u32 %v2113, 4294901760
        %v2437 = vsub.f32 %v2113, %v2436
        %2438 = vmatmul.f32.gmra.mxu0 %v2437
        %v2439 = vpop.f32.mrf.mxu0
        %v2440 = vadd.f32 %v2345, %v2439
        %v2441 = vand.u32 %v2116, 4294901760
        %v2442 = vsub.f32 %v2116, %v2441
        %2443 = vmatmul.f32.gmra.mxu0 %v2442
        %v2444 = vpop.f32.mrf.mxu0
        %v2445 = vadd.f32 %v2349, %v2444
        %v2446 = vand.u32 %v2119, 4294901760
        %v2447 = vsub.f32 %v2119, %v2446
        %2448 = vmatmul.f32.gmra.mxu0 %v2447
        %v2449 = vpop.f32.mrf.mxu0
        %v2450 = vadd.f32 %v2353, %v2449
        %v2451 = vand.u32 %v2122, 4294901760
        %v2452 = vsub.f32 %v2122, %v2451
        %2453 = vmatmul.f32.gmra.mxu0 %v2452
        %v2454 = vpop.f32.mrf.mxu0
        %v2455 = vadd.f32 %v2357, %v2454
        %v2456 = vand.u32 %v2125, 4294901760
        %v2457 = vsub.f32 %v2125, %v2456
        %2458 = vmatmul.f32.gmra.mxu0 %v2457
        %v2459 = vpop.f32.mrf.mxu0
        %v2460 = vadd.f32 %v2361, %v2459
        %v2461 = vand.u32 %v2128, 4294901760
        %v2462 = vsub.f32 %v2128, %v2461
        %2463 = vmatmul.f32.gmra.mxu0 %v2462
        %v2464 = vpop.f32.mrf.mxu0
        %v2465 = vadd.f32 %v2365, %v2464
        %v2466 = vand.u32 %v2131, 4294901760
        %v2467 = vsub.f32 %v2131, %v2466
        %2468 = vmatmul.f32.gmra.mxu0 %v2467
        %v2469 = vpop.f32.mrf.mxu0
        %v2470 = vadd.f32 %v2369, %v2469
        %2471 = vdwg.mxu0
        %2472 = vmatpush.msra.mxu0 0.0
        %2473 = vmatpush.msra.mxu0 0.0
        %2474 = vmatpush.msra.mxu0 0.0
        %2475 = vmatpush.msra.mxu0 0.0
        %2476 = vmatpush.msra.mxu0 0.0
        %2477 = vmatpush.msra.mxu0 0.0
        %2478 = vmatpush.msra.mxu0 0.0
        %2479 = vmatpush.msra.mxu0 0.0
        %2480 = vmatpush.msra.mxu0 0.0
        %2481 = vmatpush.msra.mxu0 0.0
        %2482 = vmatpush.msra.mxu0 0.0
        %2483 = vmatpush.msra.mxu0 0.0
        %2484 = vmatpush.msra.mxu0 0.0
        %2485 = vmatpush.msra.mxu0 0.0
        %v2486 = vand.u32 %v2084, 4294901760
        %2487 = vmatpush.msra.mxu0 %v2486
        %v2488 = vand.u32 %v2083, 4294901760
        %2489 = vmatpush.msra.mxu0 %v2488
        %v2490 = vand.u32 %v2086, 4294901760
        %v2491 = vsub.f32 %v2086, %v2490
        %v2492 = vand.u32 %v2491, 4294901760
        %2493 = vmatmul.f32.gmra.mxu0 %v2492
        %v2494 = vpop.f32.mrf.mxu0
        %v2495 = vadd.f32 %v2395, %v2494
        %v2496 = vand.u32 %v2089, 4294901760
        %v2497 = vsub.f32 %v2089, %v2496
        %v2498 = vand.u32 %v2497, 4294901760
        %2499 = vmatmul.f32.gmra.mxu0 %v2498
        %v2500 = vpop.f32.mrf.mxu0
        %v2501 = vadd.f32 %v2400, %v2500
        %v2502 = vand.u32 %v2092, 4294901760
        %v2503 = vsub.f32 %v2092, %v2502
        %v2504 = vand.u32 %v2503, 4294901760
        %2505 = vmatmul.f32.gmra.mxu0 %v2504
        %v2506 = vpop.f32.mrf.mxu0
        %v2507 = vadd.f32 %v2405, %v2506
        %v2508 = vand.u32 %v2095, 4294901760
        %v2509 = vsub.f32 %v2095, %v2508
        %v2510 = vand.u32 %v2509, 4294901760
        %2511 = vmatmul.f32.gmra.mxu0 %v2510
        %v2512 = vpop.f32.mrf.mxu0
        %v2513 = vadd.f32 %v2410, %v2512
        %v2514 = vand.u32 %v2098, 4294901760
        %v2515 = vsub.f32 %v2098, %v2514
        %v2516 = vand.u32 %v2515, 4294901760
        %2517 = vmatmul.f32.gmra.mxu0 %v2516
        %v2518 = vpop.f32.mrf.mxu0
        %v2519 = vadd.f32 %v2415, %v2518
        %v2520 = vand.u32 %v2101, 4294901760
        %v2521 = vsub.f32 %v2101, %v2520
        %v2522 = vand.u32 %v2521, 4294901760
        %2523 = vmatmul.f32.gmra.mxu0 %v2522
        %v2524 = vpop.f32.mrf.mxu0
        %v2525 = vadd.f32 %v2420, %v2524
        %v2526 = vand.u32 %v2104, 4294901760
        %v2527 = vsub.f32 %v2104, %v2526
        %v2528 = vand.u32 %v2527, 4294901760
        %2529 = vmatmul.f32.gmra.mxu0 %v2528
        %v2530 = vpop.f32.mrf.mxu0
        %v2531 = vadd.f32 %v2425, %v2530
        %v2532 = vand.u32 %v2107, 4294901760
        %v2533 = vsub.f32 %v2107, %v2532
        %v2534 = vand.u32 %v2533, 4294901760
        %2535 = vmatmul.f32.gmra.mxu0 %v2534
        %v2536 = vpop.f32.mrf.mxu0
        %v2537 = vadd.f32 %v2430, %v2536
        %v2538 = vand.u32 %v2110, 4294901760
        %v2539 = vsub.f32 %v2110, %v2538
        %v2540 = vand.u32 %v2539, 4294901760
        %2541 = vmatmul.f32.gmra.mxu0 %v2540
        %v2542 = vpop.f32.mrf.mxu0
        %v2543 = vadd.f32 %v2435, %v2542
        %v2544 = vand.u32 %v2113, 4294901760
        %v2545 = vsub.f32 %v2113, %v2544
        %v2546 = vand.u32 %v2545, 4294901760
        %2547 = vmatmul.f32.gmra.mxu0 %v2546
        %v2548 = vpop.f32.mrf.mxu0
        %v2549 = vadd.f32 %v2440, %v2548
        %v2550 = vand.u32 %v2116, 4294901760
        %v2551 = vsub.f32 %v2116, %v2550
        %v2552 = vand.u32 %v2551, 4294901760
        %2553 = vmatmul.f32.gmra.mxu0 %v2552
        %v2554 = vpop.f32.mrf.mxu0
        %v2555 = vadd.f32 %v2445, %v2554
        %v2556 = vand.u32 %v2119, 4294901760
        %v2557 = vsub.f32 %v2119, %v2556
        %v2558 = vand.u32 %v2557, 4294901760
        %2559 = vmatmul.f32.gmra.mxu0 %v2558
        %v2560 = vpop.f32.mrf.mxu0
        %v2561 = vadd.f32 %v2450, %v2560
        %v2562 = vand.u32 %v2122, 4294901760
        %v2563 = vsub.f32 %v2122, %v2562
        %v2564 = vand.u32 %v2563, 4294901760
        %2565 = vmatmul.f32.gmra.mxu0 %v2564
        %v2566 = vpop.f32.mrf.mxu0
        %v2567 = vadd.f32 %v2455, %v2566
        %v2568 = vand.u32 %v2125, 4294901760
        %v2569 = vsub.f32 %v2125, %v2568
        %v2570 = vand.u32 %v2569, 4294901760
        %2571 = vmatmul.f32.gmra.mxu0 %v2570
        %v2572 = vpop.f32.mrf.mxu0
        %v2573 = vadd.f32 %v2460, %v2572
        %v2574 = vand.u32 %v2128, 4294901760
        %v2575 = vsub.f32 %v2128, %v2574
        %v2576 = vand.u32 %v2575, 4294901760
        %2577 = vmatmul.f32.gmra.mxu0 %v2576
        %v2578 = vpop.f32.mrf.mxu0
        %v2579 = vadd.f32 %v2465, %v2578
        %v2580 = vand.u32 %v2131, 4294901760
        %v2581 = vsub.f32 %v2131, %v2580
        %v2582 = vand.u32 %v2581, 4294901760
        %2583 = vmatmul.f32.gmra.mxu0 %v2582
        %v2584 = vpop.f32.mrf.mxu0
        %v2585 = vadd.f32 %v2470, %v2584
        %2586 = vdwg.mxu0
        %2587 = vmatpush.msra.mxu0 0.0
        %2588 = vmatpush.msra.mxu0 0.0
        %2589 = vmatpush.msra.mxu0 0.0
        %2590 = vmatpush.msra.mxu0 0.0
        %2591 = vmatpush.msra.mxu0 0.0
        %2592 = vmatpush.msra.mxu0 0.0
        %2593 = vmatpush.msra.mxu0 0.0
        %2594 = vmatpush.msra.mxu0 0.0
        %2595 = vmatpush.msra.mxu0 0.0
        %2596 = vmatpush.msra.mxu0 0.0
        %2597 = vmatpush.msra.mxu0 0.0
        %2598 = vmatpush.msra.mxu0 0.0
        %2599 = vmatpush.msra.mxu0 0.0
        %2600 = vmatpush.msra.mxu0 0.0
        %v2601 = vand.u32 %v2084, 4294901760
        %v2602 = vsub.f32 %v2084, %v2601
        %v2603 = vand.u32 %v2602, 4294901760
        %2604 = vmatpush.msra.mxu0 %v2603
        %v2605 = vand.u32 %v2083, 4294901760
        %v2606 = vsub.f32 %v2083, %v2605
        %v2607 = vand.u32 %v2606, 4294901760
        %2608 = vmatpush.msra.mxu0 %v2607
        %v2609 = vand.u32 %v2086, 4294901760
        %2610 = vmatmul.f32.gmra.mxu0 %v2609
        %v2611 = vpop.f32.mrf.mxu0
        %v2612 = vadd.f32 %v2495, %v2611
        %v2613 = vand.u32 %v2089, 4294901760
        %2614 = vmatmul.f32.gmra.mxu0 %v2613
        %v2615 = vpop.f32.mrf.mxu0
        %v2616 = vadd.f32 %v2501, %v2615
        %v2617 = vand.u32 %v2092, 4294901760
        %2618 = vmatmul.f32.gmra.mxu0 %v2617
        %v2619 = vpop.f32.mrf.mxu0
        %v2620 = vadd.f32 %v2507, %v2619
        %v2621 = vand.u32 %v2095, 4294901760
        %2622 = vmatmul.f32.gmra.mxu0 %v2621
        %v2623 = vpop.f32.mrf.mxu0
        %v2624 = vadd.f32 %v2513, %v2623
        %v2625 = vand.u32 %v2098, 4294901760
        %2626 = vmatmul.f32.gmra.mxu0 %v2625
        %v2627 = vpop.f32.mrf.mxu0
        %v2628 = vadd.f32 %v2519, %v2627
        %v2629 = vand.u32 %v2101, 4294901760
        %2630 = vmatmul.f32.gmra.mxu0 %v2629
        %v2631 = vpop.f32.mrf.mxu0
        %v2632 = vadd.f32 %v2525, %v2631
        %v2633 = vand.u32 %v2104, 4294901760
        %2634 = vmatmul.f32.gmra.mxu0 %v2633
        %v2635 = vpop.f32.mrf.mxu0
        %v2636 = vadd.f32 %v2531, %v2635
        %v2637 = vand.u32 %v2107, 4294901760
        %2638 = vmatmul.f32.gmra.mxu0 %v2637
        %v2639 = vpop.f32.mrf.mxu0
        %v2640 = vadd.f32 %v2537, %v2639
        %v2641 = vand.u32 %v2110, 4294901760
        %2642 = vmatmul.f32.gmra.mxu0 %v2641
        %v2643 = vpop.f32.mrf.mxu0
        %v2644 = vadd.f32 %v2543, %v2643
        %v2645 = vand.u32 %v2113, 4294901760
        %2646 = vmatmul.f32.gmra.mxu0 %v2645
        %v2647 = vpop.f32.mrf.mxu0
        %v2648 = vadd.f32 %v2549, %v2647
        %v2649 = vand.u32 %v2116, 4294901760
        %2650 = vmatmul.f32.gmra.mxu0 %v2649
        %v2651 = vpop.f32.mrf.mxu0
        %v2652 = vadd.f32 %v2555, %v2651
        %v2653 = vand.u32 %v2119, 4294901760
        %2654 = vmatmul.f32.gmra.mxu0 %v2653
        %v2655 = vpop.f32.mrf.mxu0
        %v2656 = vadd.f32 %v2561, %v2655
        %v2657 = vand.u32 %v2122, 4294901760
        %2658 = vmatmul.f32.gmra.mxu0 %v2657
        %v2659 = vpop.f32.mrf.mxu0
        %v2660 = vadd.f32 %v2567, %v2659
        %v2661 = vand.u32 %v2125, 4294901760
        %2662 = vmatmul.f32.gmra.mxu0 %v2661
        %v2663 = vpop.f32.mrf.mxu0
        %v2664 = vadd.f32 %v2573, %v2663
        %v2665 = vand.u32 %v2128, 4294901760
        %2666 = vmatmul.f32.gmra.mxu0 %v2665
        %v2667 = vpop.f32.mrf.mxu0
        %v2668 = vadd.f32 %v2579, %v2667
        %v2669 = vand.u32 %v2131, 4294901760
        %2670 = vmatmul.f32.gmra.mxu0 %v2669
        %v2671 = vpop.f32.mrf.mxu0
        %v2672 = vadd.f32 %v2585, %v2671
        %2673 = vdwg.mxu0
        %2674 = vmatpush.msra.mxu0 0.0
        %2675 = vmatpush.msra.mxu0 0.0
        %2676 = vmatpush.msra.mxu0 0.0
        %2677 = vmatpush.msra.mxu0 0.0
        %2678 = vmatpush.msra.mxu0 0.0
        %2679 = vmatpush.msra.mxu0 0.0
        %2680 = vmatpush.msra.mxu0 0.0
        %2681 = vmatpush.msra.mxu0 0.0
        %2682 = vmatpush.msra.mxu0 0.0
        %2683 = vmatpush.msra.mxu0 0.0
        %2684 = vmatpush.msra.mxu0 0.0
        %2685 = vmatpush.msra.mxu0 0.0
        %2686 = vmatpush.msra.mxu0 0.0
        %2687 = vmatpush.msra.mxu0 0.0
        %v2688 = vand.u32 %v2084, 4294901760
        %2689 = vmatpush.msra.mxu0 %v2688
        %v2690 = vand.u32 %v2083, 4294901760
        %2691 = vmatpush.msra.mxu0 %v2690
        %v2692 = vand.u32 %v2086, 4294901760
        %2693 = vmatmul.f32.gmra.mxu0 %v2692
        %v2694 = vpop.f32.mrf.mxu0
        %v2695 = vadd.f32 %v2612, %v2694
        %v2696 = vand.u32 %v2089, 4294901760
        %2697 = vmatmul.f32.gmra.mxu0 %v2696
        %v2698 = vpop.f32.mrf.mxu0
        %v2699 = vadd.f32 %v2616, %v2698
        %v2700 = vand.u32 %v2092, 4294901760
        %2701 = vmatmul.f32.gmra.mxu0 %v2700
        %v2702 = vpop.f32.mrf.mxu0
        %v2703 = vadd.f32 %v2620, %v2702
        %v2704 = vand.u32 %v2095, 4294901760
        %2705 = vmatmul.f32.gmra.mxu0 %v2704
        %v2706 = vpop.f32.mrf.mxu0
        %v2707 = vadd.f32 %v2624, %v2706
        %v2708 = vand.u32 %v2098, 4294901760
        %2709 = vmatmul.f32.gmra.mxu0 %v2708
        %v2710 = vpop.f32.mrf.mxu0
        %v2711 = vadd.f32 %v2628, %v2710
        %v2712 = vand.u32 %v2101, 4294901760
        %2713 = vmatmul.f32.gmra.mxu0 %v2712
        %v2714 = vpop.f32.mrf.mxu0
        %v2715 = vadd.f32 %v2632, %v2714
        %v2716 = vand.u32 %v2104, 4294901760
        %2717 = vmatmul.f32.gmra.mxu0 %v2716
        %v2718 = vpop.f32.mrf.mxu0
        %v2719 = vadd.f32 %v2636, %v2718
        %v2720 = vand.u32 %v2107, 4294901760
        %2721 = vmatmul.f32.gmra.mxu0 %v2720
        %v2722 = vpop.f32.mrf.mxu0
        %v2723 = vadd.f32 %v2640, %v2722
        %v2724 = vand.u32 %v2110, 4294901760
        %2725 = vmatmul.f32.gmra.mxu0 %v2724
        %v2726 = vpop.f32.mrf.mxu0
        %v2727 = vadd.f32 %v2644, %v2726
        %v2728 = vand.u32 %v2113, 4294901760
        %2729 = vmatmul.f32.gmra.mxu0 %v2728
        %v2730 = vpop.f32.mrf.mxu0
        %v2731 = vadd.f32 %v2648, %v2730
        %v2732 = vand.u32 %v2116, 4294901760
        %2733 = vmatmul.f32.gmra.mxu0 %v2732
        %v2734 = vpop.f32.mrf.mxu0
        %v2735 = vadd.f32 %v2652, %v2734
        %v2736 = vand.u32 %v2119, 4294901760
        %2737 = vmatmul.f32.gmra.mxu0 %v2736
        %v2738 = vpop.f32.mrf.mxu0
        %v2739 = vadd.f32 %v2656, %v2738
        %v2740 = vand.u32 %v2122, 4294901760
        %2741 = vmatmul.f32.gmra.mxu0 %v2740
        %v2742 = vpop.f32.mrf.mxu0
        %v2743 = vadd.f32 %v2660, %v2742
        %v2744 = vand.u32 %v2125, 4294901760
        %2745 = vmatmul.f32.gmra.mxu0 %v2744
        %v2746 = vpop.f32.mrf.mxu0
        %v2747 = vadd.f32 %v2664, %v2746
        %v2748 = vand.u32 %v2128, 4294901760
        %2749 = vmatmul.f32.gmra.mxu0 %v2748
        %v2750 = vpop.f32.mrf.mxu0
        %v2751 = vadd.f32 %v2668, %v2750
        %v2752 = vand.u32 %v2131, 4294901760
        %2753 = vmatmul.f32.gmra.mxu0 %v2752
        %v2754 = vpop.f32.mrf.mxu0
        %v2755 = vadd.f32 %v2672, %v2754
        %2756 = vdwg.mxu0
        %v2758 = vsel %vm592, %v2061, 0
        %v2761 = vsel %vm592, %v2062, 0
        %2763 = vmatpush.msra.mxu0 0.0
        %2764 = vmatpush.msra.mxu0 0.0
        %2765 = vmatpush.msra.mxu0 0.0
        %2766 = vmatpush.msra.mxu0 0.0
        %2767 = vmatpush.msra.mxu0 0.0
        %2768 = vmatpush.msra.mxu0 0.0
        %2769 = vmatpush.msra.mxu0 0.0
        %2770 = vmatpush.msra.mxu0 0.0
        %2771 = vmatpush.msra.mxu0 0.0
        %2772 = vmatpush.msra.mxu0 0.0
        %2773 = vmatpush.msra.mxu0 0.0
        %2774 = vmatpush.msra.mxu0 0.0
        %2775 = vmatpush.msra.mxu0 0.0
        %2776 = vmatpush.msra.mxu0 0.0
        %v2777 = vand.u32 %v2079, 4294901760
        %2778 = vmatpush.msra.mxu0 %v2777
        %v2779 = vand.u32 %v2078, 4294901760
        %2780 = vmatpush.msra.mxu0 %v2779
        %v2781 = vand.u32 %v2758, 4294901760
        %v2782 = vsub.f32 %v2758, %v2781
        %v2783 = vand.u32 %v2782, 4294901760
        %v2784 = vsub.f32 %v2782, %v2783
        %v2785 = vand.u32 %v2784, 4294901760
        %2786 = vmatmul.f32.gmra.mxu0 %v2785
        %v2787 = vpop.f32.mrf.mxu0
        %v2788 = vadd.f32 %v2695, %v2787
        %v2789 = vand.u32 %v2761, 4294901760
        %v2790 = vsub.f32 %v2761, %v2789
        %v2791 = vand.u32 %v2790, 4294901760
        %v2792 = vsub.f32 %v2790, %v2791
        %v2793 = vand.u32 %v2792, 4294901760
        %2794 = vmatmul.f32.gmra.mxu0 %v2793
        %v2795 = vpop.f32.mrf.mxu0
        %v2796 = vadd.f32 %v2699, %v2795
        %v2797 = vand.u32 %v2086, 4294901760
        %v2798 = vsub.f32 %v2086, %v2797
        %v2799 = vand.u32 %v2798, 4294901760
        %v2800 = vsub.f32 %v2798, %v2799
        %v2801 = vand.u32 %v2800, 4294901760
        %2802 = vmatmul.f32.gmra.mxu0 %v2801
        %v2803 = vpop.f32.mrf.mxu0
        %v2804 = vadd.f32 %v2703, %v2803
        %v2805 = vand.u32 %v2089, 4294901760
        %v2806 = vsub.f32 %v2089, %v2805
        %v2807 = vand.u32 %v2806, 4294901760
        %v2808 = vsub.f32 %v2806, %v2807
        %v2809 = vand.u32 %v2808, 4294901760
        %2810 = vmatmul.f32.gmra.mxu0 %v2809
        %v2811 = vpop.f32.mrf.mxu0
        %v2812 = vadd.f32 %v2707, %v2811
        %v2813 = vand.u32 %v2092, 4294901760
        %v2814 = vsub.f32 %v2092, %v2813
        %v2815 = vand.u32 %v2814, 4294901760
        %v2816 = vsub.f32 %v2814, %v2815
        %v2817 = vand.u32 %v2816, 4294901760
        %2818 = vmatmul.f32.gmra.mxu0 %v2817
        %v2819 = vpop.f32.mrf.mxu0
        %v2820 = vadd.f32 %v2711, %v2819
        %v2821 = vand.u32 %v2095, 4294901760
        %v2822 = vsub.f32 %v2095, %v2821
        %v2823 = vand.u32 %v2822, 4294901760
        %v2824 = vsub.f32 %v2822, %v2823
        %v2825 = vand.u32 %v2824, 4294901760
        %2826 = vmatmul.f32.gmra.mxu0 %v2825
        %v2827 = vpop.f32.mrf.mxu0
        %v2828 = vadd.f32 %v2715, %v2827
        %v2829 = vand.u32 %v2098, 4294901760
        %v2830 = vsub.f32 %v2098, %v2829
        %v2831 = vand.u32 %v2830, 4294901760
        %v2832 = vsub.f32 %v2830, %v2831
        %v2833 = vand.u32 %v2832, 4294901760
        %2834 = vmatmul.f32.gmra.mxu0 %v2833
        %v2835 = vpop.f32.mrf.mxu0
        %v2836 = vadd.f32 %v2719, %v2835
        %v2837 = vand.u32 %v2101, 4294901760
        %v2838 = vsub.f32 %v2101, %v2837
        %v2839 = vand.u32 %v2838, 4294901760
        %v2840 = vsub.f32 %v2838, %v2839
        %v2841 = vand.u32 %v2840, 4294901760
        %2842 = vmatmul.f32.gmra.mxu0 %v2841
        %v2843 = vpop.f32.mrf.mxu0
        %v2844 = vadd.f32 %v2723, %v2843
        %v2845 = vand.u32 %v2104, 4294901760
        %v2846 = vsub.f32 %v2104, %v2845
        %v2847 = vand.u32 %v2846, 4294901760
        %v2848 = vsub.f32 %v2846, %v2847
        %v2849 = vand.u32 %v2848, 4294901760
        %2850 = vmatmul.f32.gmra.mxu0 %v2849
        %v2851 = vpop.f32.mrf.mxu0
        %v2852 = vadd.f32 %v2727, %v2851
        %v2853 = vand.u32 %v2107, 4294901760
        %v2854 = vsub.f32 %v2107, %v2853
        %v2855 = vand.u32 %v2854, 4294901760
        %v2856 = vsub.f32 %v2854, %v2855
        %v2857 = vand.u32 %v2856, 4294901760
        %2858 = vmatmul.f32.gmra.mxu0 %v2857
        %v2859 = vpop.f32.mrf.mxu0
        %v2860 = vadd.f32 %v2731, %v2859
        %v2861 = vand.u32 %v2110, 4294901760
        %v2862 = vsub.f32 %v2110, %v2861
        %v2863 = vand.u32 %v2862, 4294901760
        %v2864 = vsub.f32 %v2862, %v2863
        %v2865 = vand.u32 %v2864, 4294901760
        %2866 = vmatmul.f32.gmra.mxu0 %v2865
        %v2867 = vpop.f32.mrf.mxu0
        %v2868 = vadd.f32 %v2735, %v2867
        %v2869 = vand.u32 %v2113, 4294901760
        %v2870 = vsub.f32 %v2113, %v2869
        %v2871 = vand.u32 %v2870, 4294901760
        %v2872 = vsub.f32 %v2870, %v2871
        %v2873 = vand.u32 %v2872, 4294901760
        %2874 = vmatmul.f32.gmra.mxu0 %v2873
        %v2875 = vpop.f32.mrf.mxu0
        %v2876 = vadd.f32 %v2739, %v2875
        %v2877 = vand.u32 %v2116, 4294901760
        %v2878 = vsub.f32 %v2116, %v2877
        %v2879 = vand.u32 %v2878, 4294901760
        %v2880 = vsub.f32 %v2878, %v2879
        %v2881 = vand.u32 %v2880, 4294901760
        %2882 = vmatmul.f32.gmra.mxu0 %v2881
        %v2883 = vpop.f32.mrf.mxu0
        %v2884 = vadd.f32 %v2743, %v2883
        %v2885 = vand.u32 %v2119, 4294901760
        %v2886 = vsub.f32 %v2119, %v2885
        %v2887 = vand.u32 %v2886, 4294901760
        %v2888 = vsub.f32 %v2886, %v2887
        %v2889 = vand.u32 %v2888, 4294901760
        %2890 = vmatmul.f32.gmra.mxu0 %v2889
        %v2891 = vpop.f32.mrf.mxu0
        %v2892 = vadd.f32 %v2747, %v2891
        %v2893 = vand.u32 %v2122, 4294901760
        %v2894 = vsub.f32 %v2122, %v2893
        %v2895 = vand.u32 %v2894, 4294901760
        %v2896 = vsub.f32 %v2894, %v2895
        %v2897 = vand.u32 %v2896, 4294901760
        %2898 = vmatmul.f32.gmra.mxu0 %v2897
        %v2899 = vpop.f32.mrf.mxu0
        %v2900 = vadd.f32 %v2751, %v2899
        %v2901 = vand.u32 %v2125, 4294901760
        %v2902 = vsub.f32 %v2125, %v2901
        %v2903 = vand.u32 %v2902, 4294901760
        %v2904 = vsub.f32 %v2902, %v2903
        %v2905 = vand.u32 %v2904, 4294901760
        %2906 = vmatmul.f32.gmra.mxu0 %v2905
        %v2907 = vpop.f32.mrf.mxu0
        %v2908 = vadd.f32 %v2755, %v2907
        %2909 = vdwg.mxu0
        %2910 = vmatpush.msra.mxu0 0.0
        %2911 = vmatpush.msra.mxu0 0.0
        %2912 = vmatpush.msra.mxu0 0.0
        %2913 = vmatpush.msra.mxu0 0.0
        %2914 = vmatpush.msra.mxu0 0.0
        %2915 = vmatpush.msra.mxu0 0.0
        %2916 = vmatpush.msra.mxu0 0.0
        %2917 = vmatpush.msra.mxu0 0.0
        %2918 = vmatpush.msra.mxu0 0.0
        %2919 = vmatpush.msra.mxu0 0.0
        %2920 = vmatpush.msra.mxu0 0.0
        %2921 = vmatpush.msra.mxu0 0.0
        %2922 = vmatpush.msra.mxu0 0.0
        %2923 = vmatpush.msra.mxu0 0.0
        %v2924 = vand.u32 %v2079, 4294901760
        %v2925 = vsub.f32 %v2079, %v2924
        %v2926 = vand.u32 %v2925, 4294901760
        %v2927 = vsub.f32 %v2925, %v2926
        %v2928 = vand.u32 %v2927, 4294901760
        %2929 = vmatpush.msra.mxu0 %v2928
        %v2930 = vand.u32 %v2078, 4294901760
        %v2931 = vsub.f32 %v2078, %v2930
        %v2932 = vand.u32 %v2931, 4294901760
        %v2933 = vsub.f32 %v2931, %v2932
        %v2934 = vand.u32 %v2933, 4294901760
        %2935 = vmatpush.msra.mxu0 %v2934
        %v2936 = vand.u32 %v2758, 4294901760
        %2937 = vmatmul.f32.gmra.mxu0 %v2936
        %v2938 = vpop.f32.mrf.mxu0
        %v2939 = vadd.f32 %v2788, %v2938
        %v2940 = vand.u32 %v2761, 4294901760
        %2941 = vmatmul.f32.gmra.mxu0 %v2940
        %v2942 = vpop.f32.mrf.mxu0
        %v2943 = vadd.f32 %v2796, %v2942
        %v2944 = vand.u32 %v2086, 4294901760
        %2945 = vmatmul.f32.gmra.mxu0 %v2944
        %v2946 = vpop.f32.mrf.mxu0
        %v2947 = vadd.f32 %v2804, %v2946
        %v2948 = vand.u32 %v2089, 4294901760
        %2949 = vmatmul.f32.gmra.mxu0 %v2948
        %v2950 = vpop.f32.mrf.mxu0
        %v2951 = vadd.f32 %v2812, %v2950
        %v2952 = vand.u32 %v2092, 4294901760
        %2953 = vmatmul.f32.gmra.mxu0 %v2952
        %v2954 = vpop.f32.mrf.mxu0
        %v2955 = vadd.f32 %v2820, %v2954
        %v2956 = vand.u32 %v2095, 4294901760
        %2957 = vmatmul.f32.gmra.mxu0 %v2956
        %v2958 = vpop.f32.mrf.mxu0
        %v2959 = vadd.f32 %v2828, %v2958
        %v2960 = vand.u32 %v2098, 4294901760
        %2961 = vmatmul.f32.gmra.mxu0 %v2960
        %v2962 = vpop.f32.mrf.mxu0
        %v2963 = vadd.f32 %v2836, %v2962
        %v2964 = vand.u32 %v2101, 4294901760
        %2965 = vmatmul.f32.gmra.mxu0 %v2964
        %v2966 = vpop.f32.mrf.mxu0
        %v2967 = vadd.f32 %v2844, %v2966
        %v2968 = vand.u32 %v2104, 4294901760
        %2969 = vmatmul.f32.gmra.mxu0 %v2968
        %v2970 = vpop.f32.mrf.mxu0
        %v2971 = vadd.f32 %v2852, %v2970
        %v2972 = vand.u32 %v2107, 4294901760
        %2973 = vmatmul.f32.gmra.mxu0 %v2972
        %v2974 = vpop.f32.mrf.mxu0
        %v2975 = vadd.f32 %v2860, %v2974
        %v2976 = vand.u32 %v2110, 4294901760
        %2977 = vmatmul.f32.gmra.mxu0 %v2976
        %v2978 = vpop.f32.mrf.mxu0
        %v2979 = vadd.f32 %v2868, %v2978
        %v2980 = vand.u32 %v2113, 4294901760
        %2981 = vmatmul.f32.gmra.mxu0 %v2980
        %v2982 = vpop.f32.mrf.mxu0
        %v2983 = vadd.f32 %v2876, %v2982
        %v2984 = vand.u32 %v2116, 4294901760
        %2985 = vmatmul.f32.gmra.mxu0 %v2984
        %v2986 = vpop.f32.mrf.mxu0
        %v2987 = vadd.f32 %v2884, %v2986
        %v2988 = vand.u32 %v2119, 4294901760
        %2989 = vmatmul.f32.gmra.mxu0 %v2988
        %v2990 = vpop.f32.mrf.mxu0
        %v2991 = vadd.f32 %v2892, %v2990
        %v2992 = vand.u32 %v2122, 4294901760
        %2993 = vmatmul.f32.gmra.mxu0 %v2992
        %v2994 = vpop.f32.mrf.mxu0
        %v2995 = vadd.f32 %v2900, %v2994
        %v2996 = vand.u32 %v2125, 4294901760
        %2997 = vmatmul.f32.gmra.mxu0 %v2996
        %v2998 = vpop.f32.mrf.mxu0
        %v2999 = vadd.f32 %v2908, %v2998
        %3000 = vdwg.mxu0
        %3001 = vmatpush.msra.mxu0 0.0
        %3002 = vmatpush.msra.mxu0 0.0
        %3003 = vmatpush.msra.mxu0 0.0
        %3004 = vmatpush.msra.mxu0 0.0
        %3005 = vmatpush.msra.mxu0 0.0
        %3006 = vmatpush.msra.mxu0 0.0
        %3007 = vmatpush.msra.mxu0 0.0
        %3008 = vmatpush.msra.mxu0 0.0
        %3009 = vmatpush.msra.mxu0 0.0
        %3010 = vmatpush.msra.mxu0 0.0
        %3011 = vmatpush.msra.mxu0 0.0
        %3012 = vmatpush.msra.mxu0 0.0
        %3013 = vmatpush.msra.mxu0 0.0
        %3014 = vmatpush.msra.mxu0 0.0
        %v3015 = vand.u32 %v2079, 4294901760
        %v3016 = vsub.f32 %v2079, %v3015
        %3017 = vmatpush.msra.mxu0 %v3016
        %v3018 = vand.u32 %v2078, 4294901760
        %v3019 = vsub.f32 %v2078, %v3018
        %3020 = vmatpush.msra.mxu0 %v3019
        %v3021 = vand.u32 %v2758, 4294901760
        %v3022 = vsub.f32 %v2758, %v3021
        %3023 = vmatmul.f32.gmra.mxu0 %v3022
        %v3024 = vpop.f32.mrf.mxu0
        %v3025 = vadd.f32 %v2939, %v3024
        %v3026 = vand.u32 %v2761, 4294901760
        %v3027 = vsub.f32 %v2761, %v3026
        %3028 = vmatmul.f32.gmra.mxu0 %v3027
        %v3029 = vpop.f32.mrf.mxu0
        %v3030 = vadd.f32 %v2943, %v3029
        %v3031 = vand.u32 %v2086, 4294901760
        %v3032 = vsub.f32 %v2086, %v3031
        %3033 = vmatmul.f32.gmra.mxu0 %v3032
        %v3034 = vpop.f32.mrf.mxu0
        %v3035 = vadd.f32 %v2947, %v3034
        %v3036 = vand.u32 %v2089, 4294901760
        %v3037 = vsub.f32 %v2089, %v3036
        %3038 = vmatmul.f32.gmra.mxu0 %v3037
        %v3039 = vpop.f32.mrf.mxu0
        %v3040 = vadd.f32 %v2951, %v3039
        %v3041 = vand.u32 %v2092, 4294901760
        %v3042 = vsub.f32 %v2092, %v3041
        %3043 = vmatmul.f32.gmra.mxu0 %v3042
        %v3044 = vpop.f32.mrf.mxu0
        %v3045 = vadd.f32 %v2955, %v3044
        %v3046 = vand.u32 %v2095, 4294901760
        %v3047 = vsub.f32 %v2095, %v3046
        %3048 = vmatmul.f32.gmra.mxu0 %v3047
        %v3049 = vpop.f32.mrf.mxu0
        %v3050 = vadd.f32 %v2959, %v3049
        %v3051 = vand.u32 %v2098, 4294901760
        %v3052 = vsub.f32 %v2098, %v3051
        %3053 = vmatmul.f32.gmra.mxu0 %v3052
        %v3054 = vpop.f32.mrf.mxu0
        %v3055 = vadd.f32 %v2963, %v3054
        %v3056 = vand.u32 %v2101, 4294901760
        %v3057 = vsub.f32 %v2101, %v3056
        %3058 = vmatmul.f32.gmra.mxu0 %v3057
        %v3059 = vpop.f32.mrf.mxu0
        %v3060 = vadd.f32 %v2967, %v3059
        %v3061 = vand.u32 %v2104, 4294901760
        %v3062 = vsub.f32 %v2104, %v3061
        %3063 = vmatmul.f32.gmra.mxu0 %v3062
        %v3064 = vpop.f32.mrf.mxu0
        %v3065 = vadd.f32 %v2971, %v3064
        %v3066 = vand.u32 %v2107, 4294901760
        %v3067 = vsub.f32 %v2107, %v3066
        %3068 = vmatmul.f32.gmra.mxu0 %v3067
        %v3069 = vpop.f32.mrf.mxu0
        %v3070 = vadd.f32 %v2975, %v3069
        %v3071 = vand.u32 %v2110, 4294901760
        %v3072 = vsub.f32 %v2110, %v3071
        %3073 = vmatmul.f32.gmra.mxu0 %v3072
        %v3074 = vpop.f32.mrf.mxu0
        %v3075 = vadd.f32 %v2979, %v3074
        %v3076 = vand.u32 %v2113, 4294901760
        %v3077 = vsub.f32 %v2113, %v3076
        %3078 = vmatmul.f32.gmra.mxu0 %v3077
        %v3079 = vpop.f32.mrf.mxu0
        %v3080 = vadd.f32 %v2983, %v3079
        %v3081 = vand.u32 %v2116, 4294901760
        %v3082 = vsub.f32 %v2116, %v3081
        %3083 = vmatmul.f32.gmra.mxu0 %v3082
        %v3084 = vpop.f32.mrf.mxu0
        %v3085 = vadd.f32 %v2987, %v3084
        %v3086 = vand.u32 %v2119, 4294901760
        %v3087 = vsub.f32 %v2119, %v3086
        %3088 = vmatmul.f32.gmra.mxu0 %v3087
        %v3089 = vpop.f32.mrf.mxu0
        %v3090 = vadd.f32 %v2991, %v3089
        %v3091 = vand.u32 %v2122, 4294901760
        %v3092 = vsub.f32 %v2122, %v3091
        %3093 = vmatmul.f32.gmra.mxu0 %v3092
        %v3094 = vpop.f32.mrf.mxu0
        %v3095 = vadd.f32 %v2995, %v3094
        %v3096 = vand.u32 %v2125, 4294901760
        %v3097 = vsub.f32 %v2125, %v3096
        %3098 = vmatmul.f32.gmra.mxu0 %v3097
        %v3099 = vpop.f32.mrf.mxu0
        %v3100 = vadd.f32 %v2999, %v3099
        %3101 = vdwg.mxu0
        %3102 = vmatpush.msra.mxu0 0.0
        %3103 = vmatpush.msra.mxu0 0.0
        %3104 = vmatpush.msra.mxu0 0.0
        %3105 = vmatpush.msra.mxu0 0.0
        %3106 = vmatpush.msra.mxu0 0.0
        %3107 = vmatpush.msra.mxu0 0.0
        %3108 = vmatpush.msra.mxu0 0.0
        %3109 = vmatpush.msra.mxu0 0.0
        %3110 = vmatpush.msra.mxu0 0.0
        %3111 = vmatpush.msra.mxu0 0.0
        %3112 = vmatpush.msra.mxu0 0.0
        %3113 = vmatpush.msra.mxu0 0.0
        %3114 = vmatpush.msra.mxu0 0.0
        %3115 = vmatpush.msra.mxu0 0.0
        %v3116 = vand.u32 %v2079, 4294901760
        %3117 = vmatpush.msra.mxu0 %v3116
        %v3118 = vand.u32 %v2078, 4294901760
        %3119 = vmatpush.msra.mxu0 %v3118
        %v3120 = vand.u32 %v2758, 4294901760
        %v3121 = vsub.f32 %v2758, %v3120
        %v3122 = vand.u32 %v3121, 4294901760
        %3123 = vmatmul.f32.gmra.mxu0 %v3122
        %v3124 = vpop.f32.mrf.mxu0
        %v3125 = vadd.f32 %v3025, %v3124
        %v3126 = vand.u32 %v2761, 4294901760
        %v3127 = vsub.f32 %v2761, %v3126
        %v3128 = vand.u32 %v3127, 4294901760
        %3129 = vmatmul.f32.gmra.mxu0 %v3128
        %v3130 = vpop.f32.mrf.mxu0
        %v3131 = vadd.f32 %v3030, %v3130
        %v3132 = vand.u32 %v2086, 4294901760
        %v3133 = vsub.f32 %v2086, %v3132
        %v3134 = vand.u32 %v3133, 4294901760
        %3135 = vmatmul.f32.gmra.mxu0 %v3134
        %v3136 = vpop.f32.mrf.mxu0
        %v3137 = vadd.f32 %v3035, %v3136
        %v3138 = vand.u32 %v2089, 4294901760
        %v3139 = vsub.f32 %v2089, %v3138
        %v3140 = vand.u32 %v3139, 4294901760
        %3141 = vmatmul.f32.gmra.mxu0 %v3140
        %v3142 = vpop.f32.mrf.mxu0
        %v3143 = vadd.f32 %v3040, %v3142
        %v3144 = vand.u32 %v2092, 4294901760
        %v3145 = vsub.f32 %v2092, %v3144
        %v3146 = vand.u32 %v3145, 4294901760
        %3147 = vmatmul.f32.gmra.mxu0 %v3146
        %v3148 = vpop.f32.mrf.mxu0
        %v3149 = vadd.f32 %v3045, %v3148
        %v3150 = vand.u32 %v2095, 4294901760
        %v3151 = vsub.f32 %v2095, %v3150
        %v3152 = vand.u32 %v3151, 4294901760
        %3153 = vmatmul.f32.gmra.mxu0 %v3152
        %v3154 = vpop.f32.mrf.mxu0
        %v3155 = vadd.f32 %v3050, %v3154
        %v3156 = vand.u32 %v2098, 4294901760
        %v3157 = vsub.f32 %v2098, %v3156
        %v3158 = vand.u32 %v3157, 4294901760
        %3159 = vmatmul.f32.gmra.mxu0 %v3158
        %v3160 = vpop.f32.mrf.mxu0
        %v3161 = vadd.f32 %v3055, %v3160
        %v3162 = vand.u32 %v2101, 4294901760
        %v3163 = vsub.f32 %v2101, %v3162
        %v3164 = vand.u32 %v3163, 4294901760
        %3165 = vmatmul.f32.gmra.mxu0 %v3164
        %v3166 = vpop.f32.mrf.mxu0
        %v3167 = vadd.f32 %v3060, %v3166
        %v3168 = vand.u32 %v2104, 4294901760
        %v3169 = vsub.f32 %v2104, %v3168
        %v3170 = vand.u32 %v3169, 4294901760
        %3171 = vmatmul.f32.gmra.mxu0 %v3170
        %v3172 = vpop.f32.mrf.mxu0
        %v3173 = vadd.f32 %v3065, %v3172
        %v3174 = vand.u32 %v2107, 4294901760
        %v3175 = vsub.f32 %v2107, %v3174
        %v3176 = vand.u32 %v3175, 4294901760
        %3177 = vmatmul.f32.gmra.mxu0 %v3176
        %v3178 = vpop.f32.mrf.mxu0
        %v3179 = vadd.f32 %v3070, %v3178
        %v3180 = vand.u32 %v2110, 4294901760
        %v3181 = vsub.f32 %v2110, %v3180
        %v3182 = vand.u32 %v3181, 4294901760
        %3183 = vmatmul.f32.gmra.mxu0 %v3182
        %v3184 = vpop.f32.mrf.mxu0
        %v3185 = vadd.f32 %v3075, %v3184
        %v3186 = vand.u32 %v2113, 4294901760
        %v3187 = vsub.f32 %v2113, %v3186
        %v3188 = vand.u32 %v3187, 4294901760
        %3189 = vmatmul.f32.gmra.mxu0 %v3188
        %v3190 = vpop.f32.mrf.mxu0
        %v3191 = vadd.f32 %v3080, %v3190
        %v3192 = vand.u32 %v2116, 4294901760
        %v3193 = vsub.f32 %v2116, %v3192
        %v3194 = vand.u32 %v3193, 4294901760
        %3195 = vmatmul.f32.gmra.mxu0 %v3194
        %v3196 = vpop.f32.mrf.mxu0
        %v3197 = vadd.f32 %v3085, %v3196
        %v3198 = vand.u32 %v2119, 4294901760
        %v3199 = vsub.f32 %v2119, %v3198
        %v3200 = vand.u32 %v3199, 4294901760
        %3201 = vmatmul.f32.gmra.mxu0 %v3200
        %v3202 = vpop.f32.mrf.mxu0
        %v3203 = vadd.f32 %v3090, %v3202
        %v3204 = vand.u32 %v2122, 4294901760
        %v3205 = vsub.f32 %v2122, %v3204
        %v3206 = vand.u32 %v3205, 4294901760
        %3207 = vmatmul.f32.gmra.mxu0 %v3206
        %v3208 = vpop.f32.mrf.mxu0
        %v3209 = vadd.f32 %v3095, %v3208
        %v3210 = vand.u32 %v2125, 4294901760
        %v3211 = vsub.f32 %v2125, %v3210
        %v3212 = vand.u32 %v3211, 4294901760
        %3213 = vmatmul.f32.gmra.mxu0 %v3212
        %v3214 = vpop.f32.mrf.mxu0
        %v3215 = vadd.f32 %v3100, %v3214
        %3216 = vdwg.mxu0
        %3217 = vmatpush.msra.mxu0 0.0
        %3218 = vmatpush.msra.mxu0 0.0
        %3219 = vmatpush.msra.mxu0 0.0
        %3220 = vmatpush.msra.mxu0 0.0
        %3221 = vmatpush.msra.mxu0 0.0
        %3222 = vmatpush.msra.mxu0 0.0
        %3223 = vmatpush.msra.mxu0 0.0
        %3224 = vmatpush.msra.mxu0 0.0
        %3225 = vmatpush.msra.mxu0 0.0
        %3226 = vmatpush.msra.mxu0 0.0
        %3227 = vmatpush.msra.mxu0 0.0
        %3228 = vmatpush.msra.mxu0 0.0
        %3229 = vmatpush.msra.mxu0 0.0
        %3230 = vmatpush.msra.mxu0 0.0
        %v3231 = vand.u32 %v2079, 4294901760
        %v3232 = vsub.f32 %v2079, %v3231
        %v3233 = vand.u32 %v3232, 4294901760
        %3234 = vmatpush.msra.mxu0 %v3233
        %v3235 = vand.u32 %v2078, 4294901760
        %v3236 = vsub.f32 %v2078, %v3235
        %v3237 = vand.u32 %v3236, 4294901760
        %3238 = vmatpush.msra.mxu0 %v3237
        %v3239 = vand.u32 %v2758, 4294901760
        %3240 = vmatmul.f32.gmra.mxu0 %v3239
        %v3241 = vpop.f32.mrf.mxu0
        %v3242 = vadd.f32 %v3125, %v3241
        %v3243 = vand.u32 %v2761, 4294901760
        %3244 = vmatmul.f32.gmra.mxu0 %v3243
        %v3245 = vpop.f32.mrf.mxu0
        %v3246 = vadd.f32 %v3131, %v3245
        %v3247 = vand.u32 %v2086, 4294901760
        %3248 = vmatmul.f32.gmra.mxu0 %v3247
        %v3249 = vpop.f32.mrf.mxu0
        %v3250 = vadd.f32 %v3137, %v3249
        %v3251 = vand.u32 %v2089, 4294901760
        %3252 = vmatmul.f32.gmra.mxu0 %v3251
        %v3253 = vpop.f32.mrf.mxu0
        %v3254 = vadd.f32 %v3143, %v3253
        %v3255 = vand.u32 %v2092, 4294901760
        %3256 = vmatmul.f32.gmra.mxu0 %v3255
        %v3257 = vpop.f32.mrf.mxu0
        %v3258 = vadd.f32 %v3149, %v3257
        %v3259 = vand.u32 %v2095, 4294901760
        %3260 = vmatmul.f32.gmra.mxu0 %v3259
        %v3261 = vpop.f32.mrf.mxu0
        %v3262 = vadd.f32 %v3155, %v3261
        %v3263 = vand.u32 %v2098, 4294901760
        %3264 = vmatmul.f32.gmra.mxu0 %v3263
        %v3265 = vpop.f32.mrf.mxu0
        %v3266 = vadd.f32 %v3161, %v3265
        %v3267 = vand.u32 %v2101, 4294901760
        %3268 = vmatmul.f32.gmra.mxu0 %v3267
        %v3269 = vpop.f32.mrf.mxu0
        %v3270 = vadd.f32 %v3167, %v3269
        %v3271 = vand.u32 %v2104, 4294901760
        %3272 = vmatmul.f32.gmra.mxu0 %v3271
        %v3273 = vpop.f32.mrf.mxu0
        %v3274 = vadd.f32 %v3173, %v3273
        %v3275 = vand.u32 %v2107, 4294901760
        %3276 = vmatmul.f32.gmra.mxu0 %v3275
        %v3277 = vpop.f32.mrf.mxu0
        %v3278 = vadd.f32 %v3179, %v3277
        %v3279 = vand.u32 %v2110, 4294901760
        %3280 = vmatmul.f32.gmra.mxu0 %v3279
        %v3281 = vpop.f32.mrf.mxu0
        %v3282 = vadd.f32 %v3185, %v3281
        %v3283 = vand.u32 %v2113, 4294901760
        %3284 = vmatmul.f32.gmra.mxu0 %v3283
        %v3285 = vpop.f32.mrf.mxu0
        %v3286 = vadd.f32 %v3191, %v3285
        %v3287 = vand.u32 %v2116, 4294901760
        %3288 = vmatmul.f32.gmra.mxu0 %v3287
        %v3289 = vpop.f32.mrf.mxu0
        %v3290 = vadd.f32 %v3197, %v3289
        %v3291 = vand.u32 %v2119, 4294901760
        %3292 = vmatmul.f32.gmra.mxu0 %v3291
        %v3293 = vpop.f32.mrf.mxu0
        %v3294 = vadd.f32 %v3203, %v3293
        %v3295 = vand.u32 %v2122, 4294901760
        %3296 = vmatmul.f32.gmra.mxu0 %v3295
        %v3297 = vpop.f32.mrf.mxu0
        %v3298 = vadd.f32 %v3209, %v3297
        %v3299 = vand.u32 %v2125, 4294901760
        %3300 = vmatmul.f32.gmra.mxu0 %v3299
        %v3301 = vpop.f32.mrf.mxu0
        %v3302 = vadd.f32 %v3215, %v3301
        %3303 = vdwg.mxu0
        %3304 = vmatpush.msra.mxu0 0.0
        %3305 = vmatpush.msra.mxu0 0.0
        %3306 = vmatpush.msra.mxu0 0.0
        %3307 = vmatpush.msra.mxu0 0.0
        %3308 = vmatpush.msra.mxu0 0.0
        %3309 = vmatpush.msra.mxu0 0.0
        %3310 = vmatpush.msra.mxu0 0.0
        %3311 = vmatpush.msra.mxu0 0.0
        %3312 = vmatpush.msra.mxu0 0.0
        %3313 = vmatpush.msra.mxu0 0.0
        %3314 = vmatpush.msra.mxu0 0.0
        %3315 = vmatpush.msra.mxu0 0.0
        %3316 = vmatpush.msra.mxu0 0.0
        %3317 = vmatpush.msra.mxu0 0.0
        %v3318 = vand.u32 %v2079, 4294901760
        %3319 = vmatpush.msra.mxu0 %v3318
        %v3320 = vand.u32 %v2078, 4294901760
        %3321 = vmatpush.msra.mxu0 %v3320
        %v3322 = vand.u32 %v2758, 4294901760
        %3323 = vmatmul.f32.gmra.mxu0 %v3322
        %v3324 = vpop.f32.mrf.mxu0
        %v3325 = vadd.f32 %v3242, %v3324
        %v3326 = vand.u32 %v2761, 4294901760
        %3327 = vmatmul.f32.gmra.mxu0 %v3326
        %v3328 = vpop.f32.mrf.mxu0
        %v3329 = vadd.f32 %v3246, %v3328
        %v3330 = vand.u32 %v2086, 4294901760
        %3331 = vmatmul.f32.gmra.mxu0 %v3330
        %v3332 = vpop.f32.mrf.mxu0
        %v3333 = vadd.f32 %v3250, %v3332
        %v3334 = vand.u32 %v2089, 4294901760
        %3335 = vmatmul.f32.gmra.mxu0 %v3334
        %v3336 = vpop.f32.mrf.mxu0
        %v3337 = vadd.f32 %v3254, %v3336
        %v3338 = vand.u32 %v2092, 4294901760
        %3339 = vmatmul.f32.gmra.mxu0 %v3338
        %v3340 = vpop.f32.mrf.mxu0
        %v3341 = vadd.f32 %v3258, %v3340
        %v3342 = vand.u32 %v2095, 4294901760
        %3343 = vmatmul.f32.gmra.mxu0 %v3342
        %v3344 = vpop.f32.mrf.mxu0
        %v3345 = vadd.f32 %v3262, %v3344
        %v3346 = vand.u32 %v2098, 4294901760
        %3347 = vmatmul.f32.gmra.mxu0 %v3346
        %v3348 = vpop.f32.mrf.mxu0
        %v3349 = vadd.f32 %v3266, %v3348
        %v3350 = vand.u32 %v2101, 4294901760
        %3351 = vmatmul.f32.gmra.mxu0 %v3350
        %v3352 = vpop.f32.mrf.mxu0
        %v3353 = vadd.f32 %v3270, %v3352
        %v3354 = vand.u32 %v2104, 4294901760
        %3355 = vmatmul.f32.gmra.mxu0 %v3354
        %v3356 = vpop.f32.mrf.mxu0
        %v3357 = vadd.f32 %v3274, %v3356
        %v3358 = vand.u32 %v2107, 4294901760
        %3359 = vmatmul.f32.gmra.mxu0 %v3358
        %v3360 = vpop.f32.mrf.mxu0
        %v3361 = vadd.f32 %v3278, %v3360
        %v3362 = vand.u32 %v2110, 4294901760
        %3363 = vmatmul.f32.gmra.mxu0 %v3362
        %v3364 = vpop.f32.mrf.mxu0
        %v3365 = vadd.f32 %v3282, %v3364
        %v3366 = vand.u32 %v2113, 4294901760
        %3367 = vmatmul.f32.gmra.mxu0 %v3366
        %v3368 = vpop.f32.mrf.mxu0
        %v3369 = vadd.f32 %v3286, %v3368
        %v3370 = vand.u32 %v2116, 4294901760
        %3371 = vmatmul.f32.gmra.mxu0 %v3370
        %v3372 = vpop.f32.mrf.mxu0
        %v3373 = vadd.f32 %v3290, %v3372
        %v3374 = vand.u32 %v2119, 4294901760
        %3375 = vmatmul.f32.gmra.mxu0 %v3374
        %v3376 = vpop.f32.mrf.mxu0
        %v3377 = vadd.f32 %v3294, %v3376
        %v3378 = vand.u32 %v2122, 4294901760
        %3379 = vmatmul.f32.gmra.mxu0 %v3378
        %v3380 = vpop.f32.mrf.mxu0
        %v3381 = vadd.f32 %v3298, %v3380
        %v3382 = vand.u32 %v2125, 4294901760
        %3383 = vmatmul.f32.gmra.mxu0 %v3382
        %v3384 = vpop.f32.mrf.mxu0
        %v3385 = vadd.f32 %v3302, %v3384
        %3386 = vdwg.mxu0
        %v3387 = vld [vmem:[#allocation2 + $0x28] sm:$0xff]
        %v3388 = vld [vmem:[#allocation2 + $0x30] sm:$0xff]
        %v3389 = vld [vmem:[#allocation2 + $0x38] sm:$0xff]
        %v3390 = vld [vmem:[#allocation2 + $0x40] sm:$0xff]
        %v3391 = vld [vmem:[#allocation2 + $0x48] sm:$0xff]
        %v3392 = vld [vmem:[#allocation2 + $0x50] sm:$0xff]
        %v3393 = vld [vmem:[#allocation2 + $0x58] sm:$0xff]
        %v3394 = vld [vmem:[#allocation2 + $0x60] sm:$0xff]
        %v3395 = vld [vmem:[#allocation2 + $0x68] sm:$0xff]
        %v3396 = vld [vmem:[#allocation2 + $0x70] sm:$0xff]
        %v3397 = vld [vmem:[#allocation2 + $0x78] sm:$0xff]
        %v3398 = vld [vmem:[#allocation2 + $0x80] sm:$0xff]
        %v3399 = vld [vmem:[#allocation2 + $0x88] sm:$0xff]
        %v3400 = vld [vmem:[#allocation2 + $0x90] sm:$0xff]
        %v3401 = vld [vmem:[#allocation2 + $0x98] sm:$0xff]
        %v3402 = vld [vmem:[#allocation2 + $0xa0] sm:$0xff]
        %s3403 = scalar_lea.vmem %s5, 112
        %v3404 = vld [vmem:[%s3403] sm:$0xff]
        %v3405 = vld [vmem:[%s3403 + $0x8] sm:$0xff]
        %v3407 = vsel %vm592, %v3387, 0
        %v3410 = vsel %vm592, %v3388, 0
        %v3413 = vsel %vm592, %v3389, 0
        %v3416 = vsel %vm592, %v3390, 0
        %v3419 = vsel %vm592, %v3391, 0
        %v3422 = vsel %vm592, %v3392, 0
        %v3425 = vsel %vm592, %v3393, 0
        %v3428 = vsel %vm592, %v3394, 0
        %v3431 = vsel %vm592, %v3395, 0
        %v3434 = vsel %vm592, %v3396, 0
        %v3437 = vsel %vm592, %v3397, 0
        %v3440 = vsel %vm592, %v3398, 0
        %v3443 = vsel %vm592, %v3399, 0
        %v3446 = vsel %vm592, %v3400, 0
        %v3449 = vsel %vm592, %v3401, 0
        %v3452 = vsel %vm592, %v3402, 0
        %3454 = vmatpush.msra.mxu0 0.0
        %3455 = vmatpush.msra.mxu0 0.0
        %3456 = vmatpush.msra.mxu0 0.0
        %3457 = vmatpush.msra.mxu0 0.0
        %3458 = vmatpush.msra.mxu0 0.0
        %3459 = vmatpush.msra.mxu0 0.0
        %3460 = vmatpush.msra.mxu0 0.0
        %3461 = vmatpush.msra.mxu0 0.0
        %3462 = vmatpush.msra.mxu0 0.0
        %3463 = vmatpush.msra.mxu0 0.0
        %3464 = vmatpush.msra.mxu0 0.0
        %3465 = vmatpush.msra.mxu0 0.0
        %3466 = vmatpush.msra.mxu0 0.0
        %3467 = vmatpush.msra.mxu0 0.0
        %v3468 = vand.u32 %v3405, 4294901760
        %3469 = vmatpush.msra.mxu0 %v3468
        %v3470 = vand.u32 %v3404, 4294901760
        %3471 = vmatpush.msra.mxu0 %v3470
        %v3472 = vand.u32 %v3407, 4294901760
        %v3473 = vsub.f32 %v3407, %v3472
        %v3474 = vand.u32 %v3473, 4294901760
        %v3475 = vsub.f32 %v3473, %v3474
        %v3476 = vand.u32 %v3475, 4294901760
        %3477 = vmatmul.f32.gmra.mxu0 %v3476
        %v3478 = vpop.f32.mrf.mxu0
        %v3479 = vadd.f32 0.0, %v3478
        %v3480 = vand.u32 %v3410, 4294901760
        %v3481 = vsub.f32 %v3410, %v3480
        %v3482 = vand.u32 %v3481, 4294901760
        %v3483 = vsub.f32 %v3481, %v3482
        %v3484 = vand.u32 %v3483, 4294901760
        %3485 = vmatmul.f32.gmra.mxu0 %v3484
        %v3486 = vpop.f32.mrf.mxu0
        %v3487 = vadd.f32 0.0, %v3486
        %v3488 = vand.u32 %v3413, 4294901760
        %v3489 = vsub.f32 %v3413, %v3488
        %v3490 = vand.u32 %v3489, 4294901760
        %v3491 = vsub.f32 %v3489, %v3490
        %v3492 = vand.u32 %v3491, 4294901760
        %3493 = vmatmul.f32.gmra.mxu0 %v3492
        %v3494 = vpop.f32.mrf.mxu0
        %v3495 = vadd.f32 0.0, %v3494
        %v3496 = vand.u32 %v3416, 4294901760
        %v3497 = vsub.f32 %v3416, %v3496
        %v3498 = vand.u32 %v3497, 4294901760
        %v3499 = vsub.f32 %v3497, %v3498
        %v3500 = vand.u32 %v3499, 4294901760
        %3501 = vmatmul.f32.gmra.mxu0 %v3500
        %v3502 = vpop.f32.mrf.mxu0
        %v3503 = vadd.f32 0.0, %v3502
        %v3504 = vand.u32 %v3419, 4294901760
        %v3505 = vsub.f32 %v3419, %v3504
        %v3506 = vand.u32 %v3505, 4294901760
        %v3507 = vsub.f32 %v3505, %v3506
        %v3508 = vand.u32 %v3507, 4294901760
        %3509 = vmatmul.f32.gmra.mxu0 %v3508
        %v3510 = vpop.f32.mrf.mxu0
        %v3511 = vadd.f32 0.0, %v3510
        %v3512 = vand.u32 %v3422, 4294901760
        %v3513 = vsub.f32 %v3422, %v3512
        %v3514 = vand.u32 %v3513, 4294901760
        %v3515 = vsub.f32 %v3513, %v3514
        %v3516 = vand.u32 %v3515, 4294901760
        %3517 = vmatmul.f32.gmra.mxu0 %v3516
        %v3518 = vpop.f32.mrf.mxu0
        %v3519 = vadd.f32 0.0, %v3518
        %v3520 = vand.u32 %v3425, 4294901760
        %v3521 = vsub.f32 %v3425, %v3520
        %v3522 = vand.u32 %v3521, 4294901760
        %v3523 = vsub.f32 %v3521, %v3522
        %v3524 = vand.u32 %v3523, 4294901760
        %3525 = vmatmul.f32.gmra.mxu0 %v3524
        %v3526 = vpop.f32.mrf.mxu0
        %v3527 = vadd.f32 0.0, %v3526
        %v3528 = vand.u32 %v3428, 4294901760
        %v3529 = vsub.f32 %v3428, %v3528
        %v3530 = vand.u32 %v3529, 4294901760
        %v3531 = vsub.f32 %v3529, %v3530
        %v3532 = vand.u32 %v3531, 4294901760
        %3533 = vmatmul.f32.gmra.mxu0 %v3532
        %v3534 = vpop.f32.mrf.mxu0
        %v3535 = vadd.f32 0.0, %v3534
        %v3536 = vand.u32 %v3431, 4294901760
        %v3537 = vsub.f32 %v3431, %v3536
        %v3538 = vand.u32 %v3537, 4294901760
        %v3539 = vsub.f32 %v3537, %v3538
        %v3540 = vand.u32 %v3539, 4294901760
        %3541 = vmatmul.f32.gmra.mxu0 %v3540
        %v3542 = vpop.f32.mrf.mxu0
        %v3543 = vadd.f32 0.0, %v3542
        %v3544 = vand.u32 %v3434, 4294901760
        %v3545 = vsub.f32 %v3434, %v3544
        %v3546 = vand.u32 %v3545, 4294901760
        %v3547 = vsub.f32 %v3545, %v3546
        %v3548 = vand.u32 %v3547, 4294901760
        %3549 = vmatmul.f32.gmra.mxu0 %v3548
        %v3550 = vpop.f32.mrf.mxu0
        %v3551 = vadd.f32 0.0, %v3550
        %v3552 = vand.u32 %v3437, 4294901760
        %v3553 = vsub.f32 %v3437, %v3552
        %v3554 = vand.u32 %v3553, 4294901760
        %v3555 = vsub.f32 %v3553, %v3554
        %v3556 = vand.u32 %v3555, 4294901760
        %3557 = vmatmul.f32.gmra.mxu0 %v3556
        %v3558 = vpop.f32.mrf.mxu0
        %v3559 = vadd.f32 0.0, %v3558
        %v3560 = vand.u32 %v3440, 4294901760
        %v3561 = vsub.f32 %v3440, %v3560
        %v3562 = vand.u32 %v3561, 4294901760
        %v3563 = vsub.f32 %v3561, %v3562
        %v3564 = vand.u32 %v3563, 4294901760
        %3565 = vmatmul.f32.gmra.mxu0 %v3564
        %v3566 = vpop.f32.mrf.mxu0
        %v3567 = vadd.f32 0.0, %v3566
        %v3568 = vand.u32 %v3443, 4294901760
        %v3569 = vsub.f32 %v3443, %v3568
        %v3570 = vand.u32 %v3569, 4294901760
        %v3571 = vsub.f32 %v3569, %v3570
        %v3572 = vand.u32 %v3571, 4294901760
        %3573 = vmatmul.f32.gmra.mxu0 %v3572
        %v3574 = vpop.f32.mrf.mxu0
        %v3575 = vadd.f32 0.0, %v3574
        %v3576 = vand.u32 %v3446, 4294901760
        %v3577 = vsub.f32 %v3446, %v3576
        %v3578 = vand.u32 %v3577, 4294901760
        %v3579 = vsub.f32 %v3577, %v3578
        %v3580 = vand.u32 %v3579, 4294901760
        %3581 = vmatmul.f32.gmra.mxu0 %v3580
        %v3582 = vpop.f32.mrf.mxu0
        %v3583 = vadd.f32 0.0, %v3582
        %v3584 = vand.u32 %v3449, 4294901760
        %v3585 = vsub.f32 %v3449, %v3584
        %v3586 = vand.u32 %v3585, 4294901760
        %v3587 = vsub.f32 %v3585, %v3586
        %v3588 = vand.u32 %v3587, 4294901760
        %3589 = vmatmul.f32.gmra.mxu0 %v3588
        %v3590 = vpop.f32.mrf.mxu0
        %v3591 = vadd.f32 0.0, %v3590
        %v3592 = vand.u32 %v3452, 4294901760
        %v3593 = vsub.f32 %v3452, %v3592
        %v3594 = vand.u32 %v3593, 4294901760
        %v3595 = vsub.f32 %v3593, %v3594
        %v3596 = vand.u32 %v3595, 4294901760
        %3597 = vmatmul.f32.gmra.mxu0 %v3596
        %v3598 = vpop.f32.mrf.mxu0
        %v3599 = vadd.f32 0.0, %v3598
        %3600 = vdwg.mxu0
        %3601 = vmatpush.msra.mxu0 0.0
        %3602 = vmatpush.msra.mxu0 0.0
        %3603 = vmatpush.msra.mxu0 0.0
        %3604 = vmatpush.msra.mxu0 0.0
        %3605 = vmatpush.msra.mxu0 0.0
        %3606 = vmatpush.msra.mxu0 0.0
        %3607 = vmatpush.msra.mxu0 0.0
        %3608 = vmatpush.msra.mxu0 0.0
        %3609 = vmatpush.msra.mxu0 0.0
        %3610 = vmatpush.msra.mxu0 0.0
        %3611 = vmatpush.msra.mxu0 0.0
        %3612 = vmatpush.msra.mxu0 0.0
        %3613 = vmatpush.msra.mxu0 0.0
        %3614 = vmatpush.msra.mxu0 0.0
        %v3615 = vand.u32 %v3405, 4294901760
        %v3616 = vsub.f32 %v3405, %v3615
        %v3617 = vand.u32 %v3616, 4294901760
        %v3618 = vsub.f32 %v3616, %v3617
        %v3619 = vand.u32 %v3618, 4294901760
        %3620 = vmatpush.msra.mxu0 %v3619
        %v3621 = vand.u32 %v3404, 4294901760
        %v3622 = vsub.f32 %v3404, %v3621
        %v3623 = vand.u32 %v3622, 4294901760
        %v3624 = vsub.f32 %v3622, %v3623
        %v3625 = vand.u32 %v3624, 4294901760
        %3626 = vmatpush.msra.mxu0 %v3625
        %v3627 = vand.u32 %v3407, 4294901760
        %3628 = vmatmul.f32.gmra.mxu0 %v3627
        %v3629 = vpop.f32.mrf.mxu0
        %v3630 = vadd.f32 %v3479, %v3629
        %v3631 = vand.u32 %v3410, 4294901760
        %3632 = vmatmul.f32.gmra.mxu0 %v3631
        %v3633 = vpop.f32.mrf.mxu0
        %v3634 = vadd.f32 %v3487, %v3633
        %v3635 = vand.u32 %v3413, 4294901760
        %3636 = vmatmul.f32.gmra.mxu0 %v3635
        %v3637 = vpop.f32.mrf.mxu0
        %v3638 = vadd.f32 %v3495, %v3637
        %v3639 = vand.u32 %v3416, 4294901760
        %3640 = vmatmul.f32.gmra.mxu0 %v3639
        %v3641 = vpop.f32.mrf.mxu0
        %v3642 = vadd.f32 %v3503, %v3641
        %v3643 = vand.u32 %v3419, 4294901760
        %3644 = vmatmul.f32.gmra.mxu0 %v3643
        %v3645 = vpop.f32.mrf.mxu0
        %v3646 = vadd.f32 %v3511, %v3645
        %v3647 = vand.u32 %v3422, 4294901760
        %3648 = vmatmul.f32.gmra.mxu0 %v3647
        %v3649 = vpop.f32.mrf.mxu0
        %v3650 = vadd.f32 %v3519, %v3649
        %v3651 = vand.u32 %v3425, 4294901760
        %3652 = vmatmul.f32.gmra.mxu0 %v3651
        %v3653 = vpop.f32.mrf.mxu0
        %v3654 = vadd.f32 %v3527, %v3653
        %v3655 = vand.u32 %v3428, 4294901760
        %3656 = vmatmul.f32.gmra.mxu0 %v3655
        %v3657 = vpop.f32.mrf.mxu0
        %v3658 = vadd.f32 %v3535, %v3657
        %v3659 = vand.u32 %v3431, 4294901760
        %3660 = vmatmul.f32.gmra.mxu0 %v3659
        %v3661 = vpop.f32.mrf.mxu0
        %v3662 = vadd.f32 %v3543, %v3661
        %v3663 = vand.u32 %v3434, 4294901760
        %3664 = vmatmul.f32.gmra.mxu0 %v3663
        %v3665 = vpop.f32.mrf.mxu0
        %v3666 = vadd.f32 %v3551, %v3665
        %v3667 = vand.u32 %v3437, 4294901760
        %3668 = vmatmul.f32.gmra.mxu0 %v3667
        %v3669 = vpop.f32.mrf.mxu0
        %v3670 = vadd.f32 %v3559, %v3669
        %v3671 = vand.u32 %v3440, 4294901760
        %3672 = vmatmul.f32.gmra.mxu0 %v3671
        %v3673 = vpop.f32.mrf.mxu0
        %v3674 = vadd.f32 %v3567, %v3673
        %v3675 = vand.u32 %v3443, 4294901760
        %3676 = vmatmul.f32.gmra.mxu0 %v3675
        %v3677 = vpop.f32.mrf.mxu0
        %v3678 = vadd.f32 %v3575, %v3677
        %v3679 = vand.u32 %v3446, 4294901760
        %3680 = vmatmul.f32.gmra.mxu0 %v3679
        %v3681 = vpop.f32.mrf.mxu0
        %v3682 = vadd.f32 %v3583, %v3681
        %v3683 = vand.u32 %v3449, 4294901760
        %3684 = vmatmul.f32.gmra.mxu0 %v3683
        %v3685 = vpop.f32.mrf.mxu0
        %v3686 = vadd.f32 %v3591, %v3685
        %v3687 = vand.u32 %v3452, 4294901760
        %3688 = vmatmul.f32.gmra.mxu0 %v3687
        %v3689 = vpop.f32.mrf.mxu0
        %v3690 = vadd.f32 %v3599, %v3689
        %3691 = vdwg.mxu0
        %3692 = vmatpush.msra.mxu0 0.0
        %3693 = vmatpush.msra.mxu0 0.0
        %3694 = vmatpush.msra.mxu0 0.0
        %3695 = vmatpush.msra.mxu0 0.0
        %3696 = vmatpush.msra.mxu0 0.0
        %3697 = vmatpush.msra.mxu0 0.0
        %3698 = vmatpush.msra.mxu0 0.0
        %3699 = vmatpush.msra.mxu0 0.0
        %3700 = vmatpush.msra.mxu0 0.0
        %3701 = vmatpush.msra.mxu0 0.0
        %3702 = vmatpush.msra.mxu0 0.0
        %3703 = vmatpush.msra.mxu0 0.0
        %3704 = vmatpush.msra.mxu0 0.0
        %3705 = vmatpush.msra.mxu0 0.0
        %v3706 = vand.u32 %v3405, 4294901760
        %v3707 = vsub.f32 %v3405, %v3706
        %3708 = vmatpush.msra.mxu0 %v3707
        %v3709 = vand.u32 %v3404, 4294901760
        %v3710 = vsub.f32 %v3404, %v3709
        %3711 = vmatpush.msra.mxu0 %v3710
        %v3712 = vand.u32 %v3407, 4294901760
        %v3713 = vsub.f32 %v3407, %v3712
        %3714 = vmatmul.f32.gmra.mxu0 %v3713
        %v3715 = vpop.f32.mrf.mxu0
        %v3716 = vadd.f32 %v3630, %v3715
        %v3717 = vand.u32 %v3410, 4294901760
        %v3718 = vsub.f32 %v3410, %v3717
        %3719 = vmatmul.f32.gmra.mxu0 %v3718
        %v3720 = vpop.f32.mrf.mxu0
        %v3721 = vadd.f32 %v3634, %v3720
        %v3722 = vand.u32 %v3413, 4294901760
        %v3723 = vsub.f32 %v3413, %v3722
        %3724 = vmatmul.f32.gmra.mxu0 %v3723
        %v3725 = vpop.f32.mrf.mxu0
        %v3726 = vadd.f32 %v3638, %v3725
        %v3727 = vand.u32 %v3416, 4294901760
        %v3728 = vsub.f32 %v3416, %v3727
        %3729 = vmatmul.f32.gmra.mxu0 %v3728
        %v3730 = vpop.f32.mrf.mxu0
        %v3731 = vadd.f32 %v3642, %v3730
        %v3732 = vand.u32 %v3419, 4294901760
        %v3733 = vsub.f32 %v3419, %v3732
        %3734 = vmatmul.f32.gmra.mxu0 %v3733
        %v3735 = vpop.f32.mrf.mxu0
        %v3736 = vadd.f32 %v3646, %v3735
        %v3737 = vand.u32 %v3422, 4294901760
        %v3738 = vsub.f32 %v3422, %v3737
        %3739 = vmatmul.f32.gmra.mxu0 %v3738
        %v3740 = vpop.f32.mrf.mxu0
        %v3741 = vadd.f32 %v3650, %v3740
        %v3742 = vand.u32 %v3425, 4294901760
        %v3743 = vsub.f32 %v3425, %v3742
        %3744 = vmatmul.f32.gmra.mxu0 %v3743
        %v3745 = vpop.f32.mrf.mxu0
        %v3746 = vadd.f32 %v3654, %v3745
        %v3747 = vand.u32 %v3428, 4294901760
        %v3748 = vsub.f32 %v3428, %v3747
        %3749 = vmatmul.f32.gmra.mxu0 %v3748
        %v3750 = vpop.f32.mrf.mxu0
        %v3751 = vadd.f32 %v3658, %v3750
        %v3752 = vand.u32 %v3431, 4294901760
        %v3753 = vsub.f32 %v3431, %v3752
        %3754 = vmatmul.f32.gmra.mxu0 %v3753
        %v3755 = vpop.f32.mrf.mxu0
        %v3756 = vadd.f32 %v3662, %v3755
        %v3757 = vand.u32 %v3434, 4294901760
        %v3758 = vsub.f32 %v3434, %v3757
        %3759 = vmatmul.f32.gmra.mxu0 %v3758
        %v3760 = vpop.f32.mrf.mxu0
        %v3761 = vadd.f32 %v3666, %v3760
        %v3762 = vand.u32 %v3437, 4294901760
        %v3763 = vsub.f32 %v3437, %v3762
        %3764 = vmatmul.f32.gmra.mxu0 %v3763
        %v3765 = vpop.f32.mrf.mxu0
        %v3766 = vadd.f32 %v3670, %v3765
        %v3767 = vand.u32 %v3440, 4294901760
        %v3768 = vsub.f32 %v3440, %v3767
        %3769 = vmatmul.f32.gmra.mxu0 %v3768
        %v3770 = vpop.f32.mrf.mxu0
        %v3771 = vadd.f32 %v3674, %v3770
        %v3772 = vand.u32 %v3443, 4294901760
        %v3773 = vsub.f32 %v3443, %v3772
        %3774 = vmatmul.f32.gmra.mxu0 %v3773
        %v3775 = vpop.f32.mrf.mxu0
        %v3776 = vadd.f32 %v3678, %v3775
        %v3777 = vand.u32 %v3446, 4294901760
        %v3778 = vsub.f32 %v3446, %v3777
        %3779 = vmatmul.f32.gmra.mxu0 %v3778
        %v3780 = vpop.f32.mrf.mxu0
        %v3781 = vadd.f32 %v3682, %v3780
        %v3782 = vand.u32 %v3449, 4294901760
        %v3783 = vsub.f32 %v3449, %v3782
        %3784 = vmatmul.f32.gmra.mxu0 %v3783
        %v3785 = vpop.f32.mrf.mxu0
        %v3786 = vadd.f32 %v3686, %v3785
        %v3787 = vand.u32 %v3452, 4294901760
        %v3788 = vsub.f32 %v3452, %v3787
        %3789 = vmatmul.f32.gmra.mxu0 %v3788
        %v3790 = vpop.f32.mrf.mxu0
        %v3791 = vadd.f32 %v3690, %v3790
        %3792 = vdwg.mxu0
        %3793 = vmatpush.msra.mxu0 0.0
        %3794 = vmatpush.msra.mxu0 0.0
        %3795 = vmatpush.msra.mxu0 0.0
        %3796 = vmatpush.msra.mxu0 0.0
        %3797 = vmatpush.msra.mxu0 0.0
        %3798 = vmatpush.msra.mxu0 0.0
        %3799 = vmatpush.msra.mxu0 0.0
        %3800 = vmatpush.msra.mxu0 0.0
        %3801 = vmatpush.msra.mxu0 0.0
        %3802 = vmatpush.msra.mxu0 0.0
        %3803 = vmatpush.msra.mxu0 0.0
        %3804 = vmatpush.msra.mxu0 0.0
        %3805 = vmatpush.msra.mxu0 0.0
        %3806 = vmatpush.msra.mxu0 0.0
        %v3807 = vand.u32 %v3405, 4294901760
        %3808 = vmatpush.msra.mxu0 %v3807
        %v3809 = vand.u32 %v3404, 4294901760
        %3810 = vmatpush.msra.mxu0 %v3809
        %v3811 = vand.u32 %v3407, 4294901760
        %v3812 = vsub.f32 %v3407, %v3811
        %v3813 = vand.u32 %v3812, 4294901760
        %3814 = vmatmul.f32.gmra.mxu0 %v3813
        %v3815 = vpop.f32.mrf.mxu0
        %v3816 = vadd.f32 %v3716, %v3815
        %v3817 = vand.u32 %v3410, 4294901760
        %v3818 = vsub.f32 %v3410, %v3817
        %v3819 = vand.u32 %v3818, 4294901760
        %3820 = vmatmul.f32.gmra.mxu0 %v3819
        %v3821 = vpop.f32.mrf.mxu0
        %v3822 = vadd.f32 %v3721, %v3821
        %v3823 = vand.u32 %v3413, 4294901760
        %v3824 = vsub.f32 %v3413, %v3823
        %v3825 = vand.u32 %v3824, 4294901760
        %3826 = vmatmul.f32.gmra.mxu0 %v3825
        %v3827 = vpop.f32.mrf.mxu0
        %v3828 = vadd.f32 %v3726, %v3827
        %v3829 = vand.u32 %v3416, 4294901760
        %v3830 = vsub.f32 %v3416, %v3829
        %v3831 = vand.u32 %v3830, 4294901760
        %3832 = vmatmul.f32.gmra.mxu0 %v3831
        %v3833 = vpop.f32.mrf.mxu0
        %v3834 = vadd.f32 %v3731, %v3833
        %v3835 = vand.u32 %v3419, 4294901760
        %v3836 = vsub.f32 %v3419, %v3835
        %v3837 = vand.u32 %v3836, 4294901760
        %3838 = vmatmul.f32.gmra.mxu0 %v3837
        %v3839 = vpop.f32.mrf.mxu0
        %v3840 = vadd.f32 %v3736, %v3839
        %v3841 = vand.u32 %v3422, 4294901760
        %v3842 = vsub.f32 %v3422, %v3841
        %v3843 = vand.u32 %v3842, 4294901760
        %3844 = vmatmul.f32.gmra.mxu0 %v3843
        %v3845 = vpop.f32.mrf.mxu0
        %v3846 = vadd.f32 %v3741, %v3845
        %v3847 = vand.u32 %v3425, 4294901760
        %v3848 = vsub.f32 %v3425, %v3847
        %v3849 = vand.u32 %v3848, 4294901760
        %3850 = vmatmul.f32.gmra.mxu0 %v3849
        %v3851 = vpop.f32.mrf.mxu0
        %v3852 = vadd.f32 %v3746, %v3851
        %v3853 = vand.u32 %v3428, 4294901760
        %v3854 = vsub.f32 %v3428, %v3853
        %v3855 = vand.u32 %v3854, 4294901760
        %3856 = vmatmul.f32.gmra.mxu0 %v3855
        %v3857 = vpop.f32.mrf.mxu0
        %v3858 = vadd.f32 %v3751, %v3857
        %v3859 = vand.u32 %v3431, 4294901760
        %v3860 = vsub.f32 %v3431, %v3859
        %v3861 = vand.u32 %v3860, 4294901760
        %3862 = vmatmul.f32.gmra.mxu0 %v3861
        %v3863 = vpop.f32.mrf.mxu0
        %v3864 = vadd.f32 %v3756, %v3863
        %v3865 = vand.u32 %v3434, 4294901760
        %v3866 = vsub.f32 %v3434, %v3865
        %v3867 = vand.u32 %v3866, 4294901760
        %3868 = vmatmul.f32.gmra.mxu0 %v3867
        %v3869 = vpop.f32.mrf.mxu0
        %v3870 = vadd.f32 %v3761, %v3869
        %v3871 = vand.u32 %v3437, 4294901760
        %v3872 = vsub.f32 %v3437, %v3871
        %v3873 = vand.u32 %v3872, 4294901760
        %3874 = vmatmul.f32.gmra.mxu0 %v3873
        %v3875 = vpop.f32.mrf.mxu0
        %v3876 = vadd.f32 %v3766, %v3875
        %v3877 = vand.u32 %v3440, 4294901760
        %v3878 = vsub.f32 %v3440, %v3877
        %v3879 = vand.u32 %v3878, 4294901760
        %3880 = vmatmul.f32.gmra.mxu0 %v3879
        %v3881 = vpop.f32.mrf.mxu0
        %v3882 = vadd.f32 %v3771, %v3881
        %v3883 = vand.u32 %v3443, 4294901760
        %v3884 = vsub.f32 %v3443, %v3883
        %v3885 = vand.u32 %v3884, 4294901760
        %3886 = vmatmul.f32.gmra.mxu0 %v3885
        %v3887 = vpop.f32.mrf.mxu0
        %v3888 = vadd.f32 %v3776, %v3887
        %v3889 = vand.u32 %v3446, 4294901760
        %v3890 = vsub.f32 %v3446, %v3889
        %v3891 = vand.u32 %v3890, 4294901760
        %3892 = vmatmul.f32.gmra.mxu0 %v3891
        %v3893 = vpop.f32.mrf.mxu0
        %v3894 = vadd.f32 %v3781, %v3893
        %v3895 = vand.u32 %v3449, 4294901760
        %v3896 = vsub.f32 %v3449, %v3895
        %v3897 = vand.u32 %v3896, 4294901760
        %3898 = vmatmul.f32.gmra.mxu0 %v3897
        %v3899 = vpop.f32.mrf.mxu0
        %v3900 = vadd.f32 %v3786, %v3899
        %v3901 = vand.u32 %v3452, 4294901760
        %v3902 = vsub.f32 %v3452, %v3901
        %v3903 = vand.u32 %v3902, 4294901760
        %3904 = vmatmul.f32.gmra.mxu0 %v3903
        %v3905 = vpop.f32.mrf.mxu0
        %v3906 = vadd.f32 %v3791, %v3905
        %3907 = vdwg.mxu0
        %3908 = vmatpush.msra.mxu0 0.0
        %3909 = vmatpush.msra.mxu0 0.0
        %3910 = vmatpush.msra.mxu0 0.0
        %3911 = vmatpush.msra.mxu0 0.0
        %3912 = vmatpush.msra.mxu0 0.0
        %3913 = vmatpush.msra.mxu0 0.0
        %3914 = vmatpush.msra.mxu0 0.0
        %3915 = vmatpush.msra.mxu0 0.0
        %3916 = vmatpush.msra.mxu0 0.0
        %3917 = vmatpush.msra.mxu0 0.0
        %3918 = vmatpush.msra.mxu0 0.0
        %3919 = vmatpush.msra.mxu0 0.0
        %3920 = vmatpush.msra.mxu0 0.0
        %3921 = vmatpush.msra.mxu0 0.0
        %v3922 = vand.u32 %v3405, 4294901760
        %v3923 = vsub.f32 %v3405, %v3922
        %v3924 = vand.u32 %v3923, 4294901760
        %3925 = vmatpush.msra.mxu0 %v3924
        %v3926 = vand.u32 %v3404, 4294901760
        %v3927 = vsub.f32 %v3404, %v3926
        %v3928 = vand.u32 %v3927, 4294901760
        %3929 = vmatpush.msra.mxu0 %v3928
        %v3930 = vand.u32 %v3407, 4294901760
        %3931 = vmatmul.f32.gmra.mxu0 %v3930
        %v3932 = vpop.f32.mrf.mxu0
        %v3933 = vadd.f32 %v3816, %v3932
        %v3934 = vand.u32 %v3410, 4294901760
        %3935 = vmatmul.f32.gmra.mxu0 %v3934
        %v3936 = vpop.f32.mrf.mxu0
        %v3937 = vadd.f32 %v3822, %v3936
        %v3938 = vand.u32 %v3413, 4294901760
        %3939 = vmatmul.f32.gmra.mxu0 %v3938
        %v3940 = vpop.f32.mrf.mxu0
        %v3941 = vadd.f32 %v3828, %v3940
        %v3942 = vand.u32 %v3416, 4294901760
        %3943 = vmatmul.f32.gmra.mxu0 %v3942
        %v3944 = vpop.f32.mrf.mxu0
        %v3945 = vadd.f32 %v3834, %v3944
        %v3946 = vand.u32 %v3419, 4294901760
        %3947 = vmatmul.f32.gmra.mxu0 %v3946
        %v3948 = vpop.f32.mrf.mxu0
        %v3949 = vadd.f32 %v3840, %v3948
        %v3950 = vand.u32 %v3422, 4294901760
        %3951 = vmatmul.f32.gmra.mxu0 %v3950
        %v3952 = vpop.f32.mrf.mxu0
        %v3953 = vadd.f32 %v3846, %v3952
        %v3954 = vand.u32 %v3425, 4294901760
        %3955 = vmatmul.f32.gmra.mxu0 %v3954
        %v3956 = vpop.f32.mrf.mxu0
        %v3957 = vadd.f32 %v3852, %v3956
        %v3958 = vand.u32 %v3428, 4294901760
        %3959 = vmatmul.f32.gmra.mxu0 %v3958
        %v3960 = vpop.f32.mrf.mxu0
        %v3961 = vadd.f32 %v3858, %v3960
        %v3962 = vand.u32 %v3431, 4294901760
        %3963 = vmatmul.f32.gmra.mxu0 %v3962
        %v3964 = vpop.f32.mrf.mxu0
        %v3965 = vadd.f32 %v3864, %v3964
        %v3966 = vand.u32 %v3434, 4294901760
        %3967 = vmatmul.f32.gmra.mxu0 %v3966
        %v3968 = vpop.f32.mrf.mxu0
        %v3969 = vadd.f32 %v3870, %v3968
        %v3970 = vand.u32 %v3437, 4294901760
        %3971 = vmatmul.f32.gmra.mxu0 %v3970
        %v3972 = vpop.f32.mrf.mxu0
        %v3973 = vadd.f32 %v3876, %v3972
        %v3974 = vand.u32 %v3440, 4294901760
        %3975 = vmatmul.f32.gmra.mxu0 %v3974
        %v3976 = vpop.f32.mrf.mxu0
        %v3977 = vadd.f32 %v3882, %v3976
        %v3978 = vand.u32 %v3443, 4294901760
        %3979 = vmatmul.f32.gmra.mxu0 %v3978
        %v3980 = vpop.f32.mrf.mxu0
        %v3981 = vadd.f32 %v3888, %v3980
        %v3982 = vand.u32 %v3446, 4294901760
        %3983 = vmatmul.f32.gmra.mxu0 %v3982
        %v3984 = vpop.f32.mrf.mxu0
        %v3985 = vadd.f32 %v3894, %v3984
        %v3986 = vand.u32 %v3449, 4294901760
        %3987 = vmatmul.f32.gmra.mxu0 %v3986
        %v3988 = vpop.f32.mrf.mxu0
        %v3989 = vadd.f32 %v3900, %v3988
        %v3990 = vand.u32 %v3452, 4294901760
        %3991 = vmatmul.f32.gmra.mxu0 %v3990
        %v3992 = vpop.f32.mrf.mxu0
        %v3993 = vadd.f32 %v3906, %v3992
        %3994 = vdwg.mxu0
        %3995 = vmatpush.msra.mxu0 0.0
        %3996 = vmatpush.msra.mxu0 0.0
        %3997 = vmatpush.msra.mxu0 0.0
        %3998 = vmatpush.msra.mxu0 0.0
        %3999 = vmatpush.msra.mxu0 0.0
        %4000 = vmatpush.msra.mxu0 0.0
        %4001 = vmatpush.msra.mxu0 0.0
        %4002 = vmatpush.msra.mxu0 0.0
        %4003 = vmatpush.msra.mxu0 0.0
        %4004 = vmatpush.msra.mxu0 0.0
        %4005 = vmatpush.msra.mxu0 0.0
        %4006 = vmatpush.msra.mxu0 0.0
        %4007 = vmatpush.msra.mxu0 0.0
        %4008 = vmatpush.msra.mxu0 0.0
        %v4009 = vand.u32 %v3405, 4294901760
        %4010 = vmatpush.msra.mxu0 %v4009
        %v4011 = vand.u32 %v3404, 4294901760
        %4012 = vmatpush.msra.mxu0 %v4011
        %v4013 = vand.u32 %v3407, 4294901760
        %4014 = vmatmul.f32.gmra.mxu0 %v4013
        %v4015 = vpop.f32.mrf.mxu0
        %v4016 = vadd.f32 %v3933, %v4015
        %v4017 = vand.u32 %v3410, 4294901760
        %4018 = vmatmul.f32.gmra.mxu0 %v4017
        %v4019 = vpop.f32.mrf.mxu0
        %v4020 = vadd.f32 %v3937, %v4019
        %v4021 = vand.u32 %v3413, 4294901760
        %4022 = vmatmul.f32.gmra.mxu0 %v4021
        %v4023 = vpop.f32.mrf.mxu0
        %v4024 = vadd.f32 %v3941, %v4023
        %v4025 = vand.u32 %v3416, 4294901760
        %4026 = vmatmul.f32.gmra.mxu0 %v4025
        %v4027 = vpop.f32.mrf.mxu0
        %v4028 = vadd.f32 %v3945, %v4027
        %v4029 = vand.u32 %v3419, 4294901760
        %4030 = vmatmul.f32.gmra.mxu0 %v4029
        %v4031 = vpop.f32.mrf.mxu0
        %v4032 = vadd.f32 %v3949, %v4031
        %v4033 = vand.u32 %v3422, 4294901760
        %4034 = vmatmul.f32.gmra.mxu0 %v4033
        %v4035 = vpop.f32.mrf.mxu0
        %v4036 = vadd.f32 %v3953, %v4035
        %v4037 = vand.u32 %v3425, 4294901760
        %4038 = vmatmul.f32.gmra.mxu0 %v4037
        %v4039 = vpop.f32.mrf.mxu0
        %v4040 = vadd.f32 %v3957, %v4039
        %v4041 = vand.u32 %v3428, 4294901760
        %4042 = vmatmul.f32.gmra.mxu0 %v4041
        %v4043 = vpop.f32.mrf.mxu0
        %v4044 = vadd.f32 %v3961, %v4043
        %v4045 = vand.u32 %v3431, 4294901760
        %4046 = vmatmul.f32.gmra.mxu0 %v4045
        %v4047 = vpop.f32.mrf.mxu0
        %v4048 = vadd.f32 %v3965, %v4047
        %v4049 = vand.u32 %v3434, 4294901760
        %4050 = vmatmul.f32.gmra.mxu0 %v4049
        %v4051 = vpop.f32.mrf.mxu0
        %v4052 = vadd.f32 %v3969, %v4051
        %v4053 = vand.u32 %v3437, 4294901760
        %4054 = vmatmul.f32.gmra.mxu0 %v4053
        %v4055 = vpop.f32.mrf.mxu0
        %v4056 = vadd.f32 %v3973, %v4055
        %v4057 = vand.u32 %v3440, 4294901760
        %4058 = vmatmul.f32.gmra.mxu0 %v4057
        %v4059 = vpop.f32.mrf.mxu0
        %v4060 = vadd.f32 %v3977, %v4059
        %v4061 = vand.u32 %v3443, 4294901760
        %4062 = vmatmul.f32.gmra.mxu0 %v4061
        %v4063 = vpop.f32.mrf.mxu0
        %v4064 = vadd.f32 %v3981, %v4063
        %v4065 = vand.u32 %v3446, 4294901760
        %4066 = vmatmul.f32.gmra.mxu0 %v4065
        %v4067 = vpop.f32.mrf.mxu0
        %v4068 = vadd.f32 %v3985, %v4067
        %v4069 = vand.u32 %v3449, 4294901760
        %4070 = vmatmul.f32.gmra.mxu0 %v4069
        %v4071 = vpop.f32.mrf.mxu0
        %v4072 = vadd.f32 %v3989, %v4071
        %v4073 = vand.u32 %v3452, 4294901760
        %4074 = vmatmul.f32.gmra.mxu0 %v4073
        %v4075 = vpop.f32.mrf.mxu0
        %v4076 = vadd.f32 %v3993, %v4075
        %4077 = vdwg.mxu0
        %v4078 = vadd.f32 %v3325, %v4016
        %v4079 = vadd.f32 %v3329, %v4020
        %v4080 = vadd.f32 %v3333, %v4024
        %v4081 = vadd.f32 %v3337, %v4028
        %v4082 = vadd.f32 %v3341, %v4032
        %v4083 = vadd.f32 %v3345, %v4036
        %v4084 = vadd.f32 %v3349, %v4040
        %v4085 = vadd.f32 %v3353, %v4044
        %v4086 = vadd.f32 %v3357, %v4048
        %v4087 = vadd.f32 %v3361, %v4052
        %v4088 = vadd.f32 %v3365, %v4056
        %v4089 = vadd.f32 %v3369, %v4060
        %v4090 = vadd.f32 %v3373, %v4064
        %v4091 = vadd.f32 %v3377, %v4068
        %v4092 = vadd.f32 %v3381, %v4072
        %v4093 = vadd.f32 %v3385, %v4076
        %v4094 = vld [vmem:[#allocation2 + $0x7] sm:$0xff]
        %v4095 = vld [vmem:[#allocation2 + $0xf] sm:$0xff]
        %v4096 = vld [vmem:[#allocation2 + $0x17] sm:$0xff]
        %v4097 = vld [vmem:[#allocation2 + $0x1f] sm:$0xff]
        %v4098 = vld [vmem:[#allocation2 + $0x27] sm:$0xff]
        %v4099 = vld [vmem:[#allocation2 + $0x2f] sm:$0xff]
        %v4100 = vld [vmem:[#allocation2 + $0x37] sm:$0xff]
        %v4101 = vld [vmem:[#allocation2 + $0x3f] sm:$0xff]
        %v4102 = vld [vmem:[#allocation2 + $0x47] sm:$0xff]
        %v4103 = vld [vmem:[#allocation2 + $0x4f] sm:$0xff]
        %v4104 = vld [vmem:[#allocation2 + $0x57] sm:$0xff]
        %v4105 = vld [vmem:[#allocation2 + $0x5f] sm:$0xff]
        %v4106 = vld [vmem:[#allocation2 + $0x67] sm:$0xff]
        %v4107 = vld [vmem:[#allocation2 + $0x6f] sm:$0xff]
        %v4108 = vld [vmem:[#allocation2 + $0x77] sm:$0xff]
        %v4109 = vld [vmem:[#allocation2 + $0x7f] sm:$0xff]
        %v4110 = vld [vmem:[%s5] sm:$0xff]
        %v4111 = vld [vmem:[%s5 + $0x8] sm:$0xff]
        %v4112 = vld [vmem:[#allocation2 + $0x87] sm:$0xff]
        %v4113 = vld [vmem:[#allocation2 + $0x8f] sm:$0xff]
        %s4114 = scalar_lea.vmem %s5, 48
        %v4115 = vld [vmem:[%s4114] sm:$0xff]
        %v4116 = vld [vmem:[%s4114 + $0x8] sm:$0xff]
        %v4118 = vsel %vm592, %v4096, 0
        %v4121 = vsel %vm592, %v4097, 0
        %v4124 = vsel %vm592, %v4098, 0
        %v4127 = vsel %vm592, %v4099, 0
        %v4130 = vsel %vm592, %v4100, 0
        %v4133 = vsel %vm592, %v4101, 0
        %v4136 = vsel %vm592, %v4102, 0
        %v4139 = vsel %vm592, %v4103, 0
        %v4142 = vsel %vm592, %v4104, 0
        %v4145 = vsel %vm592, %v4105, 0
        %v4148 = vsel %vm592, %v4106, 0
        %v4151 = vsel %vm592, %v4107, 0
        %v4154 = vsel %vm592, %v4108, 0
        %v4157 = vsel %vm592, %v4109, 0
        %v4160 = vsel %vm592, %v4112, 0
        %v4163 = vsel %vm592, %v4113, 0
        %4165 = vmatpush.msra.mxu0 0.0
        %4166 = vmatpush.msra.mxu0 0.0
        %4167 = vmatpush.msra.mxu0 0.0
        %4168 = vmatpush.msra.mxu0 0.0
        %4169 = vmatpush.msra.mxu0 0.0
        %4170 = vmatpush.msra.mxu0 0.0
        %4171 = vmatpush.msra.mxu0 0.0
        %4172 = vmatpush.msra.mxu0 0.0
        %4173 = vmatpush.msra.mxu0 0.0
        %4174 = vmatpush.msra.mxu0 0.0
        %4175 = vmatpush.msra.mxu0 0.0
        %4176 = vmatpush.msra.mxu0 0.0
        %4177 = vmatpush.msra.mxu0 0.0
        %4178 = vmatpush.msra.mxu0 0.0
        %v4179 = vand.u32 %v4116, 4294901760
        %4180 = vmatpush.msra.mxu0 %v4179
        %v4181 = vand.u32 %v4115, 4294901760
        %4182 = vmatpush.msra.mxu0 %v4181
        %v4183 = vand.u32 %v4118, 4294901760
        %v4184 = vsub.f32 %v4118, %v4183
        %v4185 = vand.u32 %v4184, 4294901760
        %v4186 = vsub.f32 %v4184, %v4185
        %v4187 = vand.u32 %v4186, 4294901760
        %4188 = vmatmul.f32.gmra.mxu0 %v4187
        %v4189 = vpop.f32.mrf.mxu0
        %v4190 = vadd.f32 0.0, %v4189
        %v4191 = vand.u32 %v4121, 4294901760
        %v4192 = vsub.f32 %v4121, %v4191
        %v4193 = vand.u32 %v4192, 4294901760
        %v4194 = vsub.f32 %v4192, %v4193
        %v4195 = vand.u32 %v4194, 4294901760
        %4196 = vmatmul.f32.gmra.mxu0 %v4195
        %v4197 = vpop.f32.mrf.mxu0
        %v4198 = vadd.f32 0.0, %v4197
        %v4199 = vand.u32 %v4124, 4294901760
        %v4200 = vsub.f32 %v4124, %v4199
        %v4201 = vand.u32 %v4200, 4294901760
        %v4202 = vsub.f32 %v4200, %v4201
        %v4203 = vand.u32 %v4202, 4294901760
        %4204 = vmatmul.f32.gmra.mxu0 %v4203
        %v4205 = vpop.f32.mrf.mxu0
        %v4206 = vadd.f32 0.0, %v4205
        %v4207 = vand.u32 %v4127, 4294901760
        %v4208 = vsub.f32 %v4127, %v4207
        %v4209 = vand.u32 %v4208, 4294901760
        %v4210 = vsub.f32 %v4208, %v4209
        %v4211 = vand.u32 %v4210, 4294901760
        %4212 = vmatmul.f32.gmra.mxu0 %v4211
        %v4213 = vpop.f32.mrf.mxu0
        %v4214 = vadd.f32 0.0, %v4213
        %v4215 = vand.u32 %v4130, 4294901760
        %v4216 = vsub.f32 %v4130, %v4215
        %v4217 = vand.u32 %v4216, 4294901760
        %v4218 = vsub.f32 %v4216, %v4217
        %v4219 = vand.u32 %v4218, 4294901760
        %4220 = vmatmul.f32.gmra.mxu0 %v4219
        %v4221 = vpop.f32.mrf.mxu0
        %v4222 = vadd.f32 0.0, %v4221
        %v4223 = vand.u32 %v4133, 4294901760
        %v4224 = vsub.f32 %v4133, %v4223
        %v4225 = vand.u32 %v4224, 4294901760
        %v4226 = vsub.f32 %v4224, %v4225
        %v4227 = vand.u32 %v4226, 4294901760
        %4228 = vmatmul.f32.gmra.mxu0 %v4227
        %v4229 = vpop.f32.mrf.mxu0
        %v4230 = vadd.f32 0.0, %v4229
        %v4231 = vand.u32 %v4136, 4294901760
        %v4232 = vsub.f32 %v4136, %v4231
        %v4233 = vand.u32 %v4232, 4294901760
        %v4234 = vsub.f32 %v4232, %v4233
        %v4235 = vand.u32 %v4234, 4294901760
        %4236 = vmatmul.f32.gmra.mxu0 %v4235
        %v4237 = vpop.f32.mrf.mxu0
        %v4238 = vadd.f32 0.0, %v4237
        %v4239 = vand.u32 %v4139, 4294901760
        %v4240 = vsub.f32 %v4139, %v4239
        %v4241 = vand.u32 %v4240, 4294901760
        %v4242 = vsub.f32 %v4240, %v4241
        %v4243 = vand.u32 %v4242, 4294901760
        %4244 = vmatmul.f32.gmra.mxu0 %v4243
        %v4245 = vpop.f32.mrf.mxu0
        %v4246 = vadd.f32 0.0, %v4245
        %v4247 = vand.u32 %v4142, 4294901760
        %v4248 = vsub.f32 %v4142, %v4247
        %v4249 = vand.u32 %v4248, 4294901760
        %v4250 = vsub.f32 %v4248, %v4249
        %v4251 = vand.u32 %v4250, 4294901760
        %4252 = vmatmul.f32.gmra.mxu0 %v4251
        %v4253 = vpop.f32.mrf.mxu0
        %v4254 = vadd.f32 0.0, %v4253
        %v4255 = vand.u32 %v4145, 4294901760
        %v4256 = vsub.f32 %v4145, %v4255
        %v4257 = vand.u32 %v4256, 4294901760
        %v4258 = vsub.f32 %v4256, %v4257
        %v4259 = vand.u32 %v4258, 4294901760
        %4260 = vmatmul.f32.gmra.mxu0 %v4259
        %v4261 = vpop.f32.mrf.mxu0
        %v4262 = vadd.f32 0.0, %v4261
        %v4263 = vand.u32 %v4148, 4294901760
        %v4264 = vsub.f32 %v4148, %v4263
        %v4265 = vand.u32 %v4264, 4294901760
        %v4266 = vsub.f32 %v4264, %v4265
        %v4267 = vand.u32 %v4266, 4294901760
        %4268 = vmatmul.f32.gmra.mxu0 %v4267
        %v4269 = vpop.f32.mrf.mxu0
        %v4270 = vadd.f32 0.0, %v4269
        %v4271 = vand.u32 %v4151, 4294901760
        %v4272 = vsub.f32 %v4151, %v4271
        %v4273 = vand.u32 %v4272, 4294901760
        %v4274 = vsub.f32 %v4272, %v4273
        %v4275 = vand.u32 %v4274, 4294901760
        %4276 = vmatmul.f32.gmra.mxu0 %v4275
        %v4277 = vpop.f32.mrf.mxu0
        %v4278 = vadd.f32 0.0, %v4277
        %v4279 = vand.u32 %v4154, 4294901760
        %v4280 = vsub.f32 %v4154, %v4279
        %v4281 = vand.u32 %v4280, 4294901760
        %v4282 = vsub.f32 %v4280, %v4281
        %v4283 = vand.u32 %v4282, 4294901760
        %4284 = vmatmul.f32.gmra.mxu0 %v4283
        %v4285 = vpop.f32.mrf.mxu0
        %v4286 = vadd.f32 0.0, %v4285
        %v4287 = vand.u32 %v4157, 4294901760
        %v4288 = vsub.f32 %v4157, %v4287
        %v4289 = vand.u32 %v4288, 4294901760
        %v4290 = vsub.f32 %v4288, %v4289
        %v4291 = vand.u32 %v4290, 4294901760
        %4292 = vmatmul.f32.gmra.mxu0 %v4291
        %v4293 = vpop.f32.mrf.mxu0
        %v4294 = vadd.f32 0.0, %v4293
        %v4295 = vand.u32 %v4160, 4294901760
        %v4296 = vsub.f32 %v4160, %v4295
        %v4297 = vand.u32 %v4296, 4294901760
        %v4298 = vsub.f32 %v4296, %v4297
        %v4299 = vand.u32 %v4298, 4294901760
        %4300 = vmatmul.f32.gmra.mxu0 %v4299
        %v4301 = vpop.f32.mrf.mxu0
        %v4302 = vadd.f32 0.0, %v4301
        %v4303 = vand.u32 %v4163, 4294901760
        %v4304 = vsub.f32 %v4163, %v4303
        %v4305 = vand.u32 %v4304, 4294901760
        %v4306 = vsub.f32 %v4304, %v4305
        %v4307 = vand.u32 %v4306, 4294901760
        %4308 = vmatmul.f32.gmra.mxu0 %v4307
        %v4309 = vpop.f32.mrf.mxu0
        %v4310 = vadd.f32 0.0, %v4309
        %4311 = vdwg.mxu0
        %4312 = vmatpush.msra.mxu0 0.0
        %4313 = vmatpush.msra.mxu0 0.0
        %4314 = vmatpush.msra.mxu0 0.0
        %4315 = vmatpush.msra.mxu0 0.0
        %4316 = vmatpush.msra.mxu0 0.0
        %4317 = vmatpush.msra.mxu0 0.0
        %4318 = vmatpush.msra.mxu0 0.0
        %4319 = vmatpush.msra.mxu0 0.0
        %4320 = vmatpush.msra.mxu0 0.0
        %4321 = vmatpush.msra.mxu0 0.0
        %4322 = vmatpush.msra.mxu0 0.0
        %4323 = vmatpush.msra.mxu0 0.0
        %4324 = vmatpush.msra.mxu0 0.0
        %4325 = vmatpush.msra.mxu0 0.0
        %v4326 = vand.u32 %v4116, 4294901760
        %v4327 = vsub.f32 %v4116, %v4326
        %v4328 = vand.u32 %v4327, 4294901760
        %v4329 = vsub.f32 %v4327, %v4328
        %v4330 = vand.u32 %v4329, 4294901760
        %4331 = vmatpush.msra.mxu0 %v4330
        %v4332 = vand.u32 %v4115, 4294901760
        %v4333 = vsub.f32 %v4115, %v4332
        %v4334 = vand.u32 %v4333, 4294901760
        %v4335 = vsub.f32 %v4333, %v4334
        %v4336 = vand.u32 %v4335, 4294901760
        %4337 = vmatpush.msra.mxu0 %v4336
        %v4338 = vand.u32 %v4118, 4294901760
        %4339 = vmatmul.f32.gmra.mxu0 %v4338
        %v4340 = vpop.f32.mrf.mxu0
        %v4341 = vadd.f32 %v4190, %v4340
        %v4342 = vand.u32 %v4121, 4294901760
        %4343 = vmatmul.f32.gmra.mxu0 %v4342
        %v4344 = vpop.f32.mrf.mxu0
        %v4345 = vadd.f32 %v4198, %v4344
        %v4346 = vand.u32 %v4124, 4294901760
        %4347 = vmatmul.f32.gmra.mxu0 %v4346
        %v4348 = vpop.f32.mrf.mxu0
        %v4349 = vadd.f32 %v4206, %v4348
        %v4350 = vand.u32 %v4127, 4294901760
        %4351 = vmatmul.f32.gmra.mxu0 %v4350
        %v4352 = vpop.f32.mrf.mxu0
        %v4353 = vadd.f32 %v4214, %v4352
        %v4354 = vand.u32 %v4130, 4294901760
        %4355 = vmatmul.f32.gmra.mxu0 %v4354
        %v4356 = vpop.f32.mrf.mxu0
        %v4357 = vadd.f32 %v4222, %v4356
        %v4358 = vand.u32 %v4133, 4294901760
        %4359 = vmatmul.f32.gmra.mxu0 %v4358
        %v4360 = vpop.f32.mrf.mxu0
        %v4361 = vadd.f32 %v4230, %v4360
        %v4362 = vand.u32 %v4136, 4294901760
        %4363 = vmatmul.f32.gmra.mxu0 %v4362
        %v4364 = vpop.f32.mrf.mxu0
        %v4365 = vadd.f32 %v4238, %v4364
        %v4366 = vand.u32 %v4139, 4294901760
        %4367 = vmatmul.f32.gmra.mxu0 %v4366
        %v4368 = vpop.f32.mrf.mxu0
        %v4369 = vadd.f32 %v4246, %v4368
        %v4370 = vand.u32 %v4142, 4294901760
        %4371 = vmatmul.f32.gmra.mxu0 %v4370
        %v4372 = vpop.f32.mrf.mxu0
        %v4373 = vadd.f32 %v4254, %v4372
        %v4374 = vand.u32 %v4145, 4294901760
        %4375 = vmatmul.f32.gmra.mxu0 %v4374
        %v4376 = vpop.f32.mrf.mxu0
        %v4377 = vadd.f32 %v4262, %v4376
        %v4378 = vand.u32 %v4148, 4294901760
        %4379 = vmatmul.f32.gmra.mxu0 %v4378
        %v4380 = vpop.f32.mrf.mxu0
        %v4381 = vadd.f32 %v4270, %v4380
        %v4382 = vand.u32 %v4151, 4294901760
        %4383 = vmatmul.f32.gmra.mxu0 %v4382
        %v4384 = vpop.f32.mrf.mxu0
        %v4385 = vadd.f32 %v4278, %v4384
        %v4386 = vand.u32 %v4154, 4294901760
        %4387 = vmatmul.f32.gmra.mxu0 %v4386
        %v4388 = vpop.f32.mrf.mxu0
        %v4389 = vadd.f32 %v4286, %v4388
        %v4390 = vand.u32 %v4157, 4294901760
        %4391 = vmatmul.f32.gmra.mxu0 %v4390
        %v4392 = vpop.f32.mrf.mxu0
        %v4393 = vadd.f32 %v4294, %v4392
        %v4394 = vand.u32 %v4160, 4294901760
        %4395 = vmatmul.f32.gmra.mxu0 %v4394
        %v4396 = vpop.f32.mrf.mxu0
        %v4397 = vadd.f32 %v4302, %v4396
        %v4398 = vand.u32 %v4163, 4294901760
        %4399 = vmatmul.f32.gmra.mxu0 %v4398
        %v4400 = vpop.f32.mrf.mxu0
        %v4401 = vadd.f32 %v4310, %v4400
        %4402 = vdwg.mxu0
        %4403 = vmatpush.msra.mxu0 0.0
        %4404 = vmatpush.msra.mxu0 0.0
        %4405 = vmatpush.msra.mxu0 0.0
        %4406 = vmatpush.msra.mxu0 0.0
        %4407 = vmatpush.msra.mxu0 0.0
        %4408 = vmatpush.msra.mxu0 0.0
        %4409 = vmatpush.msra.mxu0 0.0
        %4410 = vmatpush.msra.mxu0 0.0
        %4411 = vmatpush.msra.mxu0 0.0
        %4412 = vmatpush.msra.mxu0 0.0
        %4413 = vmatpush.msra.mxu0 0.0
        %4414 = vmatpush.msra.mxu0 0.0
        %4415 = vmatpush.msra.mxu0 0.0
        %4416 = vmatpush.msra.mxu0 0.0
        %v4417 = vand.u32 %v4116, 4294901760
        %v4418 = vsub.f32 %v4116, %v4417
        %4419 = vmatpush.msra.mxu0 %v4418
        %v4420 = vand.u32 %v4115, 4294901760
        %v4421 = vsub.f32 %v4115, %v4420
        %4422 = vmatpush.msra.mxu0 %v4421
        %v4423 = vand.u32 %v4118, 4294901760
        %v4424 = vsub.f32 %v4118, %v4423
        %4425 = vmatmul.f32.gmra.mxu0 %v4424
        %v4426 = vpop.f32.mrf.mxu0
        %v4427 = vadd.f32 %v4341, %v4426
        %v4428 = vand.u32 %v4121, 4294901760
        %v4429 = vsub.f32 %v4121, %v4428
        %4430 = vmatmul.f32.gmra.mxu0 %v4429
        %v4431 = vpop.f32.mrf.mxu0
        %v4432 = vadd.f32 %v4345, %v4431
        %v4433 = vand.u32 %v4124, 4294901760
        %v4434 = vsub.f32 %v4124, %v4433
        %4435 = vmatmul.f32.gmra.mxu0 %v4434
        %v4436 = vpop.f32.mrf.mxu0
        %v4437 = vadd.f32 %v4349, %v4436
        %v4438 = vand.u32 %v4127, 4294901760
        %v4439 = vsub.f32 %v4127, %v4438
        %4440 = vmatmul.f32.gmra.mxu0 %v4439
        %v4441 = vpop.f32.mrf.mxu0
        %v4442 = vadd.f32 %v4353, %v4441
        %v4443 = vand.u32 %v4130, 4294901760
        %v4444 = vsub.f32 %v4130, %v4443
        %4445 = vmatmul.f32.gmra.mxu0 %v4444
        %v4446 = vpop.f32.mrf.mxu0
        %v4447 = vadd.f32 %v4357, %v4446
        %v4448 = vand.u32 %v4133, 4294901760
        %v4449 = vsub.f32 %v4133, %v4448
        %4450 = vmatmul.f32.gmra.mxu0 %v4449
        %v4451 = vpop.f32.mrf.mxu0
        %v4452 = vadd.f32 %v4361, %v4451
        %v4453 = vand.u32 %v4136, 4294901760
        %v4454 = vsub.f32 %v4136, %v4453
        %4455 = vmatmul.f32.gmra.mxu0 %v4454
        %v4456 = vpop.f32.mrf.mxu0
        %v4457 = vadd.f32 %v4365, %v4456
        %v4458 = vand.u32 %v4139, 4294901760
        %v4459 = vsub.f32 %v4139, %v4458
        %4460 = vmatmul.f32.gmra.mxu0 %v4459
        %v4461 = vpop.f32.mrf.mxu0
        %v4462 = vadd.f32 %v4369, %v4461
        %v4463 = vand.u32 %v4142, 4294901760
        %v4464 = vsub.f32 %v4142, %v4463
        %4465 = vmatmul.f32.gmra.mxu0 %v4464
        %v4466 = vpop.f32.mrf.mxu0
        %v4467 = vadd.f32 %v4373, %v4466
        %v4468 = vand.u32 %v4145, 4294901760
        %v4469 = vsub.f32 %v4145, %v4468
        %4470 = vmatmul.f32.gmra.mxu0 %v4469
        %v4471 = vpop.f32.mrf.mxu0
        %v4472 = vadd.f32 %v4377, %v4471
        %v4473 = vand.u32 %v4148, 4294901760
        %v4474 = vsub.f32 %v4148, %v4473
        %4475 = vmatmul.f32.gmra.mxu0 %v4474
        %v4476 = vpop.f32.mrf.mxu0
        %v4477 = vadd.f32 %v4381, %v4476
        %v4478 = vand.u32 %v4151, 4294901760
        %v4479 = vsub.f32 %v4151, %v4478
        %4480 = vmatmul.f32.gmra.mxu0 %v4479
        %v4481 = vpop.f32.mrf.mxu0
        %v4482 = vadd.f32 %v4385, %v4481
        %v4483 = vand.u32 %v4154, 4294901760
        %v4484 = vsub.f32 %v4154, %v4483
        %4485 = vmatmul.f32.gmra.mxu0 %v4484
        %v4486 = vpop.f32.mrf.mxu0
        %v4487 = vadd.f32 %v4389, %v4486
        %v4488 = vand.u32 %v4157, 4294901760
        %v4489 = vsub.f32 %v4157, %v4488
        %4490 = vmatmul.f32.gmra.mxu0 %v4489
        %v4491 = vpop.f32.mrf.mxu0
        %v4492 = vadd.f32 %v4393, %v4491
        %v4493 = vand.u32 %v4160, 4294901760
        %v4494 = vsub.f32 %v4160, %v4493
        %4495 = vmatmul.f32.gmra.mxu0 %v4494
        %v4496 = vpop.f32.mrf.mxu0
        %v4497 = vadd.f32 %v4397, %v4496
        %v4498 = vand.u32 %v4163, 4294901760
        %v4499 = vsub.f32 %v4163, %v4498
        %4500 = vmatmul.f32.gmra.mxu0 %v4499
        %v4501 = vpop.f32.mrf.mxu0
        %v4502 = vadd.f32 %v4401, %v4501
        %4503 = vdwg.mxu0
        %4504 = vmatpush.msra.mxu0 0.0
        %4505 = vmatpush.msra.mxu0 0.0
        %4506 = vmatpush.msra.mxu0 0.0
        %4507 = vmatpush.msra.mxu0 0.0
        %4508 = vmatpush.msra.mxu0 0.0
        %4509 = vmatpush.msra.mxu0 0.0
        %4510 = vmatpush.msra.mxu0 0.0
        %4511 = vmatpush.msra.mxu0 0.0
        %4512 = vmatpush.msra.mxu0 0.0
        %4513 = vmatpush.msra.mxu0 0.0
        %4514 = vmatpush.msra.mxu0 0.0
        %4515 = vmatpush.msra.mxu0 0.0
        %4516 = vmatpush.msra.mxu0 0.0
        %4517 = vmatpush.msra.mxu0 0.0
        %v4518 = vand.u32 %v4116, 4294901760
        %4519 = vmatpush.msra.mxu0 %v4518
        %v4520 = vand.u32 %v4115, 4294901760
        %4521 = vmatpush.msra.mxu0 %v4520
        %v4522 = vand.u32 %v4118, 4294901760
        %v4523 = vsub.f32 %v4118, %v4522
        %v4524 = vand.u32 %v4523, 4294901760
        %4525 = vmatmul.f32.gmra.mxu0 %v4524
        %v4526 = vpop.f32.mrf.mxu0
        %v4527 = vadd.f32 %v4427, %v4526
        %v4528 = vand.u32 %v4121, 4294901760
        %v4529 = vsub.f32 %v4121, %v4528
        %v4530 = vand.u32 %v4529, 4294901760
        %4531 = vmatmul.f32.gmra.mxu0 %v4530
        %v4532 = vpop.f32.mrf.mxu0
        %v4533 = vadd.f32 %v4432, %v4532
        %v4534 = vand.u32 %v4124, 4294901760
        %v4535 = vsub.f32 %v4124, %v4534
        %v4536 = vand.u32 %v4535, 4294901760
        %4537 = vmatmul.f32.gmra.mxu0 %v4536
        %v4538 = vpop.f32.mrf.mxu0
        %v4539 = vadd.f32 %v4437, %v4538
        %v4540 = vand.u32 %v4127, 4294901760
        %v4541 = vsub.f32 %v4127, %v4540
        %v4542 = vand.u32 %v4541, 4294901760
        %4543 = vmatmul.f32.gmra.mxu0 %v4542
        %v4544 = vpop.f32.mrf.mxu0
        %v4545 = vadd.f32 %v4442, %v4544
        %v4546 = vand.u32 %v4130, 4294901760
        %v4547 = vsub.f32 %v4130, %v4546
        %v4548 = vand.u32 %v4547, 4294901760
        %4549 = vmatmul.f32.gmra.mxu0 %v4548
        %v4550 = vpop.f32.mrf.mxu0
        %v4551 = vadd.f32 %v4447, %v4550
        %v4552 = vand.u32 %v4133, 4294901760
        %v4553 = vsub.f32 %v4133, %v4552
        %v4554 = vand.u32 %v4553, 4294901760
        %4555 = vmatmul.f32.gmra.mxu0 %v4554
        %v4556 = vpop.f32.mrf.mxu0
        %v4557 = vadd.f32 %v4452, %v4556
        %v4558 = vand.u32 %v4136, 4294901760
        %v4559 = vsub.f32 %v4136, %v4558
        %v4560 = vand.u32 %v4559, 4294901760
        %4561 = vmatmul.f32.gmra.mxu0 %v4560
        %v4562 = vpop.f32.mrf.mxu0
        %v4563 = vadd.f32 %v4457, %v4562
        %v4564 = vand.u32 %v4139, 4294901760
        %v4565 = vsub.f32 %v4139, %v4564
        %v4566 = vand.u32 %v4565, 4294901760
        %4567 = vmatmul.f32.gmra.mxu0 %v4566
        %v4568 = vpop.f32.mrf.mxu0
        %v4569 = vadd.f32 %v4462, %v4568
        %v4570 = vand.u32 %v4142, 4294901760
        %v4571 = vsub.f32 %v4142, %v4570
        %v4572 = vand.u32 %v4571, 4294901760
        %4573 = vmatmul.f32.gmra.mxu0 %v4572
        %v4574 = vpop.f32.mrf.mxu0
        %v4575 = vadd.f32 %v4467, %v4574
        %v4576 = vand.u32 %v4145, 4294901760
        %v4577 = vsub.f32 %v4145, %v4576
        %v4578 = vand.u32 %v4577, 4294901760
        %4579 = vmatmul.f32.gmra.mxu0 %v4578
        %v4580 = vpop.f32.mrf.mxu0
        %v4581 = vadd.f32 %v4472, %v4580
        %v4582 = vand.u32 %v4148, 4294901760
        %v4583 = vsub.f32 %v4148, %v4582
        %v4584 = vand.u32 %v4583, 4294901760
        %4585 = vmatmul.f32.gmra.mxu0 %v4584
        %v4586 = vpop.f32.mrf.mxu0
        %v4587 = vadd.f32 %v4477, %v4586
        %v4588 = vand.u32 %v4151, 4294901760
        %v4589 = vsub.f32 %v4151, %v4588
        %v4590 = vand.u32 %v4589, 4294901760
        %4591 = vmatmul.f32.gmra.mxu0 %v4590
        %v4592 = vpop.f32.mrf.mxu0
        %v4593 = vadd.f32 %v4482, %v4592
        %v4594 = vand.u32 %v4154, 4294901760
        %v4595 = vsub.f32 %v4154, %v4594
        %v4596 = vand.u32 %v4595, 4294901760
        %4597 = vmatmul.f32.gmra.mxu0 %v4596
        %v4598 = vpop.f32.mrf.mxu0
        %v4599 = vadd.f32 %v4487, %v4598
        %v4600 = vand.u32 %v4157, 4294901760
        %v4601 = vsub.f32 %v4157, %v4600
        %v4602 = vand.u32 %v4601, 4294901760
        %4603 = vmatmul.f32.gmra.mxu0 %v4602
        %v4604 = vpop.f32.mrf.mxu0
        %v4605 = vadd.f32 %v4492, %v4604
        %v4606 = vand.u32 %v4160, 4294901760
        %v4607 = vsub.f32 %v4160, %v4606
        %v4608 = vand.u32 %v4607, 4294901760
        %4609 = vmatmul.f32.gmra.mxu0 %v4608
        %v4610 = vpop.f32.mrf.mxu0
        %v4611 = vadd.f32 %v4497, %v4610
        %v4612 = vand.u32 %v4163, 4294901760
        %v4613 = vsub.f32 %v4163, %v4612
        %v4614 = vand.u32 %v4613, 4294901760
        %4615 = vmatmul.f32.gmra.mxu0 %v4614
        %v4616 = vpop.f32.mrf.mxu0
        %v4617 = vadd.f32 %v4502, %v4616
        %4618 = vdwg.mxu0
        %4619 = vmatpush.msra.mxu0 0.0
        %4620 = vmatpush.msra.mxu0 0.0
        %4621 = vmatpush.msra.mxu0 0.0
        %4622 = vmatpush.msra.mxu0 0.0
        %4623 = vmatpush.msra.mxu0 0.0
        %4624 = vmatpush.msra.mxu0 0.0
        %4625 = vmatpush.msra.mxu0 0.0
        %4626 = vmatpush.msra.mxu0 0.0
        %4627 = vmatpush.msra.mxu0 0.0
        %4628 = vmatpush.msra.mxu0 0.0
        %4629 = vmatpush.msra.mxu0 0.0
        %4630 = vmatpush.msra.mxu0 0.0
        %4631 = vmatpush.msra.mxu0 0.0
        %4632 = vmatpush.msra.mxu0 0.0
        %v4633 = vand.u32 %v4116, 4294901760
        %v4634 = vsub.f32 %v4116, %v4633
        %v4635 = vand.u32 %v4634, 4294901760
        %4636 = vmatpush.msra.mxu0 %v4635
        %v4637 = vand.u32 %v4115, 4294901760
        %v4638 = vsub.f32 %v4115, %v4637
        %v4639 = vand.u32 %v4638, 4294901760
        %4640 = vmatpush.msra.mxu0 %v4639
        %v4641 = vand.u32 %v4118, 4294901760
        %4642 = vmatmul.f32.gmra.mxu0 %v4641
        %v4643 = vpop.f32.mrf.mxu0
        %v4644 = vadd.f32 %v4527, %v4643
        %v4645 = vand.u32 %v4121, 4294901760
        %4646 = vmatmul.f32.gmra.mxu0 %v4645
        %v4647 = vpop.f32.mrf.mxu0
        %v4648 = vadd.f32 %v4533, %v4647
        %v4649 = vand.u32 %v4124, 4294901760
        %4650 = vmatmul.f32.gmra.mxu0 %v4649
        %v4651 = vpop.f32.mrf.mxu0
        %v4652 = vadd.f32 %v4539, %v4651
        %v4653 = vand.u32 %v4127, 4294901760
        %4654 = vmatmul.f32.gmra.mxu0 %v4653
        %v4655 = vpop.f32.mrf.mxu0
        %v4656 = vadd.f32 %v4545, %v4655
        %v4657 = vand.u32 %v4130, 4294901760
        %4658 = vmatmul.f32.gmra.mxu0 %v4657
        %v4659 = vpop.f32.mrf.mxu0
        %v4660 = vadd.f32 %v4551, %v4659
        %v4661 = vand.u32 %v4133, 4294901760
        %4662 = vmatmul.f32.gmra.mxu0 %v4661
        %v4663 = vpop.f32.mrf.mxu0
        %v4664 = vadd.f32 %v4557, %v4663
        %v4665 = vand.u32 %v4136, 4294901760
        %4666 = vmatmul.f32.gmra.mxu0 %v4665
        %v4667 = vpop.f32.mrf.mxu0
        %v4668 = vadd.f32 %v4563, %v4667
        %v4669 = vand.u32 %v4139, 4294901760
        %4670 = vmatmul.f32.gmra.mxu0 %v4669
        %v4671 = vpop.f32.mrf.mxu0
        %v4672 = vadd.f32 %v4569, %v4671
        %v4673 = vand.u32 %v4142, 4294901760
        %4674 = vmatmul.f32.gmra.mxu0 %v4673
        %v4675 = vpop.f32.mrf.mxu0
        %v4676 = vadd.f32 %v4575, %v4675
        %v4677 = vand.u32 %v4145, 4294901760
        %4678 = vmatmul.f32.gmra.mxu0 %v4677
        %v4679 = vpop.f32.mrf.mxu0
        %v4680 = vadd.f32 %v4581, %v4679
        %v4681 = vand.u32 %v4148, 4294901760
        %4682 = vmatmul.f32.gmra.mxu0 %v4681
        %v4683 = vpop.f32.mrf.mxu0
        %v4684 = vadd.f32 %v4587, %v4683
        %v4685 = vand.u32 %v4151, 4294901760
        %4686 = vmatmul.f32.gmra.mxu0 %v4685
        %v4687 = vpop.f32.mrf.mxu0
        %v4688 = vadd.f32 %v4593, %v4687
        %v4689 = vand.u32 %v4154, 4294901760
        %4690 = vmatmul.f32.gmra.mxu0 %v4689
        %v4691 = vpop.f32.mrf.mxu0
        %v4692 = vadd.f32 %v4599, %v4691
        %v4693 = vand.u32 %v4157, 4294901760
        %4694 = vmatmul.f32.gmra.mxu0 %v4693
        %v4695 = vpop.f32.mrf.mxu0
        %v4696 = vadd.f32 %v4605, %v4695
        %v4697 = vand.u32 %v4160, 4294901760
        %4698 = vmatmul.f32.gmra.mxu0 %v4697
        %v4699 = vpop.f32.mrf.mxu0
        %v4700 = vadd.f32 %v4611, %v4699
        %v4701 = vand.u32 %v4163, 4294901760
        %4702 = vmatmul.f32.gmra.mxu0 %v4701
        %v4703 = vpop.f32.mrf.mxu0
        %v4704 = vadd.f32 %v4617, %v4703
        %4705 = vdwg.mxu0
        %4706 = vmatpush.msra.mxu0 0.0
        %4707 = vmatpush.msra.mxu0 0.0
        %4708 = vmatpush.msra.mxu0 0.0
        %4709 = vmatpush.msra.mxu0 0.0
        %4710 = vmatpush.msra.mxu0 0.0
        %4711 = vmatpush.msra.mxu0 0.0
        %4712 = vmatpush.msra.mxu0 0.0
        %4713 = vmatpush.msra.mxu0 0.0
        %4714 = vmatpush.msra.mxu0 0.0
        %4715 = vmatpush.msra.mxu0 0.0
        %4716 = vmatpush.msra.mxu0 0.0
        %4717 = vmatpush.msra.mxu0 0.0
        %4718 = vmatpush.msra.mxu0 0.0
        %4719 = vmatpush.msra.mxu0 0.0
        %v4720 = vand.u32 %v4116, 4294901760
        %4721 = vmatpush.msra.mxu0 %v4720
        %v4722 = vand.u32 %v4115, 4294901760
        %4723 = vmatpush.msra.mxu0 %v4722
        %v4724 = vand.u32 %v4118, 4294901760
        %4725 = vmatmul.f32.gmra.mxu0 %v4724
        %v4726 = vpop.f32.mrf.mxu0
        %v4727 = vadd.f32 %v4644, %v4726
        %v4728 = vand.u32 %v4121, 4294901760
        %4729 = vmatmul.f32.gmra.mxu0 %v4728
        %v4730 = vpop.f32.mrf.mxu0
        %v4731 = vadd.f32 %v4648, %v4730
        %v4732 = vand.u32 %v4124, 4294901760
        %4733 = vmatmul.f32.gmra.mxu0 %v4732
        %v4734 = vpop.f32.mrf.mxu0
        %v4735 = vadd.f32 %v4652, %v4734
        %v4736 = vand.u32 %v4127, 4294901760
        %4737 = vmatmul.f32.gmra.mxu0 %v4736
        %v4738 = vpop.f32.mrf.mxu0
        %v4739 = vadd.f32 %v4656, %v4738
        %v4740 = vand.u32 %v4130, 4294901760
        %4741 = vmatmul.f32.gmra.mxu0 %v4740
        %v4742 = vpop.f32.mrf.mxu0
        %v4743 = vadd.f32 %v4660, %v4742
        %v4744 = vand.u32 %v4133, 4294901760
        %4745 = vmatmul.f32.gmra.mxu0 %v4744
        %v4746 = vpop.f32.mrf.mxu0
        %v4747 = vadd.f32 %v4664, %v4746
        %v4748 = vand.u32 %v4136, 4294901760
        %4749 = vmatmul.f32.gmra.mxu0 %v4748
        %v4750 = vpop.f32.mrf.mxu0
        %v4751 = vadd.f32 %v4668, %v4750
        %v4752 = vand.u32 %v4139, 4294901760
        %4753 = vmatmul.f32.gmra.mxu0 %v4752
        %v4754 = vpop.f32.mrf.mxu0
        %v4755 = vadd.f32 %v4672, %v4754
        %v4756 = vand.u32 %v4142, 4294901760
        %4757 = vmatmul.f32.gmra.mxu0 %v4756
        %v4758 = vpop.f32.mrf.mxu0
        %v4759 = vadd.f32 %v4676, %v4758
        %v4760 = vand.u32 %v4145, 4294901760
        %4761 = vmatmul.f32.gmra.mxu0 %v4760
        %v4762 = vpop.f32.mrf.mxu0
        %v4763 = vadd.f32 %v4680, %v4762
        %v4764 = vand.u32 %v4148, 4294901760
        %4765 = vmatmul.f32.gmra.mxu0 %v4764
        %v4766 = vpop.f32.mrf.mxu0
        %v4767 = vadd.f32 %v4684, %v4766
        %v4768 = vand.u32 %v4151, 4294901760
        %4769 = vmatmul.f32.gmra.mxu0 %v4768
        %v4770 = vpop.f32.mrf.mxu0
        %v4771 = vadd.f32 %v4688, %v4770
        %v4772 = vand.u32 %v4154, 4294901760
        %4773 = vmatmul.f32.gmra.mxu0 %v4772
        %v4774 = vpop.f32.mrf.mxu0
        %v4775 = vadd.f32 %v4692, %v4774
        %v4776 = vand.u32 %v4157, 4294901760
        %4777 = vmatmul.f32.gmra.mxu0 %v4776
        %v4778 = vpop.f32.mrf.mxu0
        %v4779 = vadd.f32 %v4696, %v4778
        %v4780 = vand.u32 %v4160, 4294901760
        %4781 = vmatmul.f32.gmra.mxu0 %v4780
        %v4782 = vpop.f32.mrf.mxu0
        %v4783 = vadd.f32 %v4700, %v4782
        %v4784 = vand.u32 %v4163, 4294901760
        %4785 = vmatmul.f32.gmra.mxu0 %v4784
        %v4786 = vpop.f32.mrf.mxu0
        %v4787 = vadd.f32 %v4704, %v4786
        %4788 = vdwg.mxu0
        %v4790 = vsel %vm592, %v4094, 0
        %v4793 = vsel %vm592, %v4095, 0
        %4795 = vmatpush.msra.mxu0 0.0
        %4796 = vmatpush.msra.mxu0 0.0
        %4797 = vmatpush.msra.mxu0 0.0
        %4798 = vmatpush.msra.mxu0 0.0
        %4799 = vmatpush.msra.mxu0 0.0
        %4800 = vmatpush.msra.mxu0 0.0
        %4801 = vmatpush.msra.mxu0 0.0
        %4802 = vmatpush.msra.mxu0 0.0
        %4803 = vmatpush.msra.mxu0 0.0
        %4804 = vmatpush.msra.mxu0 0.0
        %4805 = vmatpush.msra.mxu0 0.0
        %4806 = vmatpush.msra.mxu0 0.0
        %4807 = vmatpush.msra.mxu0 0.0
        %4808 = vmatpush.msra.mxu0 0.0
        %v4809 = vand.u32 %v4111, 4294901760
        %4810 = vmatpush.msra.mxu0 %v4809
        %v4811 = vand.u32 %v4110, 4294901760
        %4812 = vmatpush.msra.mxu0 %v4811
        %v4813 = vand.u32 %v4790, 4294901760
        %v4814 = vsub.f32 %v4790, %v4813
        %v4815 = vand.u32 %v4814, 4294901760
        %v4816 = vsub.f32 %v4814, %v4815
        %v4817 = vand.u32 %v4816, 4294901760
        %4818 = vmatmul.f32.gmra.mxu0 %v4817
        %v4819 = vpop.f32.mrf.mxu0
        %v4820 = vadd.f32 %v4727, %v4819
        %v4821 = vand.u32 %v4793, 4294901760
        %v4822 = vsub.f32 %v4793, %v4821
        %v4823 = vand.u32 %v4822, 4294901760
        %v4824 = vsub.f32 %v4822, %v4823
        %v4825 = vand.u32 %v4824, 4294901760
        %4826 = vmatmul.f32.gmra.mxu0 %v4825
        %v4827 = vpop.f32.mrf.mxu0
        %v4828 = vadd.f32 %v4731, %v4827
        %v4829 = vand.u32 %v4118, 4294901760
        %v4830 = vsub.f32 %v4118, %v4829
        %v4831 = vand.u32 %v4830, 4294901760
        %v4832 = vsub.f32 %v4830, %v4831
        %v4833 = vand.u32 %v4832, 4294901760
        %4834 = vmatmul.f32.gmra.mxu0 %v4833
        %v4835 = vpop.f32.mrf.mxu0
        %v4836 = vadd.f32 %v4735, %v4835
        %v4837 = vand.u32 %v4121, 4294901760
        %v4838 = vsub.f32 %v4121, %v4837
        %v4839 = vand.u32 %v4838, 4294901760
        %v4840 = vsub.f32 %v4838, %v4839
        %v4841 = vand.u32 %v4840, 4294901760
        %4842 = vmatmul.f32.gmra.mxu0 %v4841
        %v4843 = vpop.f32.mrf.mxu0
        %v4844 = vadd.f32 %v4739, %v4843
        %v4845 = vand.u32 %v4124, 4294901760
        %v4846 = vsub.f32 %v4124, %v4845
        %v4847 = vand.u32 %v4846, 4294901760
        %v4848 = vsub.f32 %v4846, %v4847
        %v4849 = vand.u32 %v4848, 4294901760
        %4850 = vmatmul.f32.gmra.mxu0 %v4849
        %v4851 = vpop.f32.mrf.mxu0
        %v4852 = vadd.f32 %v4743, %v4851
        %v4853 = vand.u32 %v4127, 4294901760
        %v4854 = vsub.f32 %v4127, %v4853
        %v4855 = vand.u32 %v4854, 4294901760
        %v4856 = vsub.f32 %v4854, %v4855
        %v4857 = vand.u32 %v4856, 4294901760
        %4858 = vmatmul.f32.gmra.mxu0 %v4857
        %v4859 = vpop.f32.mrf.mxu0
        %v4860 = vadd.f32 %v4747, %v4859
        %v4861 = vand.u32 %v4130, 4294901760
        %v4862 = vsub.f32 %v4130, %v4861
        %v4863 = vand.u32 %v4862, 4294901760
        %v4864 = vsub.f32 %v4862, %v4863
        %v4865 = vand.u32 %v4864, 4294901760
        %4866 = vmatmul.f32.gmra.mxu0 %v4865
        %v4867 = vpop.f32.mrf.mxu0
        %v4868 = vadd.f32 %v4751, %v4867
        %v4869 = vand.u32 %v4133, 4294901760
        %v4870 = vsub.f32 %v4133, %v4869
        %v4871 = vand.u32 %v4870, 4294901760
        %v4872 = vsub.f32 %v4870, %v4871
        %v4873 = vand.u32 %v4872, 4294901760
        %4874 = vmatmul.f32.gmra.mxu0 %v4873
        %v4875 = vpop.f32.mrf.mxu0
        %v4876 = vadd.f32 %v4755, %v4875
        %v4877 = vand.u32 %v4136, 4294901760
        %v4878 = vsub.f32 %v4136, %v4877
        %v4879 = vand.u32 %v4878, 4294901760
        %v4880 = vsub.f32 %v4878, %v4879
        %v4881 = vand.u32 %v4880, 4294901760
        %4882 = vmatmul.f32.gmra.mxu0 %v4881
        %v4883 = vpop.f32.mrf.mxu0
        %v4884 = vadd.f32 %v4759, %v4883
        %v4885 = vand.u32 %v4139, 4294901760
        %v4886 = vsub.f32 %v4139, %v4885
        %v4887 = vand.u32 %v4886, 4294901760
        %v4888 = vsub.f32 %v4886, %v4887
        %v4889 = vand.u32 %v4888, 4294901760
        %4890 = vmatmul.f32.gmra.mxu0 %v4889
        %v4891 = vpop.f32.mrf.mxu0
        %v4892 = vadd.f32 %v4763, %v4891
        %v4893 = vand.u32 %v4142, 4294901760
        %v4894 = vsub.f32 %v4142, %v4893
        %v4895 = vand.u32 %v4894, 4294901760
        %v4896 = vsub.f32 %v4894, %v4895
        %v4897 = vand.u32 %v4896, 4294901760
        %4898 = vmatmul.f32.gmra.mxu0 %v4897
        %v4899 = vpop.f32.mrf.mxu0
        %v4900 = vadd.f32 %v4767, %v4899
        %v4901 = vand.u32 %v4145, 4294901760
        %v4902 = vsub.f32 %v4145, %v4901
        %v4903 = vand.u32 %v4902, 4294901760
        %v4904 = vsub.f32 %v4902, %v4903
        %v4905 = vand.u32 %v4904, 4294901760
        %4906 = vmatmul.f32.gmra.mxu0 %v4905
        %v4907 = vpop.f32.mrf.mxu0
        %v4908 = vadd.f32 %v4771, %v4907
        %v4909 = vand.u32 %v4148, 4294901760
        %v4910 = vsub.f32 %v4148, %v4909
        %v4911 = vand.u32 %v4910, 4294901760
        %v4912 = vsub.f32 %v4910, %v4911
        %v4913 = vand.u32 %v4912, 4294901760
        %4914 = vmatmul.f32.gmra.mxu0 %v4913
        %v4915 = vpop.f32.mrf.mxu0
        %v4916 = vadd.f32 %v4775, %v4915
        %v4917 = vand.u32 %v4151, 4294901760
        %v4918 = vsub.f32 %v4151, %v4917
        %v4919 = vand.u32 %v4918, 4294901760
        %v4920 = vsub.f32 %v4918, %v4919
        %v4921 = vand.u32 %v4920, 4294901760
        %4922 = vmatmul.f32.gmra.mxu0 %v4921
        %v4923 = vpop.f32.mrf.mxu0
        %v4924 = vadd.f32 %v4779, %v4923
        %v4925 = vand.u32 %v4154, 4294901760
        %v4926 = vsub.f32 %v4154, %v4925
        %v4927 = vand.u32 %v4926, 4294901760
        %v4928 = vsub.f32 %v4926, %v4927
        %v4929 = vand.u32 %v4928, 4294901760
        %4930 = vmatmul.f32.gmra.mxu0 %v4929
        %v4931 = vpop.f32.mrf.mxu0
        %v4932 = vadd.f32 %v4783, %v4931
        %v4933 = vand.u32 %v4157, 4294901760
        %v4934 = vsub.f32 %v4157, %v4933
        %v4935 = vand.u32 %v4934, 4294901760
        %v4936 = vsub.f32 %v4934, %v4935
        %v4937 = vand.u32 %v4936, 4294901760
        %4938 = vmatmul.f32.gmra.mxu0 %v4937
        %v4939 = vpop.f32.mrf.mxu0
        %v4940 = vadd.f32 %v4787, %v4939
        %4941 = vdwg.mxu0
        %4942 = vmatpush.msra.mxu0 0.0
        %4943 = vmatpush.msra.mxu0 0.0
        %4944 = vmatpush.msra.mxu0 0.0
        %4945 = vmatpush.msra.mxu0 0.0
        %4946 = vmatpush.msra.mxu0 0.0
        %4947 = vmatpush.msra.mxu0 0.0
        %4948 = vmatpush.msra.mxu0 0.0
        %4949 = vmatpush.msra.mxu0 0.0
        %4950 = vmatpush.msra.mxu0 0.0
        %4951 = vmatpush.msra.mxu0 0.0
        %4952 = vmatpush.msra.mxu0 0.0
        %4953 = vmatpush.msra.mxu0 0.0
        %4954 = vmatpush.msra.mxu0 0.0
        %4955 = vmatpush.msra.mxu0 0.0
        %v4956 = vand.u32 %v4111, 4294901760
        %v4957 = vsub.f32 %v4111, %v4956
        %v4958 = vand.u32 %v4957, 4294901760
        %v4959 = vsub.f32 %v4957, %v4958
        %v4960 = vand.u32 %v4959, 4294901760
        %4961 = vmatpush.msra.mxu0 %v4960
        %v4962 = vand.u32 %v4110, 4294901760
        %v4963 = vsub.f32 %v4110, %v4962
        %v4964 = vand.u32 %v4963, 4294901760
        %v4965 = vsub.f32 %v4963, %v4964
        %v4966 = vand.u32 %v4965, 4294901760
        %4967 = vmatpush.msra.mxu0 %v4966
        %v4968 = vand.u32 %v4790, 4294901760
        %4969 = vmatmul.f32.gmra.mxu0 %v4968
        %v4970 = vpop.f32.mrf.mxu0
        %v4971 = vadd.f32 %v4820, %v4970
        %v4972 = vand.u32 %v4793, 4294901760
        %4973 = vmatmul.f32.gmra.mxu0 %v4972
        %v4974 = vpop.f32.mrf.mxu0
        %v4975 = vadd.f32 %v4828, %v4974
        %v4976 = vand.u32 %v4118, 4294901760
        %4977 = vmatmul.f32.gmra.mxu0 %v4976
        %v4978 = vpop.f32.mrf.mxu0
        %v4979 = vadd.f32 %v4836, %v4978
        %v4980 = vand.u32 %v4121, 4294901760
        %4981 = vmatmul.f32.gmra.mxu0 %v4980
        %v4982 = vpop.f32.mrf.mxu0
        %v4983 = vadd.f32 %v4844, %v4982
        %v4984 = vand.u32 %v4124, 4294901760
        %4985 = vmatmul.f32.gmra.mxu0 %v4984
        %v4986 = vpop.f32.mrf.mxu0
        %v4987 = vadd.f32 %v4852, %v4986
        %v4988 = vand.u32 %v4127, 4294901760
        %4989 = vmatmul.f32.gmra.mxu0 %v4988
        %v4990 = vpop.f32.mrf.mxu0
        %v4991 = vadd.f32 %v4860, %v4990
        %v4992 = vand.u32 %v4130, 4294901760
        %4993 = vmatmul.f32.gmra.mxu0 %v4992
        %v4994 = vpop.f32.mrf.mxu0
        %v4995 = vadd.f32 %v4868, %v4994
        %v4996 = vand.u32 %v4133, 4294901760
        %4997 = vmatmul.f32.gmra.mxu0 %v4996
        %v4998 = vpop.f32.mrf.mxu0
        %v4999 = vadd.f32 %v4876, %v4998
        %v5000 = vand.u32 %v4136, 4294901760
        %5001 = vmatmul.f32.gmra.mxu0 %v5000
        %v5002 = vpop.f32.mrf.mxu0
        %v5003 = vadd.f32 %v4884, %v5002
        %v5004 = vand.u32 %v4139, 4294901760
        %5005 = vmatmul.f32.gmra.mxu0 %v5004
        %v5006 = vpop.f32.mrf.mxu0
        %v5007 = vadd.f32 %v4892, %v5006
        %v5008 = vand.u32 %v4142, 4294901760
        %5009 = vmatmul.f32.gmra.mxu0 %v5008
        %v5010 = vpop.f32.mrf.mxu0
        %v5011 = vadd.f32 %v4900, %v5010
        %v5012 = vand.u32 %v4145, 4294901760
        %5013 = vmatmul.f32.gmra.mxu0 %v5012
        %v5014 = vpop.f32.mrf.mxu0
        %v5015 = vadd.f32 %v4908, %v5014
        %v5016 = vand.u32 %v4148, 4294901760
        %5017 = vmatmul.f32.gmra.mxu0 %v5016
        %v5018 = vpop.f32.mrf.mxu0
        %v5019 = vadd.f32 %v4916, %v5018
        %v5020 = vand.u32 %v4151, 4294901760
        %5021 = vmatmul.f32.gmra.mxu0 %v5020
        %v5022 = vpop.f32.mrf.mxu0
        %v5023 = vadd.f32 %v4924, %v5022
        %v5024 = vand.u32 %v4154, 4294901760
        %5025 = vmatmul.f32.gmra.mxu0 %v5024
        %v5026 = vpop.f32.mrf.mxu0
        %v5027 = vadd.f32 %v4932, %v5026
        %v5028 = vand.u32 %v4157, 4294901760
        %5029 = vmatmul.f32.gmra.mxu0 %v5028
        %v5030 = vpop.f32.mrf.mxu0
        %v5031 = vadd.f32 %v4940, %v5030
        %5032 = vdwg.mxu0
        %5033 = vmatpush.msra.mxu0 0.0
        %5034 = vmatpush.msra.mxu0 0.0
        %5035 = vmatpush.msra.mxu0 0.0
        %5036 = vmatpush.msra.mxu0 0.0
        %5037 = vmatpush.msra.mxu0 0.0
        %5038 = vmatpush.msra.mxu0 0.0
        %5039 = vmatpush.msra.mxu0 0.0
        %5040 = vmatpush.msra.mxu0 0.0
        %5041 = vmatpush.msra.mxu0 0.0
        %5042 = vmatpush.msra.mxu0 0.0
        %5043 = vmatpush.msra.mxu0 0.0
        %5044 = vmatpush.msra.mxu0 0.0
        %5045 = vmatpush.msra.mxu0 0.0
        %5046 = vmatpush.msra.mxu0 0.0
        %v5047 = vand.u32 %v4111, 4294901760
        %v5048 = vsub.f32 %v4111, %v5047
        %5049 = vmatpush.msra.mxu0 %v5048
        %v5050 = vand.u32 %v4110, 4294901760
        %v5051 = vsub.f32 %v4110, %v5050
        %5052 = vmatpush.msra.mxu0 %v5051
        %v5053 = vand.u32 %v4790, 4294901760
        %v5054 = vsub.f32 %v4790, %v5053
        %5055 = vmatmul.f32.gmra.mxu0 %v5054
        %v5056 = vpop.f32.mrf.mxu0
        %v5057 = vadd.f32 %v4971, %v5056
        %v5058 = vand.u32 %v4793, 4294901760
        %v5059 = vsub.f32 %v4793, %v5058
        %5060 = vmatmul.f32.gmra.mxu0 %v5059
        %v5061 = vpop.f32.mrf.mxu0
        %v5062 = vadd.f32 %v4975, %v5061
        %v5063 = vand.u32 %v4118, 4294901760
        %v5064 = vsub.f32 %v4118, %v5063
        %5065 = vmatmul.f32.gmra.mxu0 %v5064
        %v5066 = vpop.f32.mrf.mxu0
        %v5067 = vadd.f32 %v4979, %v5066
        %v5068 = vand.u32 %v4121, 4294901760
        %v5069 = vsub.f32 %v4121, %v5068
        %5070 = vmatmul.f32.gmra.mxu0 %v5069
        %v5071 = vpop.f32.mrf.mxu0
        %v5072 = vadd.f32 %v4983, %v5071
        %v5073 = vand.u32 %v4124, 4294901760
        %v5074 = vsub.f32 %v4124, %v5073
        %5075 = vmatmul.f32.gmra.mxu0 %v5074
        %v5076 = vpop.f32.mrf.mxu0
        %v5077 = vadd.f32 %v4987, %v5076
        %v5078 = vand.u32 %v4127, 4294901760
        %v5079 = vsub.f32 %v4127, %v5078
        %5080 = vmatmul.f32.gmra.mxu0 %v5079
        %v5081 = vpop.f32.mrf.mxu0
        %v5082 = vadd.f32 %v4991, %v5081
        %v5083 = vand.u32 %v4130, 4294901760
        %v5084 = vsub.f32 %v4130, %v5083
        %5085 = vmatmul.f32.gmra.mxu0 %v5084
        %v5086 = vpop.f32.mrf.mxu0
        %v5087 = vadd.f32 %v4995, %v5086
        %v5088 = vand.u32 %v4133, 4294901760
        %v5089 = vsub.f32 %v4133, %v5088
        %5090 = vmatmul.f32.gmra.mxu0 %v5089
        %v5091 = vpop.f32.mrf.mxu0
        %v5092 = vadd.f32 %v4999, %v5091
        %v5093 = vand.u32 %v4136, 4294901760
        %v5094 = vsub.f32 %v4136, %v5093
        %5095 = vmatmul.f32.gmra.mxu0 %v5094
        %v5096 = vpop.f32.mrf.mxu0
        %v5097 = vadd.f32 %v5003, %v5096
        %v5098 = vand.u32 %v4139, 4294901760
        %v5099 = vsub.f32 %v4139, %v5098
        %5100 = vmatmul.f32.gmra.mxu0 %v5099
        %v5101 = vpop.f32.mrf.mxu0
        %v5102 = vadd.f32 %v5007, %v5101
        %v5103 = vand.u32 %v4142, 4294901760
        %v5104 = vsub.f32 %v4142, %v5103
        %5105 = vmatmul.f32.gmra.mxu0 %v5104
        %v5106 = vpop.f32.mrf.mxu0
        %v5107 = vadd.f32 %v5011, %v5106
        %v5108 = vand.u32 %v4145, 4294901760
        %v5109 = vsub.f32 %v4145, %v5108
        %5110 = vmatmul.f32.gmra.mxu0 %v5109
        %v5111 = vpop.f32.mrf.mxu0
        %v5112 = vadd.f32 %v5015, %v5111
        %v5113 = vand.u32 %v4148, 4294901760
        %v5114 = vsub.f32 %v4148, %v5113
        %5115 = vmatmul.f32.gmra.mxu0 %v5114
        %v5116 = vpop.f32.mrf.mxu0
        %v5117 = vadd.f32 %v5019, %v5116
        %v5118 = vand.u32 %v4151, 4294901760
        %v5119 = vsub.f32 %v4151, %v5118
        %5120 = vmatmul.f32.gmra.mxu0 %v5119
        %v5121 = vpop.f32.mrf.mxu0
        %v5122 = vadd.f32 %v5023, %v5121
        %v5123 = vand.u32 %v4154, 4294901760
        %v5124 = vsub.f32 %v4154, %v5123
        %5125 = vmatmul.f32.gmra.mxu0 %v5124
        %v5126 = vpop.f32.mrf.mxu0
        %v5127 = vadd.f32 %v5027, %v5126
        %v5128 = vand.u32 %v4157, 4294901760
        %v5129 = vsub.f32 %v4157, %v5128
        %5130 = vmatmul.f32.gmra.mxu0 %v5129
        %v5131 = vpop.f32.mrf.mxu0
        %v5132 = vadd.f32 %v5031, %v5131
        %5133 = vdwg.mxu0
        %5134 = vmatpush.msra.mxu0 0.0
        %5135 = vmatpush.msra.mxu0 0.0
        %5136 = vmatpush.msra.mxu0 0.0
        %5137 = vmatpush.msra.mxu0 0.0
        %5138 = vmatpush.msra.mxu0 0.0
        %5139 = vmatpush.msra.mxu0 0.0
        %5140 = vmatpush.msra.mxu0 0.0
        %5141 = vmatpush.msra.mxu0 0.0
        %5142 = vmatpush.msra.mxu0 0.0
        %5143 = vmatpush.msra.mxu0 0.0
        %5144 = vmatpush.msra.mxu0 0.0
        %5145 = vmatpush.msra.mxu0 0.0
        %5146 = vmatpush.msra.mxu0 0.0
        %5147 = vmatpush.msra.mxu0 0.0
        %v5148 = vand.u32 %v4111, 4294901760
        %5149 = vmatpush.msra.mxu0 %v5148
        %v5150 = vand.u32 %v4110, 4294901760
        %5151 = vmatpush.msra.mxu0 %v5150
        %v5152 = vand.u32 %v4790, 4294901760
        %v5153 = vsub.f32 %v4790, %v5152
        %v5154 = vand.u32 %v5153, 4294901760
        %5155 = vmatmul.f32.gmra.mxu0 %v5154
        %v5156 = vpop.f32.mrf.mxu0
        %v5157 = vadd.f32 %v5057, %v5156
        %v5158 = vand.u32 %v4793, 4294901760
        %v5159 = vsub.f32 %v4793, %v5158
        %v5160 = vand.u32 %v5159, 4294901760
        %5161 = vmatmul.f32.gmra.mxu0 %v5160
        %v5162 = vpop.f32.mrf.mxu0
        %v5163 = vadd.f32 %v5062, %v5162
        %v5164 = vand.u32 %v4118, 4294901760
        %v5165 = vsub.f32 %v4118, %v5164
        %v5166 = vand.u32 %v5165, 4294901760
        %5167 = vmatmul.f32.gmra.mxu0 %v5166
        %v5168 = vpop.f32.mrf.mxu0
        %v5169 = vadd.f32 %v5067, %v5168
        %v5170 = vand.u32 %v4121, 4294901760
        %v5171 = vsub.f32 %v4121, %v5170
        %v5172 = vand.u32 %v5171, 4294901760
        %5173 = vmatmul.f32.gmra.mxu0 %v5172
        %v5174 = vpop.f32.mrf.mxu0
        %v5175 = vadd.f32 %v5072, %v5174
        %v5176 = vand.u32 %v4124, 4294901760
        %v5177 = vsub.f32 %v4124, %v5176
        %v5178 = vand.u32 %v5177, 4294901760
        %5179 = vmatmul.f32.gmra.mxu0 %v5178
        %v5180 = vpop.f32.mrf.mxu0
        %v5181 = vadd.f32 %v5077, %v5180
        %v5182 = vand.u32 %v4127, 4294901760
        %v5183 = vsub.f32 %v4127, %v5182
        %v5184 = vand.u32 %v5183, 4294901760
        %5185 = vmatmul.f32.gmra.mxu0 %v5184
        %v5186 = vpop.f32.mrf.mxu0
        %v5187 = vadd.f32 %v5082, %v5186
        %v5188 = vand.u32 %v4130, 4294901760
        %v5189 = vsub.f32 %v4130, %v5188
        %v5190 = vand.u32 %v5189, 4294901760
        %5191 = vmatmul.f32.gmra.mxu0 %v5190
        %v5192 = vpop.f32.mrf.mxu0
        %v5193 = vadd.f32 %v5087, %v5192
        %v5194 = vand.u32 %v4133, 4294901760
        %v5195 = vsub.f32 %v4133, %v5194
        %v5196 = vand.u32 %v5195, 4294901760
        %5197 = vmatmul.f32.gmra.mxu0 %v5196
        %v5198 = vpop.f32.mrf.mxu0
        %v5199 = vadd.f32 %v5092, %v5198
        %v5200 = vand.u32 %v4136, 4294901760
        %v5201 = vsub.f32 %v4136, %v5200
        %v5202 = vand.u32 %v5201, 4294901760
        %5203 = vmatmul.f32.gmra.mxu0 %v5202
        %v5204 = vpop.f32.mrf.mxu0
        %v5205 = vadd.f32 %v5097, %v5204
        %v5206 = vand.u32 %v4139, 4294901760
        %v5207 = vsub.f32 %v4139, %v5206
        %v5208 = vand.u32 %v5207, 4294901760
        %5209 = vmatmul.f32.gmra.mxu0 %v5208
        %v5210 = vpop.f32.mrf.mxu0
        %v5211 = vadd.f32 %v5102, %v5210
        %v5212 = vand.u32 %v4142, 4294901760
        %v5213 = vsub.f32 %v4142, %v5212
        %v5214 = vand.u32 %v5213, 4294901760
        %5215 = vmatmul.f32.gmra.mxu0 %v5214
        %v5216 = vpop.f32.mrf.mxu0
        %v5217 = vadd.f32 %v5107, %v5216
        %v5218 = vand.u32 %v4145, 4294901760
        %v5219 = vsub.f32 %v4145, %v5218
        %v5220 = vand.u32 %v5219, 4294901760
        %5221 = vmatmul.f32.gmra.mxu0 %v5220
        %v5222 = vpop.f32.mrf.mxu0
        %v5223 = vadd.f32 %v5112, %v5222
        %v5224 = vand.u32 %v4148, 4294901760
        %v5225 = vsub.f32 %v4148, %v5224
        %v5226 = vand.u32 %v5225, 4294901760
        %5227 = vmatmul.f32.gmra.mxu0 %v5226
        %v5228 = vpop.f32.mrf.mxu0
        %v5229 = vadd.f32 %v5117, %v5228
        %v5230 = vand.u32 %v4151, 4294901760
        %v5231 = vsub.f32 %v4151, %v5230
        %v5232 = vand.u32 %v5231, 4294901760
        %5233 = vmatmul.f32.gmra.mxu0 %v5232
        %v5234 = vpop.f32.mrf.mxu0
        %v5235 = vadd.f32 %v5122, %v5234
        %v5236 = vand.u32 %v4154, 4294901760
        %v5237 = vsub.f32 %v4154, %v5236
        %v5238 = vand.u32 %v5237, 4294901760
        %5239 = vmatmul.f32.gmra.mxu0 %v5238
        %v5240 = vpop.f32.mrf.mxu0
        %v5241 = vadd.f32 %v5127, %v5240
        %v5242 = vand.u32 %v4157, 4294901760
        %v5243 = vsub.f32 %v4157, %v5242
        %v5244 = vand.u32 %v5243, 4294901760
        %5245 = vmatmul.f32.gmra.mxu0 %v5244
        %v5246 = vpop.f32.mrf.mxu0
        %v5247 = vadd.f32 %v5132, %v5246
        %5248 = vdwg.mxu0
        %5249 = vmatpush.msra.mxu0 0.0
        %5250 = vmatpush.msra.mxu0 0.0
        %5251 = vmatpush.msra.mxu0 0.0
        %5252 = vmatpush.msra.mxu0 0.0
        %5253 = vmatpush.msra.mxu0 0.0
        %5254 = vmatpush.msra.mxu0 0.0
        %5255 = vmatpush.msra.mxu0 0.0
        %5256 = vmatpush.msra.mxu0 0.0
        %5257 = vmatpush.msra.mxu0 0.0
        %5258 = vmatpush.msra.mxu0 0.0
        %5259 = vmatpush.msra.mxu0 0.0
        %5260 = vmatpush.msra.mxu0 0.0
        %5261 = vmatpush.msra.mxu0 0.0
        %5262 = vmatpush.msra.mxu0 0.0
        %v5263 = vand.u32 %v4111, 4294901760
        %v5264 = vsub.f32 %v4111, %v5263
        %v5265 = vand.u32 %v5264, 4294901760
        %5266 = vmatpush.msra.mxu0 %v5265
        %v5267 = vand.u32 %v4110, 4294901760
        %v5268 = vsub.f32 %v4110, %v5267
        %v5269 = vand.u32 %v5268, 4294901760
        %5270 = vmatpush.msra.mxu0 %v5269
        %v5271 = vand.u32 %v4790, 4294901760
        %5272 = vmatmul.f32.gmra.mxu0 %v5271
        %v5273 = vpop.f32.mrf.mxu0
        %v5274 = vadd.f32 %v5157, %v5273
        %v5275 = vand.u32 %v4793, 4294901760
        %5276 = vmatmul.f32.gmra.mxu0 %v5275
        %v5277 = vpop.f32.mrf.mxu0
        %v5278 = vadd.f32 %v5163, %v5277
        %v5279 = vand.u32 %v4118, 4294901760
        %5280 = vmatmul.f32.gmra.mxu0 %v5279
        %v5281 = vpop.f32.mrf.mxu0
        %v5282 = vadd.f32 %v5169, %v5281
        %v5283 = vand.u32 %v4121, 4294901760
        %5284 = vmatmul.f32.gmra.mxu0 %v5283
        %v5285 = vpop.f32.mrf.mxu0
        %v5286 = vadd.f32 %v5175, %v5285
        %v5287 = vand.u32 %v4124, 4294901760
        %5288 = vmatmul.f32.gmra.mxu0 %v5287
        %v5289 = vpop.f32.mrf.mxu0
        %v5290 = vadd.f32 %v5181, %v5289
        %v5291 = vand.u32 %v4127, 4294901760
        %5292 = vmatmul.f32.gmra.mxu0 %v5291
        %v5293 = vpop.f32.mrf.mxu0
        %v5294 = vadd.f32 %v5187, %v5293
        %v5295 = vand.u32 %v4130, 4294901760
        %5296 = vmatmul.f32.gmra.mxu0 %v5295
        %v5297 = vpop.f32.mrf.mxu0
        %v5298 = vadd.f32 %v5193, %v5297
        %v5299 = vand.u32 %v4133, 4294901760
        %5300 = vmatmul.f32.gmra.mxu0 %v5299
        %v5301 = vpop.f32.mrf.mxu0
        %v5302 = vadd.f32 %v5199, %v5301
        %v5303 = vand.u32 %v4136, 4294901760
        %5304 = vmatmul.f32.gmra.mxu0 %v5303
        %v5305 = vpop.f32.mrf.mxu0
        %v5306 = vadd.f32 %v5205, %v5305
        %v5307 = vand.u32 %v4139, 4294901760
        %5308 = vmatmul.f32.gmra.mxu0 %v5307
        %v5309 = vpop.f32.mrf.mxu0
        %v5310 = vadd.f32 %v5211, %v5309
        %v5311 = vand.u32 %v4142, 4294901760
        %5312 = vmatmul.f32.gmra.mxu0 %v5311
        %v5313 = vpop.f32.mrf.mxu0
        %v5314 = vadd.f32 %v5217, %v5313
        %v5315 = vand.u32 %v4145, 4294901760
        %5316 = vmatmul.f32.gmra.mxu0 %v5315
        %v5317 = vpop.f32.mrf.mxu0
        %v5318 = vadd.f32 %v5223, %v5317
        %v5319 = vand.u32 %v4148, 4294901760
        %5320 = vmatmul.f32.gmra.mxu0 %v5319
        %v5321 = vpop.f32.mrf.mxu0
        %v5322 = vadd.f32 %v5229, %v5321
        %v5323 = vand.u32 %v4151, 4294901760
        %5324 = vmatmul.f32.gmra.mxu0 %v5323
        %v5325 = vpop.f32.mrf.mxu0
        %v5326 = vadd.f32 %v5235, %v5325
        %v5327 = vand.u32 %v4154, 4294901760
        %5328 = vmatmul.f32.gmra.mxu0 %v5327
        %v5329 = vpop.f32.mrf.mxu0
        %v5330 = vadd.f32 %v5241, %v5329
        %v5331 = vand.u32 %v4157, 4294901760
        %5332 = vmatmul.f32.gmra.mxu0 %v5331
        %v5333 = vpop.f32.mrf.mxu0
        %v5334 = vadd.f32 %v5247, %v5333
        %5335 = vdwg.mxu0
        %5336 = vmatpush.msra.mxu0 0.0
        %5337 = vmatpush.msra.mxu0 0.0
        %5338 = vmatpush.msra.mxu0 0.0
        %5339 = vmatpush.msra.mxu0 0.0
        %5340 = vmatpush.msra.mxu0 0.0
        %5341 = vmatpush.msra.mxu0 0.0
        %5342 = vmatpush.msra.mxu0 0.0
        %5343 = vmatpush.msra.mxu0 0.0
        %5344 = vmatpush.msra.mxu0 0.0
        %5345 = vmatpush.msra.mxu0 0.0
        %5346 = vmatpush.msra.mxu0 0.0
        %5347 = vmatpush.msra.mxu0 0.0
        %5348 = vmatpush.msra.mxu0 0.0
        %5349 = vmatpush.msra.mxu0 0.0
        %v5350 = vand.u32 %v4111, 4294901760
        %5351 = vmatpush.msra.mxu0 %v5350
        %v5352 = vand.u32 %v4110, 4294901760
        %5353 = vmatpush.msra.mxu0 %v5352
        %v5354 = vand.u32 %v4790, 4294901760
        %5355 = vmatmul.f32.gmra.mxu0 %v5354
        %v5356 = vpop.f32.mrf.mxu0
        %v5357 = vadd.f32 %v5274, %v5356
        %v5358 = vand.u32 %v4793, 4294901760
        %5359 = vmatmul.f32.gmra.mxu0 %v5358
        %v5360 = vpop.f32.mrf.mxu0
        %v5361 = vadd.f32 %v5278, %v5360
        %v5362 = vand.u32 %v4118, 4294901760
        %5363 = vmatmul.f32.gmra.mxu0 %v5362
        %v5364 = vpop.f32.mrf.mxu0
        %v5365 = vadd.f32 %v5282, %v5364
        %v5366 = vand.u32 %v4121, 4294901760
        %5367 = vmatmul.f32.gmra.mxu0 %v5366
        %v5368 = vpop.f32.mrf.mxu0
        %v5369 = vadd.f32 %v5286, %v5368
        %v5370 = vand.u32 %v4124, 4294901760
        %5371 = vmatmul.f32.gmra.mxu0 %v5370
        %v5372 = vpop.f32.mrf.mxu0
        %v5373 = vadd.f32 %v5290, %v5372
        %v5374 = vand.u32 %v4127, 4294901760
        %5375 = vmatmul.f32.gmra.mxu0 %v5374
        %v5376 = vpop.f32.mrf.mxu0
        %v5377 = vadd.f32 %v5294, %v5376
        %v5378 = vand.u32 %v4130, 4294901760
        %5379 = vmatmul.f32.gmra.mxu0 %v5378
        %v5380 = vpop.f32.mrf.mxu0
        %v5381 = vadd.f32 %v5298, %v5380
        %v5382 = vand.u32 %v4133, 4294901760
        %5383 = vmatmul.f32.gmra.mxu0 %v5382
        %v5384 = vpop.f32.mrf.mxu0
        %v5385 = vadd.f32 %v5302, %v5384
        %v5386 = vand.u32 %v4136, 4294901760
        %5387 = vmatmul.f32.gmra.mxu0 %v5386
        %v5388 = vpop.f32.mrf.mxu0
        %v5389 = vadd.f32 %v5306, %v5388
        %v5390 = vand.u32 %v4139, 4294901760
        %5391 = vmatmul.f32.gmra.mxu0 %v5390
        %v5392 = vpop.f32.mrf.mxu0
        %v5393 = vadd.f32 %v5310, %v5392
        %v5394 = vand.u32 %v4142, 4294901760
        %5395 = vmatmul.f32.gmra.mxu0 %v5394
        %v5396 = vpop.f32.mrf.mxu0
        %v5397 = vadd.f32 %v5314, %v5396
        %v5398 = vand.u32 %v4145, 4294901760
        %5399 = vmatmul.f32.gmra.mxu0 %v5398
        %v5400 = vpop.f32.mrf.mxu0
        %v5401 = vadd.f32 %v5318, %v5400
        %v5402 = vand.u32 %v4148, 4294901760
        %5403 = vmatmul.f32.gmra.mxu0 %v5402
        %v5404 = vpop.f32.mrf.mxu0
        %v5405 = vadd.f32 %v5322, %v5404
        %v5406 = vand.u32 %v4151, 4294901760
        %5407 = vmatmul.f32.gmra.mxu0 %v5406
        %v5408 = vpop.f32.mrf.mxu0
        %v5409 = vadd.f32 %v5326, %v5408
        %v5410 = vand.u32 %v4154, 4294901760
        %5411 = vmatmul.f32.gmra.mxu0 %v5410
        %v5412 = vpop.f32.mrf.mxu0
        %v5413 = vadd.f32 %v5330, %v5412
        %v5414 = vand.u32 %v4157, 4294901760
        %5415 = vmatmul.f32.gmra.mxu0 %v5414
        %v5416 = vpop.f32.mrf.mxu0
        %v5417 = vadd.f32 %v5334, %v5416
        %5418 = vdwg.mxu0
        %v5419 = vld [vmem:[#allocation2 + $0x27] sm:$0xff]
        %v5420 = vld [vmem:[#allocation2 + $0x2f] sm:$0xff]
        %v5421 = vld [vmem:[#allocation2 + $0x37] sm:$0xff]
        %v5422 = vld [vmem:[#allocation2 + $0x3f] sm:$0xff]
        %v5423 = vld [vmem:[#allocation2 + $0x47] sm:$0xff]
        %v5424 = vld [vmem:[#allocation2 + $0x4f] sm:$0xff]
        %v5425 = vld [vmem:[#allocation2 + $0x57] sm:$0xff]
        %v5426 = vld [vmem:[#allocation2 + $0x5f] sm:$0xff]
        %v5427 = vld [vmem:[#allocation2 + $0x67] sm:$0xff]
        %v5428 = vld [vmem:[#allocation2 + $0x6f] sm:$0xff]
        %v5429 = vld [vmem:[#allocation2 + $0x77] sm:$0xff]
        %v5430 = vld [vmem:[#allocation2 + $0x7f] sm:$0xff]
        %v5431 = vld [vmem:[#allocation2 + $0x87] sm:$0xff]
        %v5432 = vld [vmem:[#allocation2 + $0x8f] sm:$0xff]
        %v5433 = vld [vmem:[#allocation2 + $0x97] sm:$0xff]
        %v5434 = vld [vmem:[#allocation2 + $0x9f] sm:$0xff]
        %s5435 = scalar_lea.vmem %s5, 96
        %v5436 = vld [vmem:[%s5435] sm:$0xff]
        %v5437 = vld [vmem:[%s5435 + $0x8] sm:$0xff]
        %v5439 = vsel %vm592, %v5419, 0
        %v5442 = vsel %vm592, %v5420, 0
        %v5445 = vsel %vm592, %v5421, 0
        %v5448 = vsel %vm592, %v5422, 0
        %v5451 = vsel %vm592, %v5423, 0
        %v5454 = vsel %vm592, %v5424, 0
        %v5457 = vsel %vm592, %v5425, 0
        %v5460 = vsel %vm592, %v5426, 0
        %v5463 = vsel %vm592, %v5427, 0
        %v5466 = vsel %vm592, %v5428, 0
        %v5469 = vsel %vm592, %v5429, 0
        %v5472 = vsel %vm592, %v5430, 0
        %v5475 = vsel %vm592, %v5431, 0
        %v5478 = vsel %vm592, %v5432, 0
        %v5481 = vsel %vm592, %v5433, 0
        %v5484 = vsel %vm592, %v5434, 0
        %5486 = vmatpush.msra.mxu0 0.0
        %5487 = vmatpush.msra.mxu0 0.0
        %5488 = vmatpush.msra.mxu0 0.0
        %5489 = vmatpush.msra.mxu0 0.0
        %5490 = vmatpush.msra.mxu0 0.0
        %5491 = vmatpush.msra.mxu0 0.0
        %5492 = vmatpush.msra.mxu0 0.0
        %5493 = vmatpush.msra.mxu0 0.0
        %5494 = vmatpush.msra.mxu0 0.0
        %5495 = vmatpush.msra.mxu0 0.0
        %5496 = vmatpush.msra.mxu0 0.0
        %5497 = vmatpush.msra.mxu0 0.0
        %5498 = vmatpush.msra.mxu0 0.0
        %5499 = vmatpush.msra.mxu0 0.0
        %v5500 = vand.u32 %v5437, 4294901760
        %5501 = vmatpush.msra.mxu0 %v5500
        %v5502 = vand.u32 %v5436, 4294901760
        %5503 = vmatpush.msra.mxu0 %v5502
        %v5504 = vand.u32 %v5439, 4294901760
        %v5505 = vsub.f32 %v5439, %v5504
        %v5506 = vand.u32 %v5505, 4294901760
        %v5507 = vsub.f32 %v5505, %v5506
        %v5508 = vand.u32 %v5507, 4294901760
        %5509 = vmatmul.f32.gmra.mxu0 %v5508
        %v5510 = vpop.f32.mrf.mxu0
        %v5511 = vadd.f32 0.0, %v5510
        %v5512 = vand.u32 %v5442, 4294901760
        %v5513 = vsub.f32 %v5442, %v5512
        %v5514 = vand.u32 %v5513, 4294901760
        %v5515 = vsub.f32 %v5513, %v5514
        %v5516 = vand.u32 %v5515, 4294901760
        %5517 = vmatmul.f32.gmra.mxu0 %v5516
        %v5518 = vpop.f32.mrf.mxu0
        %v5519 = vadd.f32 0.0, %v5518
        %v5520 = vand.u32 %v5445, 4294901760
        %v5521 = vsub.f32 %v5445, %v5520
        %v5522 = vand.u32 %v5521, 4294901760
        %v5523 = vsub.f32 %v5521, %v5522
        %v5524 = vand.u32 %v5523, 4294901760
        %5525 = vmatmul.f32.gmra.mxu0 %v5524
        %v5526 = vpop.f32.mrf.mxu0
        %v5527 = vadd.f32 0.0, %v5526
        %v5528 = vand.u32 %v5448, 4294901760
        %v5529 = vsub.f32 %v5448, %v5528
        %v5530 = vand.u32 %v5529, 4294901760
        %v5531 = vsub.f32 %v5529, %v5530
        %v5532 = vand.u32 %v5531, 4294901760
        %5533 = vmatmul.f32.gmra.mxu0 %v5532
        %v5534 = vpop.f32.mrf.mxu0
        %v5535 = vadd.f32 0.0, %v5534
        %v5536 = vand.u32 %v5451, 4294901760
        %v5537 = vsub.f32 %v5451, %v5536
        %v5538 = vand.u32 %v5537, 4294901760
        %v5539 = vsub.f32 %v5537, %v5538
        %v5540 = vand.u32 %v5539, 4294901760
        %5541 = vmatmul.f32.gmra.mxu0 %v5540
        %v5542 = vpop.f32.mrf.mxu0
        %v5543 = vadd.f32 0.0, %v5542
        %v5544 = vand.u32 %v5454, 4294901760
        %v5545 = vsub.f32 %v5454, %v5544
        %v5546 = vand.u32 %v5545, 4294901760
        %v5547 = vsub.f32 %v5545, %v5546
        %v5548 = vand.u32 %v5547, 4294901760
        %5549 = vmatmul.f32.gmra.mxu0 %v5548
        %v5550 = vpop.f32.mrf.mxu0
        %v5551 = vadd.f32 0.0, %v5550
        %v5552 = vand.u32 %v5457, 4294901760
        %v5553 = vsub.f32 %v5457, %v5552
        %v5554 = vand.u32 %v5553, 4294901760
        %v5555 = vsub.f32 %v5553, %v5554
        %v5556 = vand.u32 %v5555, 4294901760
        %5557 = vmatmul.f32.gmra.mxu0 %v5556
        %v5558 = vpop.f32.mrf.mxu0
        %v5559 = vadd.f32 0.0, %v5558
        %v5560 = vand.u32 %v5460, 4294901760
        %v5561 = vsub.f32 %v5460, %v5560
        %v5562 = vand.u32 %v5561, 4294901760
        %v5563 = vsub.f32 %v5561, %v5562
        %v5564 = vand.u32 %v5563, 4294901760
        %5565 = vmatmul.f32.gmra.mxu0 %v5564
        %v5566 = vpop.f32.mrf.mxu0
        %v5567 = vadd.f32 0.0, %v5566
        %v5568 = vand.u32 %v5463, 4294901760
        %v5569 = vsub.f32 %v5463, %v5568
        %v5570 = vand.u32 %v5569, 4294901760
        %v5571 = vsub.f32 %v5569, %v5570
        %v5572 = vand.u32 %v5571, 4294901760
        %5573 = vmatmul.f32.gmra.mxu0 %v5572
        %v5574 = vpop.f32.mrf.mxu0
        %v5575 = vadd.f32 0.0, %v5574
        %v5576 = vand.u32 %v5466, 4294901760
        %v5577 = vsub.f32 %v5466, %v5576
        %v5578 = vand.u32 %v5577, 4294901760
        %v5579 = vsub.f32 %v5577, %v5578
        %v5580 = vand.u32 %v5579, 4294901760
        %5581 = vmatmul.f32.gmra.mxu0 %v5580
        %v5582 = vpop.f32.mrf.mxu0
        %v5583 = vadd.f32 0.0, %v5582
        %v5584 = vand.u32 %v5469, 4294901760
        %v5585 = vsub.f32 %v5469, %v5584
        %v5586 = vand.u32 %v5585, 4294901760
        %v5587 = vsub.f32 %v5585, %v5586
        %v5588 = vand.u32 %v5587, 4294901760
        %5589 = vmatmul.f32.gmra.mxu0 %v5588
        %v5590 = vpop.f32.mrf.mxu0
        %v5591 = vadd.f32 0.0, %v5590
        %v5592 = vand.u32 %v5472, 4294901760
        %v5593 = vsub.f32 %v5472, %v5592
        %v5594 = vand.u32 %v5593, 4294901760
        %v5595 = vsub.f32 %v5593, %v5594
        %v5596 = vand.u32 %v5595, 4294901760
        %5597 = vmatmul.f32.gmra.mxu0 %v5596
        %v5598 = vpop.f32.mrf.mxu0
        %v5599 = vadd.f32 0.0, %v5598
        %v5600 = vand.u32 %v5475, 4294901760
        %v5601 = vsub.f32 %v5475, %v5600
        %v5602 = vand.u32 %v5601, 4294901760
        %v5603 = vsub.f32 %v5601, %v5602
        %v5604 = vand.u32 %v5603, 4294901760
        %5605 = vmatmul.f32.gmra.mxu0 %v5604
        %v5606 = vpop.f32.mrf.mxu0
        %v5607 = vadd.f32 0.0, %v5606
        %v5608 = vand.u32 %v5478, 4294901760
        %v5609 = vsub.f32 %v5478, %v5608
        %v5610 = vand.u32 %v5609, 4294901760
        %v5611 = vsub.f32 %v5609, %v5610
        %v5612 = vand.u32 %v5611, 4294901760
        %5613 = vmatmul.f32.gmra.mxu0 %v5612
        %v5614 = vpop.f32.mrf.mxu0
        %v5615 = vadd.f32 0.0, %v5614
        %v5616 = vand.u32 %v5481, 4294901760
        %v5617 = vsub.f32 %v5481, %v5616
        %v5618 = vand.u32 %v5617, 4294901760
        %v5619 = vsub.f32 %v5617, %v5618
        %v5620 = vand.u32 %v5619, 4294901760
        %5621 = vmatmul.f32.gmra.mxu0 %v5620
        %v5622 = vpop.f32.mrf.mxu0
        %v5623 = vadd.f32 0.0, %v5622
        %v5624 = vand.u32 %v5484, 4294901760
        %v5625 = vsub.f32 %v5484, %v5624
        %v5626 = vand.u32 %v5625, 4294901760
        %v5627 = vsub.f32 %v5625, %v5626
        %v5628 = vand.u32 %v5627, 4294901760
        %5629 = vmatmul.f32.gmra.mxu0 %v5628
        %v5630 = vpop.f32.mrf.mxu0
        %v5631 = vadd.f32 0.0, %v5630
        %5632 = vdwg.mxu0
        %5633 = vmatpush.msra.mxu0 0.0
        %5634 = vmatpush.msra.mxu0 0.0
        %5635 = vmatpush.msra.mxu0 0.0
        %5636 = vmatpush.msra.mxu0 0.0
        %5637 = vmatpush.msra.mxu0 0.0
        %5638 = vmatpush.msra.mxu0 0.0
        %5639 = vmatpush.msra.mxu0 0.0
        %5640 = vmatpush.msra.mxu0 0.0
        %5641 = vmatpush.msra.mxu0 0.0
        %5642 = vmatpush.msra.mxu0 0.0
        %5643 = vmatpush.msra.mxu0 0.0
        %5644 = vmatpush.msra.mxu0 0.0
        %5645 = vmatpush.msra.mxu0 0.0
        %5646 = vmatpush.msra.mxu0 0.0
        %v5647 = vand.u32 %v5437, 4294901760
        %v5648 = vsub.f32 %v5437, %v5647
        %v5649 = vand.u32 %v5648, 4294901760
        %v5650 = vsub.f32 %v5648, %v5649
        %v5651 = vand.u32 %v5650, 4294901760
        %5652 = vmatpush.msra.mxu0 %v5651
        %v5653 = vand.u32 %v5436, 4294901760
        %v5654 = vsub.f32 %v5436, %v5653
        %v5655 = vand.u32 %v5654, 4294901760
        %v5656 = vsub.f32 %v5654, %v5655
        %v5657 = vand.u32 %v5656, 4294901760
        %5658 = vmatpush.msra.mxu0 %v5657
        %v5659 = vand.u32 %v5439, 4294901760
        %5660 = vmatmul.f32.gmra.mxu0 %v5659
        %v5661 = vpop.f32.mrf.mxu0
        %v5662 = vadd.f32 %v5511, %v5661
        %v5663 = vand.u32 %v5442, 4294901760
        %5664 = vmatmul.f32.gmra.mxu0 %v5663
        %v5665 = vpop.f32.mrf.mxu0
        %v5666 = vadd.f32 %v5519, %v5665
        %v5667 = vand.u32 %v5445, 4294901760
        %5668 = vmatmul.f32.gmra.mxu0 %v5667
        %v5669 = vpop.f32.mrf.mxu0
        %v5670 = vadd.f32 %v5527, %v5669
        %v5671 = vand.u32 %v5448, 4294901760
        %5672 = vmatmul.f32.gmra.mxu0 %v5671
        %v5673 = vpop.f32.mrf.mxu0
        %v5674 = vadd.f32 %v5535, %v5673
        %v5675 = vand.u32 %v5451, 4294901760
        %5676 = vmatmul.f32.gmra.mxu0 %v5675
        %v5677 = vpop.f32.mrf.mxu0
        %v5678 = vadd.f32 %v5543, %v5677
        %v5679 = vand.u32 %v5454, 4294901760
        %5680 = vmatmul.f32.gmra.mxu0 %v5679
        %v5681 = vpop.f32.mrf.mxu0
        %v5682 = vadd.f32 %v5551, %v5681
        %v5683 = vand.u32 %v5457, 4294901760
        %5684 = vmatmul.f32.gmra.mxu0 %v5683
        %v5685 = vpop.f32.mrf.mxu0
        %v5686 = vadd.f32 %v5559, %v5685
        %v5687 = vand.u32 %v5460, 4294901760
        %5688 = vmatmul.f32.gmra.mxu0 %v5687
        %v5689 = vpop.f32.mrf.mxu0
        %v5690 = vadd.f32 %v5567, %v5689
        %v5691 = vand.u32 %v5463, 4294901760
        %5692 = vmatmul.f32.gmra.mxu0 %v5691
        %v5693 = vpop.f32.mrf.mxu0
        %v5694 = vadd.f32 %v5575, %v5693
        %v5695 = vand.u32 %v5466, 4294901760
        %5696 = vmatmul.f32.gmra.mxu0 %v5695
        %v5697 = vpop.f32.mrf.mxu0
        %v5698 = vadd.f32 %v5583, %v5697
        %v5699 = vand.u32 %v5469, 4294901760
        %5700 = vmatmul.f32.gmra.mxu0 %v5699
        %v5701 = vpop.f32.mrf.mxu0
        %v5702 = vadd.f32 %v5591, %v5701
        %v5703 = vand.u32 %v5472, 4294901760
        %5704 = vmatmul.f32.gmra.mxu0 %v5703
        %v5705 = vpop.f32.mrf.mxu0
        %v5706 = vadd.f32 %v5599, %v5705
        %v5707 = vand.u32 %v5475, 4294901760
        %5708 = vmatmul.f32.gmra.mxu0 %v5707
        %v5709 = vpop.f32.mrf.mxu0
        %v5710 = vadd.f32 %v5607, %v5709
        %v5711 = vand.u32 %v5478, 4294901760
        %5712 = vmatmul.f32.gmra.mxu0 %v5711
        %v5713 = vpop.f32.mrf.mxu0
        %v5714 = vadd.f32 %v5615, %v5713
        %v5715 = vand.u32 %v5481, 4294901760
        %5716 = vmatmul.f32.gmra.mxu0 %v5715
        %v5717 = vpop.f32.mrf.mxu0
        %v5718 = vadd.f32 %v5623, %v5717
        %v5719 = vand.u32 %v5484, 4294901760
        %5720 = vmatmul.f32.gmra.mxu0 %v5719
        %v5721 = vpop.f32.mrf.mxu0
        %v5722 = vadd.f32 %v5631, %v5721
        %5723 = vdwg.mxu0
        %5724 = vmatpush.msra.mxu0 0.0
        %5725 = vmatpush.msra.mxu0 0.0
        %5726 = vmatpush.msra.mxu0 0.0
        %5727 = vmatpush.msra.mxu0 0.0
        %5728 = vmatpush.msra.mxu0 0.0
        %5729 = vmatpush.msra.mxu0 0.0
        %5730 = vmatpush.msra.mxu0 0.0
        %5731 = vmatpush.msra.mxu0 0.0
        %5732 = vmatpush.msra.mxu0 0.0
        %5733 = vmatpush.msra.mxu0 0.0
        %5734 = vmatpush.msra.mxu0 0.0
        %5735 = vmatpush.msra.mxu0 0.0
        %5736 = vmatpush.msra.mxu0 0.0
        %5737 = vmatpush.msra.mxu0 0.0
        %v5738 = vand.u32 %v5437, 4294901760
        %v5739 = vsub.f32 %v5437, %v5738
        %5740 = vmatpush.msra.mxu0 %v5739
        %v5741 = vand.u32 %v5436, 4294901760
        %v5742 = vsub.f32 %v5436, %v5741
        %5743 = vmatpush.msra.mxu0 %v5742
        %v5744 = vand.u32 %v5439, 4294901760
        %v5745 = vsub.f32 %v5439, %v5744
        %5746 = vmatmul.f32.gmra.mxu0 %v5745
        %v5747 = vpop.f32.mrf.mxu0
        %v5748 = vadd.f32 %v5662, %v5747
        %v5749 = vand.u32 %v5442, 4294901760
        %v5750 = vsub.f32 %v5442, %v5749
        %5751 = vmatmul.f32.gmra.mxu0 %v5750
        %v5752 = vpop.f32.mrf.mxu0
        %v5753 = vadd.f32 %v5666, %v5752
        %v5754 = vand.u32 %v5445, 4294901760
        %v5755 = vsub.f32 %v5445, %v5754
        %5756 = vmatmul.f32.gmra.mxu0 %v5755
        %v5757 = vpop.f32.mrf.mxu0
        %v5758 = vadd.f32 %v5670, %v5757
        %v5759 = vand.u32 %v5448, 4294901760
        %v5760 = vsub.f32 %v5448, %v5759
        %5761 = vmatmul.f32.gmra.mxu0 %v5760
        %v5762 = vpop.f32.mrf.mxu0
        %v5763 = vadd.f32 %v5674, %v5762
        %v5764 = vand.u32 %v5451, 4294901760
        %v5765 = vsub.f32 %v5451, %v5764
        %5766 = vmatmul.f32.gmra.mxu0 %v5765
        %v5767 = vpop.f32.mrf.mxu0
        %v5768 = vadd.f32 %v5678, %v5767
        %v5769 = vand.u32 %v5454, 4294901760
        %v5770 = vsub.f32 %v5454, %v5769
        %5771 = vmatmul.f32.gmra.mxu0 %v5770
        %v5772 = vpop.f32.mrf.mxu0
        %v5773 = vadd.f32 %v5682, %v5772
        %v5774 = vand.u32 %v5457, 4294901760
        %v5775 = vsub.f32 %v5457, %v5774
        %5776 = vmatmul.f32.gmra.mxu0 %v5775
        %v5777 = vpop.f32.mrf.mxu0
        %v5778 = vadd.f32 %v5686, %v5777
        %v5779 = vand.u32 %v5460, 4294901760
        %v5780 = vsub.f32 %v5460, %v5779
        %5781 = vmatmul.f32.gmra.mxu0 %v5780
        %v5782 = vpop.f32.mrf.mxu0
        %v5783 = vadd.f32 %v5690, %v5782
        %v5784 = vand.u32 %v5463, 4294901760
        %v5785 = vsub.f32 %v5463, %v5784
        %5786 = vmatmul.f32.gmra.mxu0 %v5785
        %v5787 = vpop.f32.mrf.mxu0
        %v5788 = vadd.f32 %v5694, %v5787
        %v5789 = vand.u32 %v5466, 4294901760
        %v5790 = vsub.f32 %v5466, %v5789
        %5791 = vmatmul.f32.gmra.mxu0 %v5790
        %v5792 = vpop.f32.mrf.mxu0
        %v5793 = vadd.f32 %v5698, %v5792
        %v5794 = vand.u32 %v5469, 4294901760
        %v5795 = vsub.f32 %v5469, %v5794
        %5796 = vmatmul.f32.gmra.mxu0 %v5795
        %v5797 = vpop.f32.mrf.mxu0
        %v5798 = vadd.f32 %v5702, %v5797
        %v5799 = vand.u32 %v5472, 4294901760
        %v5800 = vsub.f32 %v5472, %v5799
        %5801 = vmatmul.f32.gmra.mxu0 %v5800
        %v5802 = vpop.f32.mrf.mxu0
        %v5803 = vadd.f32 %v5706, %v5802
        %v5804 = vand.u32 %v5475, 4294901760
        %v5805 = vsub.f32 %v5475, %v5804
        %5806 = vmatmul.f32.gmra.mxu0 %v5805
        %v5807 = vpop.f32.mrf.mxu0
        %v5808 = vadd.f32 %v5710, %v5807
        %v5809 = vand.u32 %v5478, 4294901760
        %v5810 = vsub.f32 %v5478, %v5809
        %5811 = vmatmul.f32.gmra.mxu0 %v5810
        %v5812 = vpop.f32.mrf.mxu0
        %v5813 = vadd.f32 %v5714, %v5812
        %v5814 = vand.u32 %v5481, 4294901760
        %v5815 = vsub.f32 %v5481, %v5814
        %5816 = vmatmul.f32.gmra.mxu0 %v5815
        %v5817 = vpop.f32.mrf.mxu0
        %v5818 = vadd.f32 %v5718, %v5817
        %v5819 = vand.u32 %v5484, 4294901760
        %v5820 = vsub.f32 %v5484, %v5819
        %5821 = vmatmul.f32.gmra.mxu0 %v5820
        %v5822 = vpop.f32.mrf.mxu0
        %v5823 = vadd.f32 %v5722, %v5822
        %5824 = vdwg.mxu0
        %5825 = vmatpush.msra.mxu0 0.0
        %5826 = vmatpush.msra.mxu0 0.0
        %5827 = vmatpush.msra.mxu0 0.0
        %5828 = vmatpush.msra.mxu0 0.0
        %5829 = vmatpush.msra.mxu0 0.0
        %5830 = vmatpush.msra.mxu0 0.0
        %5831 = vmatpush.msra.mxu0 0.0
        %5832 = vmatpush.msra.mxu0 0.0
        %5833 = vmatpush.msra.mxu0 0.0
        %5834 = vmatpush.msra.mxu0 0.0
        %5835 = vmatpush.msra.mxu0 0.0
        %5836 = vmatpush.msra.mxu0 0.0
        %5837 = vmatpush.msra.mxu0 0.0
        %5838 = vmatpush.msra.mxu0 0.0
        %v5839 = vand.u32 %v5437, 4294901760
        %5840 = vmatpush.msra.mxu0 %v5839
        %v5841 = vand.u32 %v5436, 4294901760
        %5842 = vmatpush.msra.mxu0 %v5841
        %v5843 = vand.u32 %v5439, 4294901760
        %v5844 = vsub.f32 %v5439, %v5843
        %v5845 = vand.u32 %v5844, 4294901760
        %5846 = vmatmul.f32.gmra.mxu0 %v5845
        %v5847 = vpop.f32.mrf.mxu0
        %v5848 = vadd.f32 %v5748, %v5847
        %v5849 = vand.u32 %v5442, 4294901760
        %v5850 = vsub.f32 %v5442, %v5849
        %v5851 = vand.u32 %v5850, 4294901760
        %5852 = vmatmul.f32.gmra.mxu0 %v5851
        %v5853 = vpop.f32.mrf.mxu0
        %v5854 = vadd.f32 %v5753, %v5853
        %v5855 = vand.u32 %v5445, 4294901760
        %v5856 = vsub.f32 %v5445, %v5855
        %v5857 = vand.u32 %v5856, 4294901760
        %5858 = vmatmul.f32.gmra.mxu0 %v5857
        %v5859 = vpop.f32.mrf.mxu0
        %v5860 = vadd.f32 %v5758, %v5859
        %v5861 = vand.u32 %v5448, 4294901760
        %v5862 = vsub.f32 %v5448, %v5861
        %v5863 = vand.u32 %v5862, 4294901760
        %5864 = vmatmul.f32.gmra.mxu0 %v5863
        %v5865 = vpop.f32.mrf.mxu0
        %v5866 = vadd.f32 %v5763, %v5865
        %v5867 = vand.u32 %v5451, 4294901760
        %v5868 = vsub.f32 %v5451, %v5867
        %v5869 = vand.u32 %v5868, 4294901760
        %5870 = vmatmul.f32.gmra.mxu0 %v5869
        %v5871 = vpop.f32.mrf.mxu0
        %v5872 = vadd.f32 %v5768, %v5871
        %v5873 = vand.u32 %v5454, 4294901760
        %v5874 = vsub.f32 %v5454, %v5873
        %v5875 = vand.u32 %v5874, 4294901760
        %5876 = vmatmul.f32.gmra.mxu0 %v5875
        %v5877 = vpop.f32.mrf.mxu0
        %v5878 = vadd.f32 %v5773, %v5877
        %v5879 = vand.u32 %v5457, 4294901760
        %v5880 = vsub.f32 %v5457, %v5879
        %v5881 = vand.u32 %v5880, 4294901760
        %5882 = vmatmul.f32.gmra.mxu0 %v5881
        %v5883 = vpop.f32.mrf.mxu0
        %v5884 = vadd.f32 %v5778, %v5883
        %v5885 = vand.u32 %v5460, 4294901760
        %v5886 = vsub.f32 %v5460, %v5885
        %v5887 = vand.u32 %v5886, 4294901760
        %5888 = vmatmul.f32.gmra.mxu0 %v5887
        %v5889 = vpop.f32.mrf.mxu0
        %v5890 = vadd.f32 %v5783, %v5889
        %v5891 = vand.u32 %v5463, 4294901760
        %v5892 = vsub.f32 %v5463, %v5891
        %v5893 = vand.u32 %v5892, 4294901760
        %5894 = vmatmul.f32.gmra.mxu0 %v5893
        %v5895 = vpop.f32.mrf.mxu0
        %v5896 = vadd.f32 %v5788, %v5895
        %v5897 = vand.u32 %v5466, 4294901760
        %v5898 = vsub.f32 %v5466, %v5897
        %v5899 = vand.u32 %v5898, 4294901760
        %5900 = vmatmul.f32.gmra.mxu0 %v5899
        %v5901 = vpop.f32.mrf.mxu0
        %v5902 = vadd.f32 %v5793, %v5901
        %v5903 = vand.u32 %v5469, 4294901760
        %v5904 = vsub.f32 %v5469, %v5903
        %v5905 = vand.u32 %v5904, 4294901760
        %5906 = vmatmul.f32.gmra.mxu0 %v5905
        %v5907 = vpop.f32.mrf.mxu0
        %v5908 = vadd.f32 %v5798, %v5907
        %v5909 = vand.u32 %v5472, 4294901760
        %v5910 = vsub.f32 %v5472, %v5909
        %v5911 = vand.u32 %v5910, 4294901760
        %5912 = vmatmul.f32.gmra.mxu0 %v5911
        %v5913 = vpop.f32.mrf.mxu0
        %v5914 = vadd.f32 %v5803, %v5913
        %v5915 = vand.u32 %v5475, 4294901760
        %v5916 = vsub.f32 %v5475, %v5915
        %v5917 = vand.u32 %v5916, 4294901760
        %5918 = vmatmul.f32.gmra.mxu0 %v5917
        %v5919 = vpop.f32.mrf.mxu0
        %v5920 = vadd.f32 %v5808, %v5919
        %v5921 = vand.u32 %v5478, 4294901760
        %v5922 = vsub.f32 %v5478, %v5921
        %v5923 = vand.u32 %v5922, 4294901760
        %5924 = vmatmul.f32.gmra.mxu0 %v5923
        %v5925 = vpop.f32.mrf.mxu0
        %v5926 = vadd.f32 %v5813, %v5925
        %v5927 = vand.u32 %v5481, 4294901760
        %v5928 = vsub.f32 %v5481, %v5927
        %v5929 = vand.u32 %v5928, 4294901760
        %5930 = vmatmul.f32.gmra.mxu0 %v5929
        %v5931 = vpop.f32.mrf.mxu0
        %v5932 = vadd.f32 %v5818, %v5931
        %v5933 = vand.u32 %v5484, 4294901760
        %v5934 = vsub.f32 %v5484, %v5933
        %v5935 = vand.u32 %v5934, 4294901760
        %5936 = vmatmul.f32.gmra.mxu0 %v5935
        %v5937 = vpop.f32.mrf.mxu0
        %v5938 = vadd.f32 %v5823, %v5937
        %5939 = vdwg.mxu0
        %5940 = vmatpush.msra.mxu0 0.0
        %5941 = vmatpush.msra.mxu0 0.0
        %5942 = vmatpush.msra.mxu0 0.0
        %5943 = vmatpush.msra.mxu0 0.0
        %5944 = vmatpush.msra.mxu0 0.0
        %5945 = vmatpush.msra.mxu0 0.0
        %5946 = vmatpush.msra.mxu0 0.0
        %5947 = vmatpush.msra.mxu0 0.0
        %5948 = vmatpush.msra.mxu0 0.0
        %5949 = vmatpush.msra.mxu0 0.0
        %5950 = vmatpush.msra.mxu0 0.0
        %5951 = vmatpush.msra.mxu0 0.0
        %5952 = vmatpush.msra.mxu0 0.0
        %5953 = vmatpush.msra.mxu0 0.0
        %v5954 = vand.u32 %v5437, 4294901760
        %v5955 = vsub.f32 %v5437, %v5954
        %v5956 = vand.u32 %v5955, 4294901760
        %5957 = vmatpush.msra.mxu0 %v5956
        %v5958 = vand.u32 %v5436, 4294901760
        %v5959 = vsub.f32 %v5436, %v5958
        %v5960 = vand.u32 %v5959, 4294901760
        %5961 = vmatpush.msra.mxu0 %v5960
        %v5962 = vand.u32 %v5439, 4294901760
        %5963 = vmatmul.f32.gmra.mxu0 %v5962
        %v5964 = vpop.f32.mrf.mxu0
        %v5965 = vadd.f32 %v5848, %v5964
        %v5966 = vand.u32 %v5442, 4294901760
        %5967 = vmatmul.f32.gmra.mxu0 %v5966
        %v5968 = vpop.f32.mrf.mxu0
        %v5969 = vadd.f32 %v5854, %v5968
        %v5970 = vand.u32 %v5445, 4294901760
        %5971 = vmatmul.f32.gmra.mxu0 %v5970
        %v5972 = vpop.f32.mrf.mxu0
        %v5973 = vadd.f32 %v5860, %v5972
        %v5974 = vand.u32 %v5448, 4294901760
        %5975 = vmatmul.f32.gmra.mxu0 %v5974
        %v5976 = vpop.f32.mrf.mxu0
        %v5977 = vadd.f32 %v5866, %v5976
        %v5978 = vand.u32 %v5451, 4294901760
        %5979 = vmatmul.f32.gmra.mxu0 %v5978
        %v5980 = vpop.f32.mrf.mxu0
        %v5981 = vadd.f32 %v5872, %v5980
        %v5982 = vand.u32 %v5454, 4294901760
        %5983 = vmatmul.f32.gmra.mxu0 %v5982
        %v5984 = vpop.f32.mrf.mxu0
        %v5985 = vadd.f32 %v5878, %v5984
        %v5986 = vand.u32 %v5457, 4294901760
        %5987 = vmatmul.f32.gmra.mxu0 %v5986
        %v5988 = vpop.f32.mrf.mxu0
        %v5989 = vadd.f32 %v5884, %v5988
        %v5990 = vand.u32 %v5460, 4294901760
        %5991 = vmatmul.f32.gmra.mxu0 %v5990
        %v5992 = vpop.f32.mrf.mxu0
        %v5993 = vadd.f32 %v5890, %v5992
        %v5994 = vand.u32 %v5463, 4294901760
        %5995 = vmatmul.f32.gmra.mxu0 %v5994
        %v5996 = vpop.f32.mrf.mxu0
        %v5997 = vadd.f32 %v5896, %v5996
        %v5998 = vand.u32 %v5466, 4294901760
        %5999 = vmatmul.f32.gmra.mxu0 %v5998
        %v6000 = vpop.f32.mrf.mxu0
        %v6001 = vadd.f32 %v5902, %v6000
        %v6002 = vand.u32 %v5469, 4294901760
        %6003 = vmatmul.f32.gmra.mxu0 %v6002
        %v6004 = vpop.f32.mrf.mxu0
        %v6005 = vadd.f32 %v5908, %v6004
        %v6006 = vand.u32 %v5472, 4294901760
        %6007 = vmatmul.f32.gmra.mxu0 %v6006
        %v6008 = vpop.f32.mrf.mxu0
        %v6009 = vadd.f32 %v5914, %v6008
        %v6010 = vand.u32 %v5475, 4294901760
        %6011 = vmatmul.f32.gmra.mxu0 %v6010
        %v6012 = vpop.f32.mrf.mxu0
        %v6013 = vadd.f32 %v5920, %v6012
        %v6014 = vand.u32 %v5478, 4294901760
        %6015 = vmatmul.f32.gmra.mxu0 %v6014
        %v6016 = vpop.f32.mrf.mxu0
        %v6017 = vadd.f32 %v5926, %v6016
        %v6018 = vand.u32 %v5481, 4294901760
        %6019 = vmatmul.f32.gmra.mxu0 %v6018
        %v6020 = vpop.f32.mrf.mxu0
        %v6021 = vadd.f32 %v5932, %v6020
        %v6022 = vand.u32 %v5484, 4294901760
        %6023 = vmatmul.f32.gmra.mxu0 %v6022
        %v6024 = vpop.f32.mrf.mxu0
        %v6025 = vadd.f32 %v5938, %v6024
        %6026 = vdwg.mxu0
        %6027 = vmatpush.msra.mxu0 0.0
        %6028 = vmatpush.msra.mxu0 0.0
        %6029 = vmatpush.msra.mxu0 0.0
        %6030 = vmatpush.msra.mxu0 0.0
        %6031 = vmatpush.msra.mxu0 0.0
        %6032 = vmatpush.msra.mxu0 0.0
        %6033 = vmatpush.msra.mxu0 0.0
        %6034 = vmatpush.msra.mxu0 0.0
        %6035 = vmatpush.msra.mxu0 0.0
        %6036 = vmatpush.msra.mxu0 0.0
        %6037 = vmatpush.msra.mxu0 0.0
        %6038 = vmatpush.msra.mxu0 0.0
        %6039 = vmatpush.msra.mxu0 0.0
        %6040 = vmatpush.msra.mxu0 0.0
        %v6041 = vand.u32 %v5437, 4294901760
        %6042 = vmatpush.msra.mxu0 %v6041
        %v6043 = vand.u32 %v5436, 4294901760
        %6044 = vmatpush.msra.mxu0 %v6043
        %v6045 = vand.u32 %v5439, 4294901760
        %6046 = vmatmul.f32.gmra.mxu0 %v6045
        %v6047 = vpop.f32.mrf.mxu0
        %v6048 = vadd.f32 %v5965, %v6047
        %v6049 = vand.u32 %v5442, 4294901760
        %6050 = vmatmul.f32.gmra.mxu0 %v6049
        %v6051 = vpop.f32.mrf.mxu0
        %v6052 = vadd.f32 %v5969, %v6051
        %v6053 = vand.u32 %v5445, 4294901760
        %6054 = vmatmul.f32.gmra.mxu0 %v6053
        %v6055 = vpop.f32.mrf.mxu0
        %v6056 = vadd.f32 %v5973, %v6055
        %v6057 = vand.u32 %v5448, 4294901760
        %6058 = vmatmul.f32.gmra.mxu0 %v6057
        %v6059 = vpop.f32.mrf.mxu0
        %v6060 = vadd.f32 %v5977, %v6059
        %v6061 = vand.u32 %v5451, 4294901760
        %6062 = vmatmul.f32.gmra.mxu0 %v6061
        %v6063 = vpop.f32.mrf.mxu0
        %v6064 = vadd.f32 %v5981, %v6063
        %v6065 = vand.u32 %v5454, 4294901760
        %6066 = vmatmul.f32.gmra.mxu0 %v6065
        %v6067 = vpop.f32.mrf.mxu0
        %v6068 = vadd.f32 %v5985, %v6067
        %v6069 = vand.u32 %v5457, 4294901760
        %6070 = vmatmul.f32.gmra.mxu0 %v6069
        %v6071 = vpop.f32.mrf.mxu0
        %v6072 = vadd.f32 %v5989, %v6071
        %v6073 = vand.u32 %v5460, 4294901760
        %6074 = vmatmul.f32.gmra.mxu0 %v6073
        %v6075 = vpop.f32.mrf.mxu0
        %v6076 = vadd.f32 %v5993, %v6075
        %v6077 = vand.u32 %v5463, 4294901760
        %6078 = vmatmul.f32.gmra.mxu0 %v6077
        %v6079 = vpop.f32.mrf.mxu0
        %v6080 = vadd.f32 %v5997, %v6079
        %v6081 = vand.u32 %v5466, 4294901760
        %6082 = vmatmul.f32.gmra.mxu0 %v6081
        %v6083 = vpop.f32.mrf.mxu0
        %v6084 = vadd.f32 %v6001, %v6083
        %v6085 = vand.u32 %v5469, 4294901760
        %6086 = vmatmul.f32.gmra.mxu0 %v6085
        %v6087 = vpop.f32.mrf.mxu0
        %v6088 = vadd.f32 %v6005, %v6087
        %v6089 = vand.u32 %v5472, 4294901760
        %6090 = vmatmul.f32.gmra.mxu0 %v6089
        %v6091 = vpop.f32.mrf.mxu0
        %v6092 = vadd.f32 %v6009, %v6091
        %v6093 = vand.u32 %v5475, 4294901760
        %6094 = vmatmul.f32.gmra.mxu0 %v6093
        %v6095 = vpop.f32.mrf.mxu0
        %v6096 = vadd.f32 %v6013, %v6095
        %v6097 = vand.u32 %v5478, 4294901760
        %6098 = vmatmul.f32.gmra.mxu0 %v6097
        %v6099 = vpop.f32.mrf.mxu0
        %v6100 = vadd.f32 %v6017, %v6099
        %v6101 = vand.u32 %v5481, 4294901760
        %6102 = vmatmul.f32.gmra.mxu0 %v6101
        %v6103 = vpop.f32.mrf.mxu0
        %v6104 = vadd.f32 %v6021, %v6103
        %v6105 = vand.u32 %v5484, 4294901760
        %6106 = vmatmul.f32.gmra.mxu0 %v6105
        %v6107 = vpop.f32.mrf.mxu0
        %v6108 = vadd.f32 %v6025, %v6107
        %6109 = vdwg.mxu0
        %v6110 = vadd.f32 %v5357, %v6048
        %v6111 = vadd.f32 %v5361, %v6052
        %v6112 = vadd.f32 %v5365, %v6056
        %v6113 = vadd.f32 %v5369, %v6060
        %v6114 = vadd.f32 %v5373, %v6064
        %v6115 = vadd.f32 %v5377, %v6068
        %v6116 = vadd.f32 %v5381, %v6072
        %v6117 = vadd.f32 %v5385, %v6076
        %v6118 = vadd.f32 %v5389, %v6080
        %v6119 = vadd.f32 %v5393, %v6084
        %v6120 = vadd.f32 %v5397, %v6088
        %v6121 = vadd.f32 %v5401, %v6092
        %v6122 = vadd.f32 %v5405, %v6096
        %v6123 = vadd.f32 %v5409, %v6100
        %v6124 = vadd.f32 %v5413, %v6104
        %v6125 = vadd.f32 %v5417, %v6108
        %v6126 = vmul.f32 %v1997, %v6110
        %v6127 = vmul.f32 %v1998, %v6111
        %v6128 = vmul.f32 %v1999, %v6112
        %v6129 = vmul.f32 %v2000, %v6113
        %v6130 = vmul.f32 %v2001, %v6114
        %v6131 = vmul.f32 %v2002, %v6115
        %v6132 = vmul.f32 %v2003, %v6116
        %v6133 = vmul.f32 %v2004, %v6117
        %v6134 = vmul.f32 %v2005, %v6118
        %v6135 = vmul.f32 %v2006, %v6119
        %v6136 = vmul.f32 %v2007, %v6120
        %v6137 = vmul.f32 %v2008, %v6121
        %v6138 = vmul.f32 %v2009, %v6122
        %v6139 = vmul.f32 %v2010, %v6123
        %v6140 = vmul.f32 %v2011, %v6124
        %v6141 = vmul.f32 %v2012, %v6125
        %v6142 = vadd.f32 %v4078, %v6126
        %v6143 = vadd.f32 %v4079, %v6127
        %v6144 = vadd.f32 %v4080, %v6128
        %v6145 = vadd.f32 %v4081, %v6129
        %v6146 = vadd.f32 %v4082, %v6130
        %v6147 = vadd.f32 %v4083, %v6131
        %v6148 = vadd.f32 %v4084, %v6132
        %v6149 = vadd.f32 %v4085, %v6133
        %v6150 = vadd.f32 %v4086, %v6134
        %v6151 = vadd.f32 %v4087, %v6135
        %v6152 = vadd.f32 %v4088, %v6136
        %v6153 = vadd.f32 %v4089, %v6137
        %v6154 = vadd.f32 %v4090, %v6138
        %v6155 = vadd.f32 %v4091, %v6139
        %v6156 = vadd.f32 %v4092, %v6140
        %v6157 = vadd.f32 %v4093, %v6141
        %v6158 = vld [vmem:[#allocation2 + $0x9] sm:$0xff]
        %v6159 = vld [vmem:[#allocation2 + $0x11] sm:$0xff]
        %v6160 = vld [vmem:[#allocation2 + $0x19] sm:$0xff]
        %v6161 = vld [vmem:[#allocation2 + $0x21] sm:$0xff]
        %v6162 = vld [vmem:[#allocation2 + $0x29] sm:$0xff]
        %v6163 = vld [vmem:[#allocation2 + $0x31] sm:$0xff]
        %v6164 = vld [vmem:[#allocation2 + $0x39] sm:$0xff]
        %v6165 = vld [vmem:[#allocation2 + $0x41] sm:$0xff]
        %v6166 = vld [vmem:[#allocation2 + $0x49] sm:$0xff]
        %v6167 = vld [vmem:[#allocation2 + $0x51] sm:$0xff]
        %v6168 = vld [vmem:[#allocation2 + $0x59] sm:$0xff]
        %v6169 = vld [vmem:[#allocation2 + $0x61] sm:$0xff]
        %v6170 = vld [vmem:[#allocation2 + $0x69] sm:$0xff]
        %v6171 = vld [vmem:[#allocation2 + $0x71] sm:$0xff]
        %v6172 = vld [vmem:[#allocation2 + $0x79] sm:$0xff]
        %v6173 = vld [vmem:[#allocation2 + $0x81] sm:$0xff]
        %s6174 = scalar_lea.vmem %s5, 32
        %v6175 = vld [vmem:[%s6174] sm:$0xff]
        %v6176 = vld [vmem:[%s6174 + $0x8] sm:$0xff]
        %v6177 = vld [vmem:[#allocation2 + $0x89] sm:$0xff]
        %v6178 = vld [vmem:[#allocation2 + $0x91] sm:$0xff]
        %s6179 = scalar_lea.vmem %s5, 80
        %v6180 = vld [vmem:[%s6179] sm:$0xff]
        %v6181 = vld [vmem:[%s6179 + $0x8] sm:$0xff]
        %v6183 = vsel %vm592, %v6160, 0
        %v6186 = vsel %vm592, %v6161, 0
        %v6189 = vsel %vm592, %v6162, 0
        %v6192 = vsel %vm592, %v6163, 0
        %v6195 = vsel %vm592, %v6164, 0
        %v6198 = vsel %vm592, %v6165, 0
        %v6201 = vsel %vm592, %v6166, 0
        %v6204 = vsel %vm592, %v6167, 0
        %v6207 = vsel %vm592, %v6168, 0
        %v6210 = vsel %vm592, %v6169, 0
        %v6213 = vsel %vm592, %v6170, 0
        %v6216 = vsel %vm592, %v6171, 0
        %v6219 = vsel %vm592, %v6172, 0
        %v6222 = vsel %vm592, %v6173, 0
        %v6225 = vsel %vm592, %v6177, 0
        %v6228 = vsel %vm592, %v6178, 0
        %6230 = vmatpush.msra.mxu0 0.0
        %6231 = vmatpush.msra.mxu0 0.0
        %6232 = vmatpush.msra.mxu0 0.0
        %6233 = vmatpush.msra.mxu0 0.0
        %6234 = vmatpush.msra.mxu0 0.0
        %6235 = vmatpush.msra.mxu0 0.0
        %6236 = vmatpush.msra.mxu0 0.0
        %6237 = vmatpush.msra.mxu0 0.0
        %6238 = vmatpush.msra.mxu0 0.0
        %6239 = vmatpush.msra.mxu0 0.0
        %6240 = vmatpush.msra.mxu0 0.0
        %6241 = vmatpush.msra.mxu0 0.0
        %6242 = vmatpush.msra.mxu0 0.0
        %6243 = vmatpush.msra.mxu0 0.0
        %v6244 = vand.u32 %v6181, 4294901760
        %6245 = vmatpush.msra.mxu0 %v6244
        %v6246 = vand.u32 %v6180, 4294901760
        %6247 = vmatpush.msra.mxu0 %v6246
        %v6248 = vand.u32 %v6183, 4294901760
        %v6249 = vsub.f32 %v6183, %v6248
        %v6250 = vand.u32 %v6249, 4294901760
        %v6251 = vsub.f32 %v6249, %v6250
        %v6252 = vand.u32 %v6251, 4294901760
        %6253 = vmatmul.f32.gmra.mxu0 %v6252
        %v6254 = vpop.f32.mrf.mxu0
        %v6255 = vadd.f32 0.0, %v6254
        %v6256 = vand.u32 %v6186, 4294901760
        %v6257 = vsub.f32 %v6186, %v6256
        %v6258 = vand.u32 %v6257, 4294901760
        %v6259 = vsub.f32 %v6257, %v6258
        %v6260 = vand.u32 %v6259, 4294901760
        %6261 = vmatmul.f32.gmra.mxu0 %v6260
        %v6262 = vpop.f32.mrf.mxu0
        %v6263 = vadd.f32 0.0, %v6262
        %v6264 = vand.u32 %v6189, 4294901760
        %v6265 = vsub.f32 %v6189, %v6264
        %v6266 = vand.u32 %v6265, 4294901760
        %v6267 = vsub.f32 %v6265, %v6266
        %v6268 = vand.u32 %v6267, 4294901760
        %6269 = vmatmul.f32.gmra.mxu0 %v6268
        %v6270 = vpop.f32.mrf.mxu0
        %v6271 = vadd.f32 0.0, %v6270
        %v6272 = vand.u32 %v6192, 4294901760
        %v6273 = vsub.f32 %v6192, %v6272
        %v6274 = vand.u32 %v6273, 4294901760
        %v6275 = vsub.f32 %v6273, %v6274
        %v6276 = vand.u32 %v6275, 4294901760
        %6277 = vmatmul.f32.gmra.mxu0 %v6276
        %v6278 = vpop.f32.mrf.mxu0
        %v6279 = vadd.f32 0.0, %v6278
        %v6280 = vand.u32 %v6195, 4294901760
        %v6281 = vsub.f32 %v6195, %v6280
        %v6282 = vand.u32 %v6281, 4294901760
        %v6283 = vsub.f32 %v6281, %v6282
        %v6284 = vand.u32 %v6283, 4294901760
        %6285 = vmatmul.f32.gmra.mxu0 %v6284
        %v6286 = vpop.f32.mrf.mxu0
        %v6287 = vadd.f32 0.0, %v6286
        %v6288 = vand.u32 %v6198, 4294901760
        %v6289 = vsub.f32 %v6198, %v6288
        %v6290 = vand.u32 %v6289, 4294901760
        %v6291 = vsub.f32 %v6289, %v6290
        %v6292 = vand.u32 %v6291, 4294901760
        %6293 = vmatmul.f32.gmra.mxu0 %v6292
        %v6294 = vpop.f32.mrf.mxu0
        %v6295 = vadd.f32 0.0, %v6294
        %v6296 = vand.u32 %v6201, 4294901760
        %v6297 = vsub.f32 %v6201, %v6296
        %v6298 = vand.u32 %v6297, 4294901760
        %v6299 = vsub.f32 %v6297, %v6298
        %v6300 = vand.u32 %v6299, 4294901760
        %6301 = vmatmul.f32.gmra.mxu0 %v6300
        %v6302 = vpop.f32.mrf.mxu0
        %v6303 = vadd.f32 0.0, %v6302
        %v6304 = vand.u32 %v6204, 4294901760
        %v6305 = vsub.f32 %v6204, %v6304
        %v6306 = vand.u32 %v6305, 4294901760
        %v6307 = vsub.f32 %v6305, %v6306
        %v6308 = vand.u32 %v6307, 4294901760
        %6309 = vmatmul.f32.gmra.mxu0 %v6308
        %v6310 = vpop.f32.mrf.mxu0
        %v6311 = vadd.f32 0.0, %v6310
        %v6312 = vand.u32 %v6207, 4294901760
        %v6313 = vsub.f32 %v6207, %v6312
        %v6314 = vand.u32 %v6313, 4294901760
        %v6315 = vsub.f32 %v6313, %v6314
        %v6316 = vand.u32 %v6315, 4294901760
        %6317 = vmatmul.f32.gmra.mxu0 %v6316
        %v6318 = vpop.f32.mrf.mxu0
        %v6319 = vadd.f32 0.0, %v6318
        %v6320 = vand.u32 %v6210, 4294901760
        %v6321 = vsub.f32 %v6210, %v6320
        %v6322 = vand.u32 %v6321, 4294901760
        %v6323 = vsub.f32 %v6321, %v6322
        %v6324 = vand.u32 %v6323, 4294901760
        %6325 = vmatmul.f32.gmra.mxu0 %v6324
        %v6326 = vpop.f32.mrf.mxu0
        %v6327 = vadd.f32 0.0, %v6326
        %v6328 = vand.u32 %v6213, 4294901760
        %v6329 = vsub.f32 %v6213, %v6328
        %v6330 = vand.u32 %v6329, 4294901760
        %v6331 = vsub.f32 %v6329, %v6330
        %v6332 = vand.u32 %v6331, 4294901760
        %6333 = vmatmul.f32.gmra.mxu0 %v6332
        %v6334 = vpop.f32.mrf.mxu0
        %v6335 = vadd.f32 0.0, %v6334
        %v6336 = vand.u32 %v6216, 4294901760
        %v6337 = vsub.f32 %v6216, %v6336
        %v6338 = vand.u32 %v6337, 4294901760
        %v6339 = vsub.f32 %v6337, %v6338
        %v6340 = vand.u32 %v6339, 4294901760
        %6341 = vmatmul.f32.gmra.mxu0 %v6340
        %v6342 = vpop.f32.mrf.mxu0
        %v6343 = vadd.f32 0.0, %v6342
        %v6344 = vand.u32 %v6219, 4294901760
        %v6345 = vsub.f32 %v6219, %v6344
        %v6346 = vand.u32 %v6345, 4294901760
        %v6347 = vsub.f32 %v6345, %v6346
        %v6348 = vand.u32 %v6347, 4294901760
        %6349 = vmatmul.f32.gmra.mxu0 %v6348
        %v6350 = vpop.f32.mrf.mxu0
        %v6351 = vadd.f32 0.0, %v6350
        %v6352 = vand.u32 %v6222, 4294901760
        %v6353 = vsub.f32 %v6222, %v6352
        %v6354 = vand.u32 %v6353, 4294901760
        %v6355 = vsub.f32 %v6353, %v6354
        %v6356 = vand.u32 %v6355, 4294901760
        %6357 = vmatmul.f32.gmra.mxu0 %v6356
        %v6358 = vpop.f32.mrf.mxu0
        %v6359 = vadd.f32 0.0, %v6358
        %v6360 = vand.u32 %v6225, 4294901760
        %v6361 = vsub.f32 %v6225, %v6360
        %v6362 = vand.u32 %v6361, 4294901760
        %v6363 = vsub.f32 %v6361, %v6362
        %v6364 = vand.u32 %v6363, 4294901760
        %6365 = vmatmul.f32.gmra.mxu0 %v6364
        %v6366 = vpop.f32.mrf.mxu0
        %v6367 = vadd.f32 0.0, %v6366
        %v6368 = vand.u32 %v6228, 4294901760
        %v6369 = vsub.f32 %v6228, %v6368
        %v6370 = vand.u32 %v6369, 4294901760
        %v6371 = vsub.f32 %v6369, %v6370
        %v6372 = vand.u32 %v6371, 4294901760
        %6373 = vmatmul.f32.gmra.mxu0 %v6372
        %v6374 = vpop.f32.mrf.mxu0
        %v6375 = vadd.f32 0.0, %v6374
        %6376 = vdwg.mxu0
        %6377 = vmatpush.msra.mxu0 0.0
        %6378 = vmatpush.msra.mxu0 0.0
        %6379 = vmatpush.msra.mxu0 0.0
        %6380 = vmatpush.msra.mxu0 0.0
        %6381 = vmatpush.msra.mxu0 0.0
        %6382 = vmatpush.msra.mxu0 0.0
        %6383 = vmatpush.msra.mxu0 0.0
        %6384 = vmatpush.msra.mxu0 0.0
        %6385 = vmatpush.msra.mxu0 0.0
        %6386 = vmatpush.msra.mxu0 0.0
        %6387 = vmatpush.msra.mxu0 0.0
        %6388 = vmatpush.msra.mxu0 0.0
        %6389 = vmatpush.msra.mxu0 0.0
        %6390 = vmatpush.msra.mxu0 0.0
        %v6391 = vand.u32 %v6181, 4294901760
        %v6392 = vsub.f32 %v6181, %v6391
        %v6393 = vand.u32 %v6392, 4294901760
        %v6394 = vsub.f32 %v6392, %v6393
        %v6395 = vand.u32 %v6394, 4294901760
        %6396 = vmatpush.msra.mxu0 %v6395
        %v6397 = vand.u32 %v6180, 4294901760
        %v6398 = vsub.f32 %v6180, %v6397
        %v6399 = vand.u32 %v6398, 4294901760
        %v6400 = vsub.f32 %v6398, %v6399
        %v6401 = vand.u32 %v6400, 4294901760
        %6402 = vmatpush.msra.mxu0 %v6401
        %v6403 = vand.u32 %v6183, 4294901760
        %6404 = vmatmul.f32.gmra.mxu0 %v6403
        %v6405 = vpop.f32.mrf.mxu0
        %v6406 = vadd.f32 %v6255, %v6405
        %v6407 = vand.u32 %v6186, 4294901760
        %6408 = vmatmul.f32.gmra.mxu0 %v6407
        %v6409 = vpop.f32.mrf.mxu0
        %v6410 = vadd.f32 %v6263, %v6409
        %v6411 = vand.u32 %v6189, 4294901760
        %6412 = vmatmul.f32.gmra.mxu0 %v6411
        %v6413 = vpop.f32.mrf.mxu0
        %v6414 = vadd.f32 %v6271, %v6413
        %v6415 = vand.u32 %v6192, 4294901760
        %6416 = vmatmul.f32.gmra.mxu0 %v6415
        %v6417 = vpop.f32.mrf.mxu0
        %v6418 = vadd.f32 %v6279, %v6417
        %v6419 = vand.u32 %v6195, 4294901760
        %6420 = vmatmul.f32.gmra.mxu0 %v6419
        %v6421 = vpop.f32.mrf.mxu0
        %v6422 = vadd.f32 %v6287, %v6421
        %v6423 = vand.u32 %v6198, 4294901760
        %6424 = vmatmul.f32.gmra.mxu0 %v6423
        %v6425 = vpop.f32.mrf.mxu0
        %v6426 = vadd.f32 %v6295, %v6425
        %v6427 = vand.u32 %v6201, 4294901760
        %6428 = vmatmul.f32.gmra.mxu0 %v6427
        %v6429 = vpop.f32.mrf.mxu0
        %v6430 = vadd.f32 %v6303, %v6429
        %v6431 = vand.u32 %v6204, 4294901760
        %6432 = vmatmul.f32.gmra.mxu0 %v6431
        %v6433 = vpop.f32.mrf.mxu0
        %v6434 = vadd.f32 %v6311, %v6433
        %v6435 = vand.u32 %v6207, 4294901760
        %6436 = vmatmul.f32.gmra.mxu0 %v6435
        %v6437 = vpop.f32.mrf.mxu0
        %v6438 = vadd.f32 %v6319, %v6437
        %v6439 = vand.u32 %v6210, 4294901760
        %6440 = vmatmul.f32.gmra.mxu0 %v6439
        %v6441 = vpop.f32.mrf.mxu0
        %v6442 = vadd.f32 %v6327, %v6441
        %v6443 = vand.u32 %v6213, 4294901760
        %6444 = vmatmul.f32.gmra.mxu0 %v6443
        %v6445 = vpop.f32.mrf.mxu0
        %v6446 = vadd.f32 %v6335, %v6445
        %v6447 = vand.u32 %v6216, 4294901760
        %6448 = vmatmul.f32.gmra.mxu0 %v6447
        %v6449 = vpop.f32.mrf.mxu0
        %v6450 = vadd.f32 %v6343, %v6449
        %v6451 = vand.u32 %v6219, 4294901760
        %6452 = vmatmul.f32.gmra.mxu0 %v6451
        %v6453 = vpop.f32.mrf.mxu0
        %v6454 = vadd.f32 %v6351, %v6453
        %v6455 = vand.u32 %v6222, 4294901760
        %6456 = vmatmul.f32.gmra.mxu0 %v6455
        %v6457 = vpop.f32.mrf.mxu0
        %v6458 = vadd.f32 %v6359, %v6457
        %v6459 = vand.u32 %v6225, 4294901760
        %6460 = vmatmul.f32.gmra.mxu0 %v6459
        %v6461 = vpop.f32.mrf.mxu0
        %v6462 = vadd.f32 %v6367, %v6461
        %v6463 = vand.u32 %v6228, 4294901760
        %6464 = vmatmul.f32.gmra.mxu0 %v6463
        %v6465 = vpop.f32.mrf.mxu0
        %v6466 = vadd.f32 %v6375, %v6465
        %6467 = vdwg.mxu0
        %6468 = vmatpush.msra.mxu0 0.0
        %6469 = vmatpush.msra.mxu0 0.0
        %6470 = vmatpush.msra.mxu0 0.0
        %6471 = vmatpush.msra.mxu0 0.0
        %6472 = vmatpush.msra.mxu0 0.0
        %6473 = vmatpush.msra.mxu0 0.0
        %6474 = vmatpush.msra.mxu0 0.0
        %6475 = vmatpush.msra.mxu0 0.0
        %6476 = vmatpush.msra.mxu0 0.0
        %6477 = vmatpush.msra.mxu0 0.0
        %6478 = vmatpush.msra.mxu0 0.0
        %6479 = vmatpush.msra.mxu0 0.0
        %6480 = vmatpush.msra.mxu0 0.0
        %6481 = vmatpush.msra.mxu0 0.0
        %v6482 = vand.u32 %v6181, 4294901760
        %v6483 = vsub.f32 %v6181, %v6482
        %6484 = vmatpush.msra.mxu0 %v6483
        %v6485 = vand.u32 %v6180, 4294901760
        %v6486 = vsub.f32 %v6180, %v6485
        %6487 = vmatpush.msra.mxu0 %v6486
        %v6488 = vand.u32 %v6183, 4294901760
        %v6489 = vsub.f32 %v6183, %v6488
        %6490 = vmatmul.f32.gmra.mxu0 %v6489
        %v6491 = vpop.f32.mrf.mxu0
        %v6492 = vadd.f32 %v6406, %v6491
        %v6493 = vand.u32 %v6186, 4294901760
        %v6494 = vsub.f32 %v6186, %v6493
        %6495 = vmatmul.f32.gmra.mxu0 %v6494
        %v6496 = vpop.f32.mrf.mxu0
        %v6497 = vadd.f32 %v6410, %v6496
        %v6498 = vand.u32 %v6189, 4294901760
        %v6499 = vsub.f32 %v6189, %v6498
        %6500 = vmatmul.f32.gmra.mxu0 %v6499
        %v6501 = vpop.f32.mrf.mxu0
        %v6502 = vadd.f32 %v6414, %v6501
        %v6503 = vand.u32 %v6192, 4294901760
        %v6504 = vsub.f32 %v6192, %v6503
        %6505 = vmatmul.f32.gmra.mxu0 %v6504
        %v6506 = vpop.f32.mrf.mxu0
        %v6507 = vadd.f32 %v6418, %v6506
        %v6508 = vand.u32 %v6195, 4294901760
        %v6509 = vsub.f32 %v6195, %v6508
        %6510 = vmatmul.f32.gmra.mxu0 %v6509
        %v6511 = vpop.f32.mrf.mxu0
        %v6512 = vadd.f32 %v6422, %v6511
        %v6513 = vand.u32 %v6198, 4294901760
        %v6514 = vsub.f32 %v6198, %v6513
        %6515 = vmatmul.f32.gmra.mxu0 %v6514
        %v6516 = vpop.f32.mrf.mxu0
        %v6517 = vadd.f32 %v6426, %v6516
        %v6518 = vand.u32 %v6201, 4294901760
        %v6519 = vsub.f32 %v6201, %v6518
        %6520 = vmatmul.f32.gmra.mxu0 %v6519
        %v6521 = vpop.f32.mrf.mxu0
        %v6522 = vadd.f32 %v6430, %v6521
        %v6523 = vand.u32 %v6204, 4294901760
        %v6524 = vsub.f32 %v6204, %v6523
        %6525 = vmatmul.f32.gmra.mxu0 %v6524
        %v6526 = vpop.f32.mrf.mxu0
        %v6527 = vadd.f32 %v6434, %v6526
        %v6528 = vand.u32 %v6207, 4294901760
        %v6529 = vsub.f32 %v6207, %v6528
        %6530 = vmatmul.f32.gmra.mxu0 %v6529
        %v6531 = vpop.f32.mrf.mxu0
        %v6532 = vadd.f32 %v6438, %v6531
        %v6533 = vand.u32 %v6210, 4294901760
        %v6534 = vsub.f32 %v6210, %v6533
        %6535 = vmatmul.f32.gmra.mxu0 %v6534
        %v6536 = vpop.f32.mrf.mxu0
        %v6537 = vadd.f32 %v6442, %v6536
        %v6538 = vand.u32 %v6213, 4294901760
        %v6539 = vsub.f32 %v6213, %v6538
        %6540 = vmatmul.f32.gmra.mxu0 %v6539
        %v6541 = vpop.f32.mrf.mxu0
        %v6542 = vadd.f32 %v6446, %v6541
        %v6543 = vand.u32 %v6216, 4294901760
        %v6544 = vsub.f32 %v6216, %v6543
        %6545 = vmatmul.f32.gmra.mxu0 %v6544
        %v6546 = vpop.f32.mrf.mxu0
        %v6547 = vadd.f32 %v6450, %v6546
        %v6548 = vand.u32 %v6219, 4294901760
        %v6549 = vsub.f32 %v6219, %v6548
        %6550 = vmatmul.f32.gmra.mxu0 %v6549
        %v6551 = vpop.f32.mrf.mxu0
        %v6552 = vadd.f32 %v6454, %v6551
        %v6553 = vand.u32 %v6222, 4294901760
        %v6554 = vsub.f32 %v6222, %v6553
        %6555 = vmatmul.f32.gmra.mxu0 %v6554
        %v6556 = vpop.f32.mrf.mxu0
        %v6557 = vadd.f32 %v6458, %v6556
        %v6558 = vand.u32 %v6225, 4294901760
        %v6559 = vsub.f32 %v6225, %v6558
        %6560 = vmatmul.f32.gmra.mxu0 %v6559
        %v6561 = vpop.f32.mrf.mxu0
        %v6562 = vadd.f32 %v6462, %v6561
        %v6563 = vand.u32 %v6228, 4294901760
        %v6564 = vsub.f32 %v6228, %v6563
        %6565 = vmatmul.f32.gmra.mxu0 %v6564
        %v6566 = vpop.f32.mrf.mxu0
        %v6567 = vadd.f32 %v6466, %v6566
        %6568 = vdwg.mxu0
        %6569 = vmatpush.msra.mxu0 0.0
        %6570 = vmatpush.msra.mxu0 0.0
        %6571 = vmatpush.msra.mxu0 0.0
        %6572 = vmatpush.msra.mxu0 0.0
        %6573 = vmatpush.msra.mxu0 0.0
        %6574 = vmatpush.msra.mxu0 0.0
        %6575 = vmatpush.msra.mxu0 0.0
        %6576 = vmatpush.msra.mxu0 0.0
        %6577 = vmatpush.msra.mxu0 0.0
        %6578 = vmatpush.msra.mxu0 0.0
        %6579 = vmatpush.msra.mxu0 0.0
        %6580 = vmatpush.msra.mxu0 0.0
        %6581 = vmatpush.msra.mxu0 0.0
        %6582 = vmatpush.msra.mxu0 0.0
        %v6583 = vand.u32 %v6181, 4294901760
        %6584 = vmatpush.msra.mxu0 %v6583
        %v6585 = vand.u32 %v6180, 4294901760
        %6586 = vmatpush.msra.mxu0 %v6585
        %v6587 = vand.u32 %v6183, 4294901760
        %v6588 = vsub.f32 %v6183, %v6587
        %v6589 = vand.u32 %v6588, 4294901760
        %6590 = vmatmul.f32.gmra.mxu0 %v6589
        %v6591 = vpop.f32.mrf.mxu0
        %v6592 = vadd.f32 %v6492, %v6591
        %v6593 = vand.u32 %v6186, 4294901760
        %v6594 = vsub.f32 %v6186, %v6593
        %v6595 = vand.u32 %v6594, 4294901760
        %6596 = vmatmul.f32.gmra.mxu0 %v6595
        %v6597 = vpop.f32.mrf.mxu0
        %v6598 = vadd.f32 %v6497, %v6597
        %v6599 = vand.u32 %v6189, 4294901760
        %v6600 = vsub.f32 %v6189, %v6599
        %v6601 = vand.u32 %v6600, 4294901760
        %6602 = vmatmul.f32.gmra.mxu0 %v6601
        %v6603 = vpop.f32.mrf.mxu0
        %v6604 = vadd.f32 %v6502, %v6603
        %v6605 = vand.u32 %v6192, 4294901760
        %v6606 = vsub.f32 %v6192, %v6605
        %v6607 = vand.u32 %v6606, 4294901760
        %6608 = vmatmul.f32.gmra.mxu0 %v6607
        %v6609 = vpop.f32.mrf.mxu0
        %v6610 = vadd.f32 %v6507, %v6609
        %v6611 = vand.u32 %v6195, 4294901760
        %v6612 = vsub.f32 %v6195, %v6611
        %v6613 = vand.u32 %v6612, 4294901760
        %6614 = vmatmul.f32.gmra.mxu0 %v6613
        %v6615 = vpop.f32.mrf.mxu0
        %v6616 = vadd.f32 %v6512, %v6615
        %v6617 = vand.u32 %v6198, 4294901760
        %v6618 = vsub.f32 %v6198, %v6617
        %v6619 = vand.u32 %v6618, 4294901760
        %6620 = vmatmul.f32.gmra.mxu0 %v6619
        %v6621 = vpop.f32.mrf.mxu0
        %v6622 = vadd.f32 %v6517, %v6621
        %v6623 = vand.u32 %v6201, 4294901760
        %v6624 = vsub.f32 %v6201, %v6623
        %v6625 = vand.u32 %v6624, 4294901760
        %6626 = vmatmul.f32.gmra.mxu0 %v6625
        %v6627 = vpop.f32.mrf.mxu0
        %v6628 = vadd.f32 %v6522, %v6627
        %v6629 = vand.u32 %v6204, 4294901760
        %v6630 = vsub.f32 %v6204, %v6629
        %v6631 = vand.u32 %v6630, 4294901760
        %6632 = vmatmul.f32.gmra.mxu0 %v6631
        %v6633 = vpop.f32.mrf.mxu0
        %v6634 = vadd.f32 %v6527, %v6633
        %v6635 = vand.u32 %v6207, 4294901760
        %v6636 = vsub.f32 %v6207, %v6635
        %v6637 = vand.u32 %v6636, 4294901760
        %6638 = vmatmul.f32.gmra.mxu0 %v6637
        %v6639 = vpop.f32.mrf.mxu0
        %v6640 = vadd.f32 %v6532, %v6639
        %v6641 = vand.u32 %v6210, 4294901760
        %v6642 = vsub.f32 %v6210, %v6641
        %v6643 = vand.u32 %v6642, 4294901760
        %6644 = vmatmul.f32.gmra.mxu0 %v6643
        %v6645 = vpop.f32.mrf.mxu0
        %v6646 = vadd.f32 %v6537, %v6645
        %v6647 = vand.u32 %v6213, 4294901760
        %v6648 = vsub.f32 %v6213, %v6647
        %v6649 = vand.u32 %v6648, 4294901760
        %6650 = vmatmul.f32.gmra.mxu0 %v6649
        %v6651 = vpop.f32.mrf.mxu0
        %v6652 = vadd.f32 %v6542, %v6651
        %v6653 = vand.u32 %v6216, 4294901760
        %v6654 = vsub.f32 %v6216, %v6653
        %v6655 = vand.u32 %v6654, 4294901760
        %6656 = vmatmul.f32.gmra.mxu0 %v6655
        %v6657 = vpop.f32.mrf.mxu0
        %v6658 = vadd.f32 %v6547, %v6657
        %v6659 = vand.u32 %v6219, 4294901760
        %v6660 = vsub.f32 %v6219, %v6659
        %v6661 = vand.u32 %v6660, 4294901760
        %6662 = vmatmul.f32.gmra.mxu0 %v6661
        %v6663 = vpop.f32.mrf.mxu0
        %v6664 = vadd.f32 %v6552, %v6663
        %v6665 = vand.u32 %v6222, 4294901760
        %v6666 = vsub.f32 %v6222, %v6665
        %v6667 = vand.u32 %v6666, 4294901760
        %6668 = vmatmul.f32.gmra.mxu0 %v6667
        %v6669 = vpop.f32.mrf.mxu0
        %v6670 = vadd.f32 %v6557, %v6669
        %v6671 = vand.u32 %v6225, 4294901760
        %v6672 = vsub.f32 %v6225, %v6671
        %v6673 = vand.u32 %v6672, 4294901760
        %6674 = vmatmul.f32.gmra.mxu0 %v6673
        %v6675 = vpop.f32.mrf.mxu0
        %v6676 = vadd.f32 %v6562, %v6675
        %v6677 = vand.u32 %v6228, 4294901760
        %v6678 = vsub.f32 %v6228, %v6677
        %v6679 = vand.u32 %v6678, 4294901760
        %6680 = vmatmul.f32.gmra.mxu0 %v6679
        %v6681 = vpop.f32.mrf.mxu0
        %v6682 = vadd.f32 %v6567, %v6681
        %6683 = vdwg.mxu0
        %6684 = vmatpush.msra.mxu0 0.0
        %6685 = vmatpush.msra.mxu0 0.0
        %6686 = vmatpush.msra.mxu0 0.0
        %6687 = vmatpush.msra.mxu0 0.0
        %6688 = vmatpush.msra.mxu0 0.0
        %6689 = vmatpush.msra.mxu0 0.0
        %6690 = vmatpush.msra.mxu0 0.0
        %6691 = vmatpush.msra.mxu0 0.0
        %6692 = vmatpush.msra.mxu0 0.0
        %6693 = vmatpush.msra.mxu0 0.0
        %6694 = vmatpush.msra.mxu0 0.0
        %6695 = vmatpush.msra.mxu0 0.0
        %6696 = vmatpush.msra.mxu0 0.0
        %6697 = vmatpush.msra.mxu0 0.0
        %v6698 = vand.u32 %v6181, 4294901760
        %v6699 = vsub.f32 %v6181, %v6698
        %v6700 = vand.u32 %v6699, 4294901760
        %6701 = vmatpush.msra.mxu0 %v6700
        %v6702 = vand.u32 %v6180, 4294901760
        %v6703 = vsub.f32 %v6180, %v6702
        %v6704 = vand.u32 %v6703, 4294901760
        %6705 = vmatpush.msra.mxu0 %v6704
        %v6706 = vand.u32 %v6183, 4294901760
        %6707 = vmatmul.f32.gmra.mxu0 %v6706
        %v6708 = vpop.f32.mrf.mxu0
        %v6709 = vadd.f32 %v6592, %v6708
        %v6710 = vand.u32 %v6186, 4294901760
        %6711 = vmatmul.f32.gmra.mxu0 %v6710
        %v6712 = vpop.f32.mrf.mxu0
        %v6713 = vadd.f32 %v6598, %v6712
        %v6714 = vand.u32 %v6189, 4294901760
        %6715 = vmatmul.f32.gmra.mxu0 %v6714
        %v6716 = vpop.f32.mrf.mxu0
        %v6717 = vadd.f32 %v6604, %v6716
        %v6718 = vand.u32 %v6192, 4294901760
        %6719 = vmatmul.f32.gmra.mxu0 %v6718
        %v6720 = vpop.f32.mrf.mxu0
        %v6721 = vadd.f32 %v6610, %v6720
        %v6722 = vand.u32 %v6195, 4294901760
        %6723 = vmatmul.f32.gmra.mxu0 %v6722
        %v6724 = vpop.f32.mrf.mxu0
        %v6725 = vadd.f32 %v6616, %v6724
        %v6726 = vand.u32 %v6198, 4294901760
        %6727 = vmatmul.f32.gmra.mxu0 %v6726
        %v6728 = vpop.f32.mrf.mxu0
        %v6729 = vadd.f32 %v6622, %v6728
        %v6730 = vand.u32 %v6201, 4294901760
        %6731 = vmatmul.f32.gmra.mxu0 %v6730
        %v6732 = vpop.f32.mrf.mxu0
        %v6733 = vadd.f32 %v6628, %v6732
        %v6734 = vand.u32 %v6204, 4294901760
        %6735 = vmatmul.f32.gmra.mxu0 %v6734
        %v6736 = vpop.f32.mrf.mxu0
        %v6737 = vadd.f32 %v6634, %v6736
        %v6738 = vand.u32 %v6207, 4294901760
        %6739 = vmatmul.f32.gmra.mxu0 %v6738
        %v6740 = vpop.f32.mrf.mxu0
        %v6741 = vadd.f32 %v6640, %v6740
        %v6742 = vand.u32 %v6210, 4294901760
        %6743 = vmatmul.f32.gmra.mxu0 %v6742
        %v6744 = vpop.f32.mrf.mxu0
        %v6745 = vadd.f32 %v6646, %v6744
        %v6746 = vand.u32 %v6213, 4294901760
        %6747 = vmatmul.f32.gmra.mxu0 %v6746
        %v6748 = vpop.f32.mrf.mxu0
        %v6749 = vadd.f32 %v6652, %v6748
        %v6750 = vand.u32 %v6216, 4294901760
        %6751 = vmatmul.f32.gmra.mxu0 %v6750
        %v6752 = vpop.f32.mrf.mxu0
        %v6753 = vadd.f32 %v6658, %v6752
        %v6754 = vand.u32 %v6219, 4294901760
        %6755 = vmatmul.f32.gmra.mxu0 %v6754
        %v6756 = vpop.f32.mrf.mxu0
        %v6757 = vadd.f32 %v6664, %v6756
        %v6758 = vand.u32 %v6222, 4294901760
        %6759 = vmatmul.f32.gmra.mxu0 %v6758
        %v6760 = vpop.f32.mrf.mxu0
        %v6761 = vadd.f32 %v6670, %v6760
        %v6762 = vand.u32 %v6225, 4294901760
        %6763 = vmatmul.f32.gmra.mxu0 %v6762
        %v6764 = vpop.f32.mrf.mxu0
        %v6765 = vadd.f32 %v6676, %v6764
        %v6766 = vand.u32 %v6228, 4294901760
        %6767 = vmatmul.f32.gmra.mxu0 %v6766
        %v6768 = vpop.f32.mrf.mxu0
        %v6769 = vadd.f32 %v6682, %v6768
        %6770 = vdwg.mxu0
        %6771 = vmatpush.msra.mxu0 0.0
        %6772 = vmatpush.msra.mxu0 0.0
        %6773 = vmatpush.msra.mxu0 0.0
        %6774 = vmatpush.msra.mxu0 0.0
        %6775 = vmatpush.msra.mxu0 0.0
        %6776 = vmatpush.msra.mxu0 0.0
        %6777 = vmatpush.msra.mxu0 0.0
        %6778 = vmatpush.msra.mxu0 0.0
        %6779 = vmatpush.msra.mxu0 0.0
        %6780 = vmatpush.msra.mxu0 0.0
        %6781 = vmatpush.msra.mxu0 0.0
        %6782 = vmatpush.msra.mxu0 0.0
        %6783 = vmatpush.msra.mxu0 0.0
        %6784 = vmatpush.msra.mxu0 0.0
        %v6785 = vand.u32 %v6181, 4294901760
        %6786 = vmatpush.msra.mxu0 %v6785
        %v6787 = vand.u32 %v6180, 4294901760
        %6788 = vmatpush.msra.mxu0 %v6787
        %v6789 = vand.u32 %v6183, 4294901760
        %6790 = vmatmul.f32.gmra.mxu0 %v6789
        %v6791 = vpop.f32.mrf.mxu0
        %v6792 = vadd.f32 %v6709, %v6791
        %v6793 = vand.u32 %v6186, 4294901760
        %6794 = vmatmul.f32.gmra.mxu0 %v6793
        %v6795 = vpop.f32.mrf.mxu0
        %v6796 = vadd.f32 %v6713, %v6795
        %v6797 = vand.u32 %v6189, 4294901760
        %6798 = vmatmul.f32.gmra.mxu0 %v6797
        %v6799 = vpop.f32.mrf.mxu0
        %v6800 = vadd.f32 %v6717, %v6799
        %v6801 = vand.u32 %v6192, 4294901760
        %6802 = vmatmul.f32.gmra.mxu0 %v6801
        %v6803 = vpop.f32.mrf.mxu0
        %v6804 = vadd.f32 %v6721, %v6803
        %v6805 = vand.u32 %v6195, 4294901760
        %6806 = vmatmul.f32.gmra.mxu0 %v6805
        %v6807 = vpop.f32.mrf.mxu0
        %v6808 = vadd.f32 %v6725, %v6807
        %v6809 = vand.u32 %v6198, 4294901760
        %6810 = vmatmul.f32.gmra.mxu0 %v6809
        %v6811 = vpop.f32.mrf.mxu0
        %v6812 = vadd.f32 %v6729, %v6811
        %v6813 = vand.u32 %v6201, 4294901760
        %6814 = vmatmul.f32.gmra.mxu0 %v6813
        %v6815 = vpop.f32.mrf.mxu0
        %v6816 = vadd.f32 %v6733, %v6815
        %v6817 = vand.u32 %v6204, 4294901760
        %6818 = vmatmul.f32.gmra.mxu0 %v6817
        %v6819 = vpop.f32.mrf.mxu0
        %v6820 = vadd.f32 %v6737, %v6819
        %v6821 = vand.u32 %v6207, 4294901760
        %6822 = vmatmul.f32.gmra.mxu0 %v6821
        %v6823 = vpop.f32.mrf.mxu0
        %v6824 = vadd.f32 %v6741, %v6823
        %v6825 = vand.u32 %v6210, 4294901760
        %6826 = vmatmul.f32.gmra.mxu0 %v6825
        %v6827 = vpop.f32.mrf.mxu0
        %v6828 = vadd.f32 %v6745, %v6827
        %v6829 = vand.u32 %v6213, 4294901760
        %6830 = vmatmul.f32.gmra.mxu0 %v6829
        %v6831 = vpop.f32.mrf.mxu0
        %v6832 = vadd.f32 %v6749, %v6831
        %v6833 = vand.u32 %v6216, 4294901760
        %6834 = vmatmul.f32.gmra.mxu0 %v6833
        %v6835 = vpop.f32.mrf.mxu0
        %v6836 = vadd.f32 %v6753, %v6835
        %v6837 = vand.u32 %v6219, 4294901760
        %6838 = vmatmul.f32.gmra.mxu0 %v6837
        %v6839 = vpop.f32.mrf.mxu0
        %v6840 = vadd.f32 %v6757, %v6839
        %v6841 = vand.u32 %v6222, 4294901760
        %6842 = vmatmul.f32.gmra.mxu0 %v6841
        %v6843 = vpop.f32.mrf.mxu0
        %v6844 = vadd.f32 %v6761, %v6843
        %v6845 = vand.u32 %v6225, 4294901760
        %6846 = vmatmul.f32.gmra.mxu0 %v6845
        %v6847 = vpop.f32.mrf.mxu0
        %v6848 = vadd.f32 %v6765, %v6847
        %v6849 = vand.u32 %v6228, 4294901760
        %6850 = vmatmul.f32.gmra.mxu0 %v6849
        %v6851 = vpop.f32.mrf.mxu0
        %v6852 = vadd.f32 %v6769, %v6851
        %6853 = vdwg.mxu0
        %v6855 = vsel %vm592, %v6158, 0
        %v6858 = vsel %vm592, %v6159, 0
        %6860 = vmatpush.msra.mxu0 0.0
        %6861 = vmatpush.msra.mxu0 0.0
        %6862 = vmatpush.msra.mxu0 0.0
        %6863 = vmatpush.msra.mxu0 0.0
        %6864 = vmatpush.msra.mxu0 0.0
        %6865 = vmatpush.msra.mxu0 0.0
        %6866 = vmatpush.msra.mxu0 0.0
        %6867 = vmatpush.msra.mxu0 0.0
        %6868 = vmatpush.msra.mxu0 0.0
        %6869 = vmatpush.msra.mxu0 0.0
        %6870 = vmatpush.msra.mxu0 0.0
        %6871 = vmatpush.msra.mxu0 0.0
        %6872 = vmatpush.msra.mxu0 0.0
        %6873 = vmatpush.msra.mxu0 0.0
        %v6874 = vand.u32 %v6176, 4294901760
        %6875 = vmatpush.msra.mxu0 %v6874
        %v6876 = vand.u32 %v6175, 4294901760
        %6877 = vmatpush.msra.mxu0 %v6876
        %v6878 = vand.u32 %v6855, 4294901760
        %v6879 = vsub.f32 %v6855, %v6878
        %v6880 = vand.u32 %v6879, 4294901760
        %v6881 = vsub.f32 %v6879, %v6880
        %v6882 = vand.u32 %v6881, 4294901760
        %6883 = vmatmul.f32.gmra.mxu0 %v6882
        %v6884 = vpop.f32.mrf.mxu0
        %v6885 = vadd.f32 %v6792, %v6884
        %v6886 = vand.u32 %v6858, 4294901760
        %v6887 = vsub.f32 %v6858, %v6886
        %v6888 = vand.u32 %v6887, 4294901760
        %v6889 = vsub.f32 %v6887, %v6888
        %v6890 = vand.u32 %v6889, 4294901760
        %6891 = vmatmul.f32.gmra.mxu0 %v6890
        %v6892 = vpop.f32.mrf.mxu0
        %v6893 = vadd.f32 %v6796, %v6892
        %v6894 = vand.u32 %v6183, 4294901760
        %v6895 = vsub.f32 %v6183, %v6894
        %v6896 = vand.u32 %v6895, 4294901760
        %v6897 = vsub.f32 %v6895, %v6896
        %v6898 = vand.u32 %v6897, 4294901760
        %6899 = vmatmul.f32.gmra.mxu0 %v6898
        %v6900 = vpop.f32.mrf.mxu0
        %v6901 = vadd.f32 %v6800, %v6900
        %v6902 = vand.u32 %v6186, 4294901760
        %v6903 = vsub.f32 %v6186, %v6902
        %v6904 = vand.u32 %v6903, 4294901760
        %v6905 = vsub.f32 %v6903, %v6904
        %v6906 = vand.u32 %v6905, 4294901760
        %6907 = vmatmul.f32.gmra.mxu0 %v6906
        %v6908 = vpop.f32.mrf.mxu0
        %v6909 = vadd.f32 %v6804, %v6908
        %v6910 = vand.u32 %v6189, 4294901760
        %v6911 = vsub.f32 %v6189, %v6910
        %v6912 = vand.u32 %v6911, 4294901760
        %v6913 = vsub.f32 %v6911, %v6912
        %v6914 = vand.u32 %v6913, 4294901760
        %6915 = vmatmul.f32.gmra.mxu0 %v6914
        %v6916 = vpop.f32.mrf.mxu0
        %v6917 = vadd.f32 %v6808, %v6916
        %v6918 = vand.u32 %v6192, 4294901760
        %v6919 = vsub.f32 %v6192, %v6918
        %v6920 = vand.u32 %v6919, 4294901760
        %v6921 = vsub.f32 %v6919, %v6920
        %v6922 = vand.u32 %v6921, 4294901760
        %6923 = vmatmul.f32.gmra.mxu0 %v6922
        %v6924 = vpop.f32.mrf.mxu0
        %v6925 = vadd.f32 %v6812, %v6924
        %v6926 = vand.u32 %v6195, 4294901760
        %v6927 = vsub.f32 %v6195, %v6926
        %v6928 = vand.u32 %v6927, 4294901760
        %v6929 = vsub.f32 %v6927, %v6928
        %v6930 = vand.u32 %v6929, 4294901760
        %6931 = vmatmul.f32.gmra.mxu0 %v6930
        %v6932 = vpop.f32.mrf.mxu0
        %v6933 = vadd.f32 %v6816, %v6932
        %v6934 = vand.u32 %v6198, 4294901760
        %v6935 = vsub.f32 %v6198, %v6934
        %v6936 = vand.u32 %v6935, 4294901760
        %v6937 = vsub.f32 %v6935, %v6936
        %v6938 = vand.u32 %v6937, 4294901760
        %6939 = vmatmul.f32.gmra.mxu0 %v6938
        %v6940 = vpop.f32.mrf.mxu0
        %v6941 = vadd.f32 %v6820, %v6940
        %v6942 = vand.u32 %v6201, 4294901760
        %v6943 = vsub.f32 %v6201, %v6942
        %v6944 = vand.u32 %v6943, 4294901760
        %v6945 = vsub.f32 %v6943, %v6944
        %v6946 = vand.u32 %v6945, 4294901760
        %6947 = vmatmul.f32.gmra.mxu0 %v6946
        %v6948 = vpop.f32.mrf.mxu0
        %v6949 = vadd.f32 %v6824, %v6948
        %v6950 = vand.u32 %v6204, 4294901760
        %v6951 = vsub.f32 %v6204, %v6950
        %v6952 = vand.u32 %v6951, 4294901760
        %v6953 = vsub.f32 %v6951, %v6952
        %v6954 = vand.u32 %v6953, 4294901760
        %6955 = vmatmul.f32.gmra.mxu0 %v6954
        %v6956 = vpop.f32.mrf.mxu0
        %v6957 = vadd.f32 %v6828, %v6956
        %v6958 = vand.u32 %v6207, 4294901760
        %v6959 = vsub.f32 %v6207, %v6958
        %v6960 = vand.u32 %v6959, 4294901760
        %v6961 = vsub.f32 %v6959, %v6960
        %v6962 = vand.u32 %v6961, 4294901760
        %6963 = vmatmul.f32.gmra.mxu0 %v6962
        %v6964 = vpop.f32.mrf.mxu0
        %v6965 = vadd.f32 %v6832, %v6964
        %v6966 = vand.u32 %v6210, 4294901760
        %v6967 = vsub.f32 %v6210, %v6966
        %v6968 = vand.u32 %v6967, 4294901760
        %v6969 = vsub.f32 %v6967, %v6968
        %v6970 = vand.u32 %v6969, 4294901760
        %6971 = vmatmul.f32.gmra.mxu0 %v6970
        %v6972 = vpop.f32.mrf.mxu0
        %v6973 = vadd.f32 %v6836, %v6972
        %v6974 = vand.u32 %v6213, 4294901760
        %v6975 = vsub.f32 %v6213, %v6974
        %v6976 = vand.u32 %v6975, 4294901760
        %v6977 = vsub.f32 %v6975, %v6976
        %v6978 = vand.u32 %v6977, 4294901760
        %6979 = vmatmul.f32.gmra.mxu0 %v6978
        %v6980 = vpop.f32.mrf.mxu0
        %v6981 = vadd.f32 %v6840, %v6980
        %v6982 = vand.u32 %v6216, 4294901760
        %v6983 = vsub.f32 %v6216, %v6982
        %v6984 = vand.u32 %v6983, 4294901760
        %v6985 = vsub.f32 %v6983, %v6984
        %v6986 = vand.u32 %v6985, 4294901760
        %6987 = vmatmul.f32.gmra.mxu0 %v6986
        %v6988 = vpop.f32.mrf.mxu0
        %v6989 = vadd.f32 %v6844, %v6988
        %v6990 = vand.u32 %v6219, 4294901760
        %v6991 = vsub.f32 %v6219, %v6990
        %v6992 = vand.u32 %v6991, 4294901760
        %v6993 = vsub.f32 %v6991, %v6992
        %v6994 = vand.u32 %v6993, 4294901760
        %6995 = vmatmul.f32.gmra.mxu0 %v6994
        %v6996 = vpop.f32.mrf.mxu0
        %v6997 = vadd.f32 %v6848, %v6996
        %v6998 = vand.u32 %v6222, 4294901760
        %v6999 = vsub.f32 %v6222, %v6998
        %v7000 = vand.u32 %v6999, 4294901760
        %v7001 = vsub.f32 %v6999, %v7000
        %v7002 = vand.u32 %v7001, 4294901760
        %7003 = vmatmul.f32.gmra.mxu0 %v7002
        %v7004 = vpop.f32.mrf.mxu0
        %v7005 = vadd.f32 %v6852, %v7004
        %7006 = vdwg.mxu0
        %7007 = vmatpush.msra.mxu0 0.0
        %7008 = vmatpush.msra.mxu0 0.0
        %7009 = vmatpush.msra.mxu0 0.0
        %7010 = vmatpush.msra.mxu0 0.0
        %7011 = vmatpush.msra.mxu0 0.0
        %7012 = vmatpush.msra.mxu0 0.0
        %7013 = vmatpush.msra.mxu0 0.0
        %7014 = vmatpush.msra.mxu0 0.0
        %7015 = vmatpush.msra.mxu0 0.0
        %7016 = vmatpush.msra.mxu0 0.0
        %7017 = vmatpush.msra.mxu0 0.0
        %7018 = vmatpush.msra.mxu0 0.0
        %7019 = vmatpush.msra.mxu0 0.0
        %7020 = vmatpush.msra.mxu0 0.0
        %v7021 = vand.u32 %v6176, 4294901760
        %v7022 = vsub.f32 %v6176, %v7021
        %v7023 = vand.u32 %v7022, 4294901760
        %v7024 = vsub.f32 %v7022, %v7023
        %v7025 = vand.u32 %v7024, 4294901760
        %7026 = vmatpush.msra.mxu0 %v7025
        %v7027 = vand.u32 %v6175, 4294901760
        %v7028 = vsub.f32 %v6175, %v7027
        %v7029 = vand.u32 %v7028, 4294901760
        %v7030 = vsub.f32 %v7028, %v7029
        %v7031 = vand.u32 %v7030, 4294901760
        %7032 = vmatpush.msra.mxu0 %v7031
        %v7033 = vand.u32 %v6855, 4294901760
        %7034 = vmatmul.f32.gmra.mxu0 %v7033
        %v7035 = vpop.f32.mrf.mxu0
        %v7036 = vadd.f32 %v6885, %v7035
        %v7037 = vand.u32 %v6858, 4294901760
        %7038 = vmatmul.f32.gmra.mxu0 %v7037
        %v7039 = vpop.f32.mrf.mxu0
        %v7040 = vadd.f32 %v6893, %v7039
        %v7041 = vand.u32 %v6183, 4294901760
        %7042 = vmatmul.f32.gmra.mxu0 %v7041
        %v7043 = vpop.f32.mrf.mxu0
        %v7044 = vadd.f32 %v6901, %v7043
        %v7045 = vand.u32 %v6186, 4294901760
        %7046 = vmatmul.f32.gmra.mxu0 %v7045
        %v7047 = vpop.f32.mrf.mxu0
        %v7048 = vadd.f32 %v6909, %v7047
        %v7049 = vand.u32 %v6189, 4294901760
        %7050 = vmatmul.f32.gmra.mxu0 %v7049
        %v7051 = vpop.f32.mrf.mxu0
        %v7052 = vadd.f32 %v6917, %v7051
        %v7053 = vand.u32 %v6192, 4294901760
        %7054 = vmatmul.f32.gmra.mxu0 %v7053
        %v7055 = vpop.f32.mrf.mxu0
        %v7056 = vadd.f32 %v6925, %v7055
        %v7057 = vand.u32 %v6195, 4294901760
        %7058 = vmatmul.f32.gmra.mxu0 %v7057
        %v7059 = vpop.f32.mrf.mxu0
        %v7060 = vadd.f32 %v6933, %v7059
        %v7061 = vand.u32 %v6198, 4294901760
        %7062 = vmatmul.f32.gmra.mxu0 %v7061
        %v7063 = vpop.f32.mrf.mxu0
        %v7064 = vadd.f32 %v6941, %v7063
        %v7065 = vand.u32 %v6201, 4294901760
        %7066 = vmatmul.f32.gmra.mxu0 %v7065
        %v7067 = vpop.f32.mrf.mxu0
        %v7068 = vadd.f32 %v6949, %v7067
        %v7069 = vand.u32 %v6204, 4294901760
        %7070 = vmatmul.f32.gmra.mxu0 %v7069
        %v7071 = vpop.f32.mrf.mxu0
        %v7072 = vadd.f32 %v6957, %v7071
        %v7073 = vand.u32 %v6207, 4294901760
        %7074 = vmatmul.f32.gmra.mxu0 %v7073
        %v7075 = vpop.f32.mrf.mxu0
        %v7076 = vadd.f32 %v6965, %v7075
        %v7077 = vand.u32 %v6210, 4294901760
        %7078 = vmatmul.f32.gmra.mxu0 %v7077
        %v7079 = vpop.f32.mrf.mxu0
        %v7080 = vadd.f32 %v6973, %v7079
        %v7081 = vand.u32 %v6213, 4294901760
        %7082 = vmatmul.f32.gmra.mxu0 %v7081
        %v7083 = vpop.f32.mrf.mxu0
        %v7084 = vadd.f32 %v6981, %v7083
        %v7085 = vand.u32 %v6216, 4294901760
        %7086 = vmatmul.f32.gmra.mxu0 %v7085
        %v7087 = vpop.f32.mrf.mxu0
        %v7088 = vadd.f32 %v6989, %v7087
        %v7089 = vand.u32 %v6219, 4294901760
        %7090 = vmatmul.f32.gmra.mxu0 %v7089
        %v7091 = vpop.f32.mrf.mxu0
        %v7092 = vadd.f32 %v6997, %v7091
        %v7093 = vand.u32 %v6222, 4294901760
        %7094 = vmatmul.f32.gmra.mxu0 %v7093
        %v7095 = vpop.f32.mrf.mxu0
        %v7096 = vadd.f32 %v7005, %v7095
        %7097 = vdwg.mxu0
        %7098 = vmatpush.msra.mxu0 0.0
        %7099 = vmatpush.msra.mxu0 0.0
        %7100 = vmatpush.msra.mxu0 0.0
        %7101 = vmatpush.msra.mxu0 0.0
        %7102 = vmatpush.msra.mxu0 0.0
        %7103 = vmatpush.msra.mxu0 0.0
        %7104 = vmatpush.msra.mxu0 0.0
        %7105 = vmatpush.msra.mxu0 0.0
        %7106 = vmatpush.msra.mxu0 0.0
        %7107 = vmatpush.msra.mxu0 0.0
        %7108 = vmatpush.msra.mxu0 0.0
        %7109 = vmatpush.msra.mxu0 0.0
        %7110 = vmatpush.msra.mxu0 0.0
        %7111 = vmatpush.msra.mxu0 0.0
        %v7112 = vand.u32 %v6176, 4294901760
        %v7113 = vsub.f32 %v6176, %v7112
        %7114 = vmatpush.msra.mxu0 %v7113
        %v7115 = vand.u32 %v6175, 4294901760
        %v7116 = vsub.f32 %v6175, %v7115
        %7117 = vmatpush.msra.mxu0 %v7116
        %v7118 = vand.u32 %v6855, 4294901760
        %v7119 = vsub.f32 %v6855, %v7118
        %7120 = vmatmul.f32.gmra.mxu0 %v7119
        %v7121 = vpop.f32.mrf.mxu0
        %v7122 = vadd.f32 %v7036, %v7121
        %v7123 = vand.u32 %v6858, 4294901760
        %v7124 = vsub.f32 %v6858, %v7123
        %7125 = vmatmul.f32.gmra.mxu0 %v7124
        %v7126 = vpop.f32.mrf.mxu0
        %v7127 = vadd.f32 %v7040, %v7126
        %v7128 = vand.u32 %v6183, 4294901760
        %v7129 = vsub.f32 %v6183, %v7128
        %7130 = vmatmul.f32.gmra.mxu0 %v7129
        %v7131 = vpop.f32.mrf.mxu0
        %v7132 = vadd.f32 %v7044, %v7131
        %v7133 = vand.u32 %v6186, 4294901760
        %v7134 = vsub.f32 %v6186, %v7133
        %7135 = vmatmul.f32.gmra.mxu0 %v7134
        %v7136 = vpop.f32.mrf.mxu0
        %v7137 = vadd.f32 %v7048, %v7136
        %v7138 = vand.u32 %v6189, 4294901760
        %v7139 = vsub.f32 %v6189, %v7138
        %7140 = vmatmul.f32.gmra.mxu0 %v7139
        %v7141 = vpop.f32.mrf.mxu0
        %v7142 = vadd.f32 %v7052, %v7141
        %v7143 = vand.u32 %v6192, 4294901760
        %v7144 = vsub.f32 %v6192, %v7143
        %7145 = vmatmul.f32.gmra.mxu0 %v7144
        %v7146 = vpop.f32.mrf.mxu0
        %v7147 = vadd.f32 %v7056, %v7146
        %v7148 = vand.u32 %v6195, 4294901760
        %v7149 = vsub.f32 %v6195, %v7148
        %7150 = vmatmul.f32.gmra.mxu0 %v7149
        %v7151 = vpop.f32.mrf.mxu0
        %v7152 = vadd.f32 %v7060, %v7151
        %v7153 = vand.u32 %v6198, 4294901760
        %v7154 = vsub.f32 %v6198, %v7153
        %7155 = vmatmul.f32.gmra.mxu0 %v7154
        %v7156 = vpop.f32.mrf.mxu0
        %v7157 = vadd.f32 %v7064, %v7156
        %v7158 = vand.u32 %v6201, 4294901760
        %v7159 = vsub.f32 %v6201, %v7158
        %7160 = vmatmul.f32.gmra.mxu0 %v7159
        %v7161 = vpop.f32.mrf.mxu0
        %v7162 = vadd.f32 %v7068, %v7161
        %v7163 = vand.u32 %v6204, 4294901760
        %v7164 = vsub.f32 %v6204, %v7163
        %7165 = vmatmul.f32.gmra.mxu0 %v7164
        %v7166 = vpop.f32.mrf.mxu0
        %v7167 = vadd.f32 %v7072, %v7166
        %v7168 = vand.u32 %v6207, 4294901760
        %v7169 = vsub.f32 %v6207, %v7168
        %7170 = vmatmul.f32.gmra.mxu0 %v7169
        %v7171 = vpop.f32.mrf.mxu0
        %v7172 = vadd.f32 %v7076, %v7171
        %v7173 = vand.u32 %v6210, 4294901760
        %v7174 = vsub.f32 %v6210, %v7173
        %7175 = vmatmul.f32.gmra.mxu0 %v7174
        %v7176 = vpop.f32.mrf.mxu0
        %v7177 = vadd.f32 %v7080, %v7176
        %v7178 = vand.u32 %v6213, 4294901760
        %v7179 = vsub.f32 %v6213, %v7178
        %7180 = vmatmul.f32.gmra.mxu0 %v7179
        %v7181 = vpop.f32.mrf.mxu0
        %v7182 = vadd.f32 %v7084, %v7181
        %v7183 = vand.u32 %v6216, 4294901760
        %v7184 = vsub.f32 %v6216, %v7183
        %7185 = vmatmul.f32.gmra.mxu0 %v7184
        %v7186 = vpop.f32.mrf.mxu0
        %v7187 = vadd.f32 %v7088, %v7186
        %v7188 = vand.u32 %v6219, 4294901760
        %v7189 = vsub.f32 %v6219, %v7188
        %7190 = vmatmul.f32.gmra.mxu0 %v7189
        %v7191 = vpop.f32.mrf.mxu0
        %v7192 = vadd.f32 %v7092, %v7191
        %v7193 = vand.u32 %v6222, 4294901760
        %v7194 = vsub.f32 %v6222, %v7193
        %7195 = vmatmul.f32.gmra.mxu0 %v7194
        %v7196 = vpop.f32.mrf.mxu0
        %v7197 = vadd.f32 %v7096, %v7196
        %7198 = vdwg.mxu0
        %7199 = vmatpush.msra.mxu0 0.0
        %7200 = vmatpush.msra.mxu0 0.0
        %7201 = vmatpush.msra.mxu0 0.0
        %7202 = vmatpush.msra.mxu0 0.0
        %7203 = vmatpush.msra.mxu0 0.0
        %7204 = vmatpush.msra.mxu0 0.0
        %7205 = vmatpush.msra.mxu0 0.0
        %7206 = vmatpush.msra.mxu0 0.0
        %7207 = vmatpush.msra.mxu0 0.0
        %7208 = vmatpush.msra.mxu0 0.0
        %7209 = vmatpush.msra.mxu0 0.0
        %7210 = vmatpush.msra.mxu0 0.0
        %7211 = vmatpush.msra.mxu0 0.0
        %7212 = vmatpush.msra.mxu0 0.0
        %v7213 = vand.u32 %v6176, 4294901760
        %7214 = vmatpush.msra.mxu0 %v7213
        %v7215 = vand.u32 %v6175, 4294901760
        %7216 = vmatpush.msra.mxu0 %v7215
        %v7217 = vand.u32 %v6855, 4294901760
        %v7218 = vsub.f32 %v6855, %v7217
        %v7219 = vand.u32 %v7218, 4294901760
        %7220 = vmatmul.f32.gmra.mxu0 %v7219
        %v7221 = vpop.f32.mrf.mxu0
        %v7222 = vadd.f32 %v7122, %v7221
        %v7223 = vand.u32 %v6858, 4294901760
        %v7224 = vsub.f32 %v6858, %v7223
        %v7225 = vand.u32 %v7224, 4294901760
        %7226 = vmatmul.f32.gmra.mxu0 %v7225
        %v7227 = vpop.f32.mrf.mxu0
        %v7228 = vadd.f32 %v7127, %v7227
        %v7229 = vand.u32 %v6183, 4294901760
        %v7230 = vsub.f32 %v6183, %v7229
        %v7231 = vand.u32 %v7230, 4294901760
        %7232 = vmatmul.f32.gmra.mxu0 %v7231
        %v7233 = vpop.f32.mrf.mxu0
        %v7234 = vadd.f32 %v7132, %v7233
        %v7235 = vand.u32 %v6186, 4294901760
        %v7236 = vsub.f32 %v6186, %v7235
        %v7237 = vand.u32 %v7236, 4294901760
        %7238 = vmatmul.f32.gmra.mxu0 %v7237
        %v7239 = vpop.f32.mrf.mxu0
        %v7240 = vadd.f32 %v7137, %v7239
        %v7241 = vand.u32 %v6189, 4294901760
        %v7242 = vsub.f32 %v6189, %v7241
        %v7243 = vand.u32 %v7242, 4294901760
        %7244 = vmatmul.f32.gmra.mxu0 %v7243
        %v7245 = vpop.f32.mrf.mxu0
        %v7246 = vadd.f32 %v7142, %v7245
        %v7247 = vand.u32 %v6192, 4294901760
        %v7248 = vsub.f32 %v6192, %v7247
        %v7249 = vand.u32 %v7248, 4294901760
        %7250 = vmatmul.f32.gmra.mxu0 %v7249
        %v7251 = vpop.f32.mrf.mxu0
        %v7252 = vadd.f32 %v7147, %v7251
        %v7253 = vand.u32 %v6195, 4294901760
        %v7254 = vsub.f32 %v6195, %v7253
        %v7255 = vand.u32 %v7254, 4294901760
        %7256 = vmatmul.f32.gmra.mxu0 %v7255
        %v7257 = vpop.f32.mrf.mxu0
        %v7258 = vadd.f32 %v7152, %v7257
        %v7259 = vand.u32 %v6198, 4294901760
        %v7260 = vsub.f32 %v6198, %v7259
        %v7261 = vand.u32 %v7260, 4294901760
        %7262 = vmatmul.f32.gmra.mxu0 %v7261
        %v7263 = vpop.f32.mrf.mxu0
        %v7264 = vadd.f32 %v7157, %v7263
        %v7265 = vand.u32 %v6201, 4294901760
        %v7266 = vsub.f32 %v6201, %v7265
        %v7267 = vand.u32 %v7266, 4294901760
        %7268 = vmatmul.f32.gmra.mxu0 %v7267
        %v7269 = vpop.f32.mrf.mxu0
        %v7270 = vadd.f32 %v7162, %v7269
        %v7271 = vand.u32 %v6204, 4294901760
        %v7272 = vsub.f32 %v6204, %v7271
        %v7273 = vand.u32 %v7272, 4294901760
        %7274 = vmatmul.f32.gmra.mxu0 %v7273
        %v7275 = vpop.f32.mrf.mxu0
        %v7276 = vadd.f32 %v7167, %v7275
        %v7277 = vand.u32 %v6207, 4294901760
        %v7278 = vsub.f32 %v6207, %v7277
        %v7279 = vand.u32 %v7278, 4294901760
        %7280 = vmatmul.f32.gmra.mxu0 %v7279
        %v7281 = vpop.f32.mrf.mxu0
        %v7282 = vadd.f32 %v7172, %v7281
        %v7283 = vand.u32 %v6210, 4294901760
        %v7284 = vsub.f32 %v6210, %v7283
        %v7285 = vand.u32 %v7284, 4294901760
        %7286 = vmatmul.f32.gmra.mxu0 %v7285
        %v7287 = vpop.f32.mrf.mxu0
        %v7288 = vadd.f32 %v7177, %v7287
        %v7289 = vand.u32 %v6213, 4294901760
        %v7290 = vsub.f32 %v6213, %v7289
        %v7291 = vand.u32 %v7290, 4294901760
        %7292 = vmatmul.f32.gmra.mxu0 %v7291
        %v7293 = vpop.f32.mrf.mxu0
        %v7294 = vadd.f32 %v7182, %v7293
        %v7295 = vand.u32 %v6216, 4294901760
        %v7296 = vsub.f32 %v6216, %v7295
        %v7297 = vand.u32 %v7296, 4294901760
        %7298 = vmatmul.f32.gmra.mxu0 %v7297
        %v7299 = vpop.f32.mrf.mxu0
        %v7300 = vadd.f32 %v7187, %v7299
        %v7301 = vand.u32 %v6219, 4294901760
        %v7302 = vsub.f32 %v6219, %v7301
        %v7303 = vand.u32 %v7302, 4294901760
        %7304 = vmatmul.f32.gmra.mxu0 %v7303
        %v7305 = vpop.f32.mrf.mxu0
        %v7306 = vadd.f32 %v7192, %v7305
        %v7307 = vand.u32 %v6222, 4294901760
        %v7308 = vsub.f32 %v6222, %v7307
        %v7309 = vand.u32 %v7308, 4294901760
        %7310 = vmatmul.f32.gmra.mxu0 %v7309
        %v7311 = vpop.f32.mrf.mxu0
        %v7312 = vadd.f32 %v7197, %v7311
        %7313 = vdwg.mxu0
        %7314 = vmatpush.msra.mxu0 0.0
        %7315 = vmatpush.msra.mxu0 0.0
        %7316 = vmatpush.msra.mxu0 0.0
        %7317 = vmatpush.msra.mxu0 0.0
        %7318 = vmatpush.msra.mxu0 0.0
        %7319 = vmatpush.msra.mxu0 0.0
        %7320 = vmatpush.msra.mxu0 0.0
        %7321 = vmatpush.msra.mxu0 0.0
        %7322 = vmatpush.msra.mxu0 0.0
        %7323 = vmatpush.msra.mxu0 0.0
        %7324 = vmatpush.msra.mxu0 0.0
        %7325 = vmatpush.msra.mxu0 0.0
        %7326 = vmatpush.msra.mxu0 0.0
        %7327 = vmatpush.msra.mxu0 0.0
        %v7328 = vand.u32 %v6176, 4294901760
        %v7329 = vsub.f32 %v6176, %v7328
        %v7330 = vand.u32 %v7329, 4294901760
        %7331 = vmatpush.msra.mxu0 %v7330
        %v7332 = vand.u32 %v6175, 4294901760
        %v7333 = vsub.f32 %v6175, %v7332
        %v7334 = vand.u32 %v7333, 4294901760
        %7335 = vmatpush.msra.mxu0 %v7334
        %v7336 = vand.u32 %v6855, 4294901760
        %7337 = vmatmul.f32.gmra.mxu0 %v7336
        %v7338 = vpop.f32.mrf.mxu0
        %v7339 = vadd.f32 %v7222, %v7338
        %v7340 = vand.u32 %v6858, 4294901760
        %7341 = vmatmul.f32.gmra.mxu0 %v7340
        %v7342 = vpop.f32.mrf.mxu0
        %v7343 = vadd.f32 %v7228, %v7342
        %v7344 = vand.u32 %v6183, 4294901760
        %7345 = vmatmul.f32.gmra.mxu0 %v7344
        %v7346 = vpop.f32.mrf.mxu0
        %v7347 = vadd.f32 %v7234, %v7346
        %v7348 = vand.u32 %v6186, 4294901760
        %7349 = vmatmul.f32.gmra.mxu0 %v7348
        %v7350 = vpop.f32.mrf.mxu0
        %v7351 = vadd.f32 %v7240, %v7350
        %v7352 = vand.u32 %v6189, 4294901760
        %7353 = vmatmul.f32.gmra.mxu0 %v7352
        %v7354 = vpop.f32.mrf.mxu0
        %v7355 = vadd.f32 %v7246, %v7354
        %v7356 = vand.u32 %v6192, 4294901760
        %7357 = vmatmul.f32.gmra.mxu0 %v7356
        %v7358 = vpop.f32.mrf.mxu0
        %v7359 = vadd.f32 %v7252, %v7358
        %v7360 = vand.u32 %v6195, 4294901760
        %7361 = vmatmul.f32.gmra.mxu0 %v7360
        %v7362 = vpop.f32.mrf.mxu0
        %v7363 = vadd.f32 %v7258, %v7362
        %v7364 = vand.u32 %v6198, 4294901760
        %7365 = vmatmul.f32.gmra.mxu0 %v7364
        %v7366 = vpop.f32.mrf.mxu0
        %v7367 = vadd.f32 %v7264, %v7366
        %v7368 = vand.u32 %v6201, 4294901760
        %7369 = vmatmul.f32.gmra.mxu0 %v7368
        %v7370 = vpop.f32.mrf.mxu0
        %v7371 = vadd.f32 %v7270, %v7370
        %v7372 = vand.u32 %v6204, 4294901760
        %7373 = vmatmul.f32.gmra.mxu0 %v7372
        %v7374 = vpop.f32.mrf.mxu0
        %v7375 = vadd.f32 %v7276, %v7374
        %v7376 = vand.u32 %v6207, 4294901760
        %7377 = vmatmul.f32.gmra.mxu0 %v7376
        %v7378 = vpop.f32.mrf.mxu0
        %v7379 = vadd.f32 %v7282, %v7378
        %v7380 = vand.u32 %v6210, 4294901760
        %7381 = vmatmul.f32.gmra.mxu0 %v7380
        %v7382 = vpop.f32.mrf.mxu0
        %v7383 = vadd.f32 %v7288, %v7382
        %v7384 = vand.u32 %v6213, 4294901760
        %7385 = vmatmul.f32.gmra.mxu0 %v7384
        %v7386 = vpop.f32.mrf.mxu0
        %v7387 = vadd.f32 %v7294, %v7386
        %v7388 = vand.u32 %v6216, 4294901760
        %7389 = vmatmul.f32.gmra.mxu0 %v7388
        %v7390 = vpop.f32.mrf.mxu0
        %v7391 = vadd.f32 %v7300, %v7390
        %v7392 = vand.u32 %v6219, 4294901760
        %7393 = vmatmul.f32.gmra.mxu0 %v7392
        %v7394 = vpop.f32.mrf.mxu0
        %v7395 = vadd.f32 %v7306, %v7394
        %v7396 = vand.u32 %v6222, 4294901760
        %7397 = vmatmul.f32.gmra.mxu0 %v7396
        %v7398 = vpop.f32.mrf.mxu0
        %v7399 = vadd.f32 %v7312, %v7398
        %7400 = vdwg.mxu0
        %7401 = vmatpush.msra.mxu0 0.0
        %7402 = vmatpush.msra.mxu0 0.0
        %7403 = vmatpush.msra.mxu0 0.0
        %7404 = vmatpush.msra.mxu0 0.0
        %7405 = vmatpush.msra.mxu0 0.0
        %7406 = vmatpush.msra.mxu0 0.0
        %7407 = vmatpush.msra.mxu0 0.0
        %7408 = vmatpush.msra.mxu0 0.0
        %7409 = vmatpush.msra.mxu0 0.0
        %7410 = vmatpush.msra.mxu0 0.0
        %7411 = vmatpush.msra.mxu0 0.0
        %7412 = vmatpush.msra.mxu0 0.0
        %7413 = vmatpush.msra.mxu0 0.0
        %7414 = vmatpush.msra.mxu0 0.0
        %v7415 = vand.u32 %v6176, 4294901760
        %7416 = vmatpush.msra.mxu0 %v7415
        %v7417 = vand.u32 %v6175, 4294901760
        %7418 = vmatpush.msra.mxu0 %v7417
        %v7419 = vand.u32 %v6855, 4294901760
        %7420 = vmatmul.f32.gmra.mxu0 %v7419
        %v7421 = vpop.f32.mrf.mxu0
        %v7422 = vadd.f32 %v7339, %v7421
        %v7423 = vand.u32 %v6858, 4294901760
        %7424 = vmatmul.f32.gmra.mxu0 %v7423
        %v7425 = vpop.f32.mrf.mxu0
        %v7426 = vadd.f32 %v7343, %v7425
        %v7427 = vand.u32 %v6183, 4294901760
        %7428 = vmatmul.f32.gmra.mxu0 %v7427
        %v7429 = vpop.f32.mrf.mxu0
        %v7430 = vadd.f32 %v7347, %v7429
        %v7431 = vand.u32 %v6186, 4294901760
        %7432 = vmatmul.f32.gmra.mxu0 %v7431
        %v7433 = vpop.f32.mrf.mxu0
        %v7434 = vadd.f32 %v7351, %v7433
        %v7435 = vand.u32 %v6189, 4294901760
        %7436 = vmatmul.f32.gmra.mxu0 %v7435
        %v7437 = vpop.f32.mrf.mxu0
        %v7438 = vadd.f32 %v7355, %v7437
        %v7439 = vand.u32 %v6192, 4294901760
        %7440 = vmatmul.f32.gmra.mxu0 %v7439
        %v7441 = vpop.f32.mrf.mxu0
        %v7442 = vadd.f32 %v7359, %v7441
        %v7443 = vand.u32 %v6195, 4294901760
        %7444 = vmatmul.f32.gmra.mxu0 %v7443
        %v7445 = vpop.f32.mrf.mxu0
        %v7446 = vadd.f32 %v7363, %v7445
        %v7447 = vand.u32 %v6198, 4294901760
        %7448 = vmatmul.f32.gmra.mxu0 %v7447
        %v7449 = vpop.f32.mrf.mxu0
        %v7450 = vadd.f32 %v7367, %v7449
        %v7451 = vand.u32 %v6201, 4294901760
        %7452 = vmatmul.f32.gmra.mxu0 %v7451
        %v7453 = vpop.f32.mrf.mxu0
        %v7454 = vadd.f32 %v7371, %v7453
        %v7455 = vand.u32 %v6204, 4294901760
        %7456 = vmatmul.f32.gmra.mxu0 %v7455
        %v7457 = vpop.f32.mrf.mxu0
        %v7458 = vadd.f32 %v7375, %v7457
        %v7459 = vand.u32 %v6207, 4294901760
        %7460 = vmatmul.f32.gmra.mxu0 %v7459
        %v7461 = vpop.f32.mrf.mxu0
        %v7462 = vadd.f32 %v7379, %v7461
        %v7463 = vand.u32 %v6210, 4294901760
        %7464 = vmatmul.f32.gmra.mxu0 %v7463
        %v7465 = vpop.f32.mrf.mxu0
        %v7466 = vadd.f32 %v7383, %v7465
        %v7467 = vand.u32 %v6213, 4294901760
        %7468 = vmatmul.f32.gmra.mxu0 %v7467
        %v7469 = vpop.f32.mrf.mxu0
        %v7470 = vadd.f32 %v7387, %v7469
        %v7471 = vand.u32 %v6216, 4294901760
        %7472 = vmatmul.f32.gmra.mxu0 %v7471
        %v7473 = vpop.f32.mrf.mxu0
        %v7474 = vadd.f32 %v7391, %v7473
        %v7475 = vand.u32 %v6219, 4294901760
        %7476 = vmatmul.f32.gmra.mxu0 %v7475
        %v7477 = vpop.f32.mrf.mxu0
        %v7478 = vadd.f32 %v7395, %v7477
        %v7479 = vand.u32 %v6222, 4294901760
        %7480 = vmatmul.f32.gmra.mxu0 %v7479
        %v7481 = vpop.f32.mrf.mxu0
        %v7482 = vadd.f32 %v7399, %v7481
        %7483 = vdwg.mxu0
        %v7484 = vld [vmem:[#allocation2 + $0x29] sm:$0xff]
        %v7485 = vld [vmem:[#allocation2 + $0x31] sm:$0xff]
        %v7486 = vld [vmem:[#allocation2 + $0x39] sm:$0xff]
        %v7487 = vld [vmem:[#allocation2 + $0x41] sm:$0xff]
        %v7488 = vld [vmem:[#allocation2 + $0x49] sm:$0xff]
        %v7489 = vld [vmem:[#allocation2 + $0x51] sm:$0xff]
        %v7490 = vld [vmem:[#allocation2 + $0x59] sm:$0xff]
        %v7491 = vld [vmem:[#allocation2 + $0x61] sm:$0xff]
        %v7492 = vld [vmem:[#allocation2 + $0x69] sm:$0xff]
        %v7493 = vld [vmem:[#allocation2 + $0x71] sm:$0xff]
        %v7494 = vld [vmem:[#allocation2 + $0x79] sm:$0xff]
        %v7495 = vld [vmem:[#allocation2 + $0x81] sm:$0xff]
        %v7496 = vld [vmem:[#allocation2 + $0x89] sm:$0xff]
        %v7497 = vld [vmem:[#allocation2 + $0x91] sm:$0xff]
        %v7498 = vld [vmem:[#allocation2 + $0x99] sm:$0xff]
        %v7499 = vld [vmem:[#allocation2 + $0xa1] sm:$0xff]
        %s7500 = scalar_lea.vmem %s5, 128
        %v7501 = vld [vmem:[%s7500] sm:$0xff]
        %v7502 = vld [vmem:[%s7500 + $0x8] sm:$0xff]
        %v7504 = vsel %vm592, %v7484, 0
        %v7507 = vsel %vm592, %v7485, 0
        %v7510 = vsel %vm592, %v7486, 0
        %v7513 = vsel %vm592, %v7487, 0
        %v7516 = vsel %vm592, %v7488, 0
        %v7519 = vsel %vm592, %v7489, 0
        %v7522 = vsel %vm592, %v7490, 0
        %v7525 = vsel %vm592, %v7491, 0
        %v7528 = vsel %vm592, %v7492, 0
        %v7531 = vsel %vm592, %v7493, 0
        %v7534 = vsel %vm592, %v7494, 0
        %v7537 = vsel %vm592, %v7495, 0
        %v7540 = vsel %vm592, %v7496, 0
        %v7543 = vsel %vm592, %v7497, 0
        %v7546 = vsel %vm592, %v7498, 0
        %v7549 = vsel %vm592, %v7499, 0
        %7551 = vmatpush.msra.mxu0 0.0
        %7552 = vmatpush.msra.mxu0 0.0
        %7553 = vmatpush.msra.mxu0 0.0
        %7554 = vmatpush.msra.mxu0 0.0
        %7555 = vmatpush.msra.mxu0 0.0
        %7556 = vmatpush.msra.mxu0 0.0
        %7557 = vmatpush.msra.mxu0 0.0
        %7558 = vmatpush.msra.mxu0 0.0
        %7559 = vmatpush.msra.mxu0 0.0
        %7560 = vmatpush.msra.mxu0 0.0
        %7561 = vmatpush.msra.mxu0 0.0
        %7562 = vmatpush.msra.mxu0 0.0
        %7563 = vmatpush.msra.mxu0 0.0
        %7564 = vmatpush.msra.mxu0 0.0
        %v7565 = vand.u32 %v7502, 4294901760
        %7566 = vmatpush.msra.mxu0 %v7565
        %v7567 = vand.u32 %v7501, 4294901760
        %7568 = vmatpush.msra.mxu0 %v7567
        %v7569 = vand.u32 %v7504, 4294901760
        %v7570 = vsub.f32 %v7504, %v7569
        %v7571 = vand.u32 %v7570, 4294901760
        %v7572 = vsub.f32 %v7570, %v7571
        %v7573 = vand.u32 %v7572, 4294901760
        %7574 = vmatmul.f32.gmra.mxu0 %v7573
        %v7575 = vpop.f32.mrf.mxu0
        %v7576 = vadd.f32 0.0, %v7575
        %v7577 = vand.u32 %v7507, 4294901760
        %v7578 = vsub.f32 %v7507, %v7577
        %v7579 = vand.u32 %v7578, 4294901760
        %v7580 = vsub.f32 %v7578, %v7579
        %v7581 = vand.u32 %v7580, 4294901760
        %7582 = vmatmul.f32.gmra.mxu0 %v7581
        %v7583 = vpop.f32.mrf.mxu0
        %v7584 = vadd.f32 0.0, %v7583
        %v7585 = vand.u32 %v7510, 4294901760
        %v7586 = vsub.f32 %v7510, %v7585
        %v7587 = vand.u32 %v7586, 4294901760
        %v7588 = vsub.f32 %v7586, %v7587
        %v7589 = vand.u32 %v7588, 4294901760
        %7590 = vmatmul.f32.gmra.mxu0 %v7589
        %v7591 = vpop.f32.mrf.mxu0
        %v7592 = vadd.f32 0.0, %v7591
        %v7593 = vand.u32 %v7513, 4294901760
        %v7594 = vsub.f32 %v7513, %v7593
        %v7595 = vand.u32 %v7594, 4294901760
        %v7596 = vsub.f32 %v7594, %v7595
        %v7597 = vand.u32 %v7596, 4294901760
        %7598 = vmatmul.f32.gmra.mxu0 %v7597
        %v7599 = vpop.f32.mrf.mxu0
        %v7600 = vadd.f32 0.0, %v7599
        %v7601 = vand.u32 %v7516, 4294901760
        %v7602 = vsub.f32 %v7516, %v7601
        %v7603 = vand.u32 %v7602, 4294901760
        %v7604 = vsub.f32 %v7602, %v7603
        %v7605 = vand.u32 %v7604, 4294901760
        %7606 = vmatmul.f32.gmra.mxu0 %v7605
        %v7607 = vpop.f32.mrf.mxu0
        %v7608 = vadd.f32 0.0, %v7607
        %v7609 = vand.u32 %v7519, 4294901760
        %v7610 = vsub.f32 %v7519, %v7609
        %v7611 = vand.u32 %v7610, 4294901760
        %v7612 = vsub.f32 %v7610, %v7611
        %v7613 = vand.u32 %v7612, 4294901760
        %7614 = vmatmul.f32.gmra.mxu0 %v7613
        %v7615 = vpop.f32.mrf.mxu0
        %v7616 = vadd.f32 0.0, %v7615
        %v7617 = vand.u32 %v7522, 4294901760
        %v7618 = vsub.f32 %v7522, %v7617
        %v7619 = vand.u32 %v7618, 4294901760
        %v7620 = vsub.f32 %v7618, %v7619
        %v7621 = vand.u32 %v7620, 4294901760
        %7622 = vmatmul.f32.gmra.mxu0 %v7621
        %v7623 = vpop.f32.mrf.mxu0
        %v7624 = vadd.f32 0.0, %v7623
        %v7625 = vand.u32 %v7525, 4294901760
        %v7626 = vsub.f32 %v7525, %v7625
        %v7627 = vand.u32 %v7626, 4294901760
        %v7628 = vsub.f32 %v7626, %v7627
        %v7629 = vand.u32 %v7628, 4294901760
        %7630 = vmatmul.f32.gmra.mxu0 %v7629
        %v7631 = vpop.f32.mrf.mxu0
        %v7632 = vadd.f32 0.0, %v7631
        %v7633 = vand.u32 %v7528, 4294901760
        %v7634 = vsub.f32 %v7528, %v7633
        %v7635 = vand.u32 %v7634, 4294901760
        %v7636 = vsub.f32 %v7634, %v7635
        %v7637 = vand.u32 %v7636, 4294901760
        %7638 = vmatmul.f32.gmra.mxu0 %v7637
        %v7639 = vpop.f32.mrf.mxu0
        %v7640 = vadd.f32 0.0, %v7639
        %v7641 = vand.u32 %v7531, 4294901760
        %v7642 = vsub.f32 %v7531, %v7641
        %v7643 = vand.u32 %v7642, 4294901760
        %v7644 = vsub.f32 %v7642, %v7643
        %v7645 = vand.u32 %v7644, 4294901760
        %7646 = vmatmul.f32.gmra.mxu0 %v7645
        %v7647 = vpop.f32.mrf.mxu0
        %v7648 = vadd.f32 0.0, %v7647
        %v7649 = vand.u32 %v7534, 4294901760
        %v7650 = vsub.f32 %v7534, %v7649
        %v7651 = vand.u32 %v7650, 4294901760
        %v7652 = vsub.f32 %v7650, %v7651
        %v7653 = vand.u32 %v7652, 4294901760
        %7654 = vmatmul.f32.gmra.mxu0 %v7653
        %v7655 = vpop.f32.mrf.mxu0
        %v7656 = vadd.f32 0.0, %v7655
        %v7657 = vand.u32 %v7537, 4294901760
        %v7658 = vsub.f32 %v7537, %v7657
        %v7659 = vand.u32 %v7658, 4294901760
        %v7660 = vsub.f32 %v7658, %v7659
        %v7661 = vand.u32 %v7660, 4294901760
        %7662 = vmatmul.f32.gmra.mxu0 %v7661
        %v7663 = vpop.f32.mrf.mxu0
        %v7664 = vadd.f32 0.0, %v7663
        %v7665 = vand.u32 %v7540, 4294901760
        %v7666 = vsub.f32 %v7540, %v7665
        %v7667 = vand.u32 %v7666, 4294901760
        %v7668 = vsub.f32 %v7666, %v7667
        %v7669 = vand.u32 %v7668, 4294901760
        %7670 = vmatmul.f32.gmra.mxu0 %v7669
        %v7671 = vpop.f32.mrf.mxu0
        %v7672 = vadd.f32 0.0, %v7671
        %v7673 = vand.u32 %v7543, 4294901760
        %v7674 = vsub.f32 %v7543, %v7673
        %v7675 = vand.u32 %v7674, 4294901760
        %v7676 = vsub.f32 %v7674, %v7675
        %v7677 = vand.u32 %v7676, 4294901760
        %7678 = vmatmul.f32.gmra.mxu0 %v7677
        %v7679 = vpop.f32.mrf.mxu0
        %v7680 = vadd.f32 0.0, %v7679
        %v7681 = vand.u32 %v7546, 4294901760
        %v7682 = vsub.f32 %v7546, %v7681
        %v7683 = vand.u32 %v7682, 4294901760
        %v7684 = vsub.f32 %v7682, %v7683
        %v7685 = vand.u32 %v7684, 4294901760
        %7686 = vmatmul.f32.gmra.mxu0 %v7685
        %v7687 = vpop.f32.mrf.mxu0
        %v7688 = vadd.f32 0.0, %v7687
        %v7689 = vand.u32 %v7549, 4294901760
        %v7690 = vsub.f32 %v7549, %v7689
        %v7691 = vand.u32 %v7690, 4294901760
        %v7692 = vsub.f32 %v7690, %v7691
        %v7693 = vand.u32 %v7692, 4294901760
        %7694 = vmatmul.f32.gmra.mxu0 %v7693
        %v7695 = vpop.f32.mrf.mxu0
        %v7696 = vadd.f32 0.0, %v7695
        %7697 = vdwg.mxu0
        %7698 = vmatpush.msra.mxu0 0.0
        %7699 = vmatpush.msra.mxu0 0.0
        %7700 = vmatpush.msra.mxu0 0.0
        %7701 = vmatpush.msra.mxu0 0.0
        %7702 = vmatpush.msra.mxu0 0.0
        %7703 = vmatpush.msra.mxu0 0.0
        %7704 = vmatpush.msra.mxu0 0.0
        %7705 = vmatpush.msra.mxu0 0.0
        %7706 = vmatpush.msra.mxu0 0.0
        %7707 = vmatpush.msra.mxu0 0.0
        %7708 = vmatpush.msra.mxu0 0.0
        %7709 = vmatpush.msra.mxu0 0.0
        %7710 = vmatpush.msra.mxu0 0.0
        %7711 = vmatpush.msra.mxu0 0.0
        %v7712 = vand.u32 %v7502, 4294901760
        %v7713 = vsub.f32 %v7502, %v7712
        %v7714 = vand.u32 %v7713, 4294901760
        %v7715 = vsub.f32 %v7713, %v7714
        %v7716 = vand.u32 %v7715, 4294901760
        %7717 = vmatpush.msra.mxu0 %v7716
        %v7718 = vand.u32 %v7501, 4294901760
        %v7719 = vsub.f32 %v7501, %v7718
        %v7720 = vand.u32 %v7719, 4294901760
        %v7721 = vsub.f32 %v7719, %v7720
        %v7722 = vand.u32 %v7721, 4294901760
        %7723 = vmatpush.msra.mxu0 %v7722
        %v7724 = vand.u32 %v7504, 4294901760
        %7725 = vmatmul.f32.gmra.mxu0 %v7724
        %v7726 = vpop.f32.mrf.mxu0
        %v7727 = vadd.f32 %v7576, %v7726
        %v7728 = vand.u32 %v7507, 4294901760
        %7729 = vmatmul.f32.gmra.mxu0 %v7728
        %v7730 = vpop.f32.mrf.mxu0
        %v7731 = vadd.f32 %v7584, %v7730
        %v7732 = vand.u32 %v7510, 4294901760
        %7733 = vmatmul.f32.gmra.mxu0 %v7732
        %v7734 = vpop.f32.mrf.mxu0
        %v7735 = vadd.f32 %v7592, %v7734
        %v7736 = vand.u32 %v7513, 4294901760
        %7737 = vmatmul.f32.gmra.mxu0 %v7736
        %v7738 = vpop.f32.mrf.mxu0
        %v7739 = vadd.f32 %v7600, %v7738
        %v7740 = vand.u32 %v7516, 4294901760
        %7741 = vmatmul.f32.gmra.mxu0 %v7740
        %v7742 = vpop.f32.mrf.mxu0
        %v7743 = vadd.f32 %v7608, %v7742
        %v7744 = vand.u32 %v7519, 4294901760
        %7745 = vmatmul.f32.gmra.mxu0 %v7744
        %v7746 = vpop.f32.mrf.mxu0
        %v7747 = vadd.f32 %v7616, %v7746
        %v7748 = vand.u32 %v7522, 4294901760
        %7749 = vmatmul.f32.gmra.mxu0 %v7748
        %v7750 = vpop.f32.mrf.mxu0
        %v7751 = vadd.f32 %v7624, %v7750
        %v7752 = vand.u32 %v7525, 4294901760
        %7753 = vmatmul.f32.gmra.mxu0 %v7752
        %v7754 = vpop.f32.mrf.mxu0
        %v7755 = vadd.f32 %v7632, %v7754
        %v7756 = vand.u32 %v7528, 4294901760
        %7757 = vmatmul.f32.gmra.mxu0 %v7756
        %v7758 = vpop.f32.mrf.mxu0
        %v7759 = vadd.f32 %v7640, %v7758
        %v7760 = vand.u32 %v7531, 4294901760
        %7761 = vmatmul.f32.gmra.mxu0 %v7760
        %v7762 = vpop.f32.mrf.mxu0
        %v7763 = vadd.f32 %v7648, %v7762
        %v7764 = vand.u32 %v7534, 4294901760
        %7765 = vmatmul.f32.gmra.mxu0 %v7764
        %v7766 = vpop.f32.mrf.mxu0
        %v7767 = vadd.f32 %v7656, %v7766
        %v7768 = vand.u32 %v7537, 4294901760
        %7769 = vmatmul.f32.gmra.mxu0 %v7768
        %v7770 = vpop.f32.mrf.mxu0
        %v7771 = vadd.f32 %v7664, %v7770
        %v7772 = vand.u32 %v7540, 4294901760
        %7773 = vmatmul.f32.gmra.mxu0 %v7772
        %v7774 = vpop.f32.mrf.mxu0
        %v7775 = vadd.f32 %v7672, %v7774
        %v7776 = vand.u32 %v7543, 4294901760
        %7777 = vmatmul.f32.gmra.mxu0 %v7776
        %v7778 = vpop.f32.mrf.mxu0
        %v7779 = vadd.f32 %v7680, %v7778
        %v7780 = vand.u32 %v7546, 4294901760
        %7781 = vmatmul.f32.gmra.mxu0 %v7780
        %v7782 = vpop.f32.mrf.mxu0
        %v7783 = vadd.f32 %v7688, %v7782
        %v7784 = vand.u32 %v7549, 4294901760
        %7785 = vmatmul.f32.gmra.mxu0 %v7784
        %v7786 = vpop.f32.mrf.mxu0
        %v7787 = vadd.f32 %v7696, %v7786
        %7788 = vdwg.mxu0
        %7789 = vmatpush.msra.mxu0 0.0
        %7790 = vmatpush.msra.mxu0 0.0
        %7791 = vmatpush.msra.mxu0 0.0
        %7792 = vmatpush.msra.mxu0 0.0
        %7793 = vmatpush.msra.mxu0 0.0
        %7794 = vmatpush.msra.mxu0 0.0
        %7795 = vmatpush.msra.mxu0 0.0
        %7796 = vmatpush.msra.mxu0 0.0
        %7797 = vmatpush.msra.mxu0 0.0
        %7798 = vmatpush.msra.mxu0 0.0
        %7799 = vmatpush.msra.mxu0 0.0
        %7800 = vmatpush.msra.mxu0 0.0
        %7801 = vmatpush.msra.mxu0 0.0
        %7802 = vmatpush.msra.mxu0 0.0
        %v7803 = vand.u32 %v7502, 4294901760
        %v7804 = vsub.f32 %v7502, %v7803
        %7805 = vmatpush.msra.mxu0 %v7804
        %v7806 = vand.u32 %v7501, 4294901760
        %v7807 = vsub.f32 %v7501, %v7806
        %7808 = vmatpush.msra.mxu0 %v7807
        %v7809 = vand.u32 %v7504, 4294901760
        %v7810 = vsub.f32 %v7504, %v7809
        %7811 = vmatmul.f32.gmra.mxu0 %v7810
        %v7812 = vpop.f32.mrf.mxu0
        %v7813 = vadd.f32 %v7727, %v7812
        %v7814 = vand.u32 %v7507, 4294901760
        %v7815 = vsub.f32 %v7507, %v7814
        %7816 = vmatmul.f32.gmra.mxu0 %v7815
        %v7817 = vpop.f32.mrf.mxu0
        %v7818 = vadd.f32 %v7731, %v7817
        %v7819 = vand.u32 %v7510, 4294901760
        %v7820 = vsub.f32 %v7510, %v7819
        %7821 = vmatmul.f32.gmra.mxu0 %v7820
        %v7822 = vpop.f32.mrf.mxu0
        %v7823 = vadd.f32 %v7735, %v7822
        %v7824 = vand.u32 %v7513, 4294901760
        %v7825 = vsub.f32 %v7513, %v7824
        %7826 = vmatmul.f32.gmra.mxu0 %v7825
        %v7827 = vpop.f32.mrf.mxu0
        %v7828 = vadd.f32 %v7739, %v7827
        %v7829 = vand.u32 %v7516, 4294901760
        %v7830 = vsub.f32 %v7516, %v7829
        %7831 = vmatmul.f32.gmra.mxu0 %v7830
        %v7832 = vpop.f32.mrf.mxu0
        %v7833 = vadd.f32 %v7743, %v7832
        %v7834 = vand.u32 %v7519, 4294901760
        %v7835 = vsub.f32 %v7519, %v7834
        %7836 = vmatmul.f32.gmra.mxu0 %v7835
        %v7837 = vpop.f32.mrf.mxu0
        %v7838 = vadd.f32 %v7747, %v7837
        %v7839 = vand.u32 %v7522, 4294901760
        %v7840 = vsub.f32 %v7522, %v7839
        %7841 = vmatmul.f32.gmra.mxu0 %v7840
        %v7842 = vpop.f32.mrf.mxu0
        %v7843 = vadd.f32 %v7751, %v7842
        %v7844 = vand.u32 %v7525, 4294901760
        %v7845 = vsub.f32 %v7525, %v7844
        %7846 = vmatmul.f32.gmra.mxu0 %v7845
        %v7847 = vpop.f32.mrf.mxu0
        %v7848 = vadd.f32 %v7755, %v7847
        %v7849 = vand.u32 %v7528, 4294901760
        %v7850 = vsub.f32 %v7528, %v7849
        %7851 = vmatmul.f32.gmra.mxu0 %v7850
        %v7852 = vpop.f32.mrf.mxu0
        %v7853 = vadd.f32 %v7759, %v7852
        %v7854 = vand.u32 %v7531, 4294901760
        %v7855 = vsub.f32 %v7531, %v7854
        %7856 = vmatmul.f32.gmra.mxu0 %v7855
        %v7857 = vpop.f32.mrf.mxu0
        %v7858 = vadd.f32 %v7763, %v7857
        %v7859 = vand.u32 %v7534, 4294901760
        %v7860 = vsub.f32 %v7534, %v7859
        %7861 = vmatmul.f32.gmra.mxu0 %v7860
        %v7862 = vpop.f32.mrf.mxu0
        %v7863 = vadd.f32 %v7767, %v7862
        %v7864 = vand.u32 %v7537, 4294901760
        %v7865 = vsub.f32 %v7537, %v7864
        %7866 = vmatmul.f32.gmra.mxu0 %v7865
        %v7867 = vpop.f32.mrf.mxu0
        %v7868 = vadd.f32 %v7771, %v7867
        %v7869 = vand.u32 %v7540, 4294901760
        %v7870 = vsub.f32 %v7540, %v7869
        %7871 = vmatmul.f32.gmra.mxu0 %v7870
        %v7872 = vpop.f32.mrf.mxu0
        %v7873 = vadd.f32 %v7775, %v7872
        %v7874 = vand.u32 %v7543, 4294901760
        %v7875 = vsub.f32 %v7543, %v7874
        %7876 = vmatmul.f32.gmra.mxu0 %v7875
        %v7877 = vpop.f32.mrf.mxu0
        %v7878 = vadd.f32 %v7779, %v7877
        %v7879 = vand.u32 %v7546, 4294901760
        %v7880 = vsub.f32 %v7546, %v7879
        %7881 = vmatmul.f32.gmra.mxu0 %v7880
        %v7882 = vpop.f32.mrf.mxu0
        %v7883 = vadd.f32 %v7783, %v7882
        %v7884 = vand.u32 %v7549, 4294901760
        %v7885 = vsub.f32 %v7549, %v7884
        %7886 = vmatmul.f32.gmra.mxu0 %v7885
        %v7887 = vpop.f32.mrf.mxu0
        %v7888 = vadd.f32 %v7787, %v7887
        %7889 = vdwg.mxu0
        %7890 = vmatpush.msra.mxu0 0.0
        %7891 = vmatpush.msra.mxu0 0.0
        %7892 = vmatpush.msra.mxu0 0.0
        %7893 = vmatpush.msra.mxu0 0.0
        %7894 = vmatpush.msra.mxu0 0.0
        %7895 = vmatpush.msra.mxu0 0.0
        %7896 = vmatpush.msra.mxu0 0.0
        %7897 = vmatpush.msra.mxu0 0.0
        %7898 = vmatpush.msra.mxu0 0.0
        %7899 = vmatpush.msra.mxu0 0.0
        %7900 = vmatpush.msra.mxu0 0.0
        %7901 = vmatpush.msra.mxu0 0.0
        %7902 = vmatpush.msra.mxu0 0.0
        %7903 = vmatpush.msra.mxu0 0.0
        %v7904 = vand.u32 %v7502, 4294901760
        %7905 = vmatpush.msra.mxu0 %v7904
        %v7906 = vand.u32 %v7501, 4294901760
        %7907 = vmatpush.msra.mxu0 %v7906
        %v7908 = vand.u32 %v7504, 4294901760
        %v7909 = vsub.f32 %v7504, %v7908
        %v7910 = vand.u32 %v7909, 4294901760
        %7911 = vmatmul.f32.gmra.mxu0 %v7910
        %v7912 = vpop.f32.mrf.mxu0
        %v7913 = vadd.f32 %v7813, %v7912
        %v7914 = vand.u32 %v7507, 4294901760
        %v7915 = vsub.f32 %v7507, %v7914
        %v7916 = vand.u32 %v7915, 4294901760
        %7917 = vmatmul.f32.gmra.mxu0 %v7916
        %v7918 = vpop.f32.mrf.mxu0
        %v7919 = vadd.f32 %v7818, %v7918
        %v7920 = vand.u32 %v7510, 4294901760
        %v7921 = vsub.f32 %v7510, %v7920
        %v7922 = vand.u32 %v7921, 4294901760
        %7923 = vmatmul.f32.gmra.mxu0 %v7922
        %v7924 = vpop.f32.mrf.mxu0
        %v7925 = vadd.f32 %v7823, %v7924
        %v7926 = vand.u32 %v7513, 4294901760
        %v7927 = vsub.f32 %v7513, %v7926
        %v7928 = vand.u32 %v7927, 4294901760
        %7929 = vmatmul.f32.gmra.mxu0 %v7928
        %v7930 = vpop.f32.mrf.mxu0
        %v7931 = vadd.f32 %v7828, %v7930
        %v7932 = vand.u32 %v7516, 4294901760
        %v7933 = vsub.f32 %v7516, %v7932
        %v7934 = vand.u32 %v7933, 4294901760
        %7935 = vmatmul.f32.gmra.mxu0 %v7934
        %v7936 = vpop.f32.mrf.mxu0
        %v7937 = vadd.f32 %v7833, %v7936
        %v7938 = vand.u32 %v7519, 4294901760
        %v7939 = vsub.f32 %v7519, %v7938
        %v7940 = vand.u32 %v7939, 4294901760
        %7941 = vmatmul.f32.gmra.mxu0 %v7940
        %v7942 = vpop.f32.mrf.mxu0
        %v7943 = vadd.f32 %v7838, %v7942
        %v7944 = vand.u32 %v7522, 4294901760
        %v7945 = vsub.f32 %v7522, %v7944
        %v7946 = vand.u32 %v7945, 4294901760
        %7947 = vmatmul.f32.gmra.mxu0 %v7946
        %v7948 = vpop.f32.mrf.mxu0
        %v7949 = vadd.f32 %v7843, %v7948
        %v7950 = vand.u32 %v7525, 4294901760
        %v7951 = vsub.f32 %v7525, %v7950
        %v7952 = vand.u32 %v7951, 4294901760
        %7953 = vmatmul.f32.gmra.mxu0 %v7952
        %v7954 = vpop.f32.mrf.mxu0
        %v7955 = vadd.f32 %v7848, %v7954
        %v7956 = vand.u32 %v7528, 4294901760
        %v7957 = vsub.f32 %v7528, %v7956
        %v7958 = vand.u32 %v7957, 4294901760
        %7959 = vmatmul.f32.gmra.mxu0 %v7958
        %v7960 = vpop.f32.mrf.mxu0
        %v7961 = vadd.f32 %v7853, %v7960
        %v7962 = vand.u32 %v7531, 4294901760
        %v7963 = vsub.f32 %v7531, %v7962
        %v7964 = vand.u32 %v7963, 4294901760
        %7965 = vmatmul.f32.gmra.mxu0 %v7964
        %v7966 = vpop.f32.mrf.mxu0
        %v7967 = vadd.f32 %v7858, %v7966
        %v7968 = vand.u32 %v7534, 4294901760
        %v7969 = vsub.f32 %v7534, %v7968
        %v7970 = vand.u32 %v7969, 4294901760
        %7971 = vmatmul.f32.gmra.mxu0 %v7970
        %v7972 = vpop.f32.mrf.mxu0
        %v7973 = vadd.f32 %v7863, %v7972
        %v7974 = vand.u32 %v7537, 4294901760
        %v7975 = vsub.f32 %v7537, %v7974
        %v7976 = vand.u32 %v7975, 4294901760
        %7977 = vmatmul.f32.gmra.mxu0 %v7976
        %v7978 = vpop.f32.mrf.mxu0
        %v7979 = vadd.f32 %v7868, %v7978
        %v7980 = vand.u32 %v7540, 4294901760
        %v7981 = vsub.f32 %v7540, %v7980
        %v7982 = vand.u32 %v7981, 4294901760
        %7983 = vmatmul.f32.gmra.mxu0 %v7982
        %v7984 = vpop.f32.mrf.mxu0
        %v7985 = vadd.f32 %v7873, %v7984
        %v7986 = vand.u32 %v7543, 4294901760
        %v7987 = vsub.f32 %v7543, %v7986
        %v7988 = vand.u32 %v7987, 4294901760
        %7989 = vmatmul.f32.gmra.mxu0 %v7988
        %v7990 = vpop.f32.mrf.mxu0
        %v7991 = vadd.f32 %v7878, %v7990
        %v7992 = vand.u32 %v7546, 4294901760
        %v7993 = vsub.f32 %v7546, %v7992
        %v7994 = vand.u32 %v7993, 4294901760
        %7995 = vmatmul.f32.gmra.mxu0 %v7994
        %v7996 = vpop.f32.mrf.mxu0
        %v7997 = vadd.f32 %v7883, %v7996
        %v7998 = vand.u32 %v7549, 4294901760
        %v7999 = vsub.f32 %v7549, %v7998
        %v8000 = vand.u32 %v7999, 4294901760
        %8001 = vmatmul.f32.gmra.mxu0 %v8000
        %v8002 = vpop.f32.mrf.mxu0
        %v8003 = vadd.f32 %v7888, %v8002
        %8004 = vdwg.mxu0
        %8005 = vmatpush.msra.mxu0 0.0
        %8006 = vmatpush.msra.mxu0 0.0
        %8007 = vmatpush.msra.mxu0 0.0
        %8008 = vmatpush.msra.mxu0 0.0
        %8009 = vmatpush.msra.mxu0 0.0
        %8010 = vmatpush.msra.mxu0 0.0
        %8011 = vmatpush.msra.mxu0 0.0
        %8012 = vmatpush.msra.mxu0 0.0
        %8013 = vmatpush.msra.mxu0 0.0
        %8014 = vmatpush.msra.mxu0 0.0
        %8015 = vmatpush.msra.mxu0 0.0
        %8016 = vmatpush.msra.mxu0 0.0
        %8017 = vmatpush.msra.mxu0 0.0
        %8018 = vmatpush.msra.mxu0 0.0
        %v8019 = vand.u32 %v7502, 4294901760
        %v8020 = vsub.f32 %v7502, %v8019
        %v8021 = vand.u32 %v8020, 4294901760
        %8022 = vmatpush.msra.mxu0 %v8021
        %v8023 = vand.u32 %v7501, 4294901760
        %v8024 = vsub.f32 %v7501, %v8023
        %v8025 = vand.u32 %v8024, 4294901760
        %8026 = vmatpush.msra.mxu0 %v8025
        %v8027 = vand.u32 %v7504, 4294901760
        %8028 = vmatmul.f32.gmra.mxu0 %v8027
        %v8029 = vpop.f32.mrf.mxu0
        %v8030 = vadd.f32 %v7913, %v8029
        %v8031 = vand.u32 %v7507, 4294901760
        %8032 = vmatmul.f32.gmra.mxu0 %v8031
        %v8033 = vpop.f32.mrf.mxu0
        %v8034 = vadd.f32 %v7919, %v8033
        %v8035 = vand.u32 %v7510, 4294901760
        %8036 = vmatmul.f32.gmra.mxu0 %v8035
        %v8037 = vpop.f32.mrf.mxu0
        %v8038 = vadd.f32 %v7925, %v8037
        %v8039 = vand.u32 %v7513, 4294901760
        %8040 = vmatmul.f32.gmra.mxu0 %v8039
        %v8041 = vpop.f32.mrf.mxu0
        %v8042 = vadd.f32 %v7931, %v8041
        %v8043 = vand.u32 %v7516, 4294901760
        %8044 = vmatmul.f32.gmra.mxu0 %v8043
        %v8045 = vpop.f32.mrf.mxu0
        %v8046 = vadd.f32 %v7937, %v8045
        %v8047 = vand.u32 %v7519, 4294901760
        %8048 = vmatmul.f32.gmra.mxu0 %v8047
        %v8049 = vpop.f32.mrf.mxu0
        %v8050 = vadd.f32 %v7943, %v8049
        %v8051 = vand.u32 %v7522, 4294901760
        %8052 = vmatmul.f32.gmra.mxu0 %v8051
        %v8053 = vpop.f32.mrf.mxu0
        %v8054 = vadd.f32 %v7949, %v8053
        %v8055 = vand.u32 %v7525, 4294901760
        %8056 = vmatmul.f32.gmra.mxu0 %v8055
        %v8057 = vpop.f32.mrf.mxu0
        %v8058 = vadd.f32 %v7955, %v8057
        %v8059 = vand.u32 %v7528, 4294901760
        %8060 = vmatmul.f32.gmra.mxu0 %v8059
        %v8061 = vpop.f32.mrf.mxu0
        %v8062 = vadd.f32 %v7961, %v8061
        %v8063 = vand.u32 %v7531, 4294901760
        %8064 = vmatmul.f32.gmra.mxu0 %v8063
        %v8065 = vpop.f32.mrf.mxu0
        %v8066 = vadd.f32 %v7967, %v8065
        %v8067 = vand.u32 %v7534, 4294901760
        %8068 = vmatmul.f32.gmra.mxu0 %v8067
        %v8069 = vpop.f32.mrf.mxu0
        %v8070 = vadd.f32 %v7973, %v8069
        %v8071 = vand.u32 %v7537, 4294901760
        %8072 = vmatmul.f32.gmra.mxu0 %v8071
        %v8073 = vpop.f32.mrf.mxu0
        %v8074 = vadd.f32 %v7979, %v8073
        %v8075 = vand.u32 %v7540, 4294901760
        %8076 = vmatmul.f32.gmra.mxu0 %v8075
        %v8077 = vpop.f32.mrf.mxu0
        %v8078 = vadd.f32 %v7985, %v8077
        %v8079 = vand.u32 %v7543, 4294901760
        %8080 = vmatmul.f32.gmra.mxu0 %v8079
        %v8081 = vpop.f32.mrf.mxu0
        %v8082 = vadd.f32 %v7991, %v8081
        %v8083 = vand.u32 %v7546, 4294901760
        %8084 = vmatmul.f32.gmra.mxu0 %v8083
        %v8085 = vpop.f32.mrf.mxu0
        %v8086 = vadd.f32 %v7997, %v8085
        %v8087 = vand.u32 %v7549, 4294901760
        %8088 = vmatmul.f32.gmra.mxu0 %v8087
        %v8089 = vpop.f32.mrf.mxu0
        %v8090 = vadd.f32 %v8003, %v8089
        %8091 = vdwg.mxu0
        %8092 = vmatpush.msra.mxu0 0.0
        %8093 = vmatpush.msra.mxu0 0.0
        %8094 = vmatpush.msra.mxu0 0.0
        %8095 = vmatpush.msra.mxu0 0.0
        %8096 = vmatpush.msra.mxu0 0.0
        %8097 = vmatpush.msra.mxu0 0.0
        %8098 = vmatpush.msra.mxu0 0.0
        %8099 = vmatpush.msra.mxu0 0.0
        %8100 = vmatpush.msra.mxu0 0.0
        %8101 = vmatpush.msra.mxu0 0.0
        %8102 = vmatpush.msra.mxu0 0.0
        %8103 = vmatpush.msra.mxu0 0.0
        %8104 = vmatpush.msra.mxu0 0.0
        %8105 = vmatpush.msra.mxu0 0.0
        %v8106 = vand.u32 %v7502, 4294901760
        %8107 = vmatpush.msra.mxu0 %v8106
        %v8108 = vand.u32 %v7501, 4294901760
        %8109 = vmatpush.msra.mxu0 %v8108
        %v8110 = vand.u32 %v7504, 4294901760
        %8111 = vmatmul.f32.gmra.mxu0 %v8110
        %v8112 = vpop.f32.mrf.mxu0
        %v8113 = vadd.f32 %v8030, %v8112
        %v8114 = vand.u32 %v7507, 4294901760
        %8115 = vmatmul.f32.gmra.mxu0 %v8114
        %v8116 = vpop.f32.mrf.mxu0
        %v8117 = vadd.f32 %v8034, %v8116
        %v8118 = vand.u32 %v7510, 4294901760
        %8119 = vmatmul.f32.gmra.mxu0 %v8118
        %v8120 = vpop.f32.mrf.mxu0
        %v8121 = vadd.f32 %v8038, %v8120
        %v8122 = vand.u32 %v7513, 4294901760
        %8123 = vmatmul.f32.gmra.mxu0 %v8122
        %v8124 = vpop.f32.mrf.mxu0
        %v8125 = vadd.f32 %v8042, %v8124
        %v8126 = vand.u32 %v7516, 4294901760
        %8127 = vmatmul.f32.gmra.mxu0 %v8126
        %v8128 = vpop.f32.mrf.mxu0
        %v8129 = vadd.f32 %v8046, %v8128
        %v8130 = vand.u32 %v7519, 4294901760
        %8131 = vmatmul.f32.gmra.mxu0 %v8130
        %v8132 = vpop.f32.mrf.mxu0
        %v8133 = vadd.f32 %v8050, %v8132
        %v8134 = vand.u32 %v7522, 4294901760
        %8135 = vmatmul.f32.gmra.mxu0 %v8134
        %v8136 = vpop.f32.mrf.mxu0
        %v8137 = vadd.f32 %v8054, %v8136
        %v8138 = vand.u32 %v7525, 4294901760
        %8139 = vmatmul.f32.gmra.mxu0 %v8138
        %v8140 = vpop.f32.mrf.mxu0
        %v8141 = vadd.f32 %v8058, %v8140
        %v8142 = vand.u32 %v7528, 4294901760
        %8143 = vmatmul.f32.gmra.mxu0 %v8142
        %v8144 = vpop.f32.mrf.mxu0
        %v8145 = vadd.f32 %v8062, %v8144
        %v8146 = vand.u32 %v7531, 4294901760
        %8147 = vmatmul.f32.gmra.mxu0 %v8146
        %v8148 = vpop.f32.mrf.mxu0
        %v8149 = vadd.f32 %v8066, %v8148
        %v8150 = vand.u32 %v7534, 4294901760
        %8151 = vmatmul.f32.gmra.mxu0 %v8150
        %v8152 = vpop.f32.mrf.mxu0
        %v8153 = vadd.f32 %v8070, %v8152
        %v8154 = vand.u32 %v7537, 4294901760
        %8155 = vmatmul.f32.gmra.mxu0 %v8154
        %v8156 = vpop.f32.mrf.mxu0
        %v8157 = vadd.f32 %v8074, %v8156
        %v8158 = vand.u32 %v7540, 4294901760
        %8159 = vmatmul.f32.gmra.mxu0 %v8158
        %v8160 = vpop.f32.mrf.mxu0
        %v8161 = vadd.f32 %v8078, %v8160
        %v8162 = vand.u32 %v7543, 4294901760
        %8163 = vmatmul.f32.gmra.mxu0 %v8162
        %v8164 = vpop.f32.mrf.mxu0
        %v8165 = vadd.f32 %v8082, %v8164
        %v8166 = vand.u32 %v7546, 4294901760
        %8167 = vmatmul.f32.gmra.mxu0 %v8166
        %v8168 = vpop.f32.mrf.mxu0
        %v8169 = vadd.f32 %v8086, %v8168
        %v8170 = vand.u32 %v7549, 4294901760
        %8171 = vmatmul.f32.gmra.mxu0 %v8170
        %v8172 = vpop.f32.mrf.mxu0
        %v8173 = vadd.f32 %v8090, %v8172
        %8174 = vdwg.mxu0
        %v8175 = vadd.f32 %v7422, %v8113
        %v8176 = vadd.f32 %v7426, %v8117
        %v8177 = vadd.f32 %v7430, %v8121
        %v8178 = vadd.f32 %v7434, %v8125
        %v8179 = vadd.f32 %v7438, %v8129
        %v8180 = vadd.f32 %v7442, %v8133
        %v8181 = vadd.f32 %v7446, %v8137
        %v8182 = vadd.f32 %v7450, %v8141
        %v8183 = vadd.f32 %v7454, %v8145
        %v8184 = vadd.f32 %v7458, %v8149
        %v8185 = vadd.f32 %v7462, %v8153
        %v8186 = vadd.f32 %v7466, %v8157
        %v8187 = vadd.f32 %v7470, %v8161
        %v8188 = vadd.f32 %v7474, %v8165
        %v8189 = vadd.f32 %v7478, %v8169
        %v8190 = vadd.f32 %v7482, %v8173
        %v8191 = vmul.f32 %v2045, %v8175
        %v8192 = vmul.f32 %v2046, %v8176
        %v8193 = vmul.f32 %v2047, %v8177
        %v8194 = vmul.f32 %v2048, %v8178
        %v8195 = vmul.f32 %v2049, %v8179
        %v8196 = vmul.f32 %v2050, %v8180
        %v8197 = vmul.f32 %v2051, %v8181
        %v8198 = vmul.f32 %v2052, %v8182
        %v8199 = vmul.f32 %v2053, %v8183
        %v8200 = vmul.f32 %v2054, %v8184
        %v8201 = vmul.f32 %v2055, %v8185
        %v8202 = vmul.f32 %v2056, %v8186
        %v8203 = vmul.f32 %v2057, %v8187
        %v8204 = vmul.f32 %v2058, %v8188
        %v8205 = vmul.f32 %v2059, %v8189
        %v8206 = vmul.f32 %v2060, %v8190
        %v8207 = vadd.f32 %v6142, %v8191
        %v8208 = vadd.f32 %v6143, %v8192
        %v8209 = vadd.f32 %v6144, %v8193
        %v8210 = vadd.f32 %v6145, %v8194
        %v8211 = vadd.f32 %v6146, %v8195
        %v8212 = vadd.f32 %v6147, %v8196
        %v8213 = vadd.f32 %v6148, %v8197
        %v8214 = vadd.f32 %v6149, %v8198
        %v8215 = vadd.f32 %v6150, %v8199
        %v8216 = vadd.f32 %v6151, %v8200
        %v8217 = vadd.f32 %v6152, %v8201
        %v8218 = vadd.f32 %v6153, %v8202
        %v8219 = vadd.f32 %v6154, %v8203
        %v8220 = vadd.f32 %v6155, %v8204
        %v8221 = vadd.f32 %v6156, %v8205
        %v8222 = vadd.f32 %v6157, %v8206
        %v8223 = vld [vmem:[%s6] sm:$0x1]
        %v8225 = vperm.slane %v8223, 0
        %v8227 = vadd.f32 %v8207, %v8225
        %v8228 = vadd.f32 %v8208, %v8225
        %v8229 = vadd.f32 %v8209, %v8225
        %v8230 = vadd.f32 %v8210, %v8225
        %v8231 = vadd.f32 %v8211, %v8225
        %v8232 = vadd.f32 %v8212, %v8225
        %v8233 = vadd.f32 %v8213, %v8225
        %v8234 = vadd.f32 %v8214, %v8225
        %v8235 = vadd.f32 %v8215, %v8225
        %v8236 = vadd.f32 %v8216, %v8225
        %v8237 = vadd.f32 %v8217, %v8225
        %v8238 = vadd.f32 %v8218, %v8225
        %v8239 = vadd.f32 %v8219, %v8225
        %v8240 = vadd.f32 %v8220, %v8225
        %v8241 = vadd.f32 %v8221, %v8225
        %v8242 = vadd.f32 %v8222, %v8225
        %vm8243 = vcmp.ge.f32.partialorder %v8227, 0.0
        %vm8244 = vcmp.ge.f32.partialorder %v8228, 0.0
        %vm8245 = vcmp.ge.f32.partialorder %v8229, 0.0
        %vm8246 = vcmp.ge.f32.partialorder %v8230, 0.0
        %vm8247 = vcmp.ge.f32.partialorder %v8231, 0.0
        %vm8248 = vcmp.ge.f32.partialorder %v8232, 0.0
        %vm8249 = vcmp.ge.f32.partialorder %v8233, 0.0
        %vm8250 = vcmp.ge.f32.partialorder %v8234, 0.0
        %vm8251 = vcmp.ge.f32.partialorder %v8235, 0.0
        %vm8252 = vcmp.ge.f32.partialorder %v8236, 0.0
        %vm8253 = vcmp.ge.f32.partialorder %v8237, 0.0
        %vm8254 = vcmp.ge.f32.partialorder %v8238, 0.0
        %vm8255 = vcmp.ge.f32.partialorder %v8239, 0.0
        %vm8256 = vcmp.ge.f32.partialorder %v8240, 0.0
        %vm8257 = vcmp.ge.f32.partialorder %v8241, 0.0
        %vm8258 = vcmp.ge.f32.partialorder %v8242, 0.0
        %v8259 = vstv %s569
        %v8260 = vmul.f32 %v8259, %v8227
        %v8261 = vmul.f32 %v8259, %v8228
        %v8262 = vmul.f32 %v8259, %v8229
        %v8263 = vmul.f32 %v8259, %v8230
        %v8264 = vmul.f32 %v8259, %v8231
        %v8265 = vmul.f32 %v8259, %v8232
        %v8266 = vmul.f32 %v8259, %v8233
        %v8267 = vmul.f32 %v8259, %v8234
        %v8268 = vmul.f32 %v8259, %v8235
        %v8269 = vmul.f32 %v8259, %v8236
        %v8270 = vmul.f32 %v8259, %v8237
        %v8271 = vmul.f32 %v8259, %v8238
        %v8272 = vmul.f32 %v8259, %v8239
        %v8273 = vmul.f32 %v8259, %v8240
        %v8274 = vmul.f32 %v8259, %v8241
        %v8275 = vmul.f32 %v8259, %v8242
        %v8276 = vsel %vm8243, %v8227, %v8260
        %v8277 = vsel %vm8244, %v8228, %v8261
        %v8278 = vsel %vm8245, %v8229, %v8262
        %v8279 = vsel %vm8246, %v8230, %v8263
        %v8280 = vsel %vm8247, %v8231, %v8264
        %v8281 = vsel %vm8248, %v8232, %v8265
        %v8282 = vsel %vm8249, %v8233, %v8266
        %v8283 = vsel %vm8250, %v8234, %v8267
        %v8284 = vsel %vm8251, %v8235, %v8268
        %v8285 = vsel %vm8252, %v8236, %v8269
        %v8286 = vsel %vm8253, %v8237, %v8270
        %v8287 = vsel %vm8254, %v8238, %v8271
        %v8288 = vsel %vm8255, %v8239, %v8272
        %v8289 = vsel %vm8256, %v8240, %v8273
        %v8290 = vsel %vm8257, %v8241, %v8274
        %v8291 = vsel %vm8258, %v8242, %v8275
        %v8292 = vmax.f32 %v8276, %v8278
        %v8293 = vmax.f32 %v8277, %v8279
        %v8294 = vmax.f32 %v8280, %v8282
        %v8295 = vmax.f32 %v8281, %v8283
        %v8296 = vmax.f32 %v8284, %v8286
        %v8297 = vmax.f32 %v8285, %v8287
        %v8298 = vmax.f32 %v8288, %v8290
        %v8299 = vmax.f32 %v8289, %v8291
        %8300 = vst.msk [vmem:[#allocation3] sm:$0xff] %vm592, %v8292
        %8301 = vst.msk [vmem:[#allocation3 + $0x8] sm:$0xff] %vm592, %v8293
        %8302 = vst.msk [vmem:[#allocation3 + $0x10] sm:$0xff] %vm592, %v8294
        %8303 = vst.msk [vmem:[#allocation3 + $0x18] sm:$0xff] %vm592, %v8295
        %8304 = vst.msk [vmem:[#allocation3 + $0x20] sm:$0xff] %vm592, %v8296
        %8305 = vst.msk [vmem:[#allocation3 + $0x28] sm:$0xff] %vm592, %v8297
        %8306 = vst.msk [vmem:[#allocation3 + $0x30] sm:$0xff] %vm592, %v8298
        %8307 = vst.msk [vmem:[#allocation3 + $0x38] sm:$0xff] %vm592, %v8299
        %v8308 = vld [vmem:[#allocation3] ss:$2 sm:$0xff]
        %s8309 = scalar_lea.vmem [#allocation3], 16
        %v8310 = vld [vmem:[%s8309] ss:$2 sm:$0xff]
        %s8311 = scalar_lea.vmem [#allocation3], 32
        %v8312 = vld [vmem:[%s8311] ss:$2 sm:$0xff]
        %s8313 = scalar_lea.vmem [#allocation3], 48
        %v8314 = vld [vmem:[%s8313] ss:$2 sm:$0xff]
        %s8315 = scalar_lea.vmem [#allocation3], 1
        %v8316 = vld [vmem:[%s8315] ss:$2 sm:$0xff]
        %s8317 = scalar_lea.vmem [#allocation3], 17
        %v8318 = vld [vmem:[%s8317] ss:$2 sm:$0xff]
        %s8319 = scalar_lea.vmem [#allocation3], 33
        %v8320 = vld [vmem:[%s8319] ss:$2 sm:$0xff]
        %s8321 = scalar_lea.vmem [#allocation3], 49
        %v8322 = vld [vmem:[%s8321] ss:$2 sm:$0xff]
        %v8323 = vmax.f32 %v8308, %v8316
        %v8324 = vmax.f32 %v8310, %v8318
        %v8325 = vmax.f32 %v8312, %v8320
        %v8326 = vmax.f32 %v8314, %v8322
        %v8327 = vmax.f32 %v573, %v575
        %v8328 = vmax.f32 %v574, %v576
        %v8329 = vmax.f32 %v577, %v579
        %v8330 = vmax.f32 %v578, %v580
        %v8331 = vmax.f32 %v581, %v583
        %v8332 = vmax.f32 %v582, %v584
        %v8333 = vmax.f32 %v585, %v587
        %v8334 = vmax.f32 %v586, %v588
        %8335 = vst.msk [vmem:[#allocation4] sm:$0xff] %vm592, %v8327
        %8336 = vst.msk [vmem:[#allocation4 + $0x8] sm:$0xff] %vm592, %v8328
        %8337 = vst.msk [vmem:[#allocation4 + $0x10] sm:$0xff] %vm592, %v8329
        %8338 = vst.msk [vmem:[#allocation4 + $0x18] sm:$0xff] %vm592, %v8330
        %8339 = vst.msk [vmem:[#allocation4 + $0x20] sm:$0xff] %vm592, %v8331
        %8340 = vst.msk [vmem:[#allocation4 + $0x28] sm:$0xff] %vm592, %v8332
        %8341 = vst.msk [vmem:[#allocation4 + $0x30] sm:$0xff] %vm592, %v8333
        %8342 = vst.msk [vmem:[#allocation4 + $0x38] sm:$0xff] %vm592, %v8334
        %v8343 = vld [vmem:[#allocation4] ss:$2 sm:$0xff]
        %s8344 = scalar_lea.vmem [#allocation4], 16
        %v8345 = vld [vmem:[%s8344] ss:$2 sm:$0xff]
        %s8346 = scalar_lea.vmem [#allocation4], 32
        %v8347 = vld [vmem:[%s8346] ss:$2 sm:$0xff]
        %s8348 = scalar_lea.vmem [#allocation4], 48
        %v8349 = vld [vmem:[%s8348] ss:$2 sm:$0xff]
        %s8350 = scalar_lea.vmem [#allocation4], 1
        %v8351 = vld [vmem:[%s8350] ss:$2 sm:$0xff]
        %s8352 = scalar_lea.vmem [#allocation4], 17
        %v8353 = vld [vmem:[%s8352] ss:$2 sm:$0xff]
        %s8354 = scalar_lea.vmem [#allocation4], 33
        %v8355 = vld [vmem:[%s8354] ss:$2 sm:$0xff]
        %s8356 = scalar_lea.vmem [#allocation4], 49
        %v8357 = vld [vmem:[%s8356] ss:$2 sm:$0xff]
        %v8358 = vmax.f32 %v8343, %v8351
        %v8359 = vmax.f32 %v8345, %v8353
        %v8360 = vmax.f32 %v8347, %v8355
        %v8361 = vmax.f32 %v8349, %v8357
        %v8362 = vld [vmem:[%s7] sm:$0xff]
        %v8363 = vld [vmem:[%s7 + $0x8] sm:$0xff]
        %v8364 = vld [vmem:[%s8] sm:$0xff]
        %v8365 = vld [vmem:[%s8 + $0x8] sm:$0xff]
        %v8367 = vsel %vm592, %v8358, 0
        %v8370 = vsel %vm592, %v8359, 0
        %v8373 = vsel %vm592, %v8360, 0
        %v8376 = vsel %vm592, %v8361, 0
        %8378 = vmatpush.msra.mxu0 0.0
        %8379 = vmatpush.msra.mxu0 0.0
        %8380 = vmatpush.msra.mxu0 0.0
        %8381 = vmatpush.msra.mxu0 0.0
        %8382 = vmatpush.msra.mxu0 0.0
        %8383 = vmatpush.msra.mxu0 0.0
        %8384 = vmatpush.msra.mxu0 0.0
        %8385 = vmatpush.msra.mxu0 0.0
        %8386 = vmatpush.msra.mxu0 0.0
        %8387 = vmatpush.msra.mxu0 0.0
        %8388 = vmatpush.msra.mxu0 0.0
        %8389 = vmatpush.msra.mxu0 0.0
        %8390 = vmatpush.msra.mxu0 0.0
        %8391 = vmatpush.msra.mxu0 0.0
        %v8392 = vand.u32 %v8365, 4294901760
        %8393 = vmatpush.msra.mxu0 %v8392
        %v8394 = vand.u32 %v8364, 4294901760
        %8395 = vmatpush.msra.mxu0 %v8394
        %v8396 = vand.u32 %v8367, 4294901760
        %v8397 = vsub.f32 %v8367, %v8396
        %v8398 = vand.u32 %v8397, 4294901760
        %v8399 = vsub.f32 %v8397, %v8398
        %v8400 = vand.u32 %v8399, 4294901760
        %8401 = vmatmul.f32.gmra.mxu0 %v8400
        %v8402 = vpop.f32.mrf.mxu0
        %v8403 = vadd.f32 0.0, %v8402
        %v8404 = vand.u32 %v8370, 4294901760
        %v8405 = vsub.f32 %v8370, %v8404
        %v8406 = vand.u32 %v8405, 4294901760
        %v8407 = vsub.f32 %v8405, %v8406
        %v8408 = vand.u32 %v8407, 4294901760
        %8409 = vmatmul.f32.gmra.mxu0 %v8408
        %v8410 = vpop.f32.mrf.mxu0
        %v8411 = vadd.f32 0.0, %v8410
        %v8412 = vand.u32 %v8373, 4294901760
        %v8413 = vsub.f32 %v8373, %v8412
        %v8414 = vand.u32 %v8413, 4294901760
        %v8415 = vsub.f32 %v8413, %v8414
        %v8416 = vand.u32 %v8415, 4294901760
        %8417 = vmatmul.f32.gmra.mxu0 %v8416
        %v8418 = vpop.f32.mrf.mxu0
        %v8419 = vadd.f32 0.0, %v8418
        %v8420 = vand.u32 %v8376, 4294901760
        %v8421 = vsub.f32 %v8376, %v8420
        %v8422 = vand.u32 %v8421, 4294901760
        %v8423 = vsub.f32 %v8421, %v8422
        %v8424 = vand.u32 %v8423, 4294901760
        %8425 = vmatmul.f32.gmra.mxu0 %v8424
        %v8426 = vpop.f32.mrf.mxu0
        %v8427 = vadd.f32 0.0, %v8426
        %8428 = vdwg.mxu0
        %8429 = vmatpush.msra.mxu0 0.0
        %8430 = vmatpush.msra.mxu0 0.0
        %8431 = vmatpush.msra.mxu0 0.0
        %8432 = vmatpush.msra.mxu0 0.0
        %8433 = vmatpush.msra.mxu0 0.0
        %8434 = vmatpush.msra.mxu0 0.0
        %8435 = vmatpush.msra.mxu0 0.0
        %8436 = vmatpush.msra.mxu0 0.0
        %8437 = vmatpush.msra.mxu0 0.0
        %8438 = vmatpush.msra.mxu0 0.0
        %8439 = vmatpush.msra.mxu0 0.0
        %8440 = vmatpush.msra.mxu0 0.0
        %8441 = vmatpush.msra.mxu0 0.0
        %8442 = vmatpush.msra.mxu0 0.0
        %v8443 = vand.u32 %v8365, 4294901760
        %v8444 = vsub.f32 %v8365, %v8443
        %v8445 = vand.u32 %v8444, 4294901760
        %v8446 = vsub.f32 %v8444, %v8445
        %v8447 = vand.u32 %v8446, 4294901760
        %8448 = vmatpush.msra.mxu0 %v8447
        %v8449 = vand.u32 %v8364, 4294901760
        %v8450 = vsub.f32 %v8364, %v8449
        %v8451 = vand.u32 %v8450, 4294901760
        %v8452 = vsub.f32 %v8450, %v8451
        %v8453 = vand.u32 %v8452, 4294901760
        %8454 = vmatpush.msra.mxu0 %v8453
        %v8455 = vand.u32 %v8367, 4294901760
        %8456 = vmatmul.f32.gmra.mxu0 %v8455
        %v8457 = vpop.f32.mrf.mxu0
        %v8458 = vadd.f32 %v8403, %v8457
        %v8459 = vand.u32 %v8370, 4294901760
        %8460 = vmatmul.f32.gmra.mxu0 %v8459
        %v8461 = vpop.f32.mrf.mxu0
        %v8462 = vadd.f32 %v8411, %v8461
        %v8463 = vand.u32 %v8373, 4294901760
        %8464 = vmatmul.f32.gmra.mxu0 %v8463
        %v8465 = vpop.f32.mrf.mxu0
        %v8466 = vadd.f32 %v8419, %v8465
        %v8467 = vand.u32 %v8376, 4294901760
        %8468 = vmatmul.f32.gmra.mxu0 %v8467
        %v8469 = vpop.f32.mrf.mxu0
        %v8470 = vadd.f32 %v8427, %v8469
        %8471 = vdwg.mxu0
        %8472 = vmatpush.msra.mxu0 0.0
        %8473 = vmatpush.msra.mxu0 0.0
        %8474 = vmatpush.msra.mxu0 0.0
        %8475 = vmatpush.msra.mxu0 0.0
        %8476 = vmatpush.msra.mxu0 0.0
        %8477 = vmatpush.msra.mxu0 0.0
        %8478 = vmatpush.msra.mxu0 0.0
        %8479 = vmatpush.msra.mxu0 0.0
        %8480 = vmatpush.msra.mxu0 0.0
        %8481 = vmatpush.msra.mxu0 0.0
        %8482 = vmatpush.msra.mxu0 0.0
        %8483 = vmatpush.msra.mxu0 0.0
        %8484 = vmatpush.msra.mxu0 0.0
        %8485 = vmatpush.msra.mxu0 0.0
        %v8486 = vand.u32 %v8365, 4294901760
        %v8487 = vsub.f32 %v8365, %v8486
        %8488 = vmatpush.msra.mxu0 %v8487
        %v8489 = vand.u32 %v8364, 4294901760
        %v8490 = vsub.f32 %v8364, %v8489
        %8491 = vmatpush.msra.mxu0 %v8490
        %v8492 = vand.u32 %v8367, 4294901760
        %v8493 = vsub.f32 %v8367, %v8492
        %8494 = vmatmul.f32.gmra.mxu0 %v8493
        %v8495 = vpop.f32.mrf.mxu0
        %v8496 = vadd.f32 %v8458, %v8495
        %v8497 = vand.u32 %v8370, 4294901760
        %v8498 = vsub.f32 %v8370, %v8497
        %8499 = vmatmul.f32.gmra.mxu0 %v8498
        %v8500 = vpop.f32.mrf.mxu0
        %v8501 = vadd.f32 %v8462, %v8500
        %v8502 = vand.u32 %v8373, 4294901760
        %v8503 = vsub.f32 %v8373, %v8502
        %8504 = vmatmul.f32.gmra.mxu0 %v8503
        %v8505 = vpop.f32.mrf.mxu0
        %v8506 = vadd.f32 %v8466, %v8505
        %v8507 = vand.u32 %v8376, 4294901760
        %v8508 = vsub.f32 %v8376, %v8507
        %8509 = vmatmul.f32.gmra.mxu0 %v8508
        %v8510 = vpop.f32.mrf.mxu0
        %v8511 = vadd.f32 %v8470, %v8510
        %8512 = vdwg.mxu0
        %8513 = vmatpush.msra.mxu0 0.0
        %8514 = vmatpush.msra.mxu0 0.0
        %8515 = vmatpush.msra.mxu0 0.0
        %8516 = vmatpush.msra.mxu0 0.0
        %8517 = vmatpush.msra.mxu0 0.0
        %8518 = vmatpush.msra.mxu0 0.0
        %8519 = vmatpush.msra.mxu0 0.0
        %8520 = vmatpush.msra.mxu0 0.0
        %8521 = vmatpush.msra.mxu0 0.0
        %8522 = vmatpush.msra.mxu0 0.0
        %8523 = vmatpush.msra.mxu0 0.0
        %8524 = vmatpush.msra.mxu0 0.0
        %8525 = vmatpush.msra.mxu0 0.0
        %8526 = vmatpush.msra.mxu0 0.0
        %v8527 = vand.u32 %v8365, 4294901760
        %8528 = vmatpush.msra.mxu0 %v8527
        %v8529 = vand.u32 %v8364, 4294901760
        %8530 = vmatpush.msra.mxu0 %v8529
        %v8531 = vand.u32 %v8367, 4294901760
        %v8532 = vsub.f32 %v8367, %v8531
        %v8533 = vand.u32 %v8532, 4294901760
        %8534 = vmatmul.f32.gmra.mxu0 %v8533
        %v8535 = vpop.f32.mrf.mxu0
        %v8536 = vadd.f32 %v8496, %v8535
        %v8537 = vand.u32 %v8370, 4294901760
        %v8538 = vsub.f32 %v8370, %v8537
        %v8539 = vand.u32 %v8538, 4294901760
        %8540 = vmatmul.f32.gmra.mxu0 %v8539
        %v8541 = vpop.f32.mrf.mxu0
        %v8542 = vadd.f32 %v8501, %v8541
        %v8543 = vand.u32 %v8373, 4294901760
        %v8544 = vsub.f32 %v8373, %v8543
        %v8545 = vand.u32 %v8544, 4294901760
        %8546 = vmatmul.f32.gmra.mxu0 %v8545
        %v8547 = vpop.f32.mrf.mxu0
        %v8548 = vadd.f32 %v8506, %v8547
        %v8549 = vand.u32 %v8376, 4294901760
        %v8550 = vsub.f32 %v8376, %v8549
        %v8551 = vand.u32 %v8550, 4294901760
        %8552 = vmatmul.f32.gmra.mxu0 %v8551
        %v8553 = vpop.f32.mrf.mxu0
        %v8554 = vadd.f32 %v8511, %v8553
        %8555 = vdwg.mxu0
        %8556 = vmatpush.msra.mxu0 0.0
        %8557 = vmatpush.msra.mxu0 0.0
        %8558 = vmatpush.msra.mxu0 0.0
        %8559 = vmatpush.msra.mxu0 0.0
        %8560 = vmatpush.msra.mxu0 0.0
        %8561 = vmatpush.msra.mxu0 0.0
        %8562 = vmatpush.msra.mxu0 0.0
        %8563 = vmatpush.msra.mxu0 0.0
        %8564 = vmatpush.msra.mxu0 0.0
        %8565 = vmatpush.msra.mxu0 0.0
        %8566 = vmatpush.msra.mxu0 0.0
        %8567 = vmatpush.msra.mxu0 0.0
        %8568 = vmatpush.msra.mxu0 0.0
        %8569 = vmatpush.msra.mxu0 0.0
        %v8570 = vand.u32 %v8365, 4294901760
        %v8571 = vsub.f32 %v8365, %v8570
        %v8572 = vand.u32 %v8571, 4294901760
        %8573 = vmatpush.msra.mxu0 %v8572
        %v8574 = vand.u32 %v8364, 4294901760
        %v8575 = vsub.f32 %v8364, %v8574
        %v8576 = vand.u32 %v8575, 4294901760
        %8577 = vmatpush.msra.mxu0 %v8576
        %v8578 = vand.u32 %v8367, 4294901760
        %8579 = vmatmul.f32.gmra.mxu0 %v8578
        %v8580 = vpop.f32.mrf.mxu0
        %v8581 = vadd.f32 %v8536, %v8580
        %v8582 = vand.u32 %v8370, 4294901760
        %8583 = vmatmul.f32.gmra.mxu0 %v8582
        %v8584 = vpop.f32.mrf.mxu0
        %v8585 = vadd.f32 %v8542, %v8584
        %v8586 = vand.u32 %v8373, 4294901760
        %8587 = vmatmul.f32.gmra.mxu0 %v8586
        %v8588 = vpop.f32.mrf.mxu0
        %v8589 = vadd.f32 %v8548, %v8588
        %v8590 = vand.u32 %v8376, 4294901760
        %8591 = vmatmul.f32.gmra.mxu0 %v8590
        %v8592 = vpop.f32.mrf.mxu0
        %v8593 = vadd.f32 %v8554, %v8592
        %8594 = vdwg.mxu0
        %8595 = vmatpush.msra.mxu0 0.0
        %8596 = vmatpush.msra.mxu0 0.0
        %8597 = vmatpush.msra.mxu0 0.0
        %8598 = vmatpush.msra.mxu0 0.0
        %8599 = vmatpush.msra.mxu0 0.0
        %8600 = vmatpush.msra.mxu0 0.0
        %8601 = vmatpush.msra.mxu0 0.0
        %8602 = vmatpush.msra.mxu0 0.0
        %8603 = vmatpush.msra.mxu0 0.0
        %8604 = vmatpush.msra.mxu0 0.0
        %8605 = vmatpush.msra.mxu0 0.0
        %8606 = vmatpush.msra.mxu0 0.0
        %8607 = vmatpush.msra.mxu0 0.0
        %8608 = vmatpush.msra.mxu0 0.0
        %v8609 = vand.u32 %v8365, 4294901760
        %8610 = vmatpush.msra.mxu0 %v8609
        %v8611 = vand.u32 %v8364, 4294901760
        %8612 = vmatpush.msra.mxu0 %v8611
        %v8613 = vand.u32 %v8367, 4294901760
        %8614 = vmatmul.f32.gmra.mxu0 %v8613
        %v8615 = vpop.f32.mrf.mxu0
        %v8616 = vadd.f32 %v8581, %v8615
        %v8617 = vand.u32 %v8370, 4294901760
        %8618 = vmatmul.f32.gmra.mxu0 %v8617
        %v8619 = vpop.f32.mrf.mxu0
        %v8620 = vadd.f32 %v8585, %v8619
        %v8621 = vand.u32 %v8373, 4294901760
        %8622 = vmatmul.f32.gmra.mxu0 %v8621
        %v8623 = vpop.f32.mrf.mxu0
        %v8624 = vadd.f32 %v8589, %v8623
        %v8625 = vand.u32 %v8376, 4294901760
        %8626 = vmatmul.f32.gmra.mxu0 %v8625
        %v8627 = vpop.f32.mrf.mxu0
        %v8628 = vadd.f32 %v8593, %v8627
        %8629 = vdwg.mxu0
        %v8631 = vsel %vm592, %v8323, 0
        %v8634 = vsel %vm592, %v8324, 0
        %v8637 = vsel %vm592, %v8325, 0
        %v8640 = vsel %vm592, %v8326, 0
        %8642 = vmatpush.msra.mxu0 0.0
        %8643 = vmatpush.msra.mxu0 0.0
        %8644 = vmatpush.msra.mxu0 0.0
        %8645 = vmatpush.msra.mxu0 0.0
        %8646 = vmatpush.msra.mxu0 0.0
        %8647 = vmatpush.msra.mxu0 0.0
        %8648 = vmatpush.msra.mxu0 0.0
        %8649 = vmatpush.msra.mxu0 0.0
        %8650 = vmatpush.msra.mxu0 0.0
        %8651 = vmatpush.msra.mxu0 0.0
        %8652 = vmatpush.msra.mxu0 0.0
        %8653 = vmatpush.msra.mxu0 0.0
        %8654 = vmatpush.msra.mxu0 0.0
        %8655 = vmatpush.msra.mxu0 0.0
        %v8656 = vand.u32 %v8363, 4294901760
        %8657 = vmatpush.msra.mxu0 %v8656
        %v8658 = vand.u32 %v8362, 4294901760
        %8659 = vmatpush.msra.mxu0 %v8658
        %v8660 = vand.u32 %v8631, 4294901760
        %v8661 = vsub.f32 %v8631, %v8660
        %v8662 = vand.u32 %v8661, 4294901760
        %v8663 = vsub.f32 %v8661, %v8662
        %v8664 = vand.u32 %v8663, 4294901760
        %8665 = vmatmul.f32.gmra.mxu0 %v8664
        %v8666 = vpop.f32.mrf.mxu0
        %v8667 = vadd.f32 %v8616, %v8666
        %v8668 = vand.u32 %v8634, 4294901760
        %v8669 = vsub.f32 %v8634, %v8668
        %v8670 = vand.u32 %v8669, 4294901760
        %v8671 = vsub.f32 %v8669, %v8670
        %v8672 = vand.u32 %v8671, 4294901760
        %8673 = vmatmul.f32.gmra.mxu0 %v8672
        %v8674 = vpop.f32.mrf.mxu0
        %v8675 = vadd.f32 %v8620, %v8674
        %v8676 = vand.u32 %v8637, 4294901760
        %v8677 = vsub.f32 %v8637, %v8676
        %v8678 = vand.u32 %v8677, 4294901760
        %v8679 = vsub.f32 %v8677, %v8678
        %v8680 = vand.u32 %v8679, 4294901760
        %8681 = vmatmul.f32.gmra.mxu0 %v8680
        %v8682 = vpop.f32.mrf.mxu0
        %v8683 = vadd.f32 %v8624, %v8682
        %v8684 = vand.u32 %v8640, 4294901760
        %v8685 = vsub.f32 %v8640, %v8684
        %v8686 = vand.u32 %v8685, 4294901760
        %v8687 = vsub.f32 %v8685, %v8686
        %v8688 = vand.u32 %v8687, 4294901760
        %8689 = vmatmul.f32.gmra.mxu0 %v8688
        %v8690 = vpop.f32.mrf.mxu0
        %v8691 = vadd.f32 %v8628, %v8690
        %8692 = vdwg.mxu0
        %8693 = vmatpush.msra.mxu0 0.0
        %8694 = vmatpush.msra.mxu0 0.0
        %8695 = vmatpush.msra.mxu0 0.0
        %8696 = vmatpush.msra.mxu0 0.0
        %8697 = vmatpush.msra.mxu0 0.0
        %8698 = vmatpush.msra.mxu0 0.0
        %8699 = vmatpush.msra.mxu0 0.0
        %8700 = vmatpush.msra.mxu0 0.0
        %8701 = vmatpush.msra.mxu0 0.0
        %8702 = vmatpush.msra.mxu0 0.0
        %8703 = vmatpush.msra.mxu0 0.0
        %8704 = vmatpush.msra.mxu0 0.0
        %8705 = vmatpush.msra.mxu0 0.0
        %8706 = vmatpush.msra.mxu0 0.0
        %v8707 = vand.u32 %v8363, 4294901760
        %v8708 = vsub.f32 %v8363, %v8707
        %v8709 = vand.u32 %v8708, 4294901760
        %v8710 = vsub.f32 %v8708, %v8709
        %v8711 = vand.u32 %v8710, 4294901760
        %8712 = vmatpush.msra.mxu0 %v8711
        %v8713 = vand.u32 %v8362, 4294901760
        %v8714 = vsub.f32 %v8362, %v8713
        %v8715 = vand.u32 %v8714, 4294901760
        %v8716 = vsub.f32 %v8714, %v8715
        %v8717 = vand.u32 %v8716, 4294901760
        %8718 = vmatpush.msra.mxu0 %v8717
        %v8719 = vand.u32 %v8631, 4294901760
        %8720 = vmatmul.f32.gmra.mxu0 %v8719
        %v8721 = vpop.f32.mrf.mxu0
        %v8722 = vadd.f32 %v8667, %v8721
        %v8723 = vand.u32 %v8634, 4294901760
        %8724 = vmatmul.f32.gmra.mxu0 %v8723
        %v8725 = vpop.f32.mrf.mxu0
        %v8726 = vadd.f32 %v8675, %v8725
        %v8727 = vand.u32 %v8637, 4294901760
        %8728 = vmatmul.f32.gmra.mxu0 %v8727
        %v8729 = vpop.f32.mrf.mxu0
        %v8730 = vadd.f32 %v8683, %v8729
        %v8731 = vand.u32 %v8640, 4294901760
        %8732 = vmatmul.f32.gmra.mxu0 %v8731
        %v8733 = vpop.f32.mrf.mxu0
        %v8734 = vadd.f32 %v8691, %v8733
        %8735 = vdwg.mxu0
        %8736 = vmatpush.msra.mxu0 0.0
        %8737 = vmatpush.msra.mxu0 0.0
        %8738 = vmatpush.msra.mxu0 0.0
        %8739 = vmatpush.msra.mxu0 0.0
        %8740 = vmatpush.msra.mxu0 0.0
        %8741 = vmatpush.msra.mxu0 0.0
        %8742 = vmatpush.msra.mxu0 0.0
        %8743 = vmatpush.msra.mxu0 0.0
        %8744 = vmatpush.msra.mxu0 0.0
        %8745 = vmatpush.msra.mxu0 0.0
        %8746 = vmatpush.msra.mxu0 0.0
        %8747 = vmatpush.msra.mxu0 0.0
        %8748 = vmatpush.msra.mxu0 0.0
        %8749 = vmatpush.msra.mxu0 0.0
        %v8750 = vand.u32 %v8363, 4294901760
        %v8751 = vsub.f32 %v8363, %v8750
        %8752 = vmatpush.msra.mxu0 %v8751
        %v8753 = vand.u32 %v8362, 4294901760
        %v8754 = vsub.f32 %v8362, %v8753
        %8755 = vmatpush.msra.mxu0 %v8754
        %v8756 = vand.u32 %v8631, 4294901760
        %v8757 = vsub.f32 %v8631, %v8756
        %8758 = vmatmul.f32.gmra.mxu0 %v8757
        %v8759 = vpop.f32.mrf.mxu0
        %v8760 = vadd.f32 %v8722, %v8759
        %v8761 = vand.u32 %v8634, 4294901760
        %v8762 = vsub.f32 %v8634, %v8761
        %8763 = vmatmul.f32.gmra.mxu0 %v8762
        %v8764 = vpop.f32.mrf.mxu0
        %v8765 = vadd.f32 %v8726, %v8764
        %v8766 = vand.u32 %v8637, 4294901760
        %v8767 = vsub.f32 %v8637, %v8766
        %8768 = vmatmul.f32.gmra.mxu0 %v8767
        %v8769 = vpop.f32.mrf.mxu0
        %v8770 = vadd.f32 %v8730, %v8769
        %v8771 = vand.u32 %v8640, 4294901760
        %v8772 = vsub.f32 %v8640, %v8771
        %8773 = vmatmul.f32.gmra.mxu0 %v8772
        %v8774 = vpop.f32.mrf.mxu0
        %v8775 = vadd.f32 %v8734, %v8774
        %8776 = vdwg.mxu0
        %8777 = vmatpush.msra.mxu0 0.0
        %8778 = vmatpush.msra.mxu0 0.0
        %8779 = vmatpush.msra.mxu0 0.0
        %8780 = vmatpush.msra.mxu0 0.0
        %8781 = vmatpush.msra.mxu0 0.0
        %8782 = vmatpush.msra.mxu0 0.0
        %8783 = vmatpush.msra.mxu0 0.0
        %8784 = vmatpush.msra.mxu0 0.0
        %8785 = vmatpush.msra.mxu0 0.0
        %8786 = vmatpush.msra.mxu0 0.0
        %8787 = vmatpush.msra.mxu0 0.0
        %8788 = vmatpush.msra.mxu0 0.0
        %8789 = vmatpush.msra.mxu0 0.0
        %8790 = vmatpush.msra.mxu0 0.0
        %v8791 = vand.u32 %v8363, 4294901760
        %8792 = vmatpush.msra.mxu0 %v8791
        %v8793 = vand.u32 %v8362, 4294901760
        %8794 = vmatpush.msra.mxu0 %v8793
        %v8795 = vand.u32 %v8631, 4294901760
        %v8796 = vsub.f32 %v8631, %v8795
        %v8797 = vand.u32 %v8796, 4294901760
        %8798 = vmatmul.f32.gmra.mxu0 %v8797
        %v8799 = vpop.f32.mrf.mxu0
        %v8800 = vadd.f32 %v8760, %v8799
        %v8801 = vand.u32 %v8634, 4294901760
        %v8802 = vsub.f32 %v8634, %v8801
        %v8803 = vand.u32 %v8802, 4294901760
        %8804 = vmatmul.f32.gmra.mxu0 %v8803
        %v8805 = vpop.f32.mrf.mxu0
        %v8806 = vadd.f32 %v8765, %v8805
        %v8807 = vand.u32 %v8637, 4294901760
        %v8808 = vsub.f32 %v8637, %v8807
        %v8809 = vand.u32 %v8808, 4294901760
        %8810 = vmatmul.f32.gmra.mxu0 %v8809
        %v8811 = vpop.f32.mrf.mxu0
        %v8812 = vadd.f32 %v8770, %v8811
        %v8813 = vand.u32 %v8640, 4294901760
        %v8814 = vsub.f32 %v8640, %v8813
        %v8815 = vand.u32 %v8814, 4294901760
        %8816 = vmatmul.f32.gmra.mxu0 %v8815
        %v8817 = vpop.f32.mrf.mxu0
        %v8818 = vadd.f32 %v8775, %v8817
        %8819 = vdwg.mxu0
        %8820 = vmatpush.msra.mxu0 0.0
        %8821 = vmatpush.msra.mxu0 0.0
        %8822 = vmatpush.msra.mxu0 0.0
        %8823 = vmatpush.msra.mxu0 0.0
        %8824 = vmatpush.msra.mxu0 0.0
        %8825 = vmatpush.msra.mxu0 0.0
        %8826 = vmatpush.msra.mxu0 0.0
        %8827 = vmatpush.msra.mxu0 0.0
        %8828 = vmatpush.msra.mxu0 0.0
        %8829 = vmatpush.msra.mxu0 0.0
        %8830 = vmatpush.msra.mxu0 0.0
        %8831 = vmatpush.msra.mxu0 0.0
        %8832 = vmatpush.msra.mxu0 0.0
        %8833 = vmatpush.msra.mxu0 0.0
        %v8834 = vand.u32 %v8363, 4294901760
        %v8835 = vsub.f32 %v8363, %v8834
        %v8836 = vand.u32 %v8835, 4294901760
        %8837 = vmatpush.msra.mxu0 %v8836
        %v8838 = vand.u32 %v8362, 4294901760
        %v8839 = vsub.f32 %v8362, %v8838
        %v8840 = vand.u32 %v8839, 4294901760
        %8841 = vmatpush.msra.mxu0 %v8840
        %v8842 = vand.u32 %v8631, 4294901760
        %8843 = vmatmul.f32.gmra.mxu0 %v8842
        %v8844 = vpop.f32.mrf.mxu0
        %v8845 = vadd.f32 %v8800, %v8844
        %v8846 = vand.u32 %v8634, 4294901760
        %8847 = vmatmul.f32.gmra.mxu0 %v8846
        %v8848 = vpop.f32.mrf.mxu0
        %v8849 = vadd.f32 %v8806, %v8848
        %v8850 = vand.u32 %v8637, 4294901760
        %8851 = vmatmul.f32.gmra.mxu0 %v8850
        %v8852 = vpop.f32.mrf.mxu0
        %v8853 = vadd.f32 %v8812, %v8852
        %v8854 = vand.u32 %v8640, 4294901760
        %8855 = vmatmul.f32.gmra.mxu0 %v8854
        %v8856 = vpop.f32.mrf.mxu0
        %v8857 = vadd.f32 %v8818, %v8856
        %8858 = vdwg.mxu0
        %8859 = vmatpush.msra.mxu0 0.0
        %8860 = vmatpush.msra.mxu0 0.0
        %8861 = vmatpush.msra.mxu0 0.0
        %8862 = vmatpush.msra.mxu0 0.0
        %8863 = vmatpush.msra.mxu0 0.0
        %8864 = vmatpush.msra.mxu0 0.0
        %8865 = vmatpush.msra.mxu0 0.0
        %8866 = vmatpush.msra.mxu0 0.0
        %8867 = vmatpush.msra.mxu0 0.0
        %8868 = vmatpush.msra.mxu0 0.0
        %8869 = vmatpush.msra.mxu0 0.0
        %8870 = vmatpush.msra.mxu0 0.0
        %8871 = vmatpush.msra.mxu0 0.0
        %8872 = vmatpush.msra.mxu0 0.0
        %v8873 = vand.u32 %v8363, 4294901760
        %8874 = vmatpush.msra.mxu0 %v8873
        %v8875 = vand.u32 %v8362, 4294901760
        %8876 = vmatpush.msra.mxu0 %v8875
        %v8877 = vand.u32 %v8631, 4294901760
        %8878 = vmatmul.f32.gmra.mxu0 %v8877
        %v8879 = vpop.f32.mrf.mxu0
        %v8880 = vadd.f32 %v8845, %v8879
        %v8881 = vand.u32 %v8634, 4294901760
        %8882 = vmatmul.f32.gmra.mxu0 %v8881
        %v8883 = vpop.f32.mrf.mxu0
        %v8884 = vadd.f32 %v8849, %v8883
        %v8885 = vand.u32 %v8637, 4294901760
        %8886 = vmatmul.f32.gmra.mxu0 %v8885
        %v8887 = vpop.f32.mrf.mxu0
        %v8888 = vadd.f32 %v8853, %v8887
        %v8889 = vand.u32 %v8640, 4294901760
        %8890 = vmatmul.f32.gmra.mxu0 %v8889
        %v8891 = vpop.f32.mrf.mxu0
        %v8892 = vadd.f32 %v8857, %v8891
        %8893 = vdwg.mxu0
        %v8894 = vld [vmem:[%s9] sm:$0x1]
        %v8896 = vperm.slane %v8894, 0
        %v8898 = vadd.f32 %v8880, %v8896
        %v8899 = vadd.f32 %v8884, %v8896
        %v8900 = vadd.f32 %v8888, %v8896
        %v8901 = vadd.f32 %v8892, %v8896
        %vm8902 = vcmask 261120
        %8903 = vst.msk [vmem:[%s566] sm:$0xff] %vm8902, %v8898
        %8904 = vst.msk [vmem:[%s566 + $0x8] sm:$0xff] %vm8902, %v8899
        %8905 = vst.msk [vmem:[%s566 + $0x10] sm:$0xff] %vm8902, %v8900
        %8906 = vst.msk [vmem:[%s566 + $0x18] sm:$0xff] %vm8902, %v8901
        %s8907 = smul.u32 4, %s28
        %p8908 = scmp.lt.s32.totalorder %s27, 1
        %s8909 = scalar_select %p8908, %s27, 1
        %p8910 = scmp.lt.s32.totalorder %s8907, 7
        %s8911 = scalar_select %p8910, %s8907, 7
        %s8912 = smul.addr %s8909, 8
        %s8913 = sadd.s32 %s8911, %s8912
        %s8914 = smul.addr %s8913, 8
        %s8915 = scalar_lea.vmem %s11, %s8914
        // Predicated region
        $region69: #{tpu_custom_call.1} parent=63 // pred_check
          %p8916 = pneg %p323
        $region70: #{tpu_custom_call.1} parent=63 // pred_check_branch
          %8918 = sbr.rel (%p8916) target = $region72
        $region71: #{tpu_custom_call.1} parent=63 // pred_region
          %s8919 = smul.u32 4, %s28
        $region72: #{tpu_custom_call.1} parent=63 // pred_fallthru
          _
      $region64: #{tpu_custom_call.1} parent=5 // pred_fallthru
        _
      %p8920 = scmp.le.s32.totalorder 2, %s18
      // Predicated region
      $region73: #{tpu_custom_call.1} parent=5 // pred_check
        %p8921 = pneg %p8920
      $region74: #{tpu_custom_call.1} parent=5 // pred_check_branch
        %8923 = sbr.rel (%p8921) target = $region76
      $region75: #{tpu_custom_call.1} parent=5 // pred_region
        %s8924 = ssub.s32 %s18, 2
        // Predicated region
        $region77: #{tpu_custom_call.1} parent=75 // pred_check
          %p8925 = pneg %p329
        $region78: #{tpu_custom_call.1} parent=75 // pred_check_branch
          %8927 = sbr.rel (%p8925) target = $region80
        $region79: #{tpu_custom_call.1} parent=75 // pred_region
          %s8928 = smul.u32 4, %s30
          %p8929 = scmp.lt.s32.totalorder %s29, 1
          %s8930 = scalar_select %p8929, %s29, 1
          %p8931 = scmp.lt.s32.totalorder %s8928, 7
          %s8932 = scalar_select %p8931, %s8928, 7
          %s8933 = smul.addr %s8930, 8
          %s8934 = sadd.s32 %s8932, %s8933
          %s8935 = smul.addr %s8934, 8
          %s8936 = scalar_lea.vmem %s11, %s8935
        $region80: #{tpu_custom_call.1} parent=75 // pred_fallthru
          _
      $region76: #{tpu_custom_call.1} parent=5 // pred_fallthru
        _
    $region6: #{tpu_custom_call.1} parent=1 // loop_footer
      %s22 = sadd.s32 1, %s18
    $region7: #{tpu_custom_call.1} parent=1 // loop_footer_branch
      %17 = sbr.rel target = $region3
    $region8: #{tpu_custom_call.1} parent=1 // loop_exit
      _
    %8937 = vsyncpa [#allocation6], 1
    %s8938 = scalar_lea.sflag [#allocation6], 1
    %8939 = vsyncpa %s8938, 1

</llo_original>
